<compile_context>
chip_gen: v7x
topology: tpu7x:2x2x1
jax: 0.10.0
libtpu: 0.0.40
codegen_flags: <defaults>
</compile_context>

<pallas_src>
import math

import jax
import jax.numpy as jnp
from jax.experimental import pallas as pl
from jax.experimental.pallas import tpu as pltpu


# ------------------------------- helpers ------------------------------------

def _parallel_params():
    return pltpu.CompilerParams(dimension_semantics=("parallel",))


def _tile_m(m, cap=256):
    """Largest multiple-of-8 divisor of m that is <= cap (M-grid tiling)."""
    best = m
    if m % 8 == 0:
        for t in range(8, min(m, cap) + 1, 8):
            if m % t == 0:
                best = t
    return best


def _pad_k(x, w):
    """Zero-pad contraction dim (x last dim / w first dim) to a multiple of 8."""
    k = x.shape[-1]
    pad = (-k) % 8
    if pad:
        x = jnp.pad(x, [(0, 0)] * (x.ndim - 1) + [(0, pad)])
        w = jnp.pad(w, [(0, pad)] + [(0, 0)] * (w.ndim - 1))
    return x, w


def _conv_w_mat(w):
    """(Cout,Cin,kh,kw) -> [kh*kw*Cin, Cout], matching (i,j,c) im2col col order."""
    cout = w.shape[0]
    return w.transpose(2, 3, 1, 0).reshape(-1, cout)


def _im2col(x, kh, kw, pad):
    """Channels-last im2col, stride 1. x:(N,H,W,C) -> ([N*Ho*Wo, kh*kw*C], Ho, Wo)."""
    n, h, wdim, c = x.shape
    if pad:
        x = jnp.pad(x, ((0, 0), (pad, pad), (pad, pad), (0, 0)))
    ho = h + 2 * pad - kh + 1
    wo = wdim + 2 * pad - kw + 1
    cols = [x[:, i:i + ho, j:j + wo, :] for i in range(kh) for j in range(kw)]
    p = jnp.concatenate(cols, axis=-1)                       # (N, Ho, Wo, K)
    return p.reshape(n * ho * wo, kh * kw * c), ho, wo


def _im2col_pool(x, kh, kw):
    """im2col for conv (valid, stride 1) followed by a 2x2/2 max-pool.
    Returns the 4 pool-position slabs stacked: (4, N*Hp*Wp, kh*kw*C)."""
    n, h, wdim, c = x.shape
    ho, wo = h - kh + 1, wdim - kw + 1
    assert ho % 2 == 0 and wo % 2 == 0, "maxpool2 expects even conv output size"
    hp, wp = ho // 2, wo // 2
    cols = [x[:, i:i + ho, j:j + wo, :] for i in range(kh) for j in range(kw)]
    p = jnp.concatenate(cols, axis=-1)                       # (N, Ho, Wo, K)
    slabs = [p[:, dy::2, dx::2, :].reshape(n * hp * wp, -1)
             for dy in (0, 1) for dx in (0, 1)]
    return jnp.stack(slabs, axis=0), hp, wp                  # (4, Mp, K)


# ------------------------------- kernels ------------------------------------

def _conv_pool_relu_kernel(p_ref, w_ref, b_ref, o_ref):
    # p_ref: (4, tm, K) -- one im2col slab per 2x2 pool position.
    # relu(maxpool(conv(x))) == relu(max_q(conv_q(x)) + b)
    z = jnp.dot(p_ref[0], w_ref[...], preferred_element_type=jnp.float32)
    for q in range(1, 4):
        z = jnp.maximum(z, jnp.dot(p_ref[q], w_ref[...],
                                   preferred_element_type=jnp.float32))
    o_ref[...] = jnp.maximum(z + b_ref[...], 0.0)


def _gemm_bias_kernel(x_ref, w_ref, b_ref, o_ref):
    o_ref[...] = (jnp.dot(x_ref[...], w_ref[...],
                          preferred_element_type=jnp.float32) + b_ref[...])


def _incept_head_kernel(x_ref, p3_ref, wt_ref, bt_ref, wp_ref, bp_ref,
                        trio_ref, pool_ref):
    # three 1x1 convs on x fused into one [Cin,48] GEMM (b1x1|b5x5_1|b3x3_1)
    trio_ref[...] = (jnp.dot(x_ref[...], wt_ref[...],
                             preferred_element_type=jnp.float32) + bt_ref[...])
    # pool branch: avg_pool2d(3,pad=1) + 1x1 conv folded into one 3x3-conv GEMM
    pool_ref[...] = (jnp.dot(p3_ref[...], wp_ref[...],
                             preferred_element_type=jnp.float32) + bp_ref[...])


def _incept_mid_kernel(p5_ref, w5_ref, b5_ref, p3_ref, w3_ref, b3_ref,
                       o5_ref, o3_ref):
    o5_ref[...] = (jnp.dot(p5_ref[...], w5_ref[...],
                           preferred_element_type=jnp.float32) + b5_ref[...])
    o3_ref[...] = (jnp.dot(p3_ref[...], w3_ref[...],
                           preferred_element_type=jnp.float32) + b3_ref[...])


def _fc_logsoftmax_kernel(x_ref, w_ref, b_ref, o_ref):
    z = (jnp.dot(x_ref[...], w_ref[...], preferred_element_type=jnp.float32)
         + b_ref[...])
    m = jnp.max(z, axis=-1, keepdims=True)
    e = jnp.exp(z - m)
    o_ref[...] = z - m - jnp.log(jnp.sum(e, axis=-1, keepdims=True))


# ------------------------------ wrappers ------------------------------------

def conv_pool_relu(x, w, b):
    """relu(maxpool2(conv_valid(x))) on channels-last x:(N,H,W,Cin) — 1 kernel."""
    n = x.shape[0]
    kh, kw = w.shape[2], w.shape[3]
    cout = w.shape[0]
    p, hp, wp = _im2col_pool(x, kh, kw)
    wm = _conv_w_mat(w)
    p, wm = _pad_k(p, wm)
    _, mp, k = p.shape
    tm = _tile_m(mp)
    out = pl.pallas_call(
        _conv_pool_relu_kernel,
        out_shape=jax.ShapeDtypeStruct((mp, cout), jnp.float32),
        grid=(mp // tm,),
        in_specs=[
            pl.BlockSpec((4, tm, k), lambda i: (0, i, 0)),
            pl.BlockSpec((k, cout), lambda i: (0, 0)),
            pl.BlockSpec((1, cout), lambda i: (0, 0)),
        ],
        out_specs=pl.BlockSpec((tm, cout), lambda i: (i, 0)),
        compiler_params=_parallel_params(),
    )(p, wm, b.reshape(1, cout))
    return out.reshape(n, hp, wp, cout)


def gemm_bias(x, w, b):
    m = x.shape[0]
    cout = w.shape[1]
    x, w = _pad_k(x, w)
    k = x.shape[1]
    tm = _tile_m(m)
    return pl.pallas_call(
        _gemm_bias_kernel,
        out_shape=jax.ShapeDtypeStruct((m, cout), jnp.float32),
        grid=(m // tm,),
        in_specs=[pl.BlockSpec((tm, k), lambda i: (i, 0)),
                  pl.BlockSpec((k, cout), lambda i: (0, 0)),
                  pl.BlockSpec((1, cout), lambda i: (0, 0))],
        out_specs=pl.BlockSpec((tm, cout), lambda i: (i, 0)),
        compiler_params=_parallel_params(),
    )(x, w, b.reshape(1, cout))


def incept_head(xm, p3, wt, bt, wpe, bp):
    m = xm.shape[0]
    xm, wt = _pad_k(xm, wt)
    p3, wpe = _pad_k(p3, wpe)
    kx, k3 = xm.shape[1], p3.shape[1]
    tm = _tile_m(m)
    return pl.pallas_call(
        _incept_head_kernel,
        out_shape=(jax.ShapeDtypeStruct((m, 48), jnp.float32),
                   jax.ShapeDtypeStruct((m, 24), jnp.float32)),
        grid=(m // tm,),
        in_specs=[
            pl.BlockSpec((tm, kx), lambda i: (i, 0)),
            pl.BlockSpec((tm, k3), lambda i: (i, 0)),
            pl.BlockSpec((kx, 48), lambda i: (0, 0)),
            pl.BlockSpec((1, 48), lambda i: (0, 0)),
            pl.BlockSpec((k3, 24), lambda i: (0, 0)),
            pl.BlockSpec((1, 24), lambda i: (0, 0)),
        ],
        out_specs=[pl.BlockSpec((tm, 48), lambda i: (i, 0)),
                   pl.BlockSpec((tm, 24), lambda i: (i, 0))],
        compiler_params=_parallel_params(),
    )(xm, p3, wt, bt.reshape(1, 48), wpe, bp.reshape(1, 24))


def incept_mid(p5, w5, b5, p3, w3, b3):
    m = p5.shape[0]
    p5, w5 = _pad_k(p5, w5)
    p3, w3 = _pad_k(p3, w3)
    k5, k3 = p5.shape[1], p3.shape[1]
    tm = _tile_m(m)
    return pl.pallas_call(
        _incept_mid_kernel,
        out_shape=(jax.ShapeDtypeStruct((m, 24), jnp.float32),
                   jax.ShapeDtypeStruct((m, 24), jnp.float32)),
        grid=(m // tm,),
        in_specs=[
            pl.BlockSpec((tm, k5), lambda i: (i, 0)),
            pl.BlockSpec((k5, 24), lambda i: (0, 0)),
            pl.BlockSpec((1, 24), lambda i: (0, 0)),
            pl.BlockSpec((tm, k3), lambda i: (i, 0)),
            pl.BlockSpec((k3, 24), lambda i: (0, 0)),
            pl.BlockSpec((1, 24), lambda i: (0, 0)),
        ],
        out_specs=[pl.BlockSpec((tm, 24), lambda i: (i, 0)),
                   pl.BlockSpec((tm, 24), lambda i: (i, 0))],
        compiler_params=_parallel_params(),
    )(p5, w5, b5.reshape(1, 24), p3, w3, b3.reshape(1, 24))


def fc_logsoftmax(x, w, b):
    m, k = x.shape
    cout = w.shape[1]
    return pl.pallas_call(
        _fc_logsoftmax_kernel,
        out_shape=jax.ShapeDtypeStruct((m, cout), jnp.float32),
        grid=(1,),
        in_specs=[pl.BlockSpec((m, k), lambda i: (0, 0)),
                  pl.BlockSpec((k, cout), lambda i: (0, 0)),
                  pl.BlockSpec((1, cout), lambda i: (0, 0))],
        out_specs=pl.BlockSpec((m, cout), lambda i: (0, 0)),
    )(x, w, b.reshape(1, cout))


# ------------------------------ parameters ----------------------------------

def conv_params(key, cout, cin, kh, kw):
    k1, k2 = jax.random.split(key)
    bound = 1.0 / math.sqrt(cin * kh * kw)
    w = jax.random.uniform(k1, (cout, cin, kh, kw), jnp.float32, -bound, bound)
    b = jax.random.uniform(k2, (cout,), jnp.float32, -bound, bound)
    return w, b


def linear_params(key, out_f, in_f):
    k1, k2 = jax.random.split(key)
    bound = 1.0 / math.sqrt(in_f)
    w = jax.random.uniform(k1, (out_f, in_f), jnp.float32, -bound, bound)
    b = jax.random.uniform(k2, (out_f,), jnp.float32, -bound, bound)
    return w, b


def inception_params(key, in_channels):
    ks = jax.random.split(key, 7)
    return {
        "b1x1":   conv_params(ks[0], 16, in_channels, 1, 1),
        "b5x5_1": conv_params(ks[1], 16, in_channels, 1, 1),
        "b5x5_2": conv_params(ks[2], 24, 16, 5, 5),
        "b3x3_1": conv_params(ks[3], 16, in_channels, 1, 1),
        "b3x3_2": conv_params(ks[4], 24, 16, 3, 3),
        "b3x3_3": conv_params(ks[5], 24, 24, 3, 3),
        "bpool":  conv_params(ks[6], 24, in_channels, 1, 1),
    }


def init_net_params(key):
    k1, k2, k3, k4, k5 = jax.random.split(key, 5)
    return {
        "conv1": conv_params(k1, 10, 1, 5, 5),
        "conv2": conv_params(k2, 20, 88, 5, 5),
        "incept1": inception_params(k3, 10),
        "incept2": inception_params(k4, 20),
        "fc": linear_params(k5, 10, 1408),
    }


# ------------------------------ forward pass --------------------------------

def inception_a(x, p):
    """x: (N, H, W, Cin) channels-last -> (N, H, W, 88). 3 Pallas launches."""
    n, h, wdim, cin = x.shape
    m = n * h * wdim
    xm = x.reshape(m, cin)

    # three 1x1 convs on the same input fused: [Cin, 48] = [b1x1 | b5x5_1 | b3x3_1]
    w_t = jnp.concatenate(
        [p["b1x1"][0].reshape(16, cin).T,
         p["b5x5_1"][0].reshape(16, cin).T,
         p["b3x3_1"][0].reshape(16, cin).T], axis=1)
    b_t = jnp.concatenate([p["b1x1"][1], p["b5x5_1"][1], p["b3x3_1"][1]])

    # pool branch: avg_pool2d(3, stride=1, pad=1, count_include_pad) followed by a
    # 1x1 conv is exactly a 3x3 conv (pad=1) with weight Wp/9 at every tap.
    wp, bp = p["bpool"]
    w_pe = jnp.tile(wp.reshape(24, cin).T / 9.0, (9, 1))      # (9*Cin, 24)
    p3x, _, _ = _im2col(x, 3, 3, 1)

    trio, pool_out = incept_head(xm, p3x, w_t, b_t, w_pe, bp)
    b1 = trio[:, 0:16]
    t5 = trio[:, 16:32].reshape(n, h, wdim, 16)
    t3 = trio[:, 32:48].reshape(n, h, wdim, 16)

    # second conv of both chained branches in one kernel
    p5, _, _ = _im2col(t5, 5, 5, 2)
    p3b, _, _ = _im2col(t3, 3, 3, 1)
    o5, t3b = incept_mid(p5, _conv_w_mat(p["b5x5_2"][0]), p["b5x5_2"][1],
                         p3b, _conv_w_mat(p["b3x3_2"][0]), p["b3x3_2"][1])

    # third conv of the 3x3 branch
    p3c, _, _ = _im2col(t3b.reshape(n, h, wdim, 24), 3, 3, 1)
    o3 = gemm_bias(p3c, _conv_w_mat(p["b3x3_3"][0]), p["b3x3_3"][1])

    out = jnp.concatenate([b1, o5, o3, pool_out], axis=-1)    # (M, 88) = torch.cat order
    return out.reshape(n, h, wdim, 88)


def net_forward(params, x_nchw):
    n = x_nchw.shape[0]
    x = jnp.transpose(x_nchw, (0, 2, 3, 1))                   # NHWC once, up front
    x = conv_pool_relu(x, *params["conv1"])                    # (N,12,12,10)
    x = inception_a(x, params["incept1"])                      # (N,12,12,88)
    x = conv_pool_relu(x, *params["conv2"])                    # (N,4,4,20)
    x = inception_a(x, params["incept2"])                      # (N,4,4,88)
    x = jnp.transpose(x, (0, 3, 1, 2)).reshape(n, -1)          # NCHW flatten -> (N,1408)
    w_fc, b_fc = params["fc"]
    return fc_logsoftmax(x, w_fc.T, b_fc)                      # (N,10) log-probs


# --------------------------------- main --------------------------------------

if __name__ == "__main__":
    key = jax.random.PRNGKey(0)
    k_params, k_input = jax.random.split(key)
    params = init_net_params(k_params)
    x = jax.random.normal(k_input, (2, 1, 28, 28), jnp.float32)  # NCHW, MNIST-like

    fwd = jax.jit(net_forward)
    out = fwd(params, x)
    out = jax.block_until_ready(out)

    assert out.shape == (2, 10)
    # log_softmax rows should (approximately) logsumexp to 0
    assert bool(jnp.all(jnp.abs(jax.nn.logsumexp(out, axis=-1)) < 1e-4))
    print("KERNEL_OK")
</pallas_src>

<mosaic_0001>
module attributes {stable_mosaic.version = 11 : i64} {
  func.func @_conv_pool_relu_kernel(%arg0: i32, %arg1: memref<4x144x32xf32, #tpu.memory_space<vmem>>, %arg2: memref<32x10xf32, #tpu.memory_space<vmem>>, %arg3: memref<1x10xf32, #tpu.memory_space<vmem>>, %arg4: memref<144x10xf32, #tpu.memory_space<vmem>>) attributes {dimension_semantics = [#tpu.dimension_semantics<parallel>], iteration_bounds = array<i64: 2>, scalar_prefetch = 0 : i64, scratch_operands = 0 : i64, tpu.core_type = #tpu.core_type<tc>, window_params = [{transform_indices = @transform_0, window_bounds = array<i64: 4, 144, 32>}, {pipeline_mode = #tpu.pipeline_mode<synchronous>, transform_indices = @transform_1, window_bounds = array<i64: 32, 10>}, {pipeline_mode = #tpu.pipeline_mode<synchronous>, transform_indices = @transform_2, window_bounds = array<i64: 1, 10>}, {transform_indices = @transform_3, window_bounds = array<i64: 144, 10>}]} {
    %c0 = arith.constant 0 : index
    %c0_0 = arith.constant 0 : index
    %c0_1 = arith.constant 0 : index
    %0 = vector.load %arg1[%c0, %c0_0, %c0_1] : memref<4x144x32xf32, #tpu.memory_space<vmem>>, vector<1x144x32xf32>
    %1 = vector.shape_cast %0 : vector<1x144x32xf32> to vector<144x32xf32>
    %c0_2 = arith.constant 0 : index
    %c0_3 = arith.constant 0 : index
    %2 = vector.load %arg2[%c0_2, %c0_3] : memref<32x10xf32, #tpu.memory_space<vmem>>, vector<32x10xf32>
    %cst = arith.constant dense<0.000000e+00> : vector<144x10xf32>
    %3 = tpu.matmul %1, %2, %cst {dimension_numbers = #tpu.dot_dimension_numbers<[1], [0], [0], [1], [0, 0, 1, 1], [], []>} : vector<144x32xf32>, vector<32x10xf32>, vector<144x10xf32> -> vector<144x10xf32>
    %c1 = arith.constant 1 : index
    %c0_4 = arith.constant 0 : index
    %c0_5 = arith.constant 0 : index
    %4 = vector.load %arg1[%c1, %c0_4, %c0_5] : memref<4x144x32xf32, #tpu.memory_space<vmem>>, vector<1x144x32xf32>
    %5 = vector.shape_cast %4 : vector<1x144x32xf32> to vector<144x32xf32>
    %c0_6 = arith.constant 0 : index
    %c0_7 = arith.constant 0 : index
    %6 = vector.load %arg2[%c0_6, %c0_7] : memref<32x10xf32, #tpu.memory_space<vmem>>, vector<32x10xf32>
    %cst_8 = arith.constant dense<0.000000e+00> : vector<144x10xf32>
    %7 = tpu.matmul %5, %6, %cst_8 {dimension_numbers = #tpu.dot_dimension_numbers<[1], [0], [0], [1], [0, 0, 1, 1], [], []>} : vector<144x32xf32>, vector<32x10xf32>, vector<144x10xf32> -> vector<144x10xf32>
    %8 = arith.maximumf %3, %7 : vector<144x10xf32>
    %c2 = arith.constant 2 : index
    %c0_9 = arith.constant 0 : index
    %c0_10 = arith.constant 0 : index
    %9 = vector.load %arg1[%c2, %c0_9, %c0_10] : memref<4x144x32xf32, #tpu.memory_space<vmem>>, vector<1x144x32xf32>
    %10 = vector.shape_cast %9 : vector<1x144x32xf32> to vector<144x32xf32>
    %c0_11 = arith.constant 0 : index
    %c0_12 = arith.constant 0 : index
    %11 = vector.load %arg2[%c0_11, %c0_12] : memref<32x10xf32, #tpu.memory_space<vmem>>, vector<32x10xf32>
    %cst_13 = arith.constant dense<0.000000e+00> : vector<144x10xf32>
    %12 = tpu.matmul %10, %11, %cst_13 {dimension_numbers = #tpu.dot_dimension_numbers<[1], [0], [0], [1], [0, 0, 1, 1], [], []>} : vector<144x32xf32>, vector<32x10xf32>, vector<144x10xf32> -> vector<144x10xf32>
    %13 = arith.maximumf %8, %12 : vector<144x10xf32>
    %c3 = arith.constant 3 : index
    %c0_14 = arith.constant 0 : index
    %c0_15 = arith.constant 0 : index
    %14 = vector.load %arg1[%c3, %c0_14, %c0_15] : memref<4x144x32xf32, #tpu.memory_space<vmem>>, vector<1x144x32xf32>
    %15 = vector.shape_cast %14 : vector<1x144x32xf32> to vector<144x32xf32>
    %c0_16 = arith.constant 0 : index
    %c0_17 = arith.constant 0 : index
    %16 = vector.load %arg2[%c0_16, %c0_17] : memref<32x10xf32, #tpu.memory_space<vmem>>, vector<32x10xf32>
    %cst_18 = arith.constant dense<0.000000e+00> : vector<144x10xf32>
    %17 = tpu.matmul %15, %16, %cst_18 {dimension_numbers = #tpu.dot_dimension_numbers<[1], [0], [0], [1], [0, 0, 1, 1], [], []>} : vector<144x32xf32>, vector<32x10xf32>, vector<144x10xf32> -> vector<144x10xf32>
    %18 = arith.maximumf %13, %17 : vector<144x10xf32>
    %c0_19 = arith.constant 0 : index
    %c0_20 = arith.constant 0 : index
    %19 = vector.load %arg3[%c0_19, %c0_20] : memref<1x10xf32, #tpu.memory_space<vmem>>, vector<1x10xf32>
    %20 = vector.broadcast %19 : vector<1x10xf32> to vector<144x10xf32>
    %21 = arith.addf %18, %20 : vector<144x10xf32>
    %cst_21 = arith.constant 0.000000e+00 : f32
    %22 = vector.broadcast %cst_21 : f32 to vector<144x10xf32>
    %23 = arith.maximumf %21, %22 : vector<144x10xf32>
    %c0_22 = arith.constant 0 : index
    %c0_23 = arith.constant 0 : index
    %24 = vector.load %arg4[%c0_22, %c0_23] : memref<144x10xf32, #tpu.memory_space<vmem>>, vector<144x10xf32>
    tpu.vector_store %arg4[%c0_22, %c0_23], %23 {strides = array<i32>} : memref<144x10xf32, #tpu.memory_space<vmem>>, vector<144x10xf32>,
    return
  }
  func.func @transform_0(%arg0: i32) -> (i32, i32, i32) {
    %c0_i32 = arith.constant 0 : i32
    %c0_i32_0 = arith.constant 0 : i32
    %c0_i32_1 = arith.constant 0 : i32
    return %c0_i32, %arg0, %c0_i32_0 : i32, i32, i32
  }
  func.func @transform_1(%arg0: i32) -> (i32, i32) {
    %c0_i32 = arith.constant 0 : i32
    %c0_i32_0 = arith.constant 0 : i32
    %c0_i32_1 = arith.constant 0 : i32
    return %c0_i32, %c0_i32_0 : i32, i32
  }
  func.func @transform_2(%arg0: i32) -> (i32, i32) {
    %c0_i32 = arith.constant 0 : i32
    %c0_i32_0 = arith.constant 0 : i32
    %c0_i32_1 = arith.constant 0 : i32
    return %c0_i32, %c0_i32_0 : i32, i32
  }
  func.func @transform_3(%arg0: i32) -> (i32, i32) {
    %c0_i32 = arith.constant 0 : i32
    %c0_i32_0 = arith.constant 0 : i32
    return %arg0, %c0_i32 : i32, i32
  }
}

module attributes {stable_mosaic.version = 11 : i64} {
  func.func @_incept_head_kernel(%arg0: i32, %arg1: memref<144x16xf32, #tpu.memory_space<vmem>>, %arg2: memref<144x96xf32, #tpu.memory_space<vmem>>, %arg3: memref<16x48xf32, #tpu.memory_space<vmem>>, %arg4: memref<1x48xf32, #tpu.memory_space<vmem>>, %arg5: memref<96x24xf32, #tpu.memory_space<vmem>>, %arg6: memref<1x24xf32, #tpu.memory_space<vmem>>, %arg7: memref<144x48xf32, #tpu.memory_space<vmem>>, %arg8: memref<144x24xf32, #tpu.memory_space<vmem>>) attributes {dimension_semantics = [#tpu.dimension_semantics<parallel>], iteration_bounds = array<i64: 2>, scalar_prefetch = 0 : i64, scratch_operands = 0 : i64, tpu.core_type = #tpu.core_type<tc>, window_params = [{transform_indices = @transform_0, window_bounds = array<i64: 144, 16>}, {transform_indices = @transform_1, window_bounds = array<i64: 144, 96>}, {pipeline_mode = #tpu.pipeline_mode<synchronous>, transform_indices = @transform_2, window_bounds = array<i64: 16, 48>}, {pipeline_mode = #tpu.pipeline_mode<synchronous>, transform_indices = @transform_3, window_bounds = array<i64: 1, 48>}, {pipeline_mode = #tpu.pipeline_mode<synchronous>, transform_indices = @transform_4, window_bounds = array<i64: 96, 24>}, {pipeline_mode = #tpu.pipeline_mode<synchronous>, transform_indices = @transform_5, window_bounds = array<i64: 1, 24>}, {transform_indices = @transform_6, window_bounds = array<i64: 144, 48>}, {transform_indices = @transform_7, window_bounds = array<i64: 144, 24>}]} {
    %c0 = arith.constant 0 : index
    %c0_0 = arith.constant 0 : index
    %0 = vector.load %arg1[%c0, %c0_0] : memref<144x16xf32, #tpu.memory_space<vmem>>, vector<144x16xf32>
    %c0_1 = arith.constant 0 : index
    %c0_2 = arith.constant 0 : index
    %1 = vector.load %arg3[%c0_1, %c0_2] : memref<16x48xf32, #tpu.memory_space<vmem>>, vector<16x48xf32>
    %cst = arith.constant dense<0.000000e+00> : vector<144x48xf32>
    %2 = tpu.matmul %0, %1, %cst {dimension_numbers = #tpu.dot_dimension_numbers<[1], [0], [0], [1], [0, 0, 1, 1], [], []>} : vector<144x16xf32>, vector<16x48xf32>, vector<144x48xf32> -> vector<144x48xf32>
    %c0_3 = arith.constant 0 : index
    %c0_4 = arith.constant 0 : index
    %3 = vector.load %arg4[%c0_3, %c0_4] : memref<1x48xf32, #tpu.memory_space<vmem>>, vector<1x48xf32>
    %4 = vector.broadcast %3 : vector<1x48xf32> to vector<144x48xf32>
    %5 = arith.addf %2, %4 : vector<144x48xf32>
    %c0_5 = arith.constant 0 : index
    %c0_6 = arith.constant 0 : index
    %6 = vector.load %arg7[%c0_5, %c0_6] : memref<144x48xf32, #tpu.memory_space<vmem>>, vector<144x48xf32>
    tpu.vector_store %arg7[%c0_5, %c0_6], %5 {strides = array<i32>} : memref<144x48xf32, #tpu.memory_space<vmem>>, vector<144x48xf32>,
    %c0_7 = arith.constant 0 : index
    %c0_8 = arith.constant 0 : index
    %7 = vector.load %arg2[%c0_7, %c0_8] : memref<144x96xf32, #tpu.memory_space<vmem>>, vector<144x96xf32>
    %c0_9 = arith.constant 0 : index
    %c0_10 = arith.constant 0 : index
    %8 = vector.load %arg5[%c0_9, %c0_10] : memref<96x24xf32, #tpu.memory_space<vmem>>, vector<96x24xf32>
    %cst_11 = arith.constant dense<0.000000e+00> : vector<144x24xf32>
    %9 = tpu.matmul %7, %8, %cst_11 {dimension_numbers = #tpu.dot_dimension_numbers<[1], [0], [0], [1], [0, 0, 1, 1], [], []>} : vector<144x96xf32>, vector<96x24xf32>, vector<144x24xf32> -> vector<144x24xf32>
    %c0_12 = arith.constant 0 : index
    %c0_13 = arith.constant 0 : index
    %10 = vector.load %arg6[%c0_12, %c0_13] : memref<1x24xf32, #tpu.memory_space<vmem>>, vector<1x24xf32>
    %11 = vector.broadcast %10 : vector<1x24xf32> to vector<144x24xf32>
    %12 = arith.addf %9, %11 : vector<144x24xf32>
    %c0_14 = arith.constant 0 : index
    %c0_15 = arith.constant 0 : index
    %13 = vector.load %arg8[%c0_14, %c0_15] : memref<144x24xf32, #tpu.memory_space<vmem>>, vector<144x24xf32>
    tpu.vector_store %arg8[%c0_14, %c0_15], %12 {strides = array<i32>} : memref<144x24xf32, #tpu.memory_space<vmem>>, vector<144x24xf32>,
    return
  }
  func.func @transform_0(%arg0: i32) -> (i32, i32) {
    %c0_i32 = arith.constant 0 : i32
    %c0_i32_0 = arith.constant 0 : i32
    return %arg0, %c0_i32 : i32, i32
  }
  func.func @transform_1(%arg0: i32) -> (i32, i32) {
    %c0_i32 = arith.constant 0 : i32
    %c0_i32_0 = arith.constant 0 : i32
    return %arg0, %c0_i32 : i32, i32
  }
  func.func @transform_2(%arg0: i32) -> (i32, i32) {
    %c0_i32 = arith.constant 0 : i32
    %c0_i32_0 = arith.constant 0 : i32
    %c0_i32_1 = arith.constant 0 : i32
    return %c0_i32, %c0_i32_0 : i32, i32
  }
  func.func @transform_3(%arg0: i32) -> (i32, i32) {
    %c0_i32 = arith.constant 0 : i32
    %c0_i32_0 = arith.constant 0 : i32
    %c0_i32_1 = arith.constant 0 : i32
    return %c0_i32, %c0_i32_0 : i32, i32
  }
  func.func @transform_4(%arg0: i32) -> (i32, i32) {
    %c0_i32 = arith.constant 0 : i32
    %c0_i32_0 = arith.constant 0 : i32
    %c0_i32_1 = arith.constant 0 : i32
    return %c0_i32, %c0_i32_0 : i32, i32
  }
  func.func @transform_5(%arg0: i32) -> (i32, i32) {
    %c0_i32 = arith.constant 0 : i32
    %c0_i32_0 = arith.constant 0 : i32
    %c0_i32_1 = arith.constant 0 : i32
    return %c0_i32, %c0_i32_0 : i32, i32
  }
  func.func @transform_6(%arg0: i32) -> (i32, i32) {
    %c0_i32 = arith.constant 0 : i32
    %c0_i32_0 = arith.constant 0 : i32
    return %arg0, %c0_i32 : i32, i32
  }
  func.func @transform_7(%arg0: i32) -> (i32, i32) {
    %c0_i32 = arith.constant 0 : i32
    %c0_i32_0 = arith.constant 0 : i32
    return %arg0, %c0_i32 : i32, i32
  }
}

module attributes {stable_mosaic.version = 11 : i64} {
  func.func @_incept_mid_kernel(%arg0: i32, %arg1: memref<144x400xf32, #tpu.memory_space<vmem>>, %arg2: memref<400x24xf32, #tpu.memory_space<vmem>>, %arg3: memref<1x24xf32, #tpu.memory_space<vmem>>, %arg4: memref<144x144xf32, #tpu.memory_space<vmem>>, %arg5: memref<144x24xf32, #tpu.memory_space<vmem>>, %arg6: memref<1x24xf32, #tpu.memory_space<vmem>>, %arg7: memref<144x24xf32, #tpu.memory_space<vmem>>, %arg8: memref<144x24xf32, #tpu.memory_space<vmem>>) attributes {dimension_semantics = [#tpu.dimension_semantics<parallel>], iteration_bounds = array<i64: 2>, scalar_prefetch = 0 : i64, scratch_operands = 0 : i64, tpu.core_type = #tpu.core_type<tc>, window_params = [{transform_indices = @transform_0, window_bounds = array<i64: 144, 400>}, {pipeline_mode = #tpu.pipeline_mode<synchronous>, transform_indices = @transform_1, window_bounds = array<i64: 400, 24>}, {pipeline_mode = #tpu.pipeline_mode<synchronous>, transform_indices = @transform_2, window_bounds = array<i64: 1, 24>}, {transform_indices = @transform_3, window_bounds = array<i64: 144, 144>}, {pipeline_mode = #tpu.pipeline_mode<synchronous>, transform_indices = @transform_4, window_bounds = array<i64: 144, 24>}, {pipeline_mode = #tpu.pipeline_mode<synchronous>, transform_indices = @transform_5, window_bounds = array<i64: 1, 24>}, {transform_indices = @transform_6, window_bounds = array<i64: 144, 24>}, {transform_indices = @transform_7, window_bounds = array<i64: 144, 24>}]} {
    %c0 = arith.constant 0 : index
    %c0_0 = arith.constant 0 : index
    %0 = vector.load %arg1[%c0, %c0_0] : memref<144x400xf32, #tpu.memory_space<vmem>>, vector<144x400xf32>
    %c0_1 = arith.constant 0 : index
    %c0_2 = arith.constant 0 : index
    %1 = vector.load %arg2[%c0_1, %c0_2] : memref<400x24xf32, #tpu.memory_space<vmem>>, vector<400x24xf32>
    %cst = arith.constant dense<0.000000e+00> : vector<144x24xf32>
    %2 = tpu.matmul %0, %1, %cst {dimension_numbers = #tpu.dot_dimension_numbers<[1], [0], [0], [1], [0, 0, 1, 1], [], []>} : vector<144x400xf32>, vector<400x24xf32>, vector<144x24xf32> -> vector<144x24xf32>
    %c0_3 = arith.constant 0 : index
    %c0_4 = arith.constant 0 : index
    %3 = vector.load %arg3[%c0_3, %c0_4] : memref<1x24xf32, #tpu.memory_space<vmem>>, vector<1x24xf32>
    %4 = vector.broadcast %3 : vector<1x24xf32> to vector<144x24xf32>
    %5 = arith.addf %2, %4 : vector<144x24xf32>
    %c0_5 = arith.constant 0 : index
    %c0_6 = arith.constant 0 : index
    %6 = vector.load %arg7[%c0_5, %c0_6] : memref<144x24xf32, #tpu.memory_space<vmem>>, vector<144x24xf32>
    tpu.vector_store %arg7[%c0_5, %c0_6], %5 {strides = array<i32>} : memref<144x24xf32, #tpu.memory_space<vmem>>, vector<144x24xf32>,
    %c0_7 = arith.constant 0 : index
    %c0_8 = arith.constant 0 : index
    %7 = vector.load %arg4[%c0_7, %c0_8] : memref<144x144xf32, #tpu.memory_space<vmem>>, vector<144x144xf32>
    %c0_9 = arith.constant 0 : index
    %c0_10 = arith.constant 0 : index
    %8 = vector.load %arg5[%c0_9, %c0_10] : memref<144x24xf32, #tpu.memory_space<vmem>>, vector<144x24xf32>
    %cst_11 = arith.constant dense<0.000000e+00> : vector<144x24xf32>
    %9 = tpu.matmul %7, %8, %cst_11 {dimension_numbers = #tpu.dot_dimension_numbers<[1], [0], [0], [1], [0, 0, 1, 1], [], []>} : vector<144x144xf32>, vector<144x24xf32>, vector<144x24xf32> -> vector<144x24xf32>
    %c0_12 = arith.constant 0 : index
    %c0_13 = arith.constant 0 : index
    %10 = vector.load %arg6[%c0_12, %c0_13] : memref<1x24xf32, #tpu.memory_space<vmem>>, vector<1x24xf32>
    %11 = vector.broadcast %10 : vector<1x24xf32> to vector<144x24xf32>
    %12 = arith.addf %9, %11 : vector<144x24xf32>
    %c0_14 = arith.constant 0 : index
    %c0_15 = arith.constant 0 : index
    %13 = vector.load %arg8[%c0_14, %c0_15] : memref<144x24xf32, #tpu.memory_space<vmem>>, vector<144x24xf32>
    tpu.vector_store %arg8[%c0_14, %c0_15], %12 {strides = array<i32>} : memref<144x24xf32, #tpu.memory_space<vmem>>, vector<144x24xf32>,
    return
  }
  func.func @transform_0(%arg0: i32) -> (i32, i32) {
    %c0_i32 = arith.constant 0 : i32
    %c0_i32_0 = arith.constant 0 : i32
    return %arg0, %c0_i32 : i32, i32
  }
  func.func @transform_1(%arg0: i32) -> (i32, i32) {
    %c0_i32 = arith.constant 0 : i32
    %c0_i32_0 = arith.constant 0 : i32
    %c0_i32_1 = arith.constant 0 : i32
    return %c0_i32, %c0_i32_0 : i32, i32
  }
  func.func @transform_2(%arg0: i32) -> (i32, i32) {
    %c0_i32 = arith.constant 0 : i32
    %c0_i32_0 = arith.constant 0 : i32
    %c0_i32_1 = arith.constant 0 : i32
    return %c0_i32, %c0_i32_0 : i32, i32
  }
  func.func @transform_3(%arg0: i32) -> (i32, i32) {
    %c0_i32 = arith.constant 0 : i32
    %c0_i32_0 = arith.constant 0 : i32
    return %arg0, %c0_i32 : i32, i32
  }
  func.func @transform_4(%arg0: i32) -> (i32, i32) {
    %c0_i32 = arith.constant 0 : i32
    %c0_i32_0 = arith.constant 0 : i32
    %c0_i32_1 = arith.constant 0 : i32
    return %c0_i32, %c0_i32_0 : i32, i32
  }
  func.func @transform_5(%arg0: i32) -> (i32, i32) {
    %c0_i32 = arith.constant 0 : i32
    %c0_i32_0 = arith.constant 0 : i32
    %c0_i32_1 = arith.constant 0 : i32
    return %c0_i32, %c0_i32_0 : i32, i32
  }
  func.func @transform_6(%arg0: i32) -> (i32, i32) {
    %c0_i32 = arith.constant 0 : i32
    %c0_i32_0 = arith.constant 0 : i32
    return %arg0, %c0_i32 : i32, i32
  }
  func.func @transform_7(%arg0: i32) -> (i32, i32) {
    %c0_i32 = arith.constant 0 : i32
    %c0_i32_0 = arith.constant 0 : i32
    return %arg0, %c0_i32 : i32, i32
  }
}

module attributes {stable_mosaic.version = 11 : i64} {
  func.func @_gemm_bias_kernel(%arg0: i32, %arg1: memref<144x216xf32, #tpu.memory_space<vmem>>, %arg2: memref<216x24xf32, #tpu.memory_space<vmem>>, %arg3: memref<1x24xf32, #tpu.memory_space<vmem>>, %arg4: memref<144x24xf32, #tpu.memory_space<vmem>>) attributes {dimension_semantics = [#tpu.dimension_semantics<parallel>], iteration_bounds = array<i64: 2>, scalar_prefetch = 0 : i64, scratch_operands = 0 : i64, tpu.core_type = #tpu.core_type<tc>, window_params = [{transform_indices = @transform_0, window_bounds = array<i64: 144, 216>}, {pipeline_mode = #tpu.pipeline_mode<synchronous>, transform_indices = @transform_1, window_bounds = array<i64: 216, 24>}, {pipeline_mode = #tpu.pipeline_mode<synchronous>, transform_indices = @transform_2, window_bounds = array<i64: 1, 24>}, {transform_indices = @transform_3, window_bounds = array<i64: 144, 24>}]} {
    %c0 = arith.constant 0 : index
    %c0_0 = arith.constant 0 : index
    %0 = vector.load %arg1[%c0, %c0_0] : memref<144x216xf32, #tpu.memory_space<vmem>>, vector<144x216xf32>
    %c0_1 = arith.constant 0 : index
    %c0_2 = arith.constant 0 : index
    %1 = vector.load %arg2[%c0_1, %c0_2] : memref<216x24xf32, #tpu.memory_space<vmem>>, vector<216x24xf32>
    %cst = arith.constant dense<0.000000e+00> : vector<144x24xf32>
    %2 = tpu.matmul %0, %1, %cst {dimension_numbers = #tpu.dot_dimension_numbers<[1], [0], [0], [1], [0, 0, 1, 1], [], []>} : vector<144x216xf32>, vector<216x24xf32>, vector<144x24xf32> -> vector<144x24xf32>
    %c0_3 = arith.constant 0 : index
    %c0_4 = arith.constant 0 : index
    %3 = vector.load %arg3[%c0_3, %c0_4] : memref<1x24xf32, #tpu.memory_space<vmem>>, vector<1x24xf32>
    %4 = vector.broadcast %3 : vector<1x24xf32> to vector<144x24xf32>
    %5 = arith.addf %2, %4 : vector<144x24xf32>
    %c0_5 = arith.constant 0 : index
    %c0_6 = arith.constant 0 : index
    %6 = vector.load %arg4[%c0_5, %c0_6] : memref<144x24xf32, #tpu.memory_space<vmem>>, vector<144x24xf32>
    tpu.vector_store %arg4[%c0_5, %c0_6], %5 {strides = array<i32>} : memref<144x24xf32, #tpu.memory_space<vmem>>, vector<144x24xf32>,
    return
  }
  func.func @transform_0(%arg0: i32) -> (i32, i32) {
    %c0_i32 = arith.constant 0 : i32
    %c0_i32_0 = arith.constant 0 : i32
    return %arg0, %c0_i32 : i32, i32
  }
  func.func @transform_1(%arg0: i32) -> (i32, i32) {
    %c0_i32 = arith.constant 0 : i32
    %c0_i32_0 = arith.constant 0 : i32
    %c0_i32_1 = arith.constant 0 : i32
    return %c0_i32, %c0_i32_0 : i32, i32
  }
  func.func @transform_2(%arg0: i32) -> (i32, i32) {
    %c0_i32 = arith.constant 0 : i32
    %c0_i32_0 = arith.constant 0 : i32
    %c0_i32_1 = arith.constant 0 : i32
    return %c0_i32, %c0_i32_0 : i32, i32
  }
  func.func @transform_3(%arg0: i32) -> (i32, i32) {
    %c0_i32 = arith.constant 0 : i32
    %c0_i32_0 = arith.constant 0 : i32
    return %arg0, %c0_i32 : i32, i32
  }
}

module attributes {stable_mosaic.version = 11 : i64} {
  func.func @_conv_pool_relu_kernel(%arg0: i32, %arg1: memref<4x32x2200xf32, #tpu.memory_space<vmem>>, %arg2: memref<2200x20xf32, #tpu.memory_space<vmem>>, %arg3: memref<1x20xf32, #tpu.memory_space<vmem>>, %arg4: memref<32x20xf32, #tpu.memory_space<vmem>>) attributes {dimension_semantics = [#tpu.dimension_semantics<parallel>], iteration_bounds = array<i64: 1>, scalar_prefetch = 0 : i64, scratch_operands = 0 : i64, tpu.core_type = #tpu.core_type<tc>, window_params = [{transform_indices = @transform_0, window_bounds = array<i64: 4, 32, 2200>}, {pipeline_mode = #tpu.pipeline_mode<synchronous>, transform_indices = @transform_1, window_bounds = array<i64: 2200, 20>}, {pipeline_mode = #tpu.pipeline_mode<synchronous>, transform_indices = @transform_2, window_bounds = array<i64: 1, 20>}, {transform_indices = @transform_3, window_bounds = array<i64: 32, 20>}]} {
    %c0 = arith.constant 0 : index
    %c0_0 = arith.constant 0 : index
    %c0_1 = arith.constant 0 : index
    %0 = vector.load %arg1[%c0, %c0_0, %c0_1] : memref<4x32x2200xf32, #tpu.memory_space<vmem>>, vector<1x32x2200xf32>
    %1 = vector.shape_cast %0 : vector<1x32x2200xf32> to vector<32x2200xf32>
    %c0_2 = arith.constant 0 : index
    %c0_3 = arith.constant 0 : index
    %2 = vector.load %arg2[%c0_2, %c0_3] : memref<2200x20xf32, #tpu.memory_space<vmem>>, vector<2200x20xf32>
    %cst = arith.constant dense<0.000000e+00> : vector<32x20xf32>
    %3 = tpu.matmul %1, %2, %cst {dimension_numbers = #tpu.dot_dimension_numbers<[1], [0], [0], [1], [0, 0, 1, 1], [], []>} : vector<32x2200xf32>, vector<2200x20xf32>, vector<32x20xf32> -> vector<32x20xf32>
    %c1 = arith.constant 1 : index
    %c0_4 = arith.constant 0 : index
    %c0_5 = arith.constant 0 : index
    %4 = vector.load %arg1[%c1, %c0_4, %c0_5] : memref<4x32x2200xf32, #tpu.memory_space<vmem>>, vector<1x32x2200xf32>
    %5 = vector.shape_cast %4 : vector<1x32x2200xf32> to vector<32x2200xf32>
    %c0_6 = arith.constant 0 : index
    %c0_7 = arith.constant 0 : index
    %6 = vector.load %arg2[%c0_6, %c0_7] : memref<2200x20xf32, #tpu.memory_space<vmem>>, vector<2200x20xf32>
    %cst_8 = arith.constant dense<0.000000e+00> : vector<32x20xf32>
    %7 = tpu.matmul %5, %6, %cst_8 {dimension_numbers = #tpu.dot_dimension_numbers<[1], [0], [0], [1], [0, 0, 1, 1], [], []>} : vector<32x2200xf32>, vector<2200x20xf32>, vector<32x20xf32> -> vector<32x20xf32>
    %8 = arith.maximumf %3, %7 : vector<32x20xf32>
    %c2 = arith.constant 2 : index
    %c0_9 = arith.constant 0 : index
    %c0_10 = arith.constant 0 : index
    %9 = vector.load %arg1[%c2, %c0_9, %c0_10] : memref<4x32x2200xf32, #tpu.memory_space<vmem>>, vector<1x32x2200xf32>
    %10 = vector.shape_cast %9 : vector<1x32x2200xf32> to vector<32x2200xf32>
    %c0_11 = arith.constant 0 : index
    %c0_12 = arith.constant 0 : index
    %11 = vector.load %arg2[%c0_11, %c0_12] : memref<2200x20xf32, #tpu.memory_space<vmem>>, vector<2200x20xf32>
    %cst_13 = arith.constant dense<0.000000e+00> : vector<32x20xf32>
    %12 = tpu.matmul %10, %11, %cst_13 {dimension_numbers = #tpu.dot_dimension_numbers<[1], [0], [0], [1], [0, 0, 1, 1], [], []>} : vector<32x2200xf32>, vector<2200x20xf32>, vector<32x20xf32> -> vector<32x20xf32>
    %13 = arith.maximumf %8, %12 : vector<32x20xf32>
    %c3 = arith.constant 3 : index
    %c0_14 = arith.constant 0 : index
    %c0_15 = arith.constant 0 : index
    %14 = vector.load %arg1[%c3, %c0_14, %c0_15] : memref<4x32x2200xf32, #tpu.memory_space<vmem>>, vector<1x32x2200xf32>
    %15 = vector.shape_cast %14 : vector<1x32x2200xf32> to vector<32x2200xf32>
    %c0_16 = arith.constant 0 : index
    %c0_17 = arith.constant 0 : index
    %16 = vector.load %arg2[%c0_16, %c0_17] : memref<2200x20xf32, #tpu.memory_space<vmem>>, vector<2200x20xf32>
    %cst_18 = arith.constant dense<0.000000e+00> : vector<32x20xf32>
    %17 = tpu.matmul %15, %16, %cst_18 {dimension_numbers = #tpu.dot_dimension_numbers<[1], [0], [0], [1], [0, 0, 1, 1], [], []>} : vector<32x2200xf32>, vector<2200x20xf32>, vector<32x20xf32> -> vector<32x20xf32>
    %18 = arith.maximumf %13, %17 : vector<32x20xf32>
    %c0_19 = arith.constant 0 : index
    %c0_20 = arith.constant 0 : index
    %19 = vector.load %arg3[%c0_19, %c0_20] : memref<1x20xf32, #tpu.memory_space<vmem>>, vector<1x20xf32>
    %20 = vector.broadcast %19 : vector<1x20xf32> to vector<32x20xf32>
    %21 = arith.addf %18, %20 : vector<32x20xf32>
    %cst_21 = arith.constant 0.000000e+00 : f32
    %22 = vector.broadcast %cst_21 : f32 to vector<32x20xf32>
    %23 = arith.maximumf %21, %22 : vector<32x20xf32>
    %c0_22 = arith.constant 0 : index
    %c0_23 = arith.constant 0 : index
    %24 = vector.load %arg4[%c0_22, %c0_23] : memref<32x20xf32, #tpu.memory_space<vmem>>, vector<32x20xf32>
    tpu.vector_store %arg4[%c0_22, %c0_23], %23 {strides = array<i32>} : memref<32x20xf32, #tpu.memory_space<vmem>>, vector<32x20xf32>,
    return
  }
  func.func @transform_0(%arg0: i32) -> (i32, i32, i32) {
    %c0_i32 = arith.constant 0 : i32
    %c0_i32_0 = arith.constant 0 : i32
    %c0_i32_1 = arith.constant 0 : i32
    return %c0_i32, %arg0, %c0_i32_0 : i32, i32, i32
  }
  func.func @transform_1(%arg0: i32) -> (i32, i32) {
    %c0_i32 = arith.constant 0 : i32
    %c0_i32_0 = arith.constant 0 : i32
    %c0_i32_1 = arith.constant 0 : i32
    return %c0_i32, %c0_i32_0 : i32, i32
  }
  func.func @transform_2(%arg0: i32) -> (i32, i32) {
    %c0_i32 = arith.constant 0 : i32
    %c0_i32_0 = arith.constant 0 : i32
    %c0_i32_1 = arith.constant 0 : i32
    return %c0_i32, %c0_i32_0 : i32, i32
  }
  func.func @transform_3(%arg0: i32) -> (i32, i32) {
    %c0_i32 = arith.constant 0 : i32
    %c0_i32_0 = arith.constant 0 : i32
    return %arg0, %c0_i32 : i32, i32
  }
}

module attributes {stable_mosaic.version = 11 : i64} {
  func.func @_incept_head_kernel(%arg0: i32, %arg1: memref<32x24xf32, #tpu.memory_space<vmem>>, %arg2: memref<32x184xf32, #tpu.memory_space<vmem>>, %arg3: memref<24x48xf32, #tpu.memory_space<vmem>>, %arg4: memref<1x48xf32, #tpu.memory_space<vmem>>, %arg5: memref<184x24xf32, #tpu.memory_space<vmem>>, %arg6: memref<1x24xf32, #tpu.memory_space<vmem>>, %arg7: memref<32x48xf32, #tpu.memory_space<vmem>>, %arg8: memref<32x24xf32, #tpu.memory_space<vmem>>) attributes {dimension_semantics = [#tpu.dimension_semantics<parallel>], iteration_bounds = array<i64: 1>, scalar_prefetch = 0 : i64, scratch_operands = 0 : i64, tpu.core_type = #tpu.core_type<tc>, window_params = [{transform_indices = @transform_0, window_bounds = array<i64: 32, 24>}, {transform_indices = @transform_1, window_bounds = array<i64: 32, 184>}, {pipeline_mode = #tpu.pipeline_mode<synchronous>, transform_indices = @transform_2, window_bounds = array<i64: 24, 48>}, {pipeline_mode = #tpu.pipeline_mode<synchronous>, transform_indices = @transform_3, window_bounds = array<i64: 1, 48>}, {pipeline_mode = #tpu.pipeline_mode<synchronous>, transform_indices = @transform_4, window_bounds = array<i64: 184, 24>}, {pipeline_mode = #tpu.pipeline_mode<synchronous>, transform_indices = @transform_5, window_bounds = array<i64: 1, 24>}, {transform_indices = @transform_6, window_bounds = array<i64: 32, 48>}, {transform_indices = @transform_7, window_bounds = array<i64: 32, 24>}]} {
    %c0 = arith.constant 0 : index
    %c0_0 = arith.constant 0 : index
    %0 = vector.load %arg1[%c0, %c0_0] : memref<32x24xf32, #tpu.memory_space<vmem>>, vector<32x24xf32>
    %c0_1 = arith.constant 0 : index
    %c0_2 = arith.constant 0 : index
    %1 = vector.load %arg3[%c0_1, %c0_2] : memref<24x48xf32, #tpu.memory_space<vmem>>, vector<24x48xf32>
    %cst = arith.constant dense<0.000000e+00> : vector<32x48xf32>
    %2 = tpu.matmul %0, %1, %cst {dimension_numbers = #tpu.dot_dimension_numbers<[1], [0], [0], [1], [0, 0, 1, 1], [], []>} : vector<32x24xf32>, vector<24x48xf32>, vector<32x48xf32> -> vector<32x48xf32>
    %c0_3 = arith.constant 0 : index
    %c0_4 = arith.constant 0 : index
    %3 = vector.load %arg4[%c0_3, %c0_4] : memref<1x48xf32, #tpu.memory_space<vmem>>, vector<1x48xf32>
    %4 = vector.broadcast %3 : vector<1x48xf32> to vector<32x48xf32>
    %5 = arith.addf %2, %4 : vector<32x48xf32>
    %c0_5 = arith.constant 0 : index
    %c0_6 = arith.constant 0 : index
    %6 = vector.load %arg7[%c0_5, %c0_6] : memref<32x48xf32, #tpu.memory_space<vmem>>, vector<32x48xf32>
    tpu.vector_store %arg7[%c0_5, %c0_6], %5 {strides = array<i32>} : memref<32x48xf32, #tpu.memory_space<vmem>>, vector<32x48xf32>,
    %c0_7 = arith.constant 0 : index
    %c0_8 = arith.constant 0 : index
    %7 = vector.load %arg2[%c0_7, %c0_8] : memref<32x184xf32, #tpu.memory_space<vmem>>, vector<32x184xf32>
    %c0_9 = arith.constant 0 : index
    %c0_10 = arith.constant 0 : index
    %8 = vector.load %arg5[%c0_9, %c0_10] : memref<184x24xf32, #tpu.memory_space<vmem>>, vector<184x24xf32>
    %cst_11 = arith.constant dense<0.000000e+00> : vector<32x24xf32>
    %9 = tpu.matmul %7, %8, %cst_11 {dimension_numbers = #tpu.dot_dimension_numbers<[1], [0], [0], [1], [0, 0, 1, 1], [], []>} : vector<32x184xf32>, vector<184x24xf32>, vector<32x24xf32> -> vector<32x24xf32>
    %c0_12 = arith.constant 0 : index
    %c0_13 = arith.constant 0 : index
    %10 = vector.load %arg6[%c0_12, %c0_13] : memref<1x24xf32, #tpu.memory_space<vmem>>, vector<1x24xf32>
    %11 = vector.broadcast %10 : vector<1x24xf32> to vector<32x24xf32>
    %12 = arith.addf %9, %11 : vector<32x24xf32>
    %c0_14 = arith.constant 0 : index
    %c0_15 = arith.constant 0 : index
    %13 = vector.load %arg8[%c0_14, %c0_15] : memref<32x24xf32, #tpu.memory_space<vmem>>, vector<32x24xf32>
    tpu.vector_store %arg8[%c0_14, %c0_15], %12 {strides = array<i32>} : memref<32x24xf32, #tpu.memory_space<vmem>>, vector<32x24xf32>,
    return
  }
  func.func @transform_0(%arg0: i32) -> (i32, i32) {
    %c0_i32 = arith.constant 0 : i32
    %c0_i32_0 = arith.constant 0 : i32
    return %arg0, %c0_i32 : i32, i32
  }
  func.func @transform_1(%arg0: i32) -> (i32, i32) {
    %c0_i32 = arith.constant 0 : i32
    %c0_i32_0 = arith.constant 0 : i32
    return %arg0, %c0_i32 : i32, i32
  }
  func.func @transform_2(%arg0: i32) -> (i32, i32) {
    %c0_i32 = arith.constant 0 : i32
    %c0_i32_0 = arith.constant 0 : i32
    %c0_i32_1 = arith.constant 0 : i32
    return %c0_i32, %c0_i32_0 : i32, i32
  }
  func.func @transform_3(%arg0: i32) -> (i32, i32) {
    %c0_i32 = arith.constant 0 : i32
    %c0_i32_0 = arith.constant 0 : i32
    %c0_i32_1 = arith.constant 0 : i32
    return %c0_i32, %c0_i32_0 : i32, i32
  }
  func.func @transform_4(%arg0: i32) -> (i32, i32) {
    %c0_i32 = arith.constant 0 : i32
    %c0_i32_0 = arith.constant 0 : i32
    %c0_i32_1 = arith.constant 0 : i32
    return %c0_i32, %c0_i32_0 : i32, i32
  }
  func.func @transform_5(%arg0: i32) -> (i32, i32) {
    %c0_i32 = arith.constant 0 : i32
    %c0_i32_0 = arith.constant 0 : i32
    %c0_i32_1 = arith.constant 0 : i32
    return %c0_i32, %c0_i32_0 : i32, i32
  }
  func.func @transform_6(%arg0: i32) -> (i32, i32) {
    %c0_i32 = arith.constant 0 : i32
    %c0_i32_0 = arith.constant 0 : i32
    return %arg0, %c0_i32 : i32, i32
  }
  func.func @transform_7(%arg0: i32) -> (i32, i32) {
    %c0_i32 = arith.constant 0 : i32
    %c0_i32_0 = arith.constant 0 : i32
    return %arg0, %c0_i32 : i32, i32
  }
}

module attributes {stable_mosaic.version = 11 : i64} {
  func.func @_incept_mid_kernel(%arg0: i32, %arg1: memref<32x400xf32, #tpu.memory_space<vmem>>, %arg2: memref<400x24xf32, #tpu.memory_space<vmem>>, %arg3: memref<1x24xf32, #tpu.memory_space<vmem>>, %arg4: memref<32x144xf32, #tpu.memory_space<vmem>>, %arg5: memref<144x24xf32, #tpu.memory_space<vmem>>, %arg6: memref<1x24xf32, #tpu.memory_space<vmem>>, %arg7: memref<32x24xf32, #tpu.memory_space<vmem>>, %arg8: memref<32x24xf32, #tpu.memory_space<vmem>>) attributes {dimension_semantics = [#tpu.dimension_semantics<parallel>], iteration_bounds = array<i64: 1>, scalar_prefetch = 0 : i64, scratch_operands = 0 : i64, tpu.core_type = #tpu.core_type<tc>, window_params = [{transform_indices = @transform_0, window_bounds = array<i64: 32, 400>}, {pipeline_mode = #tpu.pipeline_mode<synchronous>, transform_indices = @transform_1, window_bounds = array<i64: 400, 24>}, {pipeline_mode = #tpu.pipeline_mode<synchronous>, transform_indices = @transform_2, window_bounds = array<i64: 1, 24>}, {transform_indices = @transform_3, window_bounds = array<i64: 32, 144>}, {pipeline_mode = #tpu.pipeline_mode<synchronous>, transform_indices = @transform_4, window_bounds = array<i64: 144, 24>}, {pipeline_mode = #tpu.pipeline_mode<synchronous>, transform_indices = @transform_5, window_bounds = array<i64: 1, 24>}, {transform_indices = @transform_6, window_bounds = array<i64: 32, 24>}, {transform_indices = @transform_7, window_bounds = array<i64: 32, 24>}]} {
    %c0 = arith.constant 0 : index
    %c0_0 = arith.constant 0 : index
    %0 = vector.load %arg1[%c0, %c0_0] : memref<32x400xf32, #tpu.memory_space<vmem>>, vector<32x400xf32>
    %c0_1 = arith.constant 0 : index
    %c0_2 = arith.constant 0 : index
    %1 = vector.load %arg2[%c0_1, %c0_2] : memref<400x24xf32, #tpu.memory_space<vmem>>, vector<400x24xf32>
    %cst = arith.constant dense<0.000000e+00> : vector<32x24xf32>
    %2 = tpu.matmul %0, %1, %cst {dimension_numbers = #tpu.dot_dimension_numbers<[1], [0], [0], [1], [0, 0, 1, 1], [], []>} : vector<32x400xf32>, vector<400x24xf32>, vector<32x24xf32> -> vector<32x24xf32>
    %c0_3 = arith.constant 0 : index
    %c0_4 = arith.constant 0 : index
    %3 = vector.load %arg3[%c0_3, %c0_4] : memref<1x24xf32, #tpu.memory_space<vmem>>, vector<1x24xf32>
    %4 = vector.broadcast %3 : vector<1x24xf32> to vector<32x24xf32>
    %5 = arith.addf %2, %4 : vector<32x24xf32>
    %c0_5 = arith.constant 0 : index
    %c0_6 = arith.constant 0 : index
    %6 = vector.load %arg7[%c0_5, %c0_6] : memref<32x24xf32, #tpu.memory_space<vmem>>, vector<32x24xf32>
    tpu.vector_store %arg7[%c0_5, %c0_6], %5 {strides = array<i32>} : memref<32x24xf32, #tpu.memory_space<vmem>>, vector<32x24xf32>,
    %c0_7 = arith.constant 0 : index
    %c0_8 = arith.constant 0 : index
    %7 = vector.load %arg4[%c0_7, %c0_8] : memref<32x144xf32, #tpu.memory_space<vmem>>, vector<32x144xf32>
    %c0_9 = arith.constant 0 : index
    %c0_10 = arith.constant 0 : index
    %8 = vector.load %arg5[%c0_9, %c0_10] : memref<144x24xf32, #tpu.memory_space<vmem>>, vector<144x24xf32>
    %cst_11 = arith.constant dense<0.000000e+00> : vector<32x24xf32>
    %9 = tpu.matmul %7, %8, %cst_11 {dimension_numbers = #tpu.dot_dimension_numbers<[1], [0], [0], [1], [0, 0, 1, 1], [], []>} : vector<32x144xf32>, vector<144x24xf32>, vector<32x24xf32> -> vector<32x24xf32>
    %c0_12 = arith.constant 0 : index
    %c0_13 = arith.constant 0 : index
    %10 = vector.load %arg6[%c0_12, %c0_13] : memref<1x24xf32, #tpu.memory_space<vmem>>, vector<1x24xf32>
    %11 = vector.broadcast %10 : vector<1x24xf32> to vector<32x24xf32>
    %12 = arith.addf %9, %11 : vector<32x24xf32>
    %c0_14 = arith.constant 0 : index
    %c0_15 = arith.constant 0 : index
    %13 = vector.load %arg8[%c0_14, %c0_15] : memref<32x24xf32, #tpu.memory_space<vmem>>, vector<32x24xf32>
    tpu.vector_store %arg8[%c0_14, %c0_15], %12 {strides = array<i32>} : memref<32x24xf32, #tpu.memory_space<vmem>>, vector<32x24xf32>,
    return
  }
  func.func @transform_0(%arg0: i32) -> (i32, i32) {
    %c0_i32 = arith.constant 0 : i32
    %c0_i32_0 = arith.constant 0 : i32
    return %arg0, %c0_i32 : i32, i32
  }
  func.func @transform_1(%arg0: i32) -> (i32, i32) {
    %c0_i32 = arith.constant 0 : i32
    %c0_i32_0 = arith.constant 0 : i32
    %c0_i32_1 = arith.constant 0 : i32
    return %c0_i32, %c0_i32_0 : i32, i32
  }
  func.func @transform_2(%arg0: i32) -> (i32, i32) {
    %c0_i32 = arith.constant 0 : i32
    %c0_i32_0 = arith.constant 0 : i32
    %c0_i32_1 = arith.constant 0 : i32
    return %c0_i32, %c0_i32_0 : i32, i32
  }
  func.func @transform_3(%arg0: i32) -> (i32, i32) {
    %c0_i32 = arith.constant 0 : i32
    %c0_i32_0 = arith.constant 0 : i32
    return %arg0, %c0_i32 : i32, i32
  }
  func.func @transform_4(%arg0: i32) -> (i32, i32) {
    %c0_i32 = arith.constant 0 : i32
    %c0_i32_0 = arith.constant 0 : i32
    %c0_i32_1 = arith.constant 0 : i32
    return %c0_i32, %c0_i32_0 : i32, i32
  }
  func.func @transform_5(%arg0: i32) -> (i32, i32) {
    %c0_i32 = arith.constant 0 : i32
    %c0_i32_0 = arith.constant 0 : i32
    %c0_i32_1 = arith.constant 0 : i32
    return %c0_i32, %c0_i32_0 : i32, i32
  }
  func.func @transform_6(%arg0: i32) -> (i32, i32) {
    %c0_i32 = arith.constant 0 : i32
    %c0_i32_0 = arith.constant 0 : i32
    return %arg0, %c0_i32 : i32, i32
  }
  func.func @transform_7(%arg0: i32) -> (i32, i32) {
    %c0_i32 = arith.constant 0 : i32
    %c0_i32_0 = arith.constant 0 : i32
    return %arg0, %c0_i32 : i32, i32
  }
}

module attributes {stable_mosaic.version = 11 : i64} {
  func.func @_gemm_bias_kernel(%arg0: i32, %arg1: memref<32x216xf32, #tpu.memory_space<vmem>>, %arg2: memref<216x24xf32, #tpu.memory_space<vmem>>, %arg3: memref<1x24xf32, #tpu.memory_space<vmem>>, %arg4: memref<32x24xf32, #tpu.memory_space<vmem>>) attributes {dimension_semantics = [#tpu.dimension_semantics<parallel>], iteration_bounds = array<i64: 1>, scalar_prefetch = 0 : i64, scratch_operands = 0 : i64, tpu.core_type = #tpu.core_type<tc>, window_params = [{transform_indices = @transform_0, window_bounds = array<i64: 32, 216>}, {pipeline_mode = #tpu.pipeline_mode<synchronous>, transform_indices = @transform_1, window_bounds = array<i64: 216, 24>}, {pipeline_mode = #tpu.pipeline_mode<synchronous>, transform_indices = @transform_2, window_bounds = array<i64: 1, 24>}, {transform_indices = @transform_3, window_bounds = array<i64: 32, 24>}]} {
    %c0 = arith.constant 0 : index
    %c0_0 = arith.constant 0 : index
    %0 = vector.load %arg1[%c0, %c0_0] : memref<32x216xf32, #tpu.memory_space<vmem>>, vector<32x216xf32>
    %c0_1 = arith.constant 0 : index
    %c0_2 = arith.constant 0 : index
    %1 = vector.load %arg2[%c0_1, %c0_2] : memref<216x24xf32, #tpu.memory_space<vmem>>, vector<216x24xf32>
    %cst = arith.constant dense<0.000000e+00> : vector<32x24xf32>
    %2 = tpu.matmul %0, %1, %cst {dimension_numbers = #tpu.dot_dimension_numbers<[1], [0], [0], [1], [0, 0, 1, 1], [], []>} : vector<32x216xf32>, vector<216x24xf32>, vector<32x24xf32> -> vector<32x24xf32>
    %c0_3 = arith.constant 0 : index
    %c0_4 = arith.constant 0 : index
    %3 = vector.load %arg3[%c0_3, %c0_4] : memref<1x24xf32, #tpu.memory_space<vmem>>, vector<1x24xf32>
    %4 = vector.broadcast %3 : vector<1x24xf32> to vector<32x24xf32>
    %5 = arith.addf %2, %4 : vector<32x24xf32>
    %c0_5 = arith.constant 0 : index
    %c0_6 = arith.constant 0 : index
    %6 = vector.load %arg4[%c0_5, %c0_6] : memref<32x24xf32, #tpu.memory_space<vmem>>, vector<32x24xf32>
    tpu.vector_store %arg4[%c0_5, %c0_6], %5 {strides = array<i32>} : memref<32x24xf32, #tpu.memory_space<vmem>>, vector<32x24xf32>,
    return
  }
  func.func @transform_0(%arg0: i32) -> (i32, i32) {
    %c0_i32 = arith.constant 0 : i32
    %c0_i32_0 = arith.constant 0 : i32
    return %arg0, %c0_i32 : i32, i32
  }
  func.func @transform_1(%arg0: i32) -> (i32, i32) {
    %c0_i32 = arith.constant 0 : i32
    %c0_i32_0 = arith.constant 0 : i32
    %c0_i32_1 = arith.constant 0 : i32
    return %c0_i32, %c0_i32_0 : i32, i32
  }
  func.func @transform_2(%arg0: i32) -> (i32, i32) {
    %c0_i32 = arith.constant 0 : i32
    %c0_i32_0 = arith.constant 0 : i32
    %c0_i32_1 = arith.constant 0 : i32
    return %c0_i32, %c0_i32_0 : i32, i32
  }
  func.func @transform_3(%arg0: i32) -> (i32, i32) {
    %c0_i32 = arith.constant 0 : i32
    %c0_i32_0 = arith.constant 0 : i32
    return %arg0, %c0_i32 : i32, i32
  }
}

module attributes {stable_mosaic.version = 11 : i64} {
  func.func @_fc_logsoftmax_kernel(%arg0: i32, %arg1: memref<2x1408xf32, #tpu.memory_space<vmem>>, %arg2: memref<1408x10xf32, #tpu.memory_space<vmem>>, %arg3: memref<1x10xf32, #tpu.memory_space<vmem>>, %arg4: memref<2x10xf32, #tpu.memory_space<vmem>>) attributes {dimension_semantics = [#tpu.dimension_semantics<arbitrary>], iteration_bounds = array<i64: 1>, scalar_prefetch = 0 : i64, scratch_operands = 0 : i64, tpu.core_type = #tpu.core_type<tc>, window_params = [{pipeline_mode = #tpu.pipeline_mode<synchronous>, transform_indices = @transform_0, window_bounds = array<i64: 2, 1408>}, {pipeline_mode = #tpu.pipeline_mode<synchronous>, transform_indices = @transform_1, window_bounds = array<i64: 1408, 10>}, {pipeline_mode = #tpu.pipeline_mode<synchronous>, transform_indices = @transform_2, window_bounds = array<i64: 1, 10>}, {pipeline_mode = #tpu.pipeline_mode<synchronous>, transform_indices = @transform_3, window_bounds = array<i64: 2, 10>}]} {
    %c0 = arith.constant 0 : index
    %c0_0 = arith.constant 0 : index
    %0 = vector.load %arg1[%c0, %c0_0] : memref<2x1408xf32, #tpu.memory_space<vmem>>, vector<2x1408xf32>
    %c0_1 = arith.constant 0 : index
    %c0_2 = arith.constant 0 : index
    %1 = vector.load %arg2[%c0_1, %c0_2] : memref<1408x10xf32, #tpu.memory_space<vmem>>, vector<1408x10xf32>
    %cst = arith.constant dense<0.000000e+00> : vector<2x10xf32>
    %2 = tpu.matmul %0, %1, %cst {dimension_numbers = #tpu.dot_dimension_numbers<[1], [0], [0], [1], [0, 0, 1, 1], [], []>} : vector<2x1408xf32>, vector<1408x10xf32>, vector<2x10xf32> -> vector<2x10xf32>
    %c0_3 = arith.constant 0 : index
    %c0_4 = arith.constant 0 : index
    %3 = vector.load %arg3[%c0_3, %c0_4] : memref<1x10xf32, #tpu.memory_space<vmem>>, vector<1x10xf32>
    %4 = vector.broadcast %3 : vector<1x10xf32> to vector<2x10xf32>
    %5 = arith.addf %2, %4 : vector<2x10xf32>
    %cst_5 = arith.constant dense<0xFF800000> : vector<2xf32>
    %6 = vector.multi_reduction <maximumf>, %5, %cst_5 [1] : vector<2x10xf32> to vector<2xf32>
    %7 = vector.shape_cast %6 : vector<2xf32> to vector<2x1xf32>
    %8 = vector.broadcast %7 : vector<2x1xf32> to vector<2x10xf32>
    %9 = arith.subf %5, %8 : vector<2x10xf32>
    %10 = math.exp %9 : vector<2x10xf32>
    %11 = vector.broadcast %7 : vector<2x1xf32> to vector<2x10xf32>
    %12 = arith.subf %5, %11 : vector<2x10xf32>
    %cst_6 = arith.constant dense<0.000000e+00> : vector<2xf32>
    %13 = vector.multi_reduction <add>, %10, %cst_6 [1] : vector<2x10xf32> to vector<2xf32>
    %14 = vector.shape_cast %13 : vector<2xf32> to vector<2x1xf32>
    %15 = math.log %14 : vector<2x1xf32>
    %16 = vector.broadcast %15 : vector<2x1xf32> to vector<2x10xf32>
    %17 = arith.subf %12, %16 : vector<2x10xf32>
    %c0_7 = arith.constant 0 : index
    %c0_8 = arith.constant 0 : index
    %18 = vector.load %arg4[%c0_7, %c0_8] : memref<2x10xf32, #tpu.memory_space<vmem>>, vector<2x10xf32>
    tpu.vector_store %arg4[%c0_7, %c0_8], %17 {strides = array<i32>} : memref<2x10xf32, #tpu.memory_space<vmem>>, vector<2x10xf32>,
    return
  }
  func.func @transform_0(%arg0: i32) -> (i32, i32) {
    %c0_i32 = arith.constant 0 : i32
    %c0_i32_0 = arith.constant 0 : i32
    %c0_i32_1 = arith.constant 0 : i32
    return %c0_i32, %c0_i32_0 : i32, i32
  }
  func.func @transform_1(%arg0: i32) -> (i32, i32) {
    %c0_i32 = arith.constant 0 : i32
    %c0_i32_0 = arith.constant 0 : i32
    %c0_i32_1 = arith.constant 0 : i32
    return %c0_i32, %c0_i32_0 : i32, i32
  }
  func.func @transform_2(%arg0: i32) -> (i32, i32) {
    %c0_i32 = arith.constant 0 : i32
    %c0_i32_0 = arith.constant 0 : i32
    %c0_i32_1 = arith.constant 0 : i32
    return %c0_i32, %c0_i32_0 : i32, i32
  }
  func.func @transform_3(%arg0: i32) -> (i32, i32) {
    %c0_i32 = arith.constant 0 : i32
    %c0_i32_0 = arith.constant 0 : i32
    %c0_i32_1 = arith.constant 0 : i32
    return %c0_i32, %c0_i32_0 : i32, i32
  }
}

</mosaic_0001>

<llo_original>
// kernel: net_forward.9
$region0: #{net_forward.9}
  #allocation0 [shape = 'u32[]', space=smem, size = 0x4, offset = 0x4, fixed_abs, tag = 'smem constant byte address 0x4 - core index']
  #allocation1 [shape = 'u32[144,128]{1,0:T(1,128)}', space=vmem, size = 0x12000, scoped, tag = 'internal scratch']
  %s0 = inlined_call_operand.vmem [shape: f32[4,288,32], index: 0, kind: input, shape index: {}]
  %s1 = inlined_call_operand.vmem [shape: f32[32,10], index: 1, kind: input, shape index: {}]
  %s2 = inlined_call_operand.vmem [shape: f32[1,10], index: 2, kind: input, shape index: {}]
  %s3 = inlined_call_operand.vmem [shape: f32[288,10], index: 3, kind: output, shape index: {}]
  %s4 = sld [smem:[#allocation0]]
  $region83: #{net_forward.9} parent=0
    _
  %s6 = ssub.s32 1, %s4
  %s7 = scalar_select 0, %s6, %s4
  $region1: #{net_forward.9} parent=0
    #allocation2 [shape = 'u8[589824]{0}', space=vmem, size = 0x90000, scoped, tag = 'input window, operand 0']
    loop: start=0, step=1, limit=4
    $region2: #{net_forward.9} parent=1 // loop_pre_header
      _
    $region3: #{net_forward.9} parent=1 // loop_header
      %s9 = sphi 0, %s13
      %p10 = scmp.ge.s32.totalorder %s9, 4
      %s19 = sphi 0, %s21
      %s22 = sphi 0, %s19
      %s23 = sphi 0, %s22
      %s39 = sphi 0, %s23
      %s43 = sphi 0, %s43
      %s45 = sphi 0, %s43
      %s46 = sphi 0, %s45
      %s60 = sphi 0, %s46
      %s64 = sphi 0, %s64
      %s66 = sphi 0, %s64
      %s67 = sphi 0, %s66
      %s81 = sphi 0, %s67
      %s87 = sphi 0, %s89
      %s90 = sphi 0, %s87
      %s91 = sphi 0, %s90
      %s107 = sphi 0, %s91
    $region4: #{net_forward.9} parent=1 // loop_header_branch
      %12 = sbr.rel (%p10) target = $region8
    $region5: #{net_forward.9} parent=1 // loop_body
      %s14 = ssub.s32 %s9, 1
      %s15 = ssub.s32 %s9, 2
      %s16 = sadd.s32 %s9, 1
      %s17 = ssub.s32 %s9, %s16
      %p18 = scmp.eq.s32.totalorder %s17, 0
      %s20 = sadd.s32 %s19, 1
      %s21 = scalar_select %p18, %s19, %s20
      %p24 = pneg %p18
      %p25 = scmp.eq.s32.totalorder %s9, 1
      %p26 = por %p24, %p25
      %p27 = scmp.ne.s32.totalorder %s19, %s22
      %p28 = scmp.eq.s32.totalorder %s9, 0
      %p29 = por %p27, %p28
      %p30 = scmp.ne.s32.totalorder %s19, %s22
      %p31 = scmp.eq.s32.totalorder %s14, 1
      %p32 = por %p30, %p31
      %p33 = scmp.ne.s32.totalorder %s22, %s23
      %p34 = scmp.eq.s32.totalorder %s14, 0
      %p35 = por %p33, %p34
      %p36 = scmp.ne.s32.totalorder %s22, %s23
      %p37 = scmp.eq.s32.totalorder %s15, 1
      %p38 = por %p36, %p37
      %p40 = scmp.ne.s32.totalorder %s23, %s39
      %p41 = scmp.eq.s32.totalorder %s15, 0
      %p42 = por %p40, %p41
      %s44 = sadd.s32 %s43, 1
      %p47 = scmp.eq.s32.totalorder %s9, 1
      %p48 = scmp.ne.s32.totalorder %s43, %s45
      %p49 = scmp.eq.s32.totalorder %s9, 0
      %p50 = por %p48, %p49
      %p51 = scmp.ne.s32.totalorder %s43, %s45
      %p52 = scmp.eq.s32.totalorder %s14, 1
      %p53 = por %p51, %p52
      %p54 = scmp.ne.s32.totalorder %s45, %s46
      %p55 = scmp.eq.s32.totalorder %s14, 0
      %p56 = por %p54, %p55
      %p57 = scmp.ne.s32.totalorder %s45, %s46
      %p58 = scmp.eq.s32.totalorder %s15, 1
      %p59 = por %p57, %p58
      %p61 = scmp.ne.s32.totalorder %s46, %s60
      %p62 = scmp.eq.s32.totalorder %s15, 0
      %p63 = por %p61, %p62
      %s65 = sadd.s32 %s64, 1
      %p68 = scmp.eq.s32.totalorder %s9, 1
      %p69 = scmp.ne.s32.totalorder %s64, %s66
      %p70 = scmp.eq.s32.totalorder %s9, 0
      %p71 = por %p69, %p70
      %p72 = scmp.ne.s32.totalorder %s64, %s66
      %p73 = scmp.eq.s32.totalorder %s14, 1
      %p74 = por %p72, %p73
      %p75 = scmp.ne.s32.totalorder %s66, %s67
      %p76 = scmp.eq.s32.totalorder %s14, 0
      %p77 = por %p75, %p76
      %p78 = scmp.ne.s32.totalorder %s66, %s67
      %p79 = scmp.eq.s32.totalorder %s15, 1
      %p80 = por %p78, %p79
      %p82 = scmp.ne.s32.totalorder %s67, %s81
      %p83 = scmp.eq.s32.totalorder %s15, 0
      %p84 = por %p82, %p83
      %s85 = ssub.s32 %s9, %s16
      %p86 = scmp.eq.s32.totalorder %s85, 0
      %s88 = sadd.s32 %s87, 1
      %s89 = scalar_select %p86, %s87, %s88
      %p92 = pneg %p86
      %p93 = scmp.eq.s32.totalorder %s9, 1
      %p94 = por %p92, %p93
      %p95 = scmp.ne.s32.totalorder %s87, %s90
      %p96 = scmp.eq.s32.totalorder %s9, 0
      %p97 = por %p95, %p96
      %p98 = scmp.ne.s32.totalorder %s87, %s90
      %p99 = scmp.eq.s32.totalorder %s14, 1
      %p100 = por %p98, %p99
      %p101 = scmp.ne.s32.totalorder %s90, %s91
      %p102 = scmp.eq.s32.totalorder %s14, 0
      %p103 = por %p101, %p102
      %p104 = scmp.ne.s32.totalorder %s90, %s91
      %p105 = scmp.eq.s32.totalorder %s15, 1
      %p106 = por %p104, %p105
      %p108 = scmp.ne.s32.totalorder %s91, %s107
      %p109 = scmp.eq.s32.totalorder %s15, 0
      %p110 = por %p108, %p109
      %p111 = scmp.le.s32.totalorder 1, %s9
      %p112 = scmp.lt.s32.totalorder %s9, 3
      %p113 = pnand %p111, %p112
      %p114 = pneg %p113
      // Predicated region
      $region9: #{net_forward.9} parent=5 // pred_check
        _
      $region10: #{net_forward.9} parent=5 // pred_check_branch
        %116 = sbr.rel (%p113) target = $region12
      $region11: #{net_forward.9} parent=5 // pred_region
        %s117 = ssub.s32 %s9, 1
        // Predicated region
        $region13: #{net_forward.9} parent=11 // pred_check
          %p118 = pneg %p56
        $region14: #{net_forward.9} parent=11 // pred_check_branch
          %120 = sbr.rel (%p118) target = $region16
        $region15: #{net_forward.9} parent=11 // pred_region
          _
        $region16: #{net_forward.9} parent=11 // pred_fallthru
          _
        // Predicated region
        $region17: #{net_forward.9} parent=11 // pred_check
          %p121 = pneg %p77
        $region18: #{net_forward.9} parent=11 // pred_check_branch
          %123 = sbr.rel (%p121) target = $region20
        $region19: #{net_forward.9} parent=11 // pred_region
          _
        $region20: #{net_forward.9} parent=11 // pred_fallthru
          _
      $region12: #{net_forward.9} parent=5 // pred_fallthru
        _
      %p124 = scmp.lt.s32.totalorder %s9, 2
      // Predicated region
      $region21: #{net_forward.9} parent=5 // pred_check
        %p125 = pneg %p124
      $region22: #{net_forward.9} parent=5 // pred_check_branch
        %127 = sbr.rel (%p125) target = $region24
      $region23: #{net_forward.9} parent=5 // pred_region
        // Predicated region
        $region25: #{net_forward.9} parent=23 // pred_check
          %p128 = pneg %p29
        $region26: #{net_forward.9} parent=23 // pred_check_branch
          %130 = sbr.rel (%p128) target = $region28
        $region27: #{net_forward.9} parent=23 // pred_region
          %s131 = sand.u32 %s19, 1
          %s132 = sand.u32 %s19, 1
          %s133 = smul.addr %s132, 576
          %s134 = scalar_lea.vmem [#allocation2], %s133
          %s135 = smul.u32 18, %s9
          %s136 = smul.addr %s135, 8
          %s137 = scalar_lea.vmem %s0, %s136
          // Predicated region
          $region29: #{net_forward.9} parent=27 // pred_check
            _
          $region30: #{net_forward.9} parent=27 // pred_check_branch
            %139 = sbr.rel (0) target = $region32
          $region31: #{net_forward.9} parent=27 // pred_region
            // Predicated region
            $region33: #{net_forward.9} parent=31 // pred_check
              _
            $region34: #{net_forward.9} parent=31 // pred_check_branch
              %141 = sbr.rel (0) target = $region36
            $region35: #{net_forward.9} parent=31 // pred_region
              // Predicated region
              $region48: #{net_forward.9} parent=35 // pred_check
                _
              $region49: #{net_forward.9} parent=35 // pred_check_branch
                %298 = sbr.rel (0) target = $region51
              $region50: #{net_forward.9} parent=35 // pred_region
                loop: start=0, step=1, limit=1
                $region52: #{net_forward.9} parent=50 // loop_pre_header
                  _
                $region53: #{net_forward.9} parent=50 // loop_header
                  %s300 = sphi 0, %s304
                  %p301 = scmp.ge.s32.totalorder %s300, 1
                  %s305 = sphi %s137, %s137
                  %s306 = sphi %s134, %s134
                $region54: #{net_forward.9} parent=50 // loop_header_branch
                  %303 = sbr.rel (%p301) target = $region58
                $region55: #{net_forward.9} parent=50 // loop_body
                  %v307 = vld [vmem:[%s305] sm:$0xff]
                  %308 = vst [vmem:[%s306] sm:$0xff] %v307
                  %v309 = vld [vmem:[%s305 + $0x8] sm:$0xff]
                  %310 = vst [vmem:[%s306 + $0x8] sm:$0xff] %v309
                  %v311 = vld [vmem:[%s305 + $0x10] sm:$0xff]
                  %312 = vst [vmem:[%s306 + $0x10] sm:$0xff] %v311
                  %v313 = vld [vmem:[%s305 + $0x18] sm:$0xff]
                  %314 = vst [vmem:[%s306 + $0x18] sm:$0xff] %v313
                  %v315 = vld [vmem:[%s305 + $0x20] sm:$0xff]
                  %316 = vst [vmem:[%s306 + $0x20] sm:$0xff] %v315
                  %v317 = vld [vmem:[%s305 + $0x28] sm:$0xff]
                  %318 = vst [vmem:[%s306 + $0x28] sm:$0xff] %v317
                  %v319 = vld [vmem:[%s305 + $0x30] sm:$0xff]
                  %320 = vst [vmem:[%s306 + $0x30] sm:$0xff] %v319
                  %v321 = vld [vmem:[%s305 + $0x38] sm:$0xff]
                  %322 = vst [vmem:[%s306 + $0x38] sm:$0xff] %v321
                  %v323 = vld [vmem:[%s305 + $0x40] sm:$0xff]
                  %324 = vst [vmem:[%s306 + $0x40] sm:$0xff] %v323
                  %v325 = vld [vmem:[%s305 + $0x48] sm:$0xff]
                  %326 = vst [vmem:[%s306 + $0x48] sm:$0xff] %v325
                  %v327 = vld [vmem:[%s305 + $0x50] sm:$0xff]
                  %328 = vst [vmem:[%s306 + $0x50] sm:$0xff] %v327
                  %v329 = vld [vmem:[%s305 + $0x58] sm:$0xff]
                  %330 = vst [vmem:[%s306 + $0x58] sm:$0xff] %v329
                  %v331 = vld [vmem:[%s305 + $0x60] sm:$0xff]
                  %332 = vst [vmem:[%s306 + $0x60] sm:$0xff] %v331
                  %v333 = vld [vmem:[%s305 + $0x68] sm:$0xff]
                  %334 = vst [vmem:[%s306 + $0x68] sm:$0xff] %v333
                  %v335 = vld [vmem:[%s305 + $0x70] sm:$0xff]
                  %336 = vst [vmem:[%s306 + $0x70] sm:$0xff] %v335
                  %v337 = vld [vmem:[%s305 + $0x78] sm:$0xff]
                  %338 = vst [vmem:[%s306 + $0x78] sm:$0xff] %v337
                  %v339 = vld [vmem:[%s305 + $0x80] sm:$0xff]
                  %340 = vst [vmem:[%s306 + $0x80] sm:$0xff] %v339
                  %v341 = vld [vmem:[%s305 + $0x88] sm:$0xff]
                  %342 = vst [vmem:[%s306 + $0x88] sm:$0xff] %v341
                  %v343 = vld [vmem:[%s305 + $0x120] sm:$0xff]
                  %344 = vst [vmem:[%s306 + $0x90] sm:$0xff] %v343
                  %v345 = vld [vmem:[%s305 + $0x128] sm:$0xff]
                  %346 = vst [vmem:[%s306 + $0x98] sm:$0xff] %v345
                  %v347 = vld [vmem:[%s305 + $0x130] sm:$0xff]
                  %348 = vst [vmem:[%s306 + $0xa0] sm:$0xff] %v347
                  %v349 = vld [vmem:[%s305 + $0x138] sm:$0xff]
                  %350 = vst [vmem:[%s306 + $0xa8] sm:$0xff] %v349
                  %v351 = vld [vmem:[%s305 + $0x140] sm:$0xff]
                  %352 = vst [vmem:[%s306 + $0xb0] sm:$0xff] %v351
                  %v353 = vld [vmem:[%s305 + $0x148] sm:$0xff]
                  %354 = vst [vmem:[%s306 + $0xb8] sm:$0xff] %v353
                  %v355 = vld [vmem:[%s305 + $0x150] sm:$0xff]
                  %356 = vst [vmem:[%s306 + $0xc0] sm:$0xff] %v355
                  %v357 = vld [vmem:[%s305 + $0x158] sm:$0xff]
                  %358 = vst [vmem:[%s306 + $0xc8] sm:$0xff] %v357
                  %v359 = vld [vmem:[%s305 + $0x160] sm:$0xff]
                  %360 = vst [vmem:[%s306 + $0xd0] sm:$0xff] %v359
                  %v361 = vld [vmem:[%s305 + $0x168] sm:$0xff]
                  %362 = vst [vmem:[%s306 + $0xd8] sm:$0xff] %v361
                  %v363 = vld [vmem:[%s305 + $0x170] sm:$0xff]
                  %364 = vst [vmem:[%s306 + $0xe0] sm:$0xff] %v363
                  %v365 = vld [vmem:[%s305 + $0x178] sm:$0xff]
                  %366 = vst [vmem:[%s306 + $0xe8] sm:$0xff] %v365
                  %v367 = vld [vmem:[%s305 + $0x180] sm:$0xff]
                  %368 = vst [vmem:[%s306 + $0xf0] sm:$0xff] %v367
                  %v369 = vld [vmem:[%s305 + $0x188] sm:$0xff]
                  %370 = vst [vmem:[%s306 + $0xf8] sm:$0xff] %v369
                  %v371 = vld [vmem:[%s305 + $0x190] sm:$0xff]
                  %372 = vst [vmem:[%s306 + $0x100] sm:$0xff] %v371
                  %v373 = vld [vmem:[%s305 + $0x198] sm:$0xff]
                  %374 = vst [vmem:[%s306 + $0x108] sm:$0xff] %v373
                  %v375 = vld [vmem:[%s305 + $0x1a0] sm:$0xff]
                  %376 = vst [vmem:[%s306 + $0x110] sm:$0xff] %v375
                  %v377 = vld [vmem:[%s305 + $0x1a8] sm:$0xff]
                  %378 = vst [vmem:[%s306 + $0x118] sm:$0xff] %v377
                  %v379 = vld [vmem:[%s305 + $0x240] sm:$0xff]
                  %380 = vst [vmem:[%s306 + $0x120] sm:$0xff] %v379
                  %v381 = vld [vmem:[%s305 + $0x248] sm:$0xff]
                  %382 = vst [vmem:[%s306 + $0x128] sm:$0xff] %v381
                  %v383 = vld [vmem:[%s305 + $0x250] sm:$0xff]
                  %384 = vst [vmem:[%s306 + $0x130] sm:$0xff] %v383
                  %v385 = vld [vmem:[%s305 + $0x258] sm:$0xff]
                  %386 = vst [vmem:[%s306 + $0x138] sm:$0xff] %v385
                  %v387 = vld [vmem:[%s305 + $0x260] sm:$0xff]
                  %388 = vst [vmem:[%s306 + $0x140] sm:$0xff] %v387
                  %v389 = vld [vmem:[%s305 + $0x268] sm:$0xff]
                  %390 = vst [vmem:[%s306 + $0x148] sm:$0xff] %v389
                  %v391 = vld [vmem:[%s305 + $0x270] sm:$0xff]
                  %392 = vst [vmem:[%s306 + $0x150] sm:$0xff] %v391
                  %v393 = vld [vmem:[%s305 + $0x278] sm:$0xff]
                  %394 = vst [vmem:[%s306 + $0x158] sm:$0xff] %v393
                  %v395 = vld [vmem:[%s305 + $0x280] sm:$0xff]
                  %396 = vst [vmem:[%s306 + $0x160] sm:$0xff] %v395
                  %v397 = vld [vmem:[%s305 + $0x288] sm:$0xff]
                  %398 = vst [vmem:[%s306 + $0x168] sm:$0xff] %v397
                  %v399 = vld [vmem:[%s305 + $0x290] sm:$0xff]
                  %400 = vst [vmem:[%s306 + $0x170] sm:$0xff] %v399
                  %v401 = vld [vmem:[%s305 + $0x298] sm:$0xff]
                  %402 = vst [vmem:[%s306 + $0x178] sm:$0xff] %v401
                  %v403 = vld [vmem:[%s305 + $0x2a0] sm:$0xff]
                  %404 = vst [vmem:[%s306 + $0x180] sm:$0xff] %v403
                  %v405 = vld [vmem:[%s305 + $0x2a8] sm:$0xff]
                  %406 = vst [vmem:[%s306 + $0x188] sm:$0xff] %v405
                  %v407 = vld [vmem:[%s305 + $0x2b0] sm:$0xff]
                  %408 = vst [vmem:[%s306 + $0x190] sm:$0xff] %v407
                  %v409 = vld [vmem:[%s305 + $0x2b8] sm:$0xff]
                  %410 = vst [vmem:[%s306 + $0x198] sm:$0xff] %v409
                  %v411 = vld [vmem:[%s305 + $0x2c0] sm:$0xff]
                  %412 = vst [vmem:[%s306 + $0x1a0] sm:$0xff] %v411
                  %v413 = vld [vmem:[%s305 + $0x2c8] sm:$0xff]
                  %414 = vst [vmem:[%s306 + $0x1a8] sm:$0xff] %v413
                  %v415 = vld [vmem:[%s305 + $0x360] sm:$0xff]
                  %416 = vst [vmem:[%s306 + $0x1b0] sm:$0xff] %v415
                  %v417 = vld [vmem:[%s305 + $0x368] sm:$0xff]
                  %418 = vst [vmem:[%s306 + $0x1b8] sm:$0xff] %v417
                  %v419 = vld [vmem:[%s305 + $0x370] sm:$0xff]
                  %420 = vst [vmem:[%s306 + $0x1c0] sm:$0xff] %v419
                  %v421 = vld [vmem:[%s305 + $0x378] sm:$0xff]
                  %422 = vst [vmem:[%s306 + $0x1c8] sm:$0xff] %v421
                  %v423 = vld [vmem:[%s305 + $0x380] sm:$0xff]
                  %424 = vst [vmem:[%s306 + $0x1d0] sm:$0xff] %v423
                  %v425 = vld [vmem:[%s305 + $0x388] sm:$0xff]
                  %426 = vst [vmem:[%s306 + $0x1d8] sm:$0xff] %v425
                  %v427 = vld [vmem:[%s305 + $0x390] sm:$0xff]
                  %428 = vst [vmem:[%s306 + $0x1e0] sm:$0xff] %v427
                  %v429 = vld [vmem:[%s305 + $0x398] sm:$0xff]
                  %430 = vst [vmem:[%s306 + $0x1e8] sm:$0xff] %v429
                  %v431 = vld [vmem:[%s305 + $0x3a0] sm:$0xff]
                  %432 = vst [vmem:[%s306 + $0x1f0] sm:$0xff] %v431
                  %v433 = vld [vmem:[%s305 + $0x3a8] sm:$0xff]
                  %434 = vst [vmem:[%s306 + $0x1f8] sm:$0xff] %v433
                  %v435 = vld [vmem:[%s305 + $0x3b0] sm:$0xff]
                  %436 = vst [vmem:[%s306 + $0x200] sm:$0xff] %v435
                  %v437 = vld [vmem:[%s305 + $0x3b8] sm:$0xff]
                  %438 = vst [vmem:[%s306 + $0x208] sm:$0xff] %v437
                  %v439 = vld [vmem:[%s305 + $0x3c0] sm:$0xff]
                  %440 = vst [vmem:[%s306 + $0x210] sm:$0xff] %v439
                  %v441 = vld [vmem:[%s305 + $0x3c8] sm:$0xff]
                  %442 = vst [vmem:[%s306 + $0x218] sm:$0xff] %v441
                  %v443 = vld [vmem:[%s305 + $0x3d0] sm:$0xff]
                  %444 = vst [vmem:[%s306 + $0x220] sm:$0xff] %v443
                  %v445 = vld [vmem:[%s305 + $0x3d8] sm:$0xff]
                  %446 = vst [vmem:[%s306 + $0x228] sm:$0xff] %v445
                  %v447 = vld [vmem:[%s305 + $0x3e0] sm:$0xff]
                  %448 = vst [vmem:[%s306 + $0x230] sm:$0xff] %v447
                  %v449 = vld [vmem:[%s305 + $0x3e8] sm:$0xff]
                  %450 = vst [vmem:[%s306 + $0x238] sm:$0xff] %v449
                $region56: #{net_forward.9} parent=50 // loop_footer
                  %s304 = sadd.s32 1, %s300
                $region57: #{net_forward.9} parent=50 // loop_footer_branch
                  %299 = sbr.rel target = $region53
                $region58: #{net_forward.9} parent=50 // loop_exit
                  _
              $region51: #{net_forward.9} parent=35 // pred_fallthru
                _
              // Predicated region
              $region59: #{net_forward.9} parent=35 // pred_check
                _
              $region60: #{net_forward.9} parent=35 // pred_check_branch
                %452 = sbr.rel target = $region62
              $region61: #{net_forward.9} parent=35 // pred_region
                _
              $region62: #{net_forward.9} parent=35 // pred_fallthru
                _
            $region36: #{net_forward.9} parent=31 // pred_fallthru
              _
            // Predicated region
            $region37: #{net_forward.9} parent=31 // pred_check
              _
            $region38: #{net_forward.9} parent=31 // pred_check_branch
              %143 = sbr.rel target = $region40
            $region39: #{net_forward.9} parent=31 // pred_region
              loop: start=0, step=1, limit=1
              $region41: #{net_forward.9} parent=39 // loop_pre_header
                _
              $region42: #{net_forward.9} parent=39 // loop_header
                %s146 = sphi 0, %s150
                %p147 = scmp.ge.s32.totalorder %s146, 1
                %s151 = sphi %s137, %s137
                %s152 = sphi %s134, %s134
              $region43: #{net_forward.9} parent=39 // loop_header_branch
                %149 = sbr.rel (%p147) target = $region47
              $region44: #{net_forward.9} parent=39 // loop_body
                %v153 = vld [vmem:[%s151] sm:$0xff]
                %154 = vst [vmem:[%s152] sm:$0xff] %v153
                %v155 = vld [vmem:[%s151 + $0x8] sm:$0xff]
                %156 = vst [vmem:[%s152 + $0x8] sm:$0xff] %v155
                %v157 = vld [vmem:[%s151 + $0x10] sm:$0xff]
                %158 = vst [vmem:[%s152 + $0x10] sm:$0xff] %v157
                %v159 = vld [vmem:[%s151 + $0x18] sm:$0xff]
                %160 = vst [vmem:[%s152 + $0x18] sm:$0xff] %v159
                %v161 = vld [vmem:[%s151 + $0x20] sm:$0xff]
                %162 = vst [vmem:[%s152 + $0x20] sm:$0xff] %v161
                %v163 = vld [vmem:[%s151 + $0x28] sm:$0xff]
                %164 = vst [vmem:[%s152 + $0x28] sm:$0xff] %v163
                %v165 = vld [vmem:[%s151 + $0x30] sm:$0xff]
                %166 = vst [vmem:[%s152 + $0x30] sm:$0xff] %v165
                %v167 = vld [vmem:[%s151 + $0x38] sm:$0xff]
                %168 = vst [vmem:[%s152 + $0x38] sm:$0xff] %v167
                %v169 = vld [vmem:[%s151 + $0x40] sm:$0xff]
                %170 = vst [vmem:[%s152 + $0x40] sm:$0xff] %v169
                %v171 = vld [vmem:[%s151 + $0x48] sm:$0xff]
                %172 = vst [vmem:[%s152 + $0x48] sm:$0xff] %v171
                %v173 = vld [vmem:[%s151 + $0x50] sm:$0xff]
                %174 = vst [vmem:[%s152 + $0x50] sm:$0xff] %v173
                %v175 = vld [vmem:[%s151 + $0x58] sm:$0xff]
                %176 = vst [vmem:[%s152 + $0x58] sm:$0xff] %v175
                %v177 = vld [vmem:[%s151 + $0x60] sm:$0xff]
                %178 = vst [vmem:[%s152 + $0x60] sm:$0xff] %v177
                %v179 = vld [vmem:[%s151 + $0x68] sm:$0xff]
                %180 = vst [vmem:[%s152 + $0x68] sm:$0xff] %v179
                %v181 = vld [vmem:[%s151 + $0x70] sm:$0xff]
                %182 = vst [vmem:[%s152 + $0x70] sm:$0xff] %v181
                %v183 = vld [vmem:[%s151 + $0x78] sm:$0xff]
                %184 = vst [vmem:[%s152 + $0x78] sm:$0xff] %v183
                %v185 = vld [vmem:[%s151 + $0x80] sm:$0xff]
                %186 = vst [vmem:[%s152 + $0x80] sm:$0xff] %v185
                %v187 = vld [vmem:[%s151 + $0x88] sm:$0xff]
                %188 = vst [vmem:[%s152 + $0x88] sm:$0xff] %v187
                %v189 = vld [vmem:[%s151 + $0x120] sm:$0xff]
                %190 = vst [vmem:[%s152 + $0x90] sm:$0xff] %v189
                %v191 = vld [vmem:[%s151 + $0x128] sm:$0xff]
                %192 = vst [vmem:[%s152 + $0x98] sm:$0xff] %v191
                %v193 = vld [vmem:[%s151 + $0x130] sm:$0xff]
                %194 = vst [vmem:[%s152 + $0xa0] sm:$0xff] %v193
                %v195 = vld [vmem:[%s151 + $0x138] sm:$0xff]
                %196 = vst [vmem:[%s152 + $0xa8] sm:$0xff] %v195
                %v197 = vld [vmem:[%s151 + $0x140] sm:$0xff]
                %198 = vst [vmem:[%s152 + $0xb0] sm:$0xff] %v197
                %v199 = vld [vmem:[%s151 + $0x148] sm:$0xff]
                %200 = vst [vmem:[%s152 + $0xb8] sm:$0xff] %v199
                %v201 = vld [vmem:[%s151 + $0x150] sm:$0xff]
                %202 = vst [vmem:[%s152 + $0xc0] sm:$0xff] %v201
                %v203 = vld [vmem:[%s151 + $0x158] sm:$0xff]
                %204 = vst [vmem:[%s152 + $0xc8] sm:$0xff] %v203
                %v205 = vld [vmem:[%s151 + $0x160] sm:$0xff]
                %206 = vst [vmem:[%s152 + $0xd0] sm:$0xff] %v205
                %v207 = vld [vmem:[%s151 + $0x168] sm:$0xff]
                %208 = vst [vmem:[%s152 + $0xd8] sm:$0xff] %v207
                %v209 = vld [vmem:[%s151 + $0x170] sm:$0xff]
                %210 = vst [vmem:[%s152 + $0xe0] sm:$0xff] %v209
                %v211 = vld [vmem:[%s151 + $0x178] sm:$0xff]
                %212 = vst [vmem:[%s152 + $0xe8] sm:$0xff] %v211
                %v213 = vld [vmem:[%s151 + $0x180] sm:$0xff]
                %214 = vst [vmem:[%s152 + $0xf0] sm:$0xff] %v213
                %v215 = vld [vmem:[%s151 + $0x188] sm:$0xff]
                %216 = vst [vmem:[%s152 + $0xf8] sm:$0xff] %v215
                %v217 = vld [vmem:[%s151 + $0x190] sm:$0xff]
                %218 = vst [vmem:[%s152 + $0x100] sm:$0xff] %v217
                %v219 = vld [vmem:[%s151 + $0x198] sm:$0xff]
                %220 = vst [vmem:[%s152 + $0x108] sm:$0xff] %v219
                %v221 = vld [vmem:[%s151 + $0x1a0] sm:$0xff]
                %222 = vst [vmem:[%s152 + $0x110] sm:$0xff] %v221
                %v223 = vld [vmem:[%s151 + $0x1a8] sm:$0xff]
                %224 = vst [vmem:[%s152 + $0x118] sm:$0xff] %v223
                %v225 = vld [vmem:[%s151 + $0x240] sm:$0xff]
                %226 = vst [vmem:[%s152 + $0x120] sm:$0xff] %v225
                %v227 = vld [vmem:[%s151 + $0x248] sm:$0xff]
                %228 = vst [vmem:[%s152 + $0x128] sm:$0xff] %v227
                %v229 = vld [vmem:[%s151 + $0x250] sm:$0xff]
                %230 = vst [vmem:[%s152 + $0x130] sm:$0xff] %v229
                %v231 = vld [vmem:[%s151 + $0x258] sm:$0xff]
                %232 = vst [vmem:[%s152 + $0x138] sm:$0xff] %v231
                %v233 = vld [vmem:[%s151 + $0x260] sm:$0xff]
                %234 = vst [vmem:[%s152 + $0x140] sm:$0xff] %v233
                %v235 = vld [vmem:[%s151 + $0x268] sm:$0xff]
                %236 = vst [vmem:[%s152 + $0x148] sm:$0xff] %v235
                %v237 = vld [vmem:[%s151 + $0x270] sm:$0xff]
                %238 = vst [vmem:[%s152 + $0x150] sm:$0xff] %v237
                %v239 = vld [vmem:[%s151 + $0x278] sm:$0xff]
                %240 = vst [vmem:[%s152 + $0x158] sm:$0xff] %v239
                %v241 = vld [vmem:[%s151 + $0x280] sm:$0xff]
                %242 = vst [vmem:[%s152 + $0x160] sm:$0xff] %v241
                %v243 = vld [vmem:[%s151 + $0x288] sm:$0xff]
                %244 = vst [vmem:[%s152 + $0x168] sm:$0xff] %v243
                %v245 = vld [vmem:[%s151 + $0x290] sm:$0xff]
                %246 = vst [vmem:[%s152 + $0x170] sm:$0xff] %v245
                %v247 = vld [vmem:[%s151 + $0x298] sm:$0xff]
                %248 = vst [vmem:[%s152 + $0x178] sm:$0xff] %v247
                %v249 = vld [vmem:[%s151 + $0x2a0] sm:$0xff]
                %250 = vst [vmem:[%s152 + $0x180] sm:$0xff] %v249
                %v251 = vld [vmem:[%s151 + $0x2a8] sm:$0xff]
                %252 = vst [vmem:[%s152 + $0x188] sm:$0xff] %v251
                %v253 = vld [vmem:[%s151 + $0x2b0] sm:$0xff]
                %254 = vst [vmem:[%s152 + $0x190] sm:$0xff] %v253
                %v255 = vld [vmem:[%s151 + $0x2b8] sm:$0xff]
                %256 = vst [vmem:[%s152 + $0x198] sm:$0xff] %v255
                %v257 = vld [vmem:[%s151 + $0x2c0] sm:$0xff]
                %258 = vst [vmem:[%s152 + $0x1a0] sm:$0xff] %v257
                %v259 = vld [vmem:[%s151 + $0x2c8] sm:$0xff]
                %260 = vst [vmem:[%s152 + $0x1a8] sm:$0xff] %v259
                %v261 = vld [vmem:[%s151 + $0x360] sm:$0xff]
                %262 = vst [vmem:[%s152 + $0x1b0] sm:$0xff] %v261
                %v263 = vld [vmem:[%s151 + $0x368] sm:$0xff]
                %264 = vst [vmem:[%s152 + $0x1b8] sm:$0xff] %v263
                %v265 = vld [vmem:[%s151 + $0x370] sm:$0xff]
                %266 = vst [vmem:[%s152 + $0x1c0] sm:$0xff] %v265
                %v267 = vld [vmem:[%s151 + $0x378] sm:$0xff]
                %268 = vst [vmem:[%s152 + $0x1c8] sm:$0xff] %v267
                %v269 = vld [vmem:[%s151 + $0x380] sm:$0xff]
                %270 = vst [vmem:[%s152 + $0x1d0] sm:$0xff] %v269
                %v271 = vld [vmem:[%s151 + $0x388] sm:$0xff]
                %272 = vst [vmem:[%s152 + $0x1d8] sm:$0xff] %v271
                %v273 = vld [vmem:[%s151 + $0x390] sm:$0xff]
                %274 = vst [vmem:[%s152 + $0x1e0] sm:$0xff] %v273
                %v275 = vld [vmem:[%s151 + $0x398] sm:$0xff]
                %276 = vst [vmem:[%s152 + $0x1e8] sm:$0xff] %v275
                %v277 = vld [vmem:[%s151 + $0x3a0] sm:$0xff]
                %278 = vst [vmem:[%s152 + $0x1f0] sm:$0xff] %v277
                %v279 = vld [vmem:[%s151 + $0x3a8] sm:$0xff]
                %280 = vst [vmem:[%s152 + $0x1f8] sm:$0xff] %v279
                %v281 = vld [vmem:[%s151 + $0x3b0] sm:$0xff]
                %282 = vst [vmem:[%s152 + $0x200] sm:$0xff] %v281
                %v283 = vld [vmem:[%s151 + $0x3b8] sm:$0xff]
                %284 = vst [vmem:[%s152 + $0x208] sm:$0xff] %v283
                %v285 = vld [vmem:[%s151 + $0x3c0] sm:$0xff]
                %286 = vst [vmem:[%s152 + $0x210] sm:$0xff] %v285
                %v287 = vld [vmem:[%s151 + $0x3c8] sm:$0xff]
                %288 = vst [vmem:[%s152 + $0x218] sm:$0xff] %v287
                %v289 = vld [vmem:[%s151 + $0x3d0] sm:$0xff]
                %290 = vst [vmem:[%s152 + $0x220] sm:$0xff] %v289
                %v291 = vld [vmem:[%s151 + $0x3d8] sm:$0xff]
                %292 = vst [vmem:[%s152 + $0x228] sm:$0xff] %v291
                %v293 = vld [vmem:[%s151 + $0x3e0] sm:$0xff]
                %294 = vst [vmem:[%s152 + $0x230] sm:$0xff] %v293
                %v295 = vld [vmem:[%s151 + $0x3e8] sm:$0xff]
                %296 = vst [vmem:[%s152 + $0x238] sm:$0xff] %v295
              $region45: #{net_forward.9} parent=39 // loop_footer
                %s150 = sadd.s32 1, %s146
              $region46: #{net_forward.9} parent=39 // loop_footer_branch
                %145 = sbr.rel target = $region42
              $region47: #{net_forward.9} parent=39 // loop_exit
                _
            $region40: #{net_forward.9} parent=31 // pred_fallthru
              _
          $region32: #{net_forward.9} parent=27 // pred_fallthru
            _
          %453 = vnop
        $region28: #{net_forward.9} parent=23 // pred_fallthru
          _
      $region24: #{net_forward.9} parent=5 // pred_fallthru
        _
      %p454 = scmp.le.s32.totalorder 1, %s9
      %p455 = scmp.lt.s32.totalorder %s9, 3
      %p456 = pnand %p454, %p455
      %p457 = pneg %p456
      // Predicated region
      $region63: #{net_forward.9} parent=5 // pred_check
        _
      $region64: #{net_forward.9} parent=5 // pred_check_branch
        %459 = sbr.rel (%p456) target = $region66
      $region65: #{net_forward.9} parent=5 // pred_region
        %s460 = ssub.s32 %s9, 1
        %s461 = sand.u32 %s22, 1
        %s462 = sand.u32 %s22, 1
        %s463 = smul.addr %s462, 576
        %s464 = scalar_lea.vmem [#allocation2], %s463
        // Predicated region
        $region67: #{net_forward.9} parent=65 // pred_check
          %p465 = pneg %p35
        $region68: #{net_forward.9} parent=65 // pred_check_branch
          %467 = sbr.rel (%p465) target = $region70
        $region69: #{net_forward.9} parent=65 // pred_region
          _
        $region70: #{net_forward.9} parent=65 // pred_fallthru
          _
        %s468 = sand.u32 %s22, 1
        %s469 = sand.u32 %s22, 1
        %s470 = smul.addr %s469, 576
        %s471 = scalar_lea.vmem [#allocation2], %s470
        %p472 = pneg %p35
        %p473 = pneg %p32
        %p474 = pneg %p56
        %p475 = pneg %p53
        %p476 = pneg %p77
        %p477 = pneg %p74
        %p478 = pneg %p103
        %p479 = pneg %p100
        %s480 = smul.u32 18, %s14
        %p481 = scmp.lt.s32.totalorder %s480, 35
        %s482 = scalar_select %p481, %s480, 35
        %s483 = smul.addr %s482, 8
        %s484 = scalar_lea.vmem %s3, %s483
        %s485 = smul.u32 18, %s14
        %s486 = smul.u32 18, %s14
        %p487 = scmp.lt.s32.totalorder %s486, 35
        %s488 = scalar_select %p487, %s486, 35
        %s489 = smul.addr %s488, 8
        %s490 = scalar_lea.vmem %s3, %s489
        %s491 = smul.u32 18, %s14
        %v492 = vld [vmem:[%s464] sm:$0xff]
        %v493 = vld [vmem:[%s464 + $0x8] sm:$0xff]
        %v494 = vld [vmem:[%s464 + $0x10] sm:$0xff]
        %v495 = vld [vmem:[%s464 + $0x18] sm:$0xff]
        %v496 = vld [vmem:[%s464 + $0x20] sm:$0xff]
        %v497 = vld [vmem:[%s464 + $0x28] sm:$0xff]
        %v498 = vld [vmem:[%s464 + $0x30] sm:$0xff]
        %v499 = vld [vmem:[%s464 + $0x38] sm:$0xff]
        %v500 = vld [vmem:[%s464 + $0x40] sm:$0xff]
        %v501 = vld [vmem:[%s464 + $0x48] sm:$0xff]
        %v502 = vld [vmem:[%s464 + $0x50] sm:$0xff]
        %v503 = vld [vmem:[%s464 + $0x58] sm:$0xff]
        %v504 = vld [vmem:[%s464 + $0x60] sm:$0xff]
        %v505 = vld [vmem:[%s464 + $0x68] sm:$0xff]
        %v506 = vld [vmem:[%s464 + $0x70] sm:$0xff]
        %v507 = vld [vmem:[%s464 + $0x78] sm:$0xff]
        %v508 = vld [vmem:[%s464 + $0x80] sm:$0xff]
        %v509 = vld [vmem:[%s464 + $0x88] sm:$0xff]
        %v510 = vld [vmem:[%s1] sm:$0xff]
        %v511 = vld [vmem:[%s1 + $0x8] sm:$0xff]
        %v512 = vld [vmem:[%s1 + $0x10] sm:$0xff]
        %v513 = vld [vmem:[%s1 + $0x18] sm:$0xff]
        %vm514 = vcmask 261120
        %v516 = vsel %vm514, %v492, 0
        %v519 = vsel %vm514, %v493, 0
        %v522 = vsel %vm514, %v494, 0
        %v525 = vsel %vm514, %v495, 0
        %v528 = vsel %vm514, %v496, 0
        %v531 = vsel %vm514, %v497, 0
        %v534 = vsel %vm514, %v498, 0
        %v537 = vsel %vm514, %v499, 0
        %v540 = vsel %vm514, %v500, 0
        %v543 = vsel %vm514, %v501, 0
        %v546 = vsel %vm514, %v502, 0
        %v549 = vsel %vm514, %v503, 0
        %v552 = vsel %vm514, %v504, 0
        %v555 = vsel %vm514, %v505, 0
        %v558 = vsel %vm514, %v506, 0
        %v561 = vsel %vm514, %v507, 0
        %v564 = vsel %vm514, %v508, 0
        %v567 = vsel %vm514, %v509, 0
        %569 = vmatprep.subr.mxu0 0.0
        %570 = vmatpush1.msra.mxu0 %v510
        %571 = vmatprep.subr.mxu0 0.0
        %572 = vmatpush1.msra.mxu0 %v511
        %573 = vmatprep.subr.mxu0 0.0
        %574 = vmatpush1.msra.mxu0 %v512
        %575 = vmatprep.subr.mxu0 0.0
        %576 = vmatpush1.msra.mxu0 %v513
        %577 = vmatprep.subr.mxu0 0.0
        %578 = vmatpush1.msra.mxu0 0.0
        %579 = vmatprep.subr.mxu0 0.0
        %580 = vmatpush1.msra.mxu0 0.0
        %581 = vmatprep.subr.mxu0 0.0
        %582 = vmatpush1.msra.mxu0 0.0
        %583 = vmatprep.subr.mxu0 0.0
        %584 = vmatpush1.msra.mxu0 0.0
        %585 = vmatprep.subr.mxu0 0.0
        %586 = vmatpush1.msra.mxu0 0.0
        %587 = vmatprep.subr.mxu0 0.0
        %588 = vmatpush1.msra.mxu0 0.0
        %589 = vmatprep.subr.mxu0 0.0
        %590 = vmatpush1.msra.mxu0 0.0
        %591 = vmatprep.subr.mxu0 0.0
        %592 = vmatpush1.msra.mxu0 0.0
        %593 = vmatprep.subr.mxu0 0.0
        %594 = vmatpush1.msra.mxu0 0.0
        %595 = vmatprep.subr.mxu0 0.0
        %596 = vmatpush1.msra.mxu0 0.0
        %597 = vmatprep.subr.mxu0 0.0
        %598 = vmatpush1.msra.mxu0 0.0
        %599 = vmatprep.subr.mxu0 0.0
        %600 = vmatpush1.msra.mxu0 0.0
        %601 = vmatprep.subr.mxu0 0.0
        %602 = vmatpush1.msra.mxu0 0.0
        %603 = vmatprep.subr.mxu0 0.0
        %604 = vmatpush1.msra.mxu0 0.0
        %605 = vmatprep.subr.mxu0 0.0
        %606 = vmatpush1.msra.mxu0 0.0
        %607 = vmatprep.subr.mxu0 0.0
        %608 = vmatpush1.msra.mxu0 0.0
        %609 = vmatprep.subr.mxu0 0.0
        %610 = vmatpush1.msra.mxu0 0.0
        %611 = vmatprep.subr.mxu0 0.0
        %612 = vmatpush1.msra.mxu0 0.0
        %613 = vmatprep.subr.mxu0 0.0
        %614 = vmatpush1.msra.mxu0 0.0
        %615 = vmatprep.subr.mxu0 0.0
        %616 = vmatpush1.msra.mxu0 0.0
        %617 = vmatprep.subr.mxu0 0.0
        %618 = vmatpush1.msra.mxu0 0.0
        %619 = vmatprep.subr.mxu0 0.0
        %620 = vmatpush1.msra.mxu0 0.0
        %621 = vmatprep.subr.mxu0 0.0
        %622 = vmatpush1.msra.mxu0 0.0
        %623 = vmatprep.subr.mxu0 0.0
        %624 = vmatpush1.msra.mxu0 0.0
        %625 = vmatprep.subr.mxu0 0.0
        %626 = vmatpush1.msra.mxu0 0.0
        %627 = vmatprep.subr.mxu0 0.0
        %628 = vmatpush1.msra.mxu0 0.0
        %629 = vmatprep.subr.mxu0 0.0
        %630 = vmatpush1.msra.mxu0 0.0
        %631 = vmatprep.subr.mxu0 0.0
        %632 = vmatpush1.msra.mxu0 0.0
        %633 = vmatprep.mubr.f32.mxu0 0.0
        %634 = vmatmul.mubr.f32.gmra.mrb[0].mxu0 %v516
        %v635 = vpop.f32.mrb[0].mxu0
        %v636 = vadd.f32 0.0, %v635
        %v637 = vpop.f32.mrb[0].mxu0
        %638 = vmatprep.mubr.f32.mxu0 0.0
        %639 = vmatmul.mubr.f32.gmra.mrb[0].mxu0 %v519
        %v640 = vpop.f32.mrb[0].mxu0
        %v641 = vadd.f32 0.0, %v640
        %v642 = vpop.f32.mrb[0].mxu0
        %643 = vmatprep.mubr.f32.mxu0 0.0
        %644 = vmatmul.mubr.f32.gmra.mrb[0].mxu0 %v522
        %v645 = vpop.f32.mrb[0].mxu0
        %v646 = vadd.f32 0.0, %v645
        %v647 = vpop.f32.mrb[0].mxu0
        %648 = vmatprep.mubr.f32.mxu0 0.0
        %649 = vmatmul.mubr.f32.gmra.mrb[0].mxu0 %v525
        %v650 = vpop.f32.mrb[0].mxu0
        %v651 = vadd.f32 0.0, %v650
        %v652 = vpop.f32.mrb[0].mxu0
        %653 = vmatprep.mubr.f32.mxu0 0.0
        %654 = vmatmul.mubr.f32.gmra.mrb[0].mxu0 %v528
        %v655 = vpop.f32.mrb[0].mxu0
        %v656 = vadd.f32 0.0, %v655
        %v657 = vpop.f32.mrb[0].mxu0
        %658 = vmatprep.mubr.f32.mxu0 0.0
        %659 = vmatmul.mubr.f32.gmra.mrb[0].mxu0 %v531
        %v660 = vpop.f32.mrb[0].mxu0
        %v661 = vadd.f32 0.0, %v660
        %v662 = vpop.f32.mrb[0].mxu0
        %663 = vmatprep.mubr.f32.mxu0 0.0
        %664 = vmatmul.mubr.f32.gmra.mrb[0].mxu0 %v534
        %v665 = vpop.f32.mrb[0].mxu0
        %v666 = vadd.f32 0.0, %v665
        %v667 = vpop.f32.mrb[0].mxu0
        %668 = vmatprep.mubr.f32.mxu0 0.0
        %669 = vmatmul.mubr.f32.gmra.mrb[0].mxu0 %v537
        %v670 = vpop.f32.mrb[0].mxu0
        %v671 = vadd.f32 0.0, %v670
        %v672 = vpop.f32.mrb[0].mxu0
        %673 = vmatprep.mubr.f32.mxu0 0.0
        %674 = vmatmul.mubr.f32.gmra.mrb[0].mxu0 %v540
        %v675 = vpop.f32.mrb[0].mxu0
        %v676 = vadd.f32 0.0, %v675
        %v677 = vpop.f32.mrb[0].mxu0
        %678 = vmatprep.mubr.f32.mxu0 0.0
        %679 = vmatmul.mubr.f32.gmra.mrb[0].mxu0 %v543
        %v680 = vpop.f32.mrb[0].mxu0
        %v681 = vadd.f32 0.0, %v680
        %v682 = vpop.f32.mrb[0].mxu0
        %683 = vmatprep.mubr.f32.mxu0 0.0
        %684 = vmatmul.mubr.f32.gmra.mrb[0].mxu0 %v546
        %v685 = vpop.f32.mrb[0].mxu0
        %v686 = vadd.f32 0.0, %v685
        %v687 = vpop.f32.mrb[0].mxu0
        %688 = vmatprep.mubr.f32.mxu0 0.0
        %689 = vmatmul.mubr.f32.gmra.mrb[0].mxu0 %v549
        %v690 = vpop.f32.mrb[0].mxu0
        %v691 = vadd.f32 0.0, %v690
        %v692 = vpop.f32.mrb[0].mxu0
        %693 = vmatprep.mubr.f32.mxu0 0.0
        %694 = vmatmul.mubr.f32.gmra.mrb[0].mxu0 %v552
        %v695 = vpop.f32.mrb[0].mxu0
        %v696 = vadd.f32 0.0, %v695
        %v697 = vpop.f32.mrb[0].mxu0
        %698 = vmatprep.mubr.f32.mxu0 0.0
        %699 = vmatmul.mubr.f32.gmra.mrb[0].mxu0 %v555
        %v700 = vpop.f32.mrb[0].mxu0
        %v701 = vadd.f32 0.0, %v700
        %v702 = vpop.f32.mrb[0].mxu0
        %703 = vmatprep.mubr.f32.mxu0 0.0
        %704 = vmatmul.mubr.f32.gmra.mrb[0].mxu0 %v558
        %v705 = vpop.f32.mrb[0].mxu0
        %v706 = vadd.f32 0.0, %v705
        %v707 = vpop.f32.mrb[0].mxu0
        %708 = vmatprep.mubr.f32.mxu0 0.0
        %709 = vmatmul.mubr.f32.gmra.mrb[0].mxu0 %v561
        %v710 = vpop.f32.mrb[0].mxu0
        %v711 = vadd.f32 0.0, %v710
        %v712 = vpop.f32.mrb[0].mxu0
        %713 = vmatprep.mubr.f32.mxu0 0.0
        %714 = vmatmul.mubr.f32.gmra.mrb[0].mxu0 %v564
        %v715 = vpop.f32.mrb[0].mxu0
        %v716 = vadd.f32 0.0, %v715
        %v717 = vpop.f32.mrb[0].mxu0
        %718 = vmatprep.mubr.f32.mxu0 0.0
        %719 = vmatmul.mubr.f32.gmra.mrb[0].mxu0 %v567
        %v720 = vpop.f32.mrb[0].mxu0
        %v721 = vadd.f32 0.0, %v720
        %v722 = vpop.f32.mrb[0].mxu0
        %723 = vdwg.mxu0
        %s724 = scalar_lea.vmem %s464, 144 [#allocation2]
        %v725 = vld [vmem:[%s724] sm:$0xff]
        %v726 = vld [vmem:[%s724 + $0x8] sm:$0xff]
        %v727 = vld [vmem:[%s724 + $0x10] sm:$0xff]
        %v728 = vld [vmem:[%s724 + $0x18] sm:$0xff]
        %v729 = vld [vmem:[%s724 + $0x20] sm:$0xff]
        %v730 = vld [vmem:[%s724 + $0x28] sm:$0xff]
        %v731 = vld [vmem:[%s724 + $0x30] sm:$0xff]
        %v732 = vld [vmem:[%s724 + $0x38] sm:$0xff]
        %v733 = vld [vmem:[%s724 + $0x40] sm:$0xff]
        %v734 = vld [vmem:[%s724 + $0x48] sm:$0xff]
        %v735 = vld [vmem:[%s724 + $0x50] sm:$0xff]
        %v736 = vld [vmem:[%s724 + $0x58] sm:$0xff]
        %v737 = vld [vmem:[%s724 + $0x60] sm:$0xff]
        %v738 = vld [vmem:[%s724 + $0x68] sm:$0xff]
        %v739 = vld [vmem:[%s724 + $0x70] sm:$0xff]
        %v740 = vld [vmem:[%s724 + $0x78] sm:$0xff]
        %v741 = vld [vmem:[%s724 + $0x80] sm:$0xff]
        %v742 = vld [vmem:[%s724 + $0x88] sm:$0xff]
        %v744 = vsel %vm514, %v725, 0
        %v747 = vsel %vm514, %v726, 0
        %v750 = vsel %vm514, %v727, 0
        %v753 = vsel %vm514, %v728, 0
        %v756 = vsel %vm514, %v729, 0
        %v759 = vsel %vm514, %v730, 0
        %v762 = vsel %vm514, %v731, 0
        %v765 = vsel %vm514, %v732, 0
        %v768 = vsel %vm514, %v733, 0
        %v771 = vsel %vm514, %v734, 0
        %v774 = vsel %vm514, %v735, 0
        %v777 = vsel %vm514, %v736, 0
        %v780 = vsel %vm514, %v737, 0
        %v783 = vsel %vm514, %v738, 0
        %v786 = vsel %vm514, %v739, 0
        %v789 = vsel %vm514, %v740, 0
        %v792 = vsel %vm514, %v741, 0
        %v795 = vsel %vm514, %v742, 0
        %797 = vmatprep.subr.mxu0 0.0
        %798 = vmatpush1.msra.mxu0 %v510
        %799 = vmatprep.subr.mxu0 0.0
        %800 = vmatpush1.msra.mxu0 %v511
        %801 = vmatprep.subr.mxu0 0.0
        %802 = vmatpush1.msra.mxu0 %v512
        %803 = vmatprep.subr.mxu0 0.0
        %804 = vmatpush1.msra.mxu0 %v513
        %805 = vmatprep.subr.mxu0 0.0
        %806 = vmatpush1.msra.mxu0 0.0
        %807 = vmatprep.subr.mxu0 0.0
        %808 = vmatpush1.msra.mxu0 0.0
        %809 = vmatprep.subr.mxu0 0.0
        %810 = vmatpush1.msra.mxu0 0.0
        %811 = vmatprep.subr.mxu0 0.0
        %812 = vmatpush1.msra.mxu0 0.0
        %813 = vmatprep.subr.mxu0 0.0
        %814 = vmatpush1.msra.mxu0 0.0
        %815 = vmatprep.subr.mxu0 0.0
        %816 = vmatpush1.msra.mxu0 0.0
        %817 = vmatprep.subr.mxu0 0.0
        %818 = vmatpush1.msra.mxu0 0.0
        %819 = vmatprep.subr.mxu0 0.0
        %820 = vmatpush1.msra.mxu0 0.0
        %821 = vmatprep.subr.mxu0 0.0
        %822 = vmatpush1.msra.mxu0 0.0
        %823 = vmatprep.subr.mxu0 0.0
        %824 = vmatpush1.msra.mxu0 0.0
        %825 = vmatprep.subr.mxu0 0.0
        %826 = vmatpush1.msra.mxu0 0.0
        %827 = vmatprep.subr.mxu0 0.0
        %828 = vmatpush1.msra.mxu0 0.0
        %829 = vmatprep.subr.mxu0 0.0
        %830 = vmatpush1.msra.mxu0 0.0
        %831 = vmatprep.subr.mxu0 0.0
        %832 = vmatpush1.msra.mxu0 0.0
        %833 = vmatprep.subr.mxu0 0.0
        %834 = vmatpush1.msra.mxu0 0.0
        %835 = vmatprep.subr.mxu0 0.0
        %836 = vmatpush1.msra.mxu0 0.0
        %837 = vmatprep.subr.mxu0 0.0
        %838 = vmatpush1.msra.mxu0 0.0
        %839 = vmatprep.subr.mxu0 0.0
        %840 = vmatpush1.msra.mxu0 0.0
        %841 = vmatprep.subr.mxu0 0.0
        %842 = vmatpush1.msra.mxu0 0.0
        %843 = vmatprep.subr.mxu0 0.0
        %844 = vmatpush1.msra.mxu0 0.0
        %845 = vmatprep.subr.mxu0 0.0
        %846 = vmatpush1.msra.mxu0 0.0
        %847 = vmatprep.subr.mxu0 0.0
        %848 = vmatpush1.msra.mxu0 0.0
        %849 = vmatprep.subr.mxu0 0.0
        %850 = vmatpush1.msra.mxu0 0.0
        %851 = vmatprep.subr.mxu0 0.0
        %852 = vmatpush1.msra.mxu0 0.0
        %853 = vmatprep.subr.mxu0 0.0
        %854 = vmatpush1.msra.mxu0 0.0
        %855 = vmatprep.subr.mxu0 0.0
        %856 = vmatpush1.msra.mxu0 0.0
        %857 = vmatprep.subr.mxu0 0.0
        %858 = vmatpush1.msra.mxu0 0.0
        %859 = vmatprep.subr.mxu0 0.0
        %860 = vmatpush1.msra.mxu0 0.0
        %861 = vmatprep.mubr.f32.mxu0 0.0
        %862 = vmatmul.mubr.f32.gmra.mrb[0].mxu0 %v744
        %v863 = vpop.f32.mrb[0].mxu0
        %v864 = vadd.f32 0.0, %v863
        %v865 = vpop.f32.mrb[0].mxu0
        %866 = vmatprep.mubr.f32.mxu0 0.0
        %867 = vmatmul.mubr.f32.gmra.mrb[0].mxu0 %v747
        %v868 = vpop.f32.mrb[0].mxu0
        %v869 = vadd.f32 0.0, %v868
        %v870 = vpop.f32.mrb[0].mxu0
        %871 = vmatprep.mubr.f32.mxu0 0.0
        %872 = vmatmul.mubr.f32.gmra.mrb[0].mxu0 %v750
        %v873 = vpop.f32.mrb[0].mxu0
        %v874 = vadd.f32 0.0, %v873
        %v875 = vpop.f32.mrb[0].mxu0
        %876 = vmatprep.mubr.f32.mxu0 0.0
        %877 = vmatmul.mubr.f32.gmra.mrb[0].mxu0 %v753
        %v878 = vpop.f32.mrb[0].mxu0
        %v879 = vadd.f32 0.0, %v878
        %v880 = vpop.f32.mrb[0].mxu0
        %881 = vmatprep.mubr.f32.mxu0 0.0
        %882 = vmatmul.mubr.f32.gmra.mrb[0].mxu0 %v756
        %v883 = vpop.f32.mrb[0].mxu0
        %v884 = vadd.f32 0.0, %v883
        %v885 = vpop.f32.mrb[0].mxu0
        %886 = vmatprep.mubr.f32.mxu0 0.0
        %887 = vmatmul.mubr.f32.gmra.mrb[0].mxu0 %v759
        %v888 = vpop.f32.mrb[0].mxu0
        %v889 = vadd.f32 0.0, %v888
        %v890 = vpop.f32.mrb[0].mxu0
        %891 = vmatprep.mubr.f32.mxu0 0.0
        %892 = vmatmul.mubr.f32.gmra.mrb[0].mxu0 %v762
        %v893 = vpop.f32.mrb[0].mxu0
        %v894 = vadd.f32 0.0, %v893
        %v895 = vpop.f32.mrb[0].mxu0
        %896 = vmatprep.mubr.f32.mxu0 0.0
        %897 = vmatmul.mubr.f32.gmra.mrb[0].mxu0 %v765
        %v898 = vpop.f32.mrb[0].mxu0
        %v899 = vadd.f32 0.0, %v898
        %v900 = vpop.f32.mrb[0].mxu0
        %901 = vmatprep.mubr.f32.mxu0 0.0
        %902 = vmatmul.mubr.f32.gmra.mrb[0].mxu0 %v768
        %v903 = vpop.f32.mrb[0].mxu0
        %v904 = vadd.f32 0.0, %v903
        %v905 = vpop.f32.mrb[0].mxu0
        %906 = vmatprep.mubr.f32.mxu0 0.0
        %907 = vmatmul.mubr.f32.gmra.mrb[0].mxu0 %v771
        %v908 = vpop.f32.mrb[0].mxu0
        %v909 = vadd.f32 0.0, %v908
        %v910 = vpop.f32.mrb[0].mxu0
        %911 = vmatprep.mubr.f32.mxu0 0.0
        %912 = vmatmul.mubr.f32.gmra.mrb[0].mxu0 %v774
        %v913 = vpop.f32.mrb[0].mxu0
        %v914 = vadd.f32 0.0, %v913
        %v915 = vpop.f32.mrb[0].mxu0
        %916 = vmatprep.mubr.f32.mxu0 0.0
        %917 = vmatmul.mubr.f32.gmra.mrb[0].mxu0 %v777
        %v918 = vpop.f32.mrb[0].mxu0
        %v919 = vadd.f32 0.0, %v918
        %v920 = vpop.f32.mrb[0].mxu0
        %921 = vmatprep.mubr.f32.mxu0 0.0
        %922 = vmatmul.mubr.f32.gmra.mrb[0].mxu0 %v780
        %v923 = vpop.f32.mrb[0].mxu0
        %v924 = vadd.f32 0.0, %v923
        %v925 = vpop.f32.mrb[0].mxu0
        %926 = vmatprep.mubr.f32.mxu0 0.0
        %927 = vmatmul.mubr.f32.gmra.mrb[0].mxu0 %v783
        %v928 = vpop.f32.mrb[0].mxu0
        %v929 = vadd.f32 0.0, %v928
        %v930 = vpop.f32.mrb[0].mxu0
        %931 = vmatprep.mubr.f32.mxu0 0.0
        %932 = vmatmul.mubr.f32.gmra.mrb[0].mxu0 %v786
        %v933 = vpop.f32.mrb[0].mxu0
        %v934 = vadd.f32 0.0, %v933
        %v935 = vpop.f32.mrb[0].mxu0
        %936 = vmatprep.mubr.f32.mxu0 0.0
        %937 = vmatmul.mubr.f32.gmra.mrb[0].mxu0 %v789
        %v938 = vpop.f32.mrb[0].mxu0
        %v939 = vadd.f32 0.0, %v938
        %v940 = vpop.f32.mrb[0].mxu0
        %941 = vmatprep.mubr.f32.mxu0 0.0
        %942 = vmatmul.mubr.f32.gmra.mrb[0].mxu0 %v792
        %v943 = vpop.f32.mrb[0].mxu0
        %v944 = vadd.f32 0.0, %v943
        %v945 = vpop.f32.mrb[0].mxu0
        %946 = vmatprep.mubr.f32.mxu0 0.0
        %947 = vmatmul.mubr.f32.gmra.mrb[0].mxu0 %v795
        %v948 = vpop.f32.mrb[0].mxu0
        %v949 = vadd.f32 0.0, %v948
        %v950 = vpop.f32.mrb[0].mxu0
        %951 = vdwg.mxu0
        %v952 = vmax.f32 %v636, %v864
        %v953 = vmax.f32 %v641, %v869
        %v954 = vmax.f32 %v646, %v874
        %v955 = vmax.f32 %v651, %v879
        %v956 = vmax.f32 %v656, %v884
        %v957 = vmax.f32 %v661, %v889
        %v958 = vmax.f32 %v666, %v894
        %v959 = vmax.f32 %v671, %v899
        %v960 = vmax.f32 %v676, %v904
        %v961 = vmax.f32 %v681, %v909
        %v962 = vmax.f32 %v686, %v914
        %v963 = vmax.f32 %v691, %v919
        %v964 = vmax.f32 %v696, %v924
        %v965 = vmax.f32 %v701, %v929
        %v966 = vmax.f32 %v706, %v934
        %v967 = vmax.f32 %v711, %v939
        %v968 = vmax.f32 %v716, %v944
        %v969 = vmax.f32 %v721, %v949
        %s970 = scalar_lea.vmem %s464, 288 [#allocation2]
        %v971 = vld [vmem:[%s970] sm:$0xff]
        %v972 = vld [vmem:[%s970 + $0x8] sm:$0xff]
        %v973 = vld [vmem:[%s970 + $0x10] sm:$0xff]
        %v974 = vld [vmem:[%s970 + $0x18] sm:$0xff]
        %v975 = vld [vmem:[%s970 + $0x20] sm:$0xff]
        %v976 = vld [vmem:[%s970 + $0x28] sm:$0xff]
        %v977 = vld [vmem:[%s970 + $0x30] sm:$0xff]
        %v978 = vld [vmem:[%s970 + $0x38] sm:$0xff]
        %v979 = vld [vmem:[%s970 + $0x40] sm:$0xff]
        %v980 = vld [vmem:[%s970 + $0x48] sm:$0xff]
        %v981 = vld [vmem:[%s970 + $0x50] sm:$0xff]
        %v982 = vld [vmem:[%s970 + $0x58] sm:$0xff]
        %v983 = vld [vmem:[%s970 + $0x60] sm:$0xff]
        %v984 = vld [vmem:[%s970 + $0x68] sm:$0xff]
        %v985 = vld [vmem:[%s970 + $0x70] sm:$0xff]
        %v986 = vld [vmem:[%s970 + $0x78] sm:$0xff]
        %v987 = vld [vmem:[%s970 + $0x80] sm:$0xff]
        %v988 = vld [vmem:[%s970 + $0x88] sm:$0xff]
        %v990 = vsel %vm514, %v971, 0
        %v993 = vsel %vm514, %v972, 0
        %v996 = vsel %vm514, %v973, 0
        %v999 = vsel %vm514, %v974, 0
        %v1002 = vsel %vm514, %v975, 0
        %v1005 = vsel %vm514, %v976, 0
        %v1008 = vsel %vm514, %v977, 0
        %v1011 = vsel %vm514, %v978, 0
        %v1014 = vsel %vm514, %v979, 0
        %v1017 = vsel %vm514, %v980, 0
        %v1020 = vsel %vm514, %v981, 0
        %v1023 = vsel %vm514, %v982, 0
        %v1026 = vsel %vm514, %v983, 0
        %v1029 = vsel %vm514, %v984, 0
        %v1032 = vsel %vm514, %v985, 0
        %v1035 = vsel %vm514, %v986, 0
        %v1038 = vsel %vm514, %v987, 0
        %v1041 = vsel %vm514, %v988, 0
        %1043 = vmatprep.subr.mxu0 0.0
        %1044 = vmatpush1.msra.mxu0 %v510
        %1045 = vmatprep.subr.mxu0 0.0
        %1046 = vmatpush1.msra.mxu0 %v511
        %1047 = vmatprep.subr.mxu0 0.0
        %1048 = vmatpush1.msra.mxu0 %v512
        %1049 = vmatprep.subr.mxu0 0.0
        %1050 = vmatpush1.msra.mxu0 %v513
        %1051 = vmatprep.subr.mxu0 0.0
        %1052 = vmatpush1.msra.mxu0 0.0
        %1053 = vmatprep.subr.mxu0 0.0
        %1054 = vmatpush1.msra.mxu0 0.0
        %1055 = vmatprep.subr.mxu0 0.0
        %1056 = vmatpush1.msra.mxu0 0.0
        %1057 = vmatprep.subr.mxu0 0.0
        %1058 = vmatpush1.msra.mxu0 0.0
        %1059 = vmatprep.subr.mxu0 0.0
        %1060 = vmatpush1.msra.mxu0 0.0
        %1061 = vmatprep.subr.mxu0 0.0
        %1062 = vmatpush1.msra.mxu0 0.0
        %1063 = vmatprep.subr.mxu0 0.0
        %1064 = vmatpush1.msra.mxu0 0.0
        %1065 = vmatprep.subr.mxu0 0.0
        %1066 = vmatpush1.msra.mxu0 0.0
        %1067 = vmatprep.subr.mxu0 0.0
        %1068 = vmatpush1.msra.mxu0 0.0
        %1069 = vmatprep.subr.mxu0 0.0
        %1070 = vmatpush1.msra.mxu0 0.0
        %1071 = vmatprep.subr.mxu0 0.0
        %1072 = vmatpush1.msra.mxu0 0.0
        %1073 = vmatprep.subr.mxu0 0.0
        %1074 = vmatpush1.msra.mxu0 0.0
        %1075 = vmatprep.subr.mxu0 0.0
        %1076 = vmatpush1.msra.mxu0 0.0
        %1077 = vmatprep.subr.mxu0 0.0
        %1078 = vmatpush1.msra.mxu0 0.0
        %1079 = vmatprep.subr.mxu0 0.0
        %1080 = vmatpush1.msra.mxu0 0.0
        %1081 = vmatprep.subr.mxu0 0.0
        %1082 = vmatpush1.msra.mxu0 0.0
        %1083 = vmatprep.subr.mxu0 0.0
        %1084 = vmatpush1.msra.mxu0 0.0
        %1085 = vmatprep.subr.mxu0 0.0
        %1086 = vmatpush1.msra.mxu0 0.0
        %1087 = vmatprep.subr.mxu0 0.0
        %1088 = vmatpush1.msra.mxu0 0.0
        %1089 = vmatprep.subr.mxu0 0.0
        %1090 = vmatpush1.msra.mxu0 0.0
        %1091 = vmatprep.subr.mxu0 0.0
        %1092 = vmatpush1.msra.mxu0 0.0
        %1093 = vmatprep.subr.mxu0 0.0
        %1094 = vmatpush1.msra.mxu0 0.0
        %1095 = vmatprep.subr.mxu0 0.0
        %1096 = vmatpush1.msra.mxu0 0.0
        %1097 = vmatprep.subr.mxu0 0.0
        %1098 = vmatpush1.msra.mxu0 0.0
        %1099 = vmatprep.subr.mxu0 0.0
        %1100 = vmatpush1.msra.mxu0 0.0
        %1101 = vmatprep.subr.mxu0 0.0
        %1102 = vmatpush1.msra.mxu0 0.0
        %1103 = vmatprep.subr.mxu0 0.0
        %1104 = vmatpush1.msra.mxu0 0.0
        %1105 = vmatprep.subr.mxu0 0.0
        %1106 = vmatpush1.msra.mxu0 0.0
        %1107 = vmatprep.mubr.f32.mxu0 0.0
        %1108 = vmatmul.mubr.f32.gmra.mrb[0].mxu0 %v990
        %v1109 = vpop.f32.mrb[0].mxu0
        %v1110 = vadd.f32 0.0, %v1109
        %v1111 = vpop.f32.mrb[0].mxu0
        %1112 = vmatprep.mubr.f32.mxu0 0.0
        %1113 = vmatmul.mubr.f32.gmra.mrb[0].mxu0 %v993
        %v1114 = vpop.f32.mrb[0].mxu0
        %v1115 = vadd.f32 0.0, %v1114
        %v1116 = vpop.f32.mrb[0].mxu0
        %1117 = vmatprep.mubr.f32.mxu0 0.0
        %1118 = vmatmul.mubr.f32.gmra.mrb[0].mxu0 %v996
        %v1119 = vpop.f32.mrb[0].mxu0
        %v1120 = vadd.f32 0.0, %v1119
        %v1121 = vpop.f32.mrb[0].mxu0
        %1122 = vmatprep.mubr.f32.mxu0 0.0
        %1123 = vmatmul.mubr.f32.gmra.mrb[0].mxu0 %v999
        %v1124 = vpop.f32.mrb[0].mxu0
        %v1125 = vadd.f32 0.0, %v1124
        %v1126 = vpop.f32.mrb[0].mxu0
        %1127 = vmatprep.mubr.f32.mxu0 0.0
        %1128 = vmatmul.mubr.f32.gmra.mrb[0].mxu0 %v1002
        %v1129 = vpop.f32.mrb[0].mxu0
        %v1130 = vadd.f32 0.0, %v1129
        %v1131 = vpop.f32.mrb[0].mxu0
        %1132 = vmatprep.mubr.f32.mxu0 0.0
        %1133 = vmatmul.mubr.f32.gmra.mrb[0].mxu0 %v1005
        %v1134 = vpop.f32.mrb[0].mxu0
        %v1135 = vadd.f32 0.0, %v1134
        %v1136 = vpop.f32.mrb[0].mxu0
        %1137 = vmatprep.mubr.f32.mxu0 0.0
        %1138 = vmatmul.mubr.f32.gmra.mrb[0].mxu0 %v1008
        %v1139 = vpop.f32.mrb[0].mxu0
        %v1140 = vadd.f32 0.0, %v1139
        %v1141 = vpop.f32.mrb[0].mxu0
        %1142 = vmatprep.mubr.f32.mxu0 0.0
        %1143 = vmatmul.mubr.f32.gmra.mrb[0].mxu0 %v1011
        %v1144 = vpop.f32.mrb[0].mxu0
        %v1145 = vadd.f32 0.0, %v1144
        %v1146 = vpop.f32.mrb[0].mxu0
        %1147 = vmatprep.mubr.f32.mxu0 0.0
        %1148 = vmatmul.mubr.f32.gmra.mrb[0].mxu0 %v1014
        %v1149 = vpop.f32.mrb[0].mxu0
        %v1150 = vadd.f32 0.0, %v1149
        %v1151 = vpop.f32.mrb[0].mxu0
        %1152 = vmatprep.mubr.f32.mxu0 0.0
        %1153 = vmatmul.mubr.f32.gmra.mrb[0].mxu0 %v1017
        %v1154 = vpop.f32.mrb[0].mxu0
        %v1155 = vadd.f32 0.0, %v1154
        %v1156 = vpop.f32.mrb[0].mxu0
        %1157 = vmatprep.mubr.f32.mxu0 0.0
        %1158 = vmatmul.mubr.f32.gmra.mrb[0].mxu0 %v1020
        %v1159 = vpop.f32.mrb[0].mxu0
        %v1160 = vadd.f32 0.0, %v1159
        %v1161 = vpop.f32.mrb[0].mxu0
        %1162 = vmatprep.mubr.f32.mxu0 0.0
        %1163 = vmatmul.mubr.f32.gmra.mrb[0].mxu0 %v1023
        %v1164 = vpop.f32.mrb[0].mxu0
        %v1165 = vadd.f32 0.0, %v1164
        %v1166 = vpop.f32.mrb[0].mxu0
        %1167 = vmatprep.mubr.f32.mxu0 0.0
        %1168 = vmatmul.mubr.f32.gmra.mrb[0].mxu0 %v1026
        %v1169 = vpop.f32.mrb[0].mxu0
        %v1170 = vadd.f32 0.0, %v1169
        %v1171 = vpop.f32.mrb[0].mxu0
        %1172 = vmatprep.mubr.f32.mxu0 0.0
        %1173 = vmatmul.mubr.f32.gmra.mrb[0].mxu0 %v1029
        %v1174 = vpop.f32.mrb[0].mxu0
        %v1175 = vadd.f32 0.0, %v1174
        %v1176 = vpop.f32.mrb[0].mxu0
        %1177 = vmatprep.mubr.f32.mxu0 0.0
        %1178 = vmatmul.mubr.f32.gmra.mrb[0].mxu0 %v1032
        %v1179 = vpop.f32.mrb[0].mxu0
        %v1180 = vadd.f32 0.0, %v1179
        %v1181 = vpop.f32.mrb[0].mxu0
        %1182 = vmatprep.mubr.f32.mxu0 0.0
        %1183 = vmatmul.mubr.f32.gmra.mrb[0].mxu0 %v1035
        %v1184 = vpop.f32.mrb[0].mxu0
        %v1185 = vadd.f32 0.0, %v1184
        %v1186 = vpop.f32.mrb[0].mxu0
        %1187 = vmatprep.mubr.f32.mxu0 0.0
        %1188 = vmatmul.mubr.f32.gmra.mrb[0].mxu0 %v1038
        %v1189 = vpop.f32.mrb[0].mxu0
        %v1190 = vadd.f32 0.0, %v1189
        %v1191 = vpop.f32.mrb[0].mxu0
        %1192 = vmatprep.mubr.f32.mxu0 0.0
        %1193 = vmatmul.mubr.f32.gmra.mrb[0].mxu0 %v1041
        %v1194 = vpop.f32.mrb[0].mxu0
        %v1195 = vadd.f32 0.0, %v1194
        %v1196 = vpop.f32.mrb[0].mxu0
        %1197 = vdwg.mxu0
        %v1198 = vmax.f32 %v952, %v1110
        %v1199 = vmax.f32 %v953, %v1115
        %v1200 = vmax.f32 %v954, %v1120
        %v1201 = vmax.f32 %v955, %v1125
        %v1202 = vmax.f32 %v956, %v1130
        %v1203 = vmax.f32 %v957, %v1135
        %v1204 = vmax.f32 %v958, %v1140
        %v1205 = vmax.f32 %v959, %v1145
        %v1206 = vmax.f32 %v960, %v1150
        %v1207 = vmax.f32 %v961, %v1155
        %v1208 = vmax.f32 %v962, %v1160
        %v1209 = vmax.f32 %v963, %v1165
        %v1210 = vmax.f32 %v964, %v1170
        %v1211 = vmax.f32 %v965, %v1175
        %v1212 = vmax.f32 %v966, %v1180
        %v1213 = vmax.f32 %v967, %v1185
        %v1214 = vmax.f32 %v968, %v1190
        %v1215 = vmax.f32 %v969, %v1195
        %s1216 = scalar_lea.vmem %s464, 432 [#allocation2]
        %v1217 = vld [vmem:[%s1216] sm:$0xff]
        %v1218 = vld [vmem:[%s1216 + $0x8] sm:$0xff]
        %v1219 = vld [vmem:[%s1216 + $0x10] sm:$0xff]
        %v1220 = vld [vmem:[%s1216 + $0x18] sm:$0xff]
        %v1221 = vld [vmem:[%s1216 + $0x20] sm:$0xff]
        %v1222 = vld [vmem:[%s1216 + $0x28] sm:$0xff]
        %v1223 = vld [vmem:[%s1216 + $0x30] sm:$0xff]
        %v1224 = vld [vmem:[%s1216 + $0x38] sm:$0xff]
        %v1225 = vld [vmem:[%s1216 + $0x40] sm:$0xff]
        %v1226 = vld [vmem:[%s1216 + $0x48] sm:$0xff]
        %v1227 = vld [vmem:[%s1216 + $0x50] sm:$0xff]
        %v1228 = vld [vmem:[%s1216 + $0x58] sm:$0xff]
        %v1229 = vld [vmem:[%s1216 + $0x60] sm:$0xff]
        %v1230 = vld [vmem:[%s1216 + $0x68] sm:$0xff]
        %v1231 = vld [vmem:[%s1216 + $0x70] sm:$0xff]
        %v1232 = vld [vmem:[%s1216 + $0x78] sm:$0xff]
        %v1233 = vld [vmem:[%s1216 + $0x80] sm:$0xff]
        %v1234 = vld [vmem:[%s1216 + $0x88] sm:$0xff]
        %v1236 = vsel %vm514, %v1217, 0
        %v1239 = vsel %vm514, %v1218, 0
        %v1242 = vsel %vm514, %v1219, 0
        %v1245 = vsel %vm514, %v1220, 0
        %v1248 = vsel %vm514, %v1221, 0
        %v1251 = vsel %vm514, %v1222, 0
        %v1254 = vsel %vm514, %v1223, 0
        %v1257 = vsel %vm514, %v1224, 0
        %v1260 = vsel %vm514, %v1225, 0
        %v1263 = vsel %vm514, %v1226, 0
        %v1266 = vsel %vm514, %v1227, 0
        %v1269 = vsel %vm514, %v1228, 0
        %v1272 = vsel %vm514, %v1229, 0
        %v1275 = vsel %vm514, %v1230, 0
        %v1278 = vsel %vm514, %v1231, 0
        %v1281 = vsel %vm514, %v1232, 0
        %v1284 = vsel %vm514, %v1233, 0
        %v1287 = vsel %vm514, %v1234, 0
        %1289 = vmatprep.subr.mxu0 0.0
        %1290 = vmatpush1.msra.mxu0 %v510
        %1291 = vmatprep.subr.mxu0 0.0
        %1292 = vmatpush1.msra.mxu0 %v511
        %1293 = vmatprep.subr.mxu0 0.0
        %1294 = vmatpush1.msra.mxu0 %v512
        %1295 = vmatprep.subr.mxu0 0.0
        %1296 = vmatpush1.msra.mxu0 %v513
        %1297 = vmatprep.subr.mxu0 0.0
        %1298 = vmatpush1.msra.mxu0 0.0
        %1299 = vmatprep.subr.mxu0 0.0
        %1300 = vmatpush1.msra.mxu0 0.0
        %1301 = vmatprep.subr.mxu0 0.0
        %1302 = vmatpush1.msra.mxu0 0.0
        %1303 = vmatprep.subr.mxu0 0.0
        %1304 = vmatpush1.msra.mxu0 0.0
        %1305 = vmatprep.subr.mxu0 0.0
        %1306 = vmatpush1.msra.mxu0 0.0
        %1307 = vmatprep.subr.mxu0 0.0
        %1308 = vmatpush1.msra.mxu0 0.0
        %1309 = vmatprep.subr.mxu0 0.0
        %1310 = vmatpush1.msra.mxu0 0.0
        %1311 = vmatprep.subr.mxu0 0.0
        %1312 = vmatpush1.msra.mxu0 0.0
        %1313 = vmatprep.subr.mxu0 0.0
        %1314 = vmatpush1.msra.mxu0 0.0
        %1315 = vmatprep.subr.mxu0 0.0
        %1316 = vmatpush1.msra.mxu0 0.0
        %1317 = vmatprep.subr.mxu0 0.0
        %1318 = vmatpush1.msra.mxu0 0.0
        %1319 = vmatprep.subr.mxu0 0.0
        %1320 = vmatpush1.msra.mxu0 0.0
        %1321 = vmatprep.subr.mxu0 0.0
        %1322 = vmatpush1.msra.mxu0 0.0
        %1323 = vmatprep.subr.mxu0 0.0
        %1324 = vmatpush1.msra.mxu0 0.0
        %1325 = vmatprep.subr.mxu0 0.0
        %1326 = vmatpush1.msra.mxu0 0.0
        %1327 = vmatprep.subr.mxu0 0.0
        %1328 = vmatpush1.msra.mxu0 0.0
        %1329 = vmatprep.subr.mxu0 0.0
        %1330 = vmatpush1.msra.mxu0 0.0
        %1331 = vmatprep.subr.mxu0 0.0
        %1332 = vmatpush1.msra.mxu0 0.0
        %1333 = vmatprep.subr.mxu0 0.0
        %1334 = vmatpush1.msra.mxu0 0.0
        %1335 = vmatprep.subr.mxu0 0.0
        %1336 = vmatpush1.msra.mxu0 0.0
        %1337 = vmatprep.subr.mxu0 0.0
        %1338 = vmatpush1.msra.mxu0 0.0
        %1339 = vmatprep.subr.mxu0 0.0
        %1340 = vmatpush1.msra.mxu0 0.0
        %1341 = vmatprep.subr.mxu0 0.0
        %1342 = vmatpush1.msra.mxu0 0.0
        %1343 = vmatprep.subr.mxu0 0.0
        %1344 = vmatpush1.msra.mxu0 0.0
        %1345 = vmatprep.subr.mxu0 0.0
        %1346 = vmatpush1.msra.mxu0 0.0
        %1347 = vmatprep.subr.mxu0 0.0
        %1348 = vmatpush1.msra.mxu0 0.0
        %1349 = vmatprep.subr.mxu0 0.0
        %1350 = vmatpush1.msra.mxu0 0.0
        %1351 = vmatprep.subr.mxu0 0.0
        %1352 = vmatpush1.msra.mxu0 0.0
        %1353 = vmatprep.mubr.f32.mxu0 0.0
        %1354 = vmatmul.mubr.f32.gmra.mrb[0].mxu0 %v1236
        %v1355 = vpop.f32.mrb[0].mxu0
        %v1356 = vadd.f32 0.0, %v1355
        %v1357 = vpop.f32.mrb[0].mxu0
        %1358 = vmatprep.mubr.f32.mxu0 0.0
        %1359 = vmatmul.mubr.f32.gmra.mrb[0].mxu0 %v1239
        %v1360 = vpop.f32.mrb[0].mxu0
        %v1361 = vadd.f32 0.0, %v1360
        %v1362 = vpop.f32.mrb[0].mxu0
        %1363 = vmatprep.mubr.f32.mxu0 0.0
        %1364 = vmatmul.mubr.f32.gmra.mrb[0].mxu0 %v1242
        %v1365 = vpop.f32.mrb[0].mxu0
        %v1366 = vadd.f32 0.0, %v1365
        %v1367 = vpop.f32.mrb[0].mxu0
        %1368 = vmatprep.mubr.f32.mxu0 0.0
        %1369 = vmatmul.mubr.f32.gmra.mrb[0].mxu0 %v1245
        %v1370 = vpop.f32.mrb[0].mxu0
        %v1371 = vadd.f32 0.0, %v1370
        %v1372 = vpop.f32.mrb[0].mxu0
        %1373 = vmatprep.mubr.f32.mxu0 0.0
        %1374 = vmatmul.mubr.f32.gmra.mrb[0].mxu0 %v1248
        %v1375 = vpop.f32.mrb[0].mxu0
        %v1376 = vadd.f32 0.0, %v1375
        %v1377 = vpop.f32.mrb[0].mxu0
        %1378 = vmatprep.mubr.f32.mxu0 0.0
        %1379 = vmatmul.mubr.f32.gmra.mrb[0].mxu0 %v1251
        %v1380 = vpop.f32.mrb[0].mxu0
        %v1381 = vadd.f32 0.0, %v1380
        %v1382 = vpop.f32.mrb[0].mxu0
        %1383 = vmatprep.mubr.f32.mxu0 0.0
        %1384 = vmatmul.mubr.f32.gmra.mrb[0].mxu0 %v1254
        %v1385 = vpop.f32.mrb[0].mxu0
        %v1386 = vadd.f32 0.0, %v1385
        %v1387 = vpop.f32.mrb[0].mxu0
        %1388 = vmatprep.mubr.f32.mxu0 0.0
        %1389 = vmatmul.mubr.f32.gmra.mrb[0].mxu0 %v1257
        %v1390 = vpop.f32.mrb[0].mxu0
        %v1391 = vadd.f32 0.0, %v1390
        %v1392 = vpop.f32.mrb[0].mxu0
        %1393 = vmatprep.mubr.f32.mxu0 0.0
        %1394 = vmatmul.mubr.f32.gmra.mrb[0].mxu0 %v1260
        %v1395 = vpop.f32.mrb[0].mxu0
        %v1396 = vadd.f32 0.0, %v1395
        %v1397 = vpop.f32.mrb[0].mxu0
        %1398 = vmatprep.mubr.f32.mxu0 0.0
        %1399 = vmatmul.mubr.f32.gmra.mrb[0].mxu0 %v1263
        %v1400 = vpop.f32.mrb[0].mxu0
        %v1401 = vadd.f32 0.0, %v1400
        %v1402 = vpop.f32.mrb[0].mxu0
        %1403 = vmatprep.mubr.f32.mxu0 0.0
        %1404 = vmatmul.mubr.f32.gmra.mrb[0].mxu0 %v1266
        %v1405 = vpop.f32.mrb[0].mxu0
        %v1406 = vadd.f32 0.0, %v1405
        %v1407 = vpop.f32.mrb[0].mxu0
        %1408 = vmatprep.mubr.f32.mxu0 0.0
        %1409 = vmatmul.mubr.f32.gmra.mrb[0].mxu0 %v1269
        %v1410 = vpop.f32.mrb[0].mxu0
        %v1411 = vadd.f32 0.0, %v1410
        %v1412 = vpop.f32.mrb[0].mxu0
        %1413 = vmatprep.mubr.f32.mxu0 0.0
        %1414 = vmatmul.mubr.f32.gmra.mrb[0].mxu0 %v1272
        %v1415 = vpop.f32.mrb[0].mxu0
        %v1416 = vadd.f32 0.0, %v1415
        %v1417 = vpop.f32.mrb[0].mxu0
        %1418 = vmatprep.mubr.f32.mxu0 0.0
        %1419 = vmatmul.mubr.f32.gmra.mrb[0].mxu0 %v1275
        %v1420 = vpop.f32.mrb[0].mxu0
        %v1421 = vadd.f32 0.0, %v1420
        %v1422 = vpop.f32.mrb[0].mxu0
        %1423 = vmatprep.mubr.f32.mxu0 0.0
        %1424 = vmatmul.mubr.f32.gmra.mrb[0].mxu0 %v1278
        %v1425 = vpop.f32.mrb[0].mxu0
        %v1426 = vadd.f32 0.0, %v1425
        %v1427 = vpop.f32.mrb[0].mxu0
        %1428 = vmatprep.mubr.f32.mxu0 0.0
        %1429 = vmatmul.mubr.f32.gmra.mrb[0].mxu0 %v1281
        %v1430 = vpop.f32.mrb[0].mxu0
        %v1431 = vadd.f32 0.0, %v1430
        %v1432 = vpop.f32.mrb[0].mxu0
        %1433 = vmatprep.mubr.f32.mxu0 0.0
        %1434 = vmatmul.mubr.f32.gmra.mrb[0].mxu0 %v1284
        %v1435 = vpop.f32.mrb[0].mxu0
        %v1436 = vadd.f32 0.0, %v1435
        %v1437 = vpop.f32.mrb[0].mxu0
        %1438 = vmatprep.mubr.f32.mxu0 0.0
        %1439 = vmatmul.mubr.f32.gmra.mrb[0].mxu0 %v1287
        %v1440 = vpop.f32.mrb[0].mxu0
        %v1441 = vadd.f32 0.0, %v1440
        %v1442 = vpop.f32.mrb[0].mxu0
        %1443 = vdwg.mxu0
        %v1444 = vmax.f32 %v1198, %v1356
        %v1445 = vmax.f32 %v1199, %v1361
        %v1446 = vmax.f32 %v1200, %v1366
        %v1447 = vmax.f32 %v1201, %v1371
        %v1448 = vmax.f32 %v1202, %v1376
        %v1449 = vmax.f32 %v1203, %v1381
        %v1450 = vmax.f32 %v1204, %v1386
        %v1451 = vmax.f32 %v1205, %v1391
        %v1452 = vmax.f32 %v1206, %v1396
        %v1453 = vmax.f32 %v1207, %v1401
        %v1454 = vmax.f32 %v1208, %v1406
        %v1455 = vmax.f32 %v1209, %v1411
        %v1456 = vmax.f32 %v1210, %v1416
        %v1457 = vmax.f32 %v1211, %v1421
        %v1458 = vmax.f32 %v1212, %v1426
        %v1459 = vmax.f32 %v1213, %v1431
        %v1460 = vmax.f32 %v1214, %v1436
        %v1461 = vmax.f32 %v1215, %v1441
        %v1462 = vld [vmem:[%s2] sm:$0x1]
        %v1464 = vlaneseq
        %v1465 = vshrl.u32 %v1464, 7
        %v1466 = vsub.s32 0, %v1465
        %v1467 = vrot.slane %v1462, %v1466
        %v1469 = vadd.f32 %v1444, %v1467
        %v1470 = vadd.f32 %v1445, %v1467
        %v1471 = vadd.f32 %v1446, %v1467
        %v1472 = vadd.f32 %v1447, %v1467
        %v1473 = vadd.f32 %v1448, %v1467
        %v1474 = vadd.f32 %v1449, %v1467
        %v1475 = vadd.f32 %v1450, %v1467
        %v1476 = vadd.f32 %v1451, %v1467
        %v1477 = vadd.f32 %v1452, %v1467
        %v1478 = vadd.f32 %v1453, %v1467
        %v1479 = vadd.f32 %v1454, %v1467
        %v1480 = vadd.f32 %v1455, %v1467
        %v1481 = vadd.f32 %v1456, %v1467
        %v1482 = vadd.f32 %v1457, %v1467
        %v1483 = vadd.f32 %v1458, %v1467
        %v1484 = vadd.f32 %v1459, %v1467
        %v1485 = vadd.f32 %v1460, %v1467
        %v1486 = vadd.f32 %v1461, %v1467
        %v1487 = vmax.f32 %v1469, 0.0
        %v1488 = vmax.f32 %v1470, 0.0
        %v1489 = vmax.f32 %v1471, 0.0
        %v1490 = vmax.f32 %v1472, 0.0
        %v1491 = vmax.f32 %v1473, 0.0
        %v1492 = vmax.f32 %v1474, 0.0
        %v1493 = vmax.f32 %v1475, 0.0
        %v1494 = vmax.f32 %v1476, 0.0
        %v1495 = vmax.f32 %v1477, 0.0
        %v1496 = vmax.f32 %v1478, 0.0
        %v1497 = vmax.f32 %v1479, 0.0
        %v1498 = vmax.f32 %v1480, 0.0
        %v1499 = vmax.f32 %v1481, 0.0
        %v1500 = vmax.f32 %v1482, 0.0
        %v1501 = vmax.f32 %v1483, 0.0
        %v1502 = vmax.f32 %v1484, 0.0
        %v1503 = vmax.f32 %v1485, 0.0
        %v1504 = vmax.f32 %v1486, 0.0
        %vm1505 = vcmask 80896
        %1506 = vst.msk [vmem:[%s490] sm:$0xff] %vm1505, %v1487
        %1507 = vst.msk [vmem:[%s490 + $0x8] sm:$0xff] %vm1505, %v1488
        %1508 = vst.msk [vmem:[%s490 + $0x10] sm:$0xff] %vm1505, %v1489
        %1509 = vst.msk [vmem:[%s490 + $0x18] sm:$0xff] %vm1505, %v1490
        %1510 = vst.msk [vmem:[%s490 + $0x20] sm:$0xff] %vm1505, %v1491
        %1511 = vst.msk [vmem:[%s490 + $0x28] sm:$0xff] %vm1505, %v1492
        %1512 = vst.msk [vmem:[%s490 + $0x30] sm:$0xff] %vm1505, %v1493
        %1513 = vst.msk [vmem:[%s490 + $0x38] sm:$0xff] %vm1505, %v1494
        %1514 = vst.msk [vmem:[%s490 + $0x40] sm:$0xff] %vm1505, %v1495
        %1515 = vst.msk [vmem:[%s490 + $0x48] sm:$0xff] %vm1505, %v1496
        %1516 = vst.msk [vmem:[%s490 + $0x50] sm:$0xff] %vm1505, %v1497
        %1517 = vst.msk [vmem:[%s490 + $0x58] sm:$0xff] %vm1505, %v1498
        %1518 = vst.msk [vmem:[%s490 + $0x60] sm:$0xff] %vm1505, %v1499
        %1519 = vst.msk [vmem:[%s490 + $0x68] sm:$0xff] %vm1505, %v1500
        %1520 = vst.msk [vmem:[%s490 + $0x70] sm:$0xff] %vm1505, %v1501
        %1521 = vst.msk [vmem:[%s490 + $0x78] sm:$0xff] %vm1505, %v1502
        %1522 = vst.msk [vmem:[%s490 + $0x80] sm:$0xff] %vm1505, %v1503
        %1523 = vst.msk [vmem:[%s490 + $0x88] sm:$0xff] %vm1505, %v1504
        %s1524 = smul.u32 18, %s14
        %p1525 = scmp.lt.s32.totalorder %s1524, 35
        %s1526 = scalar_select %p1525, %s1524, 35
        %s1527 = smul.addr %s1526, 8
        %s1528 = scalar_lea.vmem %s3, %s1527
        // Predicated region
        $region71: #{net_forward.9} parent=65 // pred_check
          %p1529 = pneg %p100
        $region72: #{net_forward.9} parent=65 // pred_check_branch
          %1531 = sbr.rel (%p1529) target = $region74
        $region73: #{net_forward.9} parent=65 // pred_region
          %s1532 = smul.u32 18, %s14
        $region74: #{net_forward.9} parent=65 // pred_fallthru
          _
      $region66: #{net_forward.9} parent=5 // pred_fallthru
        _
      %p1533 = scmp.le.s32.totalorder 2, %s9
      // Predicated region
      $region75: #{net_forward.9} parent=5 // pred_check
        %p1534 = pneg %p1533
      $region76: #{net_forward.9} parent=5 // pred_check_branch
        %1536 = sbr.rel (%p1534) target = $region78
      $region77: #{net_forward.9} parent=5 // pred_region
        %s1537 = ssub.s32 %s9, 2
        // Predicated region
        $region79: #{net_forward.9} parent=77 // pred_check
          %p1538 = pneg %p106
        $region80: #{net_forward.9} parent=77 // pred_check_branch
          %1540 = sbr.rel (%p1538) target = $region82
        $region81: #{net_forward.9} parent=77 // pred_region
          %s1541 = smul.u32 18, %s15
          %p1542 = scmp.lt.s32.totalorder %s1541, 35
          %s1543 = scalar_select %p1542, %s1541, 35
          %s1544 = smul.addr %s1543, 8
          %s1545 = scalar_lea.vmem %s3, %s1544
        $region82: #{net_forward.9} parent=77 // pred_fallthru
          _
      $region78: #{net_forward.9} parent=5 // pred_fallthru
        _
    $region6: #{net_forward.9} parent=1 // loop_footer
      %s13 = sadd.s32 1, %s9
    $region7: #{net_forward.9} parent=1 // loop_footer_branch
      %8 = sbr.rel target = $region3
    $region8: #{net_forward.9} parent=1 // loop_exit
      _

// kernel: tile.14
$region0: #{tile.14}
  %s0 = inlined_call_operand.vmem [shape: f32[9,10,24], index: 0, kind: input, shape index: {}]
  %s1 = inlined_call_operand.vmem [shape: f32[90,24], index: 1, kind: output, shape index: {}]
  %v2 = vld [vmem:[%s0] sm:$0xff]
  %vm3 = vcmask 195584
  %4 = vst.msk [vmem:[%s1] sm:$0xff] %vm3, %v2
  %s5 = scalar_lea.vmem %s0, 8
  %v6 = vld [vmem:[%s5] sm:$0x3]
  %vm7 = vcmask 195584
  %s8 = scalar_lea.vmem %s1, 8
  %9 = vst.msk [vmem:[%s8] sm:$0x3] %vm7, %v6
  %s10 = scalar_lea.vmem %s0, 16
  %v11 = vld [vmem:[%s10] sm:$0xff]
  %vm12 = vcmask 195584
  %s13 = scalar_lea.vmem %s1, 10
  %14 = vst.msk [vmem:[%s13] sm:$0xff] %vm12, %v11
  %s15 = scalar_lea.vmem %s0, 24
  %v16 = vld [vmem:[%s15] sm:$0x3]
  %vm17 = vcmask 195584
  %s18 = scalar_lea.vmem %s1, 18
  %19 = vst.msk [vmem:[%s18] sm:$0x3] %vm17, %v16
  %s20 = scalar_lea.vmem %s0, 32
  %v21 = vld [vmem:[%s20] sm:$0xff]
  %vm22 = vcmask 195584
  %s23 = scalar_lea.vmem %s1, 20
  %24 = vst.msk [vmem:[%s23] sm:$0xff] %vm22, %v21
  %s25 = scalar_lea.vmem %s0, 40
  %v26 = vld [vmem:[%s25] sm:$0x3]
  %vm27 = vcmask 195584
  %s28 = scalar_lea.vmem %s1, 28
  %29 = vst.msk [vmem:[%s28] sm:$0x3] %vm27, %v26
  %s30 = scalar_lea.vmem %s0, 48
  %v31 = vld [vmem:[%s30] sm:$0xff]
  %vm32 = vcmask 195584
  %s33 = scalar_lea.vmem %s1, 30
  %34 = vst.msk [vmem:[%s33] sm:$0xff] %vm32, %v31
  %s35 = scalar_lea.vmem %s0, 56
  %v36 = vld [vmem:[%s35] sm:$0x3]
  %vm37 = vcmask 195584
  %s38 = scalar_lea.vmem %s1, 38
  %39 = vst.msk [vmem:[%s38] sm:$0x3] %vm37, %v36
  %s40 = scalar_lea.vmem %s0, 64
  %v41 = vld [vmem:[%s40] sm:$0xff]
  %vm42 = vcmask 195584
  %s43 = scalar_lea.vmem %s1, 40
  %44 = vst.msk [vmem:[%s43] sm:$0xff] %vm42, %v41
  %s45 = scalar_lea.vmem %s0, 72
  %v46 = vld [vmem:[%s45] sm:$0x3]
  %vm47 = vcmask 195584
  %s48 = scalar_lea.vmem %s1, 48
  %49 = vst.msk [vmem:[%s48] sm:$0x3] %vm47, %v46
  %s50 = scalar_lea.vmem %s0, 80
  %v51 = vld [vmem:[%s50] sm:$0xff]
  %vm52 = vcmask 195584
  %s53 = scalar_lea.vmem %s1, 50
  %54 = vst.msk [vmem:[%s53] sm:$0xff] %vm52, %v51
  %s55 = scalar_lea.vmem %s0, 88
  %v56 = vld [vmem:[%s55] sm:$0x3]
  %vm57 = vcmask 195584
  %s58 = scalar_lea.vmem %s1, 58
  %59 = vst.msk [vmem:[%s58] sm:$0x3] %vm57, %v56
  %s60 = scalar_lea.vmem %s0, 96
  %v61 = vld [vmem:[%s60] sm:$0xff]
  %vm62 = vcmask 195584
  %s63 = scalar_lea.vmem %s1, 60
  %64 = vst.msk [vmem:[%s63] sm:$0xff] %vm62, %v61
  %s65 = scalar_lea.vmem %s0, 104
  %v66 = vld [vmem:[%s65] sm:$0x3]
  %vm67 = vcmask 195584
  %s68 = scalar_lea.vmem %s1, 68
  %69 = vst.msk [vmem:[%s68] sm:$0x3] %vm67, %v66
  %s70 = scalar_lea.vmem %s0, 112
  %v71 = vld [vmem:[%s70] sm:$0xff]
  %vm72 = vcmask 195584
  %s73 = scalar_lea.vmem %s1, 70
  %74 = vst.msk [vmem:[%s73] sm:$0xff] %vm72, %v71
  %s75 = scalar_lea.vmem %s0, 120
  %v76 = vld [vmem:[%s75] sm:$0x3]
  %vm77 = vcmask 195584
  %s78 = scalar_lea.vmem %s1, 78
  %79 = vst.msk [vmem:[%s78] sm:$0x3] %vm77, %v76
  %s80 = scalar_lea.vmem %s0, 128
  %v81 = vld [vmem:[%s80] sm:$0xff]
  %vm82 = vcmask 195584
  %s83 = scalar_lea.vmem %s1, 80
  %84 = vst.msk [vmem:[%s83] sm:$0xff] %vm82, %v81
  %s85 = scalar_lea.vmem %s0, 136
  %v86 = vld [vmem:[%s85] sm:$0x3]
  %vm87 = vcmask 195584
  %s88 = scalar_lea.vmem %s1, 88
  %89 = vst.msk [vmem:[%s88] sm:$0x3] %vm87, %v86

// kernel: net_forward.10
$region0: #{net_forward.10}
  #allocation0 [shape = 'u32[]', space=smem, size = 0x4, offset = 0x4, fixed_abs, tag = 'smem constant byte address 0x4 - core index']
  #allocation1 [shape = 'u32[144,128]{1,0:T(1,128)}', space=vmem, size = 0x12000, scoped, tag = 'internal scratch']
  %s0 = inlined_call_operand.vmem [shape: f32[288,16], index: 0, kind: input, shape index: {}]
  %s1 = inlined_call_operand.vmem [shape: f32[288,96], index: 1, kind: input, shape index: {}]
  %s2 = inlined_call_operand.vmem [shape: f32[16,48], index: 2, kind: input, shape index: {}]
  %s3 = inlined_call_operand.vmem [shape: f32[1,48], index: 3, kind: input, shape index: {}]
  %s4 = inlined_call_operand.vmem [shape: f32[96,24], index: 4, kind: input, shape index: {}]
  %s5 = inlined_call_operand.vmem [shape: f32[1,24], index: 5, kind: input, shape index: {}]
  %s6 = inlined_call_operand.vmem [shape: f32[288,48], index: 6, kind: output, shape index: {0}]
  %s7 = inlined_call_operand.vmem [shape: f32[288,24], index: 7, kind: output, shape index: {1}]
  %8 = xla_tuple %s6, %s7
  %s9 = sld [smem:[#allocation0]]
  $region65: #{net_forward.10} parent=0
    _
  %s11 = ssub.s32 1, %s9
  %s12 = scalar_select 0, %s11, %s9
  loop: start=0, step=1, limit=4
  $region2: #{net_forward.10} parent=0 // loop_pre_header
    _
  $region3: #{net_forward.10} parent=0 // loop_header
    %s14 = sphi 0, %s18
    %p15 = scmp.ge.s32.totalorder %s14, 4
    %s24 = sphi 0, %s26
    %s27 = sphi 0, %s24
    %s28 = sphi 0, %s27
    %s44 = sphi 0, %s28
    %s50 = sphi 0, %s52
    %s53 = sphi 0, %s50
    %s54 = sphi 0, %s53
    %s70 = sphi 0, %s54
    %s74 = sphi 0, %s74
    %s76 = sphi 0, %s74
    %s77 = sphi 0, %s76
    %s91 = sphi 0, %s77
    %s95 = sphi 0, %s95
    %s97 = sphi 0, %s95
    %s98 = sphi 0, %s97
    %s112 = sphi 0, %s98
    %s116 = sphi 0, %s116
    %s118 = sphi 0, %s116
    %s119 = sphi 0, %s118
    %s133 = sphi 0, %s119
    %s137 = sphi 0, %s137
    %s139 = sphi 0, %s137
    %s140 = sphi 0, %s139
    %s154 = sphi 0, %s140
    %s160 = sphi 0, %s162
    %s163 = sphi 0, %s160
    %s164 = sphi 0, %s163
    %s180 = sphi 0, %s164
    %s186 = sphi 0, %s188
    %s189 = sphi 0, %s186
    %s190 = sphi 0, %s189
    %s206 = sphi 0, %s190
  $region4: #{net_forward.10} parent=0 // loop_header_branch
    %17 = sbr.rel (%p15) target = $region8
  $region5: #{net_forward.10} parent=0 // loop_body
    %s19 = ssub.s32 %s14, 1
    %s20 = ssub.s32 %s14, 2
    %s21 = sadd.s32 %s14, 1
    %s22 = ssub.s32 %s14, %s21
    %p23 = scmp.eq.s32.totalorder %s22, 0
    %s25 = sadd.s32 %s24, 1
    %s26 = scalar_select %p23, %s24, %s25
    %p29 = pneg %p23
    %p30 = scmp.eq.s32.totalorder %s14, 1
    %p31 = por %p29, %p30
    %p32 = scmp.ne.s32.totalorder %s24, %s27
    %p33 = scmp.eq.s32.totalorder %s14, 0
    %p34 = por %p32, %p33
    %p35 = scmp.ne.s32.totalorder %s24, %s27
    %p36 = scmp.eq.s32.totalorder %s19, 1
    %p37 = por %p35, %p36
    %p38 = scmp.ne.s32.totalorder %s27, %s28
    %p39 = scmp.eq.s32.totalorder %s19, 0
    %p40 = por %p38, %p39
    %p41 = scmp.ne.s32.totalorder %s27, %s28
    %p42 = scmp.eq.s32.totalorder %s20, 1
    %p43 = por %p41, %p42
    %p45 = scmp.ne.s32.totalorder %s28, %s44
    %p46 = scmp.eq.s32.totalorder %s20, 0
    %p47 = por %p45, %p46
    %s48 = ssub.s32 %s14, %s21
    %p49 = scmp.eq.s32.totalorder %s48, 0
    %s51 = sadd.s32 %s50, 1
    %s52 = scalar_select %p49, %s50, %s51
    %p55 = pneg %p49
    %p56 = scmp.eq.s32.totalorder %s14, 1
    %p57 = por %p55, %p56
    %p58 = scmp.ne.s32.totalorder %s50, %s53
    %p59 = scmp.eq.s32.totalorder %s14, 0
    %p60 = por %p58, %p59
    %p61 = scmp.ne.s32.totalorder %s50, %s53
    %p62 = scmp.eq.s32.totalorder %s19, 1
    %p63 = por %p61, %p62
    %p64 = scmp.ne.s32.totalorder %s53, %s54
    %p65 = scmp.eq.s32.totalorder %s19, 0
    %p66 = por %p64, %p65
    %p67 = scmp.ne.s32.totalorder %s53, %s54
    %p68 = scmp.eq.s32.totalorder %s20, 1
    %p69 = por %p67, %p68
    %p71 = scmp.ne.s32.totalorder %s54, %s70
    %p72 = scmp.eq.s32.totalorder %s20, 0
    %p73 = por %p71, %p72
    %s75 = sadd.s32 %s74, 1
    %p78 = scmp.eq.s32.totalorder %s14, 1
    %p79 = scmp.ne.s32.totalorder %s74, %s76
    %p80 = scmp.eq.s32.totalorder %s14, 0
    %p81 = por %p79, %p80
    %p82 = scmp.ne.s32.totalorder %s74, %s76
    %p83 = scmp.eq.s32.totalorder %s19, 1
    %p84 = por %p82, %p83
    %p85 = scmp.ne.s32.totalorder %s76, %s77
    %p86 = scmp.eq.s32.totalorder %s19, 0
    %p87 = por %p85, %p86
    %p88 = scmp.ne.s32.totalorder %s76, %s77
    %p89 = scmp.eq.s32.totalorder %s20, 1
    %p90 = por %p88, %p89
    %p92 = scmp.ne.s32.totalorder %s77, %s91
    %p93 = scmp.eq.s32.totalorder %s20, 0
    %p94 = por %p92, %p93
    %s96 = sadd.s32 %s95, 1
    %p99 = scmp.eq.s32.totalorder %s14, 1
    %p100 = scmp.ne.s32.totalorder %s95, %s97
    %p101 = scmp.eq.s32.totalorder %s14, 0
    %p102 = por %p100, %p101
    %p103 = scmp.ne.s32.totalorder %s95, %s97
    %p104 = scmp.eq.s32.totalorder %s19, 1
    %p105 = por %p103, %p104
    %p106 = scmp.ne.s32.totalorder %s97, %s98
    %p107 = scmp.eq.s32.totalorder %s19, 0
    %p108 = por %p106, %p107
    %p109 = scmp.ne.s32.totalorder %s97, %s98
    %p110 = scmp.eq.s32.totalorder %s20, 1
    %p111 = por %p109, %p110
    %p113 = scmp.ne.s32.totalorder %s98, %s112
    %p114 = scmp.eq.s32.totalorder %s20, 0
    %p115 = por %p113, %p114
    %s117 = sadd.s32 %s116, 1
    %p120 = scmp.eq.s32.totalorder %s14, 1
    %p121 = scmp.ne.s32.totalorder %s116, %s118
    %p122 = scmp.eq.s32.totalorder %s14, 0
    %p123 = por %p121, %p122
    %p124 = scmp.ne.s32.totalorder %s116, %s118
    %p125 = scmp.eq.s32.totalorder %s19, 1
    %p126 = por %p124, %p125
    %p127 = scmp.ne.s32.totalorder %s118, %s119
    %p128 = scmp.eq.s32.totalorder %s19, 0
    %p129 = por %p127, %p128
    %p130 = scmp.ne.s32.totalorder %s118, %s119
    %p131 = scmp.eq.s32.totalorder %s20, 1
    %p132 = por %p130, %p131
    %p134 = scmp.ne.s32.totalorder %s119, %s133
    %p135 = scmp.eq.s32.totalorder %s20, 0
    %p136 = por %p134, %p135
    %s138 = sadd.s32 %s137, 1
    %p141 = scmp.eq.s32.totalorder %s14, 1
    %p142 = scmp.ne.s32.totalorder %s137, %s139
    %p143 = scmp.eq.s32.totalorder %s14, 0
    %p144 = por %p142, %p143
    %p145 = scmp.ne.s32.totalorder %s137, %s139
    %p146 = scmp.eq.s32.totalorder %s19, 1
    %p147 = por %p145, %p146
    %p148 = scmp.ne.s32.totalorder %s139, %s140
    %p149 = scmp.eq.s32.totalorder %s19, 0
    %p150 = por %p148, %p149
    %p151 = scmp.ne.s32.totalorder %s139, %s140
    %p152 = scmp.eq.s32.totalorder %s20, 1
    %p153 = por %p151, %p152
    %p155 = scmp.ne.s32.totalorder %s140, %s154
    %p156 = scmp.eq.s32.totalorder %s20, 0
    %p157 = por %p155, %p156
    %s158 = ssub.s32 %s14, %s21
    %p159 = scmp.eq.s32.totalorder %s158, 0
    %s161 = sadd.s32 %s160, 1
    %s162 = scalar_select %p159, %s160, %s161
    %p165 = pneg %p159
    %p166 = scmp.eq.s32.totalorder %s14, 1
    %p167 = por %p165, %p166
    %p168 = scmp.ne.s32.totalorder %s160, %s163
    %p169 = scmp.eq.s32.totalorder %s14, 0
    %p170 = por %p168, %p169
    %p171 = scmp.ne.s32.totalorder %s160, %s163
    %p172 = scmp.eq.s32.totalorder %s19, 1
    %p173 = por %p171, %p172
    %p174 = scmp.ne.s32.totalorder %s163, %s164
    %p175 = scmp.eq.s32.totalorder %s19, 0
    %p176 = por %p174, %p175
    %p177 = scmp.ne.s32.totalorder %s163, %s164
    %p178 = scmp.eq.s32.totalorder %s20, 1
    %p179 = por %p177, %p178
    %p181 = scmp.ne.s32.totalorder %s164, %s180
    %p182 = scmp.eq.s32.totalorder %s20, 0
    %p183 = por %p181, %p182
    %s184 = ssub.s32 %s14, %s21
    %p185 = scmp.eq.s32.totalorder %s184, 0
    %s187 = sadd.s32 %s186, 1
    %s188 = scalar_select %p185, %s186, %s187
    %p191 = pneg %p185
    %p192 = scmp.eq.s32.totalorder %s14, 1
    %p193 = por %p191, %p192
    %p194 = scmp.ne.s32.totalorder %s186, %s189
    %p195 = scmp.eq.s32.totalorder %s14, 0
    %p196 = por %p194, %p195
    %p197 = scmp.ne.s32.totalorder %s186, %s189
    %p198 = scmp.eq.s32.totalorder %s19, 1
    %p199 = por %p197, %p198
    %p200 = scmp.ne.s32.totalorder %s189, %s190
    %p201 = scmp.eq.s32.totalorder %s19, 0
    %p202 = por %p200, %p201
    %p203 = scmp.ne.s32.totalorder %s189, %s190
    %p204 = scmp.eq.s32.totalorder %s20, 1
    %p205 = por %p203, %p204
    %p207 = scmp.ne.s32.totalorder %s190, %s206
    %p208 = scmp.eq.s32.totalorder %s20, 0
    %p209 = por %p207, %p208
    %p210 = scmp.le.s32.totalorder 1, %s14
    %p211 = scmp.lt.s32.totalorder %s14, 3
    %p212 = pnand %p210, %p211
    %p213 = pneg %p212
    // Predicated region
    $region9: #{net_forward.10} parent=5 // pred_check
      _
    $region10: #{net_forward.10} parent=5 // pred_check_branch
      %215 = sbr.rel (%p212) target = $region12
    $region11: #{net_forward.10} parent=5 // pred_region
      %s216 = ssub.s32 %s14, 1
      // Predicated region
      $region13: #{net_forward.10} parent=11 // pred_check
        %p217 = pneg %p87
      $region14: #{net_forward.10} parent=11 // pred_check_branch
        %219 = sbr.rel (%p217) target = $region16
      $region15: #{net_forward.10} parent=11 // pred_region
        _
      $region16: #{net_forward.10} parent=11 // pred_fallthru
        _
      // Predicated region
      $region17: #{net_forward.10} parent=11 // pred_check
        %p220 = pneg %p108
      $region18: #{net_forward.10} parent=11 // pred_check_branch
        %222 = sbr.rel (%p220) target = $region20
      $region19: #{net_forward.10} parent=11 // pred_region
        _
      $region20: #{net_forward.10} parent=11 // pred_fallthru
        _
      // Predicated region
      $region21: #{net_forward.10} parent=11 // pred_check
        %p223 = pneg %p129
      $region22: #{net_forward.10} parent=11 // pred_check_branch
        %225 = sbr.rel (%p223) target = $region24
      $region23: #{net_forward.10} parent=11 // pred_region
        _
      $region24: #{net_forward.10} parent=11 // pred_fallthru
        _
      // Predicated region
      $region25: #{net_forward.10} parent=11 // pred_check
        %p226 = pneg %p150
      $region26: #{net_forward.10} parent=11 // pred_check_branch
        %228 = sbr.rel (%p226) target = $region28
      $region27: #{net_forward.10} parent=11 // pred_region
        _
      $region28: #{net_forward.10} parent=11 // pred_fallthru
        _
    $region12: #{net_forward.10} parent=5 // pred_fallthru
      _
    %p229 = scmp.lt.s32.totalorder %s14, 2
    // Predicated region
    $region29: #{net_forward.10} parent=5 // pred_check
      %p230 = pneg %p229
    $region30: #{net_forward.10} parent=5 // pred_check_branch
      %232 = sbr.rel (%p230) target = $region32
    $region31: #{net_forward.10} parent=5 // pred_region
      // Predicated region
      $region33: #{net_forward.10} parent=31 // pred_check
        %p233 = pneg %p34
      $region34: #{net_forward.10} parent=31 // pred_check_branch
        %235 = sbr.rel (%p233) target = $region36
      $region35: #{net_forward.10} parent=31 // pred_region
        %s236 = smul.u32 18, %s14
        %p237 = scmp.lt.s32.totalorder %s236, 35
        %s238 = scalar_select %p237, %s236, 35
        %s239 = smul.addr %s238, 8
        %s240 = scalar_lea.vmem %s0, %s239
        %s241 = smul.u32 18, %s14
      $region36: #{net_forward.10} parent=31 // pred_fallthru
        _
      // Predicated region
      $region37: #{net_forward.10} parent=31 // pred_check
        %p242 = pneg %p60
      $region38: #{net_forward.10} parent=31 // pred_check_branch
        %244 = sbr.rel (%p242) target = $region40
      $region39: #{net_forward.10} parent=31 // pred_region
        %s245 = smul.u32 18, %s14
        %p246 = scmp.lt.s32.totalorder %s245, 35
        %s247 = scalar_select %p246, %s245, 35
        %s248 = smul.addr %s247, 8
        %s249 = scalar_lea.vmem %s1, %s248
        %s250 = smul.u32 18, %s14
      $region40: #{net_forward.10} parent=31 // pred_fallthru
        _
    $region32: #{net_forward.10} parent=5 // pred_fallthru
      _
    %p251 = scmp.le.s32.totalorder 1, %s14
    %p252 = scmp.lt.s32.totalorder %s14, 3
    %p253 = pnand %p251, %p252
    %p254 = pneg %p253
    // Predicated region
    $region41: #{net_forward.10} parent=5 // pred_check
      _
    $region42: #{net_forward.10} parent=5 // pred_check_branch
      %256 = sbr.rel (%p253) target = $region44
    $region43: #{net_forward.10} parent=5 // pred_region
      %s257 = ssub.s32 %s14, 1
      %s258 = smul.u32 18, %s19
      %p259 = scmp.lt.s32.totalorder %s258, 35
      %s260 = scalar_select %p259, %s258, 35
      %s261 = smul.addr %s260, 8
      %s262 = scalar_lea.vmem %s0, %s261
      %p263 = pneg %p40
      %p264 = pneg %p37
      %s265 = smul.u32 18, %s19
      %p266 = scmp.lt.s32.totalorder %s265, 35
      %s267 = scalar_select %p266, %s265, 35
      %s268 = smul.addr %s267, 8
      %s269 = scalar_lea.vmem %s1, %s268
      %p270 = pneg %p66
      %p271 = pneg %p63
      %p272 = pneg %p87
      %p273 = pneg %p84
      %p274 = pneg %p108
      %p275 = pneg %p105
      %p276 = pneg %p129
      %p277 = pneg %p126
      %p278 = pneg %p150
      %p279 = pneg %p147
      %p280 = pneg %p176
      %p281 = pneg %p173
      %s282 = smul.u32 18, %s19
      %p283 = scmp.lt.s32.totalorder %s282, 35
      %s284 = scalar_select %p283, %s282, 35
      %s285 = smul.addr %s284, 8
      %s286 = scalar_lea.vmem %s6, %s285
      %p287 = pneg %p202
      %p288 = pneg %p199
      %s289 = smul.u32 18, %s19
      %p290 = scmp.lt.s32.totalorder %s289, 35
      %s291 = scalar_select %p290, %s289, 35
      %s292 = smul.addr %s291, 8
      %s293 = scalar_lea.vmem %s7, %s292
      %s294 = smul.u32 18, %s19
      %p295 = scmp.lt.s32.totalorder %s294, 35
      %s296 = scalar_select %p295, %s294, 35
      %s297 = smul.addr %s296, 8
      %s298 = scalar_lea.vmem %s0, %s297
      %s299 = smul.u32 18, %s19
      %s300 = smul.u32 18, %s19
      %p301 = scmp.lt.s32.totalorder %s300, 35
      %s302 = scalar_select %p301, %s300, 35
      %s303 = smul.addr %s302, 8
      %s304 = scalar_lea.vmem %s1, %s303
      %s305 = smul.u32 18, %s19
      %s306 = smul.u32 18, %s19
      %p307 = scmp.lt.s32.totalorder %s306, 35
      %s308 = scalar_select %p307, %s306, 35
      %s309 = smul.addr %s308, 8
      %s310 = scalar_lea.vmem %s6, %s309
      %s311 = smul.u32 18, %s19
      %s312 = smul.u32 18, %s19
      %p313 = scmp.lt.s32.totalorder %s312, 35
      %s314 = scalar_select %p313, %s312, 35
      %s315 = smul.addr %s314, 8
      %s316 = scalar_lea.vmem %s7, %s315
      %s317 = smul.u32 18, %s19
      %v318 = vld [vmem:[%s298] sm:$0xff]
      %v319 = vld [vmem:[%s298 + $0x8] sm:$0xff]
      %v320 = vld [vmem:[%s298 + $0x10] sm:$0xff]
      %v321 = vld [vmem:[%s298 + $0x18] sm:$0xff]
      %v322 = vld [vmem:[%s298 + $0x20] sm:$0xff]
      %v323 = vld [vmem:[%s298 + $0x28] sm:$0xff]
      %v324 = vld [vmem:[%s298 + $0x30] sm:$0xff]
      %v325 = vld [vmem:[%s298 + $0x38] sm:$0xff]
      %v326 = vld [vmem:[%s298 + $0x40] sm:$0xff]
      %v327 = vld [vmem:[%s298 + $0x48] sm:$0xff]
      %v328 = vld [vmem:[%s298 + $0x50] sm:$0xff]
      %v329 = vld [vmem:[%s298 + $0x58] sm:$0xff]
      %v330 = vld [vmem:[%s298 + $0x60] sm:$0xff]
      %v331 = vld [vmem:[%s298 + $0x68] sm:$0xff]
      %v332 = vld [vmem:[%s298 + $0x70] sm:$0xff]
      %v333 = vld [vmem:[%s298 + $0x78] sm:$0xff]
      %v334 = vld [vmem:[%s298 + $0x80] sm:$0xff]
      %v335 = vld [vmem:[%s298 + $0x88] sm:$0xff]
      %v336 = vld [vmem:[%s2] sm:$0xff]
      %v337 = vld [vmem:[%s2 + $0x8] sm:$0xff]
      %v338 = vld [vmem:[%s3] sm:$0x1]
      %v340 = vlaneseq
      %v341 = vshrl.u32 %v340, 7
      %v342 = vsub.s32 0, %v341
      %v343 = vrot.slane %v338, %v342
      %vm345 = vcmask 130048
      %v347 = vsel %vm345, %v318, 0
      %v350 = vsel %vm345, %v319, 0
      %v353 = vsel %vm345, %v320, 0
      %v356 = vsel %vm345, %v321, 0
      %v359 = vsel %vm345, %v322, 0
      %v362 = vsel %vm345, %v323, 0
      %v365 = vsel %vm345, %v324, 0
      %v368 = vsel %vm345, %v325, 0
      %v371 = vsel %vm345, %v326, 0
      %v374 = vsel %vm345, %v327, 0
      %v377 = vsel %vm345, %v328, 0
      %v380 = vsel %vm345, %v329, 0
      %v383 = vsel %vm345, %v330, 0
      %v386 = vsel %vm345, %v331, 0
      %v389 = vsel %vm345, %v332, 0
      %v392 = vsel %vm345, %v333, 0
      %v395 = vsel %vm345, %v334, 0
      %v398 = vsel %vm345, %v335, 0
      %400 = vmatprep.subr.mxu0 0.0
      %401 = vmatpush1.msra.mxu0 %v336
      %402 = vmatprep.subr.mxu0 0.0
      %403 = vmatpush1.msra.mxu0 %v337
      %404 = vmatprep.subr.mxu0 0.0
      %405 = vmatpush1.msra.mxu0 0.0
      %406 = vmatprep.subr.mxu0 0.0
      %407 = vmatpush1.msra.mxu0 0.0
      %408 = vmatprep.subr.mxu0 0.0
      %409 = vmatpush1.msra.mxu0 0.0
      %410 = vmatprep.subr.mxu0 0.0
      %411 = vmatpush1.msra.mxu0 0.0
      %412 = vmatprep.subr.mxu0 0.0
      %413 = vmatpush1.msra.mxu0 0.0
      %414 = vmatprep.subr.mxu0 0.0
      %415 = vmatpush1.msra.mxu0 0.0
      %416 = vmatprep.subr.mxu0 0.0
      %417 = vmatpush1.msra.mxu0 0.0
      %418 = vmatprep.subr.mxu0 0.0
      %419 = vmatpush1.msra.mxu0 0.0
      %420 = vmatprep.subr.mxu0 0.0
      %421 = vmatpush1.msra.mxu0 0.0
      %422 = vmatprep.subr.mxu0 0.0
      %423 = vmatpush1.msra.mxu0 0.0
      %424 = vmatprep.subr.mxu0 0.0
      %425 = vmatpush1.msra.mxu0 0.0
      %426 = vmatprep.subr.mxu0 0.0
      %427 = vmatpush1.msra.mxu0 0.0
      %428 = vmatprep.subr.mxu0 0.0
      %429 = vmatpush1.msra.mxu0 0.0
      %430 = vmatprep.subr.mxu0 0.0
      %431 = vmatpush1.msra.mxu0 0.0
      %432 = vmatprep.subr.mxu0 0.0
      %433 = vmatpush1.msra.mxu0 0.0
      %434 = vmatprep.subr.mxu0 0.0
      %435 = vmatpush1.msra.mxu0 0.0
      %436 = vmatprep.subr.mxu0 0.0
      %437 = vmatpush1.msra.mxu0 0.0
      %438 = vmatprep.subr.mxu0 0.0
      %439 = vmatpush1.msra.mxu0 0.0
      %440 = vmatprep.subr.mxu0 0.0
      %441 = vmatpush1.msra.mxu0 0.0
      %442 = vmatprep.subr.mxu0 0.0
      %443 = vmatpush1.msra.mxu0 0.0
      %444 = vmatprep.subr.mxu0 0.0
      %445 = vmatpush1.msra.mxu0 0.0
      %446 = vmatprep.subr.mxu0 0.0
      %447 = vmatpush1.msra.mxu0 0.0
      %448 = vmatprep.subr.mxu0 0.0
      %449 = vmatpush1.msra.mxu0 0.0
      %450 = vmatprep.subr.mxu0 0.0
      %451 = vmatpush1.msra.mxu0 0.0
      %452 = vmatprep.subr.mxu0 0.0
      %453 = vmatpush1.msra.mxu0 0.0
      %454 = vmatprep.subr.mxu0 0.0
      %455 = vmatpush1.msra.mxu0 0.0
      %456 = vmatprep.subr.mxu0 0.0
      %457 = vmatpush1.msra.mxu0 0.0
      %458 = vmatprep.subr.mxu0 0.0
      %459 = vmatpush1.msra.mxu0 0.0
      %460 = vmatprep.subr.mxu0 0.0
      %461 = vmatpush1.msra.mxu0 0.0
      %462 = vmatprep.subr.mxu0 0.0
      %463 = vmatpush1.msra.mxu0 0.0
      %464 = vmatprep.mubr.f32.mxu0 0.0
      %465 = vmatmul.mubr.f32.gmra.mrb[0].mxu0 %v347
      %v466 = vpop.f32.mrb[0].mxu0
      %v467 = vadd.f32 %v343, %v466
      %v468 = vpop.f32.mrb[0].mxu0
      %469 = vmatprep.mubr.f32.mxu0 0.0
      %470 = vmatmul.mubr.f32.gmra.mrb[0].mxu0 %v350
      %v471 = vpop.f32.mrb[0].mxu0
      %v472 = vadd.f32 %v343, %v471
      %v473 = vpop.f32.mrb[0].mxu0
      %474 = vmatprep.mubr.f32.mxu0 0.0
      %475 = vmatmul.mubr.f32.gmra.mrb[0].mxu0 %v353
      %v476 = vpop.f32.mrb[0].mxu0
      %v477 = vadd.f32 %v343, %v476
      %v478 = vpop.f32.mrb[0].mxu0
      %479 = vmatprep.mubr.f32.mxu0 0.0
      %480 = vmatmul.mubr.f32.gmra.mrb[0].mxu0 %v356
      %v481 = vpop.f32.mrb[0].mxu0
      %v482 = vadd.f32 %v343, %v481
      %v483 = vpop.f32.mrb[0].mxu0
      %484 = vmatprep.mubr.f32.mxu0 0.0
      %485 = vmatmul.mubr.f32.gmra.mrb[0].mxu0 %v359
      %v486 = vpop.f32.mrb[0].mxu0
      %v487 = vadd.f32 %v343, %v486
      %v488 = vpop.f32.mrb[0].mxu0
      %489 = vmatprep.mubr.f32.mxu0 0.0
      %490 = vmatmul.mubr.f32.gmra.mrb[0].mxu0 %v362
      %v491 = vpop.f32.mrb[0].mxu0
      %v492 = vadd.f32 %v343, %v491
      %v493 = vpop.f32.mrb[0].mxu0
      %494 = vmatprep.mubr.f32.mxu0 0.0
      %495 = vmatmul.mubr.f32.gmra.mrb[0].mxu0 %v365
      %v496 = vpop.f32.mrb[0].mxu0
      %v497 = vadd.f32 %v343, %v496
      %v498 = vpop.f32.mrb[0].mxu0
      %499 = vmatprep.mubr.f32.mxu0 0.0
      %500 = vmatmul.mubr.f32.gmra.mrb[0].mxu0 %v368
      %v501 = vpop.f32.mrb[0].mxu0
      %v502 = vadd.f32 %v343, %v501
      %v503 = vpop.f32.mrb[0].mxu0
      %504 = vmatprep.mubr.f32.mxu0 0.0
      %505 = vmatmul.mubr.f32.gmra.mrb[0].mxu0 %v371
      %v506 = vpop.f32.mrb[0].mxu0
      %v507 = vadd.f32 %v343, %v506
      %v508 = vpop.f32.mrb[0].mxu0
      %509 = vmatprep.mubr.f32.mxu0 0.0
      %510 = vmatmul.mubr.f32.gmra.mrb[0].mxu0 %v374
      %v511 = vpop.f32.mrb[0].mxu0
      %v512 = vadd.f32 %v343, %v511
      %v513 = vpop.f32.mrb[0].mxu0
      %514 = vmatprep.mubr.f32.mxu0 0.0
      %515 = vmatmul.mubr.f32.gmra.mrb[0].mxu0 %v377
      %v516 = vpop.f32.mrb[0].mxu0
      %v517 = vadd.f32 %v343, %v516
      %v518 = vpop.f32.mrb[0].mxu0
      %519 = vmatprep.mubr.f32.mxu0 0.0
      %520 = vmatmul.mubr.f32.gmra.mrb[0].mxu0 %v380
      %v521 = vpop.f32.mrb[0].mxu0
      %v522 = vadd.f32 %v343, %v521
      %v523 = vpop.f32.mrb[0].mxu0
      %524 = vmatprep.mubr.f32.mxu0 0.0
      %525 = vmatmul.mubr.f32.gmra.mrb[0].mxu0 %v383
      %v526 = vpop.f32.mrb[0].mxu0
      %v527 = vadd.f32 %v343, %v526
      %v528 = vpop.f32.mrb[0].mxu0
      %529 = vmatprep.mubr.f32.mxu0 0.0
      %530 = vmatmul.mubr.f32.gmra.mrb[0].mxu0 %v386
      %v531 = vpop.f32.mrb[0].mxu0
      %v532 = vadd.f32 %v343, %v531
      %v533 = vpop.f32.mrb[0].mxu0
      %534 = vmatprep.mubr.f32.mxu0 0.0
      %535 = vmatmul.mubr.f32.gmra.mrb[0].mxu0 %v389
      %v536 = vpop.f32.mrb[0].mxu0
      %v537 = vadd.f32 %v343, %v536
      %v538 = vpop.f32.mrb[0].mxu0
      %539 = vmatprep.mubr.f32.mxu0 0.0
      %540 = vmatmul.mubr.f32.gmra.mrb[0].mxu0 %v392
      %v541 = vpop.f32.mrb[0].mxu0
      %v542 = vadd.f32 %v343, %v541
      %v543 = vpop.f32.mrb[0].mxu0
      %544 = vmatprep.mubr.f32.mxu0 0.0
      %545 = vmatmul.mubr.f32.gmra.mrb[0].mxu0 %v395
      %v546 = vpop.f32.mrb[0].mxu0
      %v547 = vadd.f32 %v343, %v546
      %v548 = vpop.f32.mrb[0].mxu0
      %549 = vmatprep.mubr.f32.mxu0 0.0
      %550 = vmatmul.mubr.f32.gmra.mrb[0].mxu0 %v398
      %v551 = vpop.f32.mrb[0].mxu0
      %v552 = vadd.f32 %v343, %v551
      %v553 = vpop.f32.mrb[0].mxu0
      %554 = vdwg.mxu0
      %vm555 = vcmask 392192
      %556 = vst.msk [vmem:[%s310] sm:$0xff] %vm555, %v467
      %557 = vst.msk [vmem:[%s310 + $0x8] sm:$0xff] %vm555, %v472
      %558 = vst.msk [vmem:[%s310 + $0x10] sm:$0xff] %vm555, %v477
      %559 = vst.msk [vmem:[%s310 + $0x18] sm:$0xff] %vm555, %v482
      %560 = vst.msk [vmem:[%s310 + $0x20] sm:$0xff] %vm555, %v487
      %561 = vst.msk [vmem:[%s310 + $0x28] sm:$0xff] %vm555, %v492
      %562 = vst.msk [vmem:[%s310 + $0x30] sm:$0xff] %vm555, %v497
      %563 = vst.msk [vmem:[%s310 + $0x38] sm:$0xff] %vm555, %v502
      %564 = vst.msk [vmem:[%s310 + $0x40] sm:$0xff] %vm555, %v507
      %565 = vst.msk [vmem:[%s310 + $0x48] sm:$0xff] %vm555, %v512
      %566 = vst.msk [vmem:[%s310 + $0x50] sm:$0xff] %vm555, %v517
      %567 = vst.msk [vmem:[%s310 + $0x58] sm:$0xff] %vm555, %v522
      %568 = vst.msk [vmem:[%s310 + $0x60] sm:$0xff] %vm555, %v527
      %569 = vst.msk [vmem:[%s310 + $0x68] sm:$0xff] %vm555, %v532
      %570 = vst.msk [vmem:[%s310 + $0x70] sm:$0xff] %vm555, %v537
      %571 = vst.msk [vmem:[%s310 + $0x78] sm:$0xff] %vm555, %v542
      %572 = vst.msk [vmem:[%s310 + $0x80] sm:$0xff] %vm555, %v547
      %573 = vst.msk [vmem:[%s310 + $0x88] sm:$0xff] %vm555, %v552
      %v574 = vld [vmem:[%s304] sm:$0xff]
      %v575 = vld [vmem:[%s304 + $0x8] sm:$0xff]
      %v576 = vld [vmem:[%s304 + $0x10] sm:$0xff]
      %v577 = vld [vmem:[%s304 + $0x18] sm:$0xff]
      %v578 = vld [vmem:[%s304 + $0x20] sm:$0xff]
      %v579 = vld [vmem:[%s304 + $0x28] sm:$0xff]
      %v580 = vld [vmem:[%s304 + $0x30] sm:$0xff]
      %v581 = vld [vmem:[%s304 + $0x38] sm:$0xff]
      %v582 = vld [vmem:[%s304 + $0x40] sm:$0xff]
      %v583 = vld [vmem:[%s304 + $0x48] sm:$0xff]
      %v584 = vld [vmem:[%s304 + $0x50] sm:$0xff]
      %v585 = vld [vmem:[%s304 + $0x58] sm:$0xff]
      %v586 = vld [vmem:[%s304 + $0x60] sm:$0xff]
      %v587 = vld [vmem:[%s304 + $0x68] sm:$0xff]
      %v588 = vld [vmem:[%s304 + $0x70] sm:$0xff]
      %v589 = vld [vmem:[%s304 + $0x78] sm:$0xff]
      %v590 = vld [vmem:[%s304 + $0x80] sm:$0xff]
      %v591 = vld [vmem:[%s304 + $0x88] sm:$0xff]
      %v592 = vld [vmem:[%s4] sm:$0xff]
      %v593 = vld [vmem:[%s4 + $0x8] sm:$0xff]
      %v594 = vld [vmem:[%s4 + $0x10] sm:$0xff]
      %v595 = vld [vmem:[%s4 + $0x18] sm:$0xff]
      %v596 = vld [vmem:[%s4 + $0x20] sm:$0xff]
      %v597 = vld [vmem:[%s4 + $0x28] sm:$0xff]
      %v598 = vld [vmem:[%s4 + $0x30] sm:$0xff]
      %v599 = vld [vmem:[%s4 + $0x38] sm:$0xff]
      %v600 = vld [vmem:[%s4 + $0x40] sm:$0xff]
      %v601 = vld [vmem:[%s4 + $0x48] sm:$0xff]
      %v602 = vld [vmem:[%s4 + $0x50] sm:$0xff]
      %v603 = vld [vmem:[%s4 + $0x58] sm:$0xff]
      %v604 = vld [vmem:[%s5] sm:$0x1]
      %v606 = vlaneseq
      %v607 = vshrl.u32 %v606, 7
      %v608 = vsub.s32 0, %v607
      %v609 = vrot.slane %v604, %v608
      %vm611 = vcmask 785408
      %v613 = vsel %vm611, %v574, 0
      %v616 = vsel %vm611, %v575, 0
      %v619 = vsel %vm611, %v576, 0
      %v622 = vsel %vm611, %v577, 0
      %v625 = vsel %vm611, %v578, 0
      %v628 = vsel %vm611, %v579, 0
      %v631 = vsel %vm611, %v580, 0
      %v634 = vsel %vm611, %v581, 0
      %v637 = vsel %vm611, %v582, 0
      %v640 = vsel %vm611, %v583, 0
      %v643 = vsel %vm611, %v584, 0
      %v646 = vsel %vm611, %v585, 0
      %v649 = vsel %vm611, %v586, 0
      %v652 = vsel %vm611, %v587, 0
      %v655 = vsel %vm611, %v588, 0
      %v658 = vsel %vm611, %v589, 0
      %v661 = vsel %vm611, %v590, 0
      %v664 = vsel %vm611, %v591, 0
      %666 = vmatprep.subr.mxu0 0.0
      %667 = vmatpush1.msra.mxu0 %v592
      %668 = vmatprep.subr.mxu0 0.0
      %669 = vmatpush1.msra.mxu0 %v593
      %670 = vmatprep.subr.mxu0 0.0
      %671 = vmatpush1.msra.mxu0 %v594
      %672 = vmatprep.subr.mxu0 0.0
      %673 = vmatpush1.msra.mxu0 %v595
      %674 = vmatprep.subr.mxu0 0.0
      %675 = vmatpush1.msra.mxu0 %v596
      %676 = vmatprep.subr.mxu0 0.0
      %677 = vmatpush1.msra.mxu0 %v597
      %678 = vmatprep.subr.mxu0 0.0
      %679 = vmatpush1.msra.mxu0 %v598
      %680 = vmatprep.subr.mxu0 0.0
      %681 = vmatpush1.msra.mxu0 %v599
      %682 = vmatprep.subr.mxu0 0.0
      %683 = vmatpush1.msra.mxu0 %v600
      %684 = vmatprep.subr.mxu0 0.0
      %685 = vmatpush1.msra.mxu0 %v601
      %686 = vmatprep.subr.mxu0 0.0
      %687 = vmatpush1.msra.mxu0 %v602
      %688 = vmatprep.subr.mxu0 0.0
      %689 = vmatpush1.msra.mxu0 %v603
      %690 = vmatprep.subr.mxu0 0.0
      %691 = vmatpush1.msra.mxu0 0.0
      %692 = vmatprep.subr.mxu0 0.0
      %693 = vmatpush1.msra.mxu0 0.0
      %694 = vmatprep.subr.mxu0 0.0
      %695 = vmatpush1.msra.mxu0 0.0
      %696 = vmatprep.subr.mxu0 0.0
      %697 = vmatpush1.msra.mxu0 0.0
      %698 = vmatprep.subr.mxu0 0.0
      %699 = vmatpush1.msra.mxu0 0.0
      %700 = vmatprep.subr.mxu0 0.0
      %701 = vmatpush1.msra.mxu0 0.0
      %702 = vmatprep.subr.mxu0 0.0
      %703 = vmatpush1.msra.mxu0 0.0
      %704 = vmatprep.subr.mxu0 0.0
      %705 = vmatpush1.msra.mxu0 0.0
      %706 = vmatprep.subr.mxu0 0.0
      %707 = vmatpush1.msra.mxu0 0.0
      %708 = vmatprep.subr.mxu0 0.0
      %709 = vmatpush1.msra.mxu0 0.0
      %710 = vmatprep.subr.mxu0 0.0
      %711 = vmatpush1.msra.mxu0 0.0
      %712 = vmatprep.subr.mxu0 0.0
      %713 = vmatpush1.msra.mxu0 0.0
      %714 = vmatprep.subr.mxu0 0.0
      %715 = vmatpush1.msra.mxu0 0.0
      %716 = vmatprep.subr.mxu0 0.0
      %717 = vmatpush1.msra.mxu0 0.0
      %718 = vmatprep.subr.mxu0 0.0
      %719 = vmatpush1.msra.mxu0 0.0
      %720 = vmatprep.subr.mxu0 0.0
      %721 = vmatpush1.msra.mxu0 0.0
      %722 = vmatprep.subr.mxu0 0.0
      %723 = vmatpush1.msra.mxu0 0.0
      %724 = vmatprep.subr.mxu0 0.0
      %725 = vmatpush1.msra.mxu0 0.0
      %726 = vmatprep.subr.mxu0 0.0
      %727 = vmatpush1.msra.mxu0 0.0
      %728 = vmatprep.subr.mxu0 0.0
      %729 = vmatpush1.msra.mxu0 0.0
      %730 = vmatprep.mubr.f32.mxu0 0.0
      %731 = vmatmul.mubr.f32.gmra.mrb[0].mxu0 %v613
      %v732 = vpop.f32.mrb[0].mxu0
      %v733 = vadd.f32 %v609, %v732
      %v734 = vpop.f32.mrb[0].mxu0
      %735 = vmatprep.mubr.f32.mxu0 0.0
      %736 = vmatmul.mubr.f32.gmra.mrb[0].mxu0 %v616
      %v737 = vpop.f32.mrb[0].mxu0
      %v738 = vadd.f32 %v609, %v737
      %v739 = vpop.f32.mrb[0].mxu0
      %740 = vmatprep.mubr.f32.mxu0 0.0
      %741 = vmatmul.mubr.f32.gmra.mrb[0].mxu0 %v619
      %v742 = vpop.f32.mrb[0].mxu0
      %v743 = vadd.f32 %v609, %v742
      %v744 = vpop.f32.mrb[0].mxu0
      %745 = vmatprep.mubr.f32.mxu0 0.0
      %746 = vmatmul.mubr.f32.gmra.mrb[0].mxu0 %v622
      %v747 = vpop.f32.mrb[0].mxu0
      %v748 = vadd.f32 %v609, %v747
      %v749 = vpop.f32.mrb[0].mxu0
      %750 = vmatprep.mubr.f32.mxu0 0.0
      %751 = vmatmul.mubr.f32.gmra.mrb[0].mxu0 %v625
      %v752 = vpop.f32.mrb[0].mxu0
      %v753 = vadd.f32 %v609, %v752
      %v754 = vpop.f32.mrb[0].mxu0
      %755 = vmatprep.mubr.f32.mxu0 0.0
      %756 = vmatmul.mubr.f32.gmra.mrb[0].mxu0 %v628
      %v757 = vpop.f32.mrb[0].mxu0
      %v758 = vadd.f32 %v609, %v757
      %v759 = vpop.f32.mrb[0].mxu0
      %760 = vmatprep.mubr.f32.mxu0 0.0
      %761 = vmatmul.mubr.f32.gmra.mrb[0].mxu0 %v631
      %v762 = vpop.f32.mrb[0].mxu0
      %v763 = vadd.f32 %v609, %v762
      %v764 = vpop.f32.mrb[0].mxu0
      %765 = vmatprep.mubr.f32.mxu0 0.0
      %766 = vmatmul.mubr.f32.gmra.mrb[0].mxu0 %v634
      %v767 = vpop.f32.mrb[0].mxu0
      %v768 = vadd.f32 %v609, %v767
      %v769 = vpop.f32.mrb[0].mxu0
      %770 = vmatprep.mubr.f32.mxu0 0.0
      %771 = vmatmul.mubr.f32.gmra.mrb[0].mxu0 %v637
      %v772 = vpop.f32.mrb[0].mxu0
      %v773 = vadd.f32 %v609, %v772
      %v774 = vpop.f32.mrb[0].mxu0
      %775 = vmatprep.mubr.f32.mxu0 0.0
      %776 = vmatmul.mubr.f32.gmra.mrb[0].mxu0 %v640
      %v777 = vpop.f32.mrb[0].mxu0
      %v778 = vadd.f32 %v609, %v777
      %v779 = vpop.f32.mrb[0].mxu0
      %780 = vmatprep.mubr.f32.mxu0 0.0
      %781 = vmatmul.mubr.f32.gmra.mrb[0].mxu0 %v643
      %v782 = vpop.f32.mrb[0].mxu0
      %v783 = vadd.f32 %v609, %v782
      %v784 = vpop.f32.mrb[0].mxu0
      %785 = vmatprep.mubr.f32.mxu0 0.0
      %786 = vmatmul.mubr.f32.gmra.mrb[0].mxu0 %v646
      %v787 = vpop.f32.mrb[0].mxu0
      %v788 = vadd.f32 %v609, %v787
      %v789 = vpop.f32.mrb[0].mxu0
      %790 = vmatprep.mubr.f32.mxu0 0.0
      %791 = vmatmul.mubr.f32.gmra.mrb[0].mxu0 %v649
      %v792 = vpop.f32.mrb[0].mxu0
      %v793 = vadd.f32 %v609, %v792
      %v794 = vpop.f32.mrb[0].mxu0
      %795 = vmatprep.mubr.f32.mxu0 0.0
      %796 = vmatmul.mubr.f32.gmra.mrb[0].mxu0 %v652
      %v797 = vpop.f32.mrb[0].mxu0
      %v798 = vadd.f32 %v609, %v797
      %v799 = vpop.f32.mrb[0].mxu0
      %800 = vmatprep.mubr.f32.mxu0 0.0
      %801 = vmatmul.mubr.f32.gmra.mrb[0].mxu0 %v655
      %v802 = vpop.f32.mrb[0].mxu0
      %v803 = vadd.f32 %v609, %v802
      %v804 = vpop.f32.mrb[0].mxu0
      %805 = vmatprep.mubr.f32.mxu0 0.0
      %806 = vmatmul.mubr.f32.gmra.mrb[0].mxu0 %v658
      %v807 = vpop.f32.mrb[0].mxu0
      %v808 = vadd.f32 %v609, %v807
      %v809 = vpop.f32.mrb[0].mxu0
      %810 = vmatprep.mubr.f32.mxu0 0.0
      %811 = vmatmul.mubr.f32.gmra.mrb[0].mxu0 %v661
      %v812 = vpop.f32.mrb[0].mxu0
      %v813 = vadd.f32 %v609, %v812
      %v814 = vpop.f32.mrb[0].mxu0
      %815 = vmatprep.mubr.f32.mxu0 0.0
      %816 = vmatmul.mubr.f32.gmra.mrb[0].mxu0 %v664
      %v817 = vpop.f32.mrb[0].mxu0
      %v818 = vadd.f32 %v609, %v817
      %v819 = vpop.f32.mrb[0].mxu0
      %820 = vdwg.mxu0
      %vm821 = vcmask 195584
      %822 = vst.msk [vmem:[%s316] sm:$0xff] %vm821, %v733
      %823 = vst.msk [vmem:[%s316 + $0x8] sm:$0xff] %vm821, %v738
      %824 = vst.msk [vmem:[%s316 + $0x10] sm:$0xff] %vm821, %v743
      %825 = vst.msk [vmem:[%s316 + $0x18] sm:$0xff] %vm821, %v748
      %826 = vst.msk [vmem:[%s316 + $0x20] sm:$0xff] %vm821, %v753
      %827 = vst.msk [vmem:[%s316 + $0x28] sm:$0xff] %vm821, %v758
      %828 = vst.msk [vmem:[%s316 + $0x30] sm:$0xff] %vm821, %v763
      %829 = vst.msk [vmem:[%s316 + $0x38] sm:$0xff] %vm821, %v768
      %830 = vst.msk [vmem:[%s316 + $0x40] sm:$0xff] %vm821, %v773
      %831 = vst.msk [vmem:[%s316 + $0x48] sm:$0xff] %vm821, %v778
      %832 = vst.msk [vmem:[%s316 + $0x50] sm:$0xff] %vm821, %v783
      %833 = vst.msk [vmem:[%s316 + $0x58] sm:$0xff] %vm821, %v788
      %834 = vst.msk [vmem:[%s316 + $0x60] sm:$0xff] %vm821, %v793
      %835 = vst.msk [vmem:[%s316 + $0x68] sm:$0xff] %vm821, %v798
      %836 = vst.msk [vmem:[%s316 + $0x70] sm:$0xff] %vm821, %v803
      %837 = vst.msk [vmem:[%s316 + $0x78] sm:$0xff] %vm821, %v808
      %838 = vst.msk [vmem:[%s316 + $0x80] sm:$0xff] %vm821, %v813
      %839 = vst.msk [vmem:[%s316 + $0x88] sm:$0xff] %vm821, %v818
      %s840 = smul.u32 18, %s19
      %p841 = scmp.lt.s32.totalorder %s840, 35
      %s842 = scalar_select %p841, %s840, 35
      %s843 = smul.addr %s842, 8
      %s844 = scalar_lea.vmem %s6, %s843
      %s845 = smul.u32 18, %s19
      %p846 = scmp.lt.s32.totalorder %s845, 35
      %s847 = scalar_select %p846, %s845, 35
      %s848 = smul.addr %s847, 8
      %s849 = scalar_lea.vmem %s7, %s848
      // Predicated region
      $region45: #{net_forward.10} parent=43 // pred_check
        %p850 = pneg %p173
      $region46: #{net_forward.10} parent=43 // pred_check_branch
        %852 = sbr.rel (%p850) target = $region48
      $region47: #{net_forward.10} parent=43 // pred_region
        %s853 = smul.u32 18, %s19
      $region48: #{net_forward.10} parent=43 // pred_fallthru
        _
      // Predicated region
      $region49: #{net_forward.10} parent=43 // pred_check
        %p854 = pneg %p199
      $region50: #{net_forward.10} parent=43 // pred_check_branch
        %856 = sbr.rel (%p854) target = $region52
      $region51: #{net_forward.10} parent=43 // pred_region
        %s857 = smul.u32 18, %s19
      $region52: #{net_forward.10} parent=43 // pred_fallthru
        _
    $region44: #{net_forward.10} parent=5 // pred_fallthru
      _
    %p858 = scmp.le.s32.totalorder 2, %s14
    // Predicated region
    $region53: #{net_forward.10} parent=5 // pred_check
      %p859 = pneg %p858
    $region54: #{net_forward.10} parent=5 // pred_check_branch
      %861 = sbr.rel (%p859) target = $region56
    $region55: #{net_forward.10} parent=5 // pred_region
      %s862 = ssub.s32 %s14, 2
      // Predicated region
      $region57: #{net_forward.10} parent=55 // pred_check
        %p863 = pneg %p179
      $region58: #{net_forward.10} parent=55 // pred_check_branch
        %865 = sbr.rel (%p863) target = $region60
      $region59: #{net_forward.10} parent=55 // pred_region
        %s866 = smul.u32 18, %s20
        %p867 = scmp.lt.s32.totalorder %s866, 35
        %s868 = scalar_select %p867, %s866, 35
        %s869 = smul.addr %s868, 8
        %s870 = scalar_lea.vmem %s6, %s869
      $region60: #{net_forward.10} parent=55 // pred_fallthru
        _
      // Predicated region
      $region61: #{net_forward.10} parent=55 // pred_check
        %p871 = pneg %p205
      $region62: #{net_forward.10} parent=55 // pred_check_branch
        %873 = sbr.rel (%p871) target = $region64
      $region63: #{net_forward.10} parent=55 // pred_region
        %s874 = smul.u32 18, %s20
        %p875 = scmp.lt.s32.totalorder %s874, 35
        %s876 = scalar_select %p875, %s874, 35
        %s877 = smul.addr %s876, 8
        %s878 = scalar_lea.vmem %s7, %s877
      $region64: #{net_forward.10} parent=55 // pred_fallthru
        _
    $region56: #{net_forward.10} parent=5 // pred_fallthru
      _
  $region6: #{net_forward.10} parent=0 // loop_footer
    %s18 = sadd.s32 1, %s14
  $region7: #{net_forward.10} parent=0 // loop_footer_branch
    %13 = sbr.rel target = $region3
  $region8: #{net_forward.10} parent=0 // loop_exit
    _

// kernel: net_forward.11
$region0: #{net_forward.11}
  #allocation0 [shape = 'u32[]', space=smem, size = 0x4, offset = 0x4, fixed_abs, tag = 'smem constant byte address 0x4 - core index']
  #allocation1 [shape = 'u32[144,128]{1,0:T(1,128)}', space=vmem, size = 0x12000, scoped, tag = 'internal scratch']
  %s0 = inlined_call_operand.vmem [shape: f32[288,400], index: 0, kind: input, shape index: {}]
  %s1 = inlined_call_operand.vmem [shape: f32[400,24], index: 1, kind: input, shape index: {}]
  %s2 = inlined_call_operand.vmem [shape: f32[1,24], index: 2, kind: input, shape index: {}]
  %s3 = inlined_call_operand.vmem [shape: f32[288,144], index: 3, kind: input, shape index: {}]
  %s4 = inlined_call_operand.vmem [shape: f32[144,24], index: 4, kind: input, shape index: {}]
  %s5 = inlined_call_operand.vmem [shape: f32[1,24], index: 5, kind: input, shape index: {}]
  %s6 = inlined_call_operand.vmem [shape: f32[288,24], index: 6, kind: output, shape index: {0}]
  %s7 = inlined_call_operand.vmem [shape: f32[288,24], index: 7, kind: output, shape index: {1}]
  %8 = xla_tuple %s6, %s7
  %s9 = sld [smem:[#allocation0]]
  $region65: #{net_forward.11} parent=0
    _
  %s11 = ssub.s32 1, %s9
  %s12 = scalar_select 0, %s11, %s9
  loop: start=0, step=1, limit=4
  $region2: #{net_forward.11} parent=0 // loop_pre_header
    _
  $region3: #{net_forward.11} parent=0 // loop_header
    %s14 = sphi 0, %s18
    %p15 = scmp.ge.s32.totalorder %s14, 4
    %s24 = sphi 0, %s26
    %s27 = sphi 0, %s24
    %s28 = sphi 0, %s27
    %s44 = sphi 0, %s28
    %s48 = sphi 0, %s48
    %s50 = sphi 0, %s48
    %s51 = sphi 0, %s50
    %s65 = sphi 0, %s51
    %s69 = sphi 0, %s69
    %s71 = sphi 0, %s69
    %s72 = sphi 0, %s71
    %s86 = sphi 0, %s72
    %s92 = sphi 0, %s94
    %s95 = sphi 0, %s92
    %s96 = sphi 0, %s95
    %s112 = sphi 0, %s96
    %s116 = sphi 0, %s116
    %s118 = sphi 0, %s116
    %s119 = sphi 0, %s118
    %s133 = sphi 0, %s119
    %s137 = sphi 0, %s137
    %s139 = sphi 0, %s137
    %s140 = sphi 0, %s139
    %s154 = sphi 0, %s140
    %s160 = sphi 0, %s162
    %s163 = sphi 0, %s160
    %s164 = sphi 0, %s163
    %s180 = sphi 0, %s164
    %s186 = sphi 0, %s188
    %s189 = sphi 0, %s186
    %s190 = sphi 0, %s189
    %s206 = sphi 0, %s190
  $region4: #{net_forward.11} parent=0 // loop_header_branch
    %17 = sbr.rel (%p15) target = $region8
  $region5: #{net_forward.11} parent=0 // loop_body
    %s19 = ssub.s32 %s14, 1
    %s20 = ssub.s32 %s14, 2
    %s21 = sadd.s32 %s14, 1
    %s22 = ssub.s32 %s14, %s21
    %p23 = scmp.eq.s32.totalorder %s22, 0
    %s25 = sadd.s32 %s24, 1
    %s26 = scalar_select %p23, %s24, %s25
    %p29 = pneg %p23
    %p30 = scmp.eq.s32.totalorder %s14, 1
    %p31 = por %p29, %p30
    %p32 = scmp.ne.s32.totalorder %s24, %s27
    %p33 = scmp.eq.s32.totalorder %s14, 0
    %p34 = por %p32, %p33
    %p35 = scmp.ne.s32.totalorder %s24, %s27
    %p36 = scmp.eq.s32.totalorder %s19, 1
    %p37 = por %p35, %p36
    %p38 = scmp.ne.s32.totalorder %s27, %s28
    %p39 = scmp.eq.s32.totalorder %s19, 0
    %p40 = por %p38, %p39
    %p41 = scmp.ne.s32.totalorder %s27, %s28
    %p42 = scmp.eq.s32.totalorder %s20, 1
    %p43 = por %p41, %p42
    %p45 = scmp.ne.s32.totalorder %s28, %s44
    %p46 = scmp.eq.s32.totalorder %s20, 0
    %p47 = por %p45, %p46
    %s49 = sadd.s32 %s48, 1
    %p52 = scmp.eq.s32.totalorder %s14, 1
    %p53 = scmp.ne.s32.totalorder %s48, %s50
    %p54 = scmp.eq.s32.totalorder %s14, 0
    %p55 = por %p53, %p54
    %p56 = scmp.ne.s32.totalorder %s48, %s50
    %p57 = scmp.eq.s32.totalorder %s19, 1
    %p58 = por %p56, %p57
    %p59 = scmp.ne.s32.totalorder %s50, %s51
    %p60 = scmp.eq.s32.totalorder %s19, 0
    %p61 = por %p59, %p60
    %p62 = scmp.ne.s32.totalorder %s50, %s51
    %p63 = scmp.eq.s32.totalorder %s20, 1
    %p64 = por %p62, %p63
    %p66 = scmp.ne.s32.totalorder %s51, %s65
    %p67 = scmp.eq.s32.totalorder %s20, 0
    %p68 = por %p66, %p67
    %s70 = sadd.s32 %s69, 1
    %p73 = scmp.eq.s32.totalorder %s14, 1
    %p74 = scmp.ne.s32.totalorder %s69, %s71
    %p75 = scmp.eq.s32.totalorder %s14, 0
    %p76 = por %p74, %p75
    %p77 = scmp.ne.s32.totalorder %s69, %s71
    %p78 = scmp.eq.s32.totalorder %s19, 1
    %p79 = por %p77, %p78
    %p80 = scmp.ne.s32.totalorder %s71, %s72
    %p81 = scmp.eq.s32.totalorder %s19, 0
    %p82 = por %p80, %p81
    %p83 = scmp.ne.s32.totalorder %s71, %s72
    %p84 = scmp.eq.s32.totalorder %s20, 1
    %p85 = por %p83, %p84
    %p87 = scmp.ne.s32.totalorder %s72, %s86
    %p88 = scmp.eq.s32.totalorder %s20, 0
    %p89 = por %p87, %p88
    %s90 = ssub.s32 %s14, %s21
    %p91 = scmp.eq.s32.totalorder %s90, 0
    %s93 = sadd.s32 %s92, 1
    %s94 = scalar_select %p91, %s92, %s93
    %p97 = pneg %p91
    %p98 = scmp.eq.s32.totalorder %s14, 1
    %p99 = por %p97, %p98
    %p100 = scmp.ne.s32.totalorder %s92, %s95
    %p101 = scmp.eq.s32.totalorder %s14, 0
    %p102 = por %p100, %p101
    %p103 = scmp.ne.s32.totalorder %s92, %s95
    %p104 = scmp.eq.s32.totalorder %s19, 1
    %p105 = por %p103, %p104
    %p106 = scmp.ne.s32.totalorder %s95, %s96
    %p107 = scmp.eq.s32.totalorder %s19, 0
    %p108 = por %p106, %p107
    %p109 = scmp.ne.s32.totalorder %s95, %s96
    %p110 = scmp.eq.s32.totalorder %s20, 1
    %p111 = por %p109, %p110
    %p113 = scmp.ne.s32.totalorder %s96, %s112
    %p114 = scmp.eq.s32.totalorder %s20, 0
    %p115 = por %p113, %p114
    %s117 = sadd.s32 %s116, 1
    %p120 = scmp.eq.s32.totalorder %s14, 1
    %p121 = scmp.ne.s32.totalorder %s116, %s118
    %p122 = scmp.eq.s32.totalorder %s14, 0
    %p123 = por %p121, %p122
    %p124 = scmp.ne.s32.totalorder %s116, %s118
    %p125 = scmp.eq.s32.totalorder %s19, 1
    %p126 = por %p124, %p125
    %p127 = scmp.ne.s32.totalorder %s118, %s119
    %p128 = scmp.eq.s32.totalorder %s19, 0
    %p129 = por %p127, %p128
    %p130 = scmp.ne.s32.totalorder %s118, %s119
    %p131 = scmp.eq.s32.totalorder %s20, 1
    %p132 = por %p130, %p131
    %p134 = scmp.ne.s32.totalorder %s119, %s133
    %p135 = scmp.eq.s32.totalorder %s20, 0
    %p136 = por %p134, %p135
    %s138 = sadd.s32 %s137, 1
    %p141 = scmp.eq.s32.totalorder %s14, 1
    %p142 = scmp.ne.s32.totalorder %s137, %s139
    %p143 = scmp.eq.s32.totalorder %s14, 0
    %p144 = por %p142, %p143
    %p145 = scmp.ne.s32.totalorder %s137, %s139
    %p146 = scmp.eq.s32.totalorder %s19, 1
    %p147 = por %p145, %p146
    %p148 = scmp.ne.s32.totalorder %s139, %s140
    %p149 = scmp.eq.s32.totalorder %s19, 0
    %p150 = por %p148, %p149
    %p151 = scmp.ne.s32.totalorder %s139, %s140
    %p152 = scmp.eq.s32.totalorder %s20, 1
    %p153 = por %p151, %p152
    %p155 = scmp.ne.s32.totalorder %s140, %s154
    %p156 = scmp.eq.s32.totalorder %s20, 0
    %p157 = por %p155, %p156
    %s158 = ssub.s32 %s14, %s21
    %p159 = scmp.eq.s32.totalorder %s158, 0
    %s161 = sadd.s32 %s160, 1
    %s162 = scalar_select %p159, %s160, %s161
    %p165 = pneg %p159
    %p166 = scmp.eq.s32.totalorder %s14, 1
    %p167 = por %p165, %p166
    %p168 = scmp.ne.s32.totalorder %s160, %s163
    %p169 = scmp.eq.s32.totalorder %s14, 0
    %p170 = por %p168, %p169
    %p171 = scmp.ne.s32.totalorder %s160, %s163
    %p172 = scmp.eq.s32.totalorder %s19, 1
    %p173 = por %p171, %p172
    %p174 = scmp.ne.s32.totalorder %s163, %s164
    %p175 = scmp.eq.s32.totalorder %s19, 0
    %p176 = por %p174, %p175
    %p177 = scmp.ne.s32.totalorder %s163, %s164
    %p178 = scmp.eq.s32.totalorder %s20, 1
    %p179 = por %p177, %p178
    %p181 = scmp.ne.s32.totalorder %s164, %s180
    %p182 = scmp.eq.s32.totalorder %s20, 0
    %p183 = por %p181, %p182
    %s184 = ssub.s32 %s14, %s21
    %p185 = scmp.eq.s32.totalorder %s184, 0
    %s187 = sadd.s32 %s186, 1
    %s188 = scalar_select %p185, %s186, %s187
    %p191 = pneg %p185
    %p192 = scmp.eq.s32.totalorder %s14, 1
    %p193 = por %p191, %p192
    %p194 = scmp.ne.s32.totalorder %s186, %s189
    %p195 = scmp.eq.s32.totalorder %s14, 0
    %p196 = por %p194, %p195
    %p197 = scmp.ne.s32.totalorder %s186, %s189
    %p198 = scmp.eq.s32.totalorder %s19, 1
    %p199 = por %p197, %p198
    %p200 = scmp.ne.s32.totalorder %s189, %s190
    %p201 = scmp.eq.s32.totalorder %s19, 0
    %p202 = por %p200, %p201
    %p203 = scmp.ne.s32.totalorder %s189, %s190
    %p204 = scmp.eq.s32.totalorder %s20, 1
    %p205 = por %p203, %p204
    %p207 = scmp.ne.s32.totalorder %s190, %s206
    %p208 = scmp.eq.s32.totalorder %s20, 0
    %p209 = por %p207, %p208
    %p210 = scmp.le.s32.totalorder 1, %s14
    %p211 = scmp.lt.s32.totalorder %s14, 3
    %p212 = pnand %p210, %p211
    %p213 = pneg %p212
    // Predicated region
    $region9: #{net_forward.11} parent=5 // pred_check
      _
    $region10: #{net_forward.11} parent=5 // pred_check_branch
      %215 = sbr.rel (%p212) target = $region12
    $region11: #{net_forward.11} parent=5 // pred_region
      %s216 = ssub.s32 %s14, 1
      // Predicated region
      $region13: #{net_forward.11} parent=11 // pred_check
        %p217 = pneg %p61
      $region14: #{net_forward.11} parent=11 // pred_check_branch
        %219 = sbr.rel (%p217) target = $region16
      $region15: #{net_forward.11} parent=11 // pred_region
        _
      $region16: #{net_forward.11} parent=11 // pred_fallthru
        _
      // Predicated region
      $region17: #{net_forward.11} parent=11 // pred_check
        %p220 = pneg %p82
      $region18: #{net_forward.11} parent=11 // pred_check_branch
        %222 = sbr.rel (%p220) target = $region20
      $region19: #{net_forward.11} parent=11 // pred_region
        _
      $region20: #{net_forward.11} parent=11 // pred_fallthru
        _
      // Predicated region
      $region21: #{net_forward.11} parent=11 // pred_check
        %p223 = pneg %p129
      $region22: #{net_forward.11} parent=11 // pred_check_branch
        %225 = sbr.rel (%p223) target = $region24
      $region23: #{net_forward.11} parent=11 // pred_region
        _
      $region24: #{net_forward.11} parent=11 // pred_fallthru
        _
      // Predicated region
      $region25: #{net_forward.11} parent=11 // pred_check
        %p226 = pneg %p150
      $region26: #{net_forward.11} parent=11 // pred_check_branch
        %228 = sbr.rel (%p226) target = $region28
      $region27: #{net_forward.11} parent=11 // pred_region
        _
      $region28: #{net_forward.11} parent=11 // pred_fallthru
        _
    $region12: #{net_forward.11} parent=5 // pred_fallthru
      _
    %p229 = scmp.lt.s32.totalorder %s14, 2
    // Predicated region
    $region29: #{net_forward.11} parent=5 // pred_check
      %p230 = pneg %p229
    $region30: #{net_forward.11} parent=5 // pred_check_branch
      %232 = sbr.rel (%p230) target = $region32
    $region31: #{net_forward.11} parent=5 // pred_region
      // Predicated region
      $region33: #{net_forward.11} parent=31 // pred_check
        %p233 = pneg %p34
      $region34: #{net_forward.11} parent=31 // pred_check_branch
        %235 = sbr.rel (%p233) target = $region36
      $region35: #{net_forward.11} parent=31 // pred_region
        %s236 = smul.u32 18, %s14
        %p237 = scmp.lt.s32.totalorder %s236, 35
        %s238 = scalar_select %p237, %s236, 35
        %s239 = smul.addr %s238, 4
        %s240 = smul.addr %s239, 8
        %s241 = scalar_lea.vmem %s0, %s240
        %s242 = smul.u32 18, %s14
      $region36: #{net_forward.11} parent=31 // pred_fallthru
        _
      // Predicated region
      $region37: #{net_forward.11} parent=31 // pred_check
        %p243 = pneg %p102
      $region38: #{net_forward.11} parent=31 // pred_check_branch
        %245 = sbr.rel (%p243) target = $region40
      $region39: #{net_forward.11} parent=31 // pred_region
        %s246 = smul.u32 18, %s14
        %p247 = scmp.lt.s32.totalorder %s246, 35
        %s248 = scalar_select %p247, %s246, 35
        %s249 = smul.addr %s248, 2
        %s250 = smul.addr %s249, 8
        %s251 = scalar_lea.vmem %s3, %s250
        %s252 = smul.u32 18, %s14
      $region40: #{net_forward.11} parent=31 // pred_fallthru
        _
    $region32: #{net_forward.11} parent=5 // pred_fallthru
      _
    %p253 = scmp.le.s32.totalorder 1, %s14
    %p254 = scmp.lt.s32.totalorder %s14, 3
    %p255 = pnand %p253, %p254
    %p256 = pneg %p255
    // Predicated region
    $region41: #{net_forward.11} parent=5 // pred_check
      _
    $region42: #{net_forward.11} parent=5 // pred_check_branch
      %258 = sbr.rel (%p255) target = $region44
    $region43: #{net_forward.11} parent=5 // pred_region
      %s259 = ssub.s32 %s14, 1
      %s260 = smul.u32 18, %s19
      %p261 = scmp.lt.s32.totalorder %s260, 35
      %s262 = scalar_select %p261, %s260, 35
      %s263 = smul.addr %s262, 4
      %s264 = smul.addr %s263, 8
      %s265 = scalar_lea.vmem %s0, %s264
      %p266 = pneg %p40
      %p267 = pneg %p37
      %p268 = pneg %p61
      %p269 = pneg %p58
      %p270 = pneg %p82
      %p271 = pneg %p79
      %s272 = smul.u32 18, %s19
      %p273 = scmp.lt.s32.totalorder %s272, 35
      %s274 = scalar_select %p273, %s272, 35
      %s275 = smul.addr %s274, 2
      %s276 = smul.addr %s275, 8
      %s277 = scalar_lea.vmem %s3, %s276
      %p278 = pneg %p108
      %p279 = pneg %p105
      %p280 = pneg %p129
      %p281 = pneg %p126
      %p282 = pneg %p150
      %p283 = pneg %p147
      %p284 = pneg %p176
      %p285 = pneg %p173
      %s286 = smul.u32 18, %s19
      %p287 = scmp.lt.s32.totalorder %s286, 35
      %s288 = scalar_select %p287, %s286, 35
      %s289 = smul.addr %s288, 8
      %s290 = scalar_lea.vmem %s6, %s289
      %p291 = pneg %p202
      %p292 = pneg %p199
      %s293 = smul.u32 18, %s19
      %p294 = scmp.lt.s32.totalorder %s293, 35
      %s295 = scalar_select %p294, %s293, 35
      %s296 = smul.addr %s295, 8
      %s297 = scalar_lea.vmem %s7, %s296
      %s298 = smul.u32 18, %s19
      %p299 = scmp.lt.s32.totalorder %s298, 35
      %s300 = scalar_select %p299, %s298, 35
      %s301 = smul.addr %s300, 4
      %s302 = smul.addr %s301, 8
      %s303 = scalar_lea.vmem %s0, %s302
      %s304 = smul.u32 18, %s19
      %s305 = smul.u32 18, %s19
      %p306 = scmp.lt.s32.totalorder %s305, 35
      %s307 = scalar_select %p306, %s305, 35
      %s308 = smul.addr %s307, 2
      %s309 = smul.addr %s308, 8
      %s310 = scalar_lea.vmem %s3, %s309
      %s311 = smul.u32 18, %s19
      %s312 = smul.u32 18, %s19
      %p313 = scmp.lt.s32.totalorder %s312, 35
      %s314 = scalar_select %p313, %s312, 35
      %s315 = smul.addr %s314, 8
      %s316 = scalar_lea.vmem %s6, %s315
      %s317 = smul.u32 18, %s19
      %s318 = smul.u32 18, %s19
      %p319 = scmp.lt.s32.totalorder %s318, 35
      %s320 = scalar_select %p319, %s318, 35
      %s321 = smul.addr %s320, 8
      %s322 = scalar_lea.vmem %s7, %s321
      %s323 = smul.u32 18, %s19
      %v324 = vld [vmem:[%s303] sm:$0xff]
      %v325 = vld [vmem:[%s303 + $0x8] sm:$0xff]
      %v326 = vld [vmem:[%s303 + $0x10] sm:$0xff]
      %v327 = vld [vmem:[%s303 + $0x18] sm:$0xff]
      %v328 = vld [vmem:[%s303 + $0x20] sm:$0xff]
      %v329 = vld [vmem:[%s303 + $0x28] sm:$0xff]
      %v330 = vld [vmem:[%s303 + $0x30] sm:$0xff]
      %v331 = vld [vmem:[%s303 + $0x38] sm:$0xff]
      %v332 = vld [vmem:[%s303 + $0x40] sm:$0xff]
      %v333 = vld [vmem:[%s303 + $0x48] sm:$0xff]
      %v334 = vld [vmem:[%s303 + $0x50] sm:$0xff]
      %v335 = vld [vmem:[%s303 + $0x58] sm:$0xff]
      %v336 = vld [vmem:[%s303 + $0x60] sm:$0xff]
      %v337 = vld [vmem:[%s303 + $0x68] sm:$0xff]
      %v338 = vld [vmem:[%s303 + $0x70] sm:$0xff]
      %v339 = vld [vmem:[%s303 + $0x78] sm:$0xff]
      %v340 = vld [vmem:[%s303 + $0x80] sm:$0xff]
      %v341 = vld [vmem:[%s303 + $0x88] sm:$0xff]
      %v342 = vld [vmem:[%s303 + $0x90] sm:$0xff]
      %v343 = vld [vmem:[%s303 + $0x98] sm:$0xff]
      %v344 = vld [vmem:[%s303 + $0xa0] sm:$0xff]
      %v345 = vld [vmem:[%s303 + $0xa8] sm:$0xff]
      %v346 = vld [vmem:[%s303 + $0xb0] sm:$0xff]
      %v347 = vld [vmem:[%s303 + $0xb8] sm:$0xff]
      %v348 = vld [vmem:[%s303 + $0xc0] sm:$0xff]
      %v349 = vld [vmem:[%s303 + $0xc8] sm:$0xff]
      %v350 = vld [vmem:[%s303 + $0xd0] sm:$0xff]
      %v351 = vld [vmem:[%s303 + $0xd8] sm:$0xff]
      %v352 = vld [vmem:[%s303 + $0xe0] sm:$0xff]
      %v353 = vld [vmem:[%s303 + $0xe8] sm:$0xff]
      %v354 = vld [vmem:[%s303 + $0xf0] sm:$0xff]
      %v355 = vld [vmem:[%s303 + $0xf8] sm:$0xff]
      %v356 = vld [vmem:[%s303 + $0x100] sm:$0xff]
      %v357 = vld [vmem:[%s303 + $0x108] sm:$0xff]
      %v358 = vld [vmem:[%s303 + $0x110] sm:$0xff]
      %v359 = vld [vmem:[%s303 + $0x118] sm:$0xff]
      %v360 = vld [vmem:[%s303 + $0x120] sm:$0xff]
      %v361 = vld [vmem:[%s303 + $0x128] sm:$0xff]
      %v362 = vld [vmem:[%s303 + $0x130] sm:$0xff]
      %v363 = vld [vmem:[%s303 + $0x138] sm:$0xff]
      %v364 = vld [vmem:[%s303 + $0x140] sm:$0xff]
      %v365 = vld [vmem:[%s303 + $0x148] sm:$0xff]
      %v366 = vld [vmem:[%s303 + $0x150] sm:$0xff]
      %v367 = vld [vmem:[%s303 + $0x158] sm:$0xff]
      %v368 = vld [vmem:[%s303 + $0x160] sm:$0xff]
      %v369 = vld [vmem:[%s303 + $0x168] sm:$0xff]
      %v370 = vld [vmem:[%s303 + $0x170] sm:$0xff]
      %v371 = vld [vmem:[%s303 + $0x178] sm:$0xff]
      %v372 = vld [vmem:[%s303 + $0x180] sm:$0xff]
      %v373 = vld [vmem:[%s303 + $0x188] sm:$0xff]
      %v374 = vld [vmem:[%s303 + $0x190] sm:$0xff]
      %v375 = vld [vmem:[%s303 + $0x198] sm:$0xff]
      %v376 = vld [vmem:[%s303 + $0x1a0] sm:$0xff]
      %v377 = vld [vmem:[%s303 + $0x1a8] sm:$0xff]
      %v378 = vld [vmem:[%s303 + $0x1b0] sm:$0xff]
      %v379 = vld [vmem:[%s303 + $0x1b8] sm:$0xff]
      %v380 = vld [vmem:[%s303 + $0x1c0] sm:$0xff]
      %v381 = vld [vmem:[%s303 + $0x1c8] sm:$0xff]
      %v382 = vld [vmem:[%s303 + $0x1d0] sm:$0xff]
      %v383 = vld [vmem:[%s303 + $0x1d8] sm:$0xff]
      %v384 = vld [vmem:[%s303 + $0x1e0] sm:$0xff]
      %v385 = vld [vmem:[%s303 + $0x1e8] sm:$0xff]
      %v386 = vld [vmem:[%s303 + $0x1f0] sm:$0xff]
      %v387 = vld [vmem:[%s303 + $0x1f8] sm:$0xff]
      %v388 = vld [vmem:[%s303 + $0x200] sm:$0xff]
      %v389 = vld [vmem:[%s303 + $0x208] sm:$0xff]
      %v390 = vld [vmem:[%s303 + $0x210] sm:$0xff]
      %v391 = vld [vmem:[%s303 + $0x218] sm:$0xff]
      %v392 = vld [vmem:[%s303 + $0x220] sm:$0xff]
      %v393 = vld [vmem:[%s303 + $0x228] sm:$0xff]
      %v394 = vld [vmem:[%s303 + $0x230] sm:$0xff]
      %v395 = vld [vmem:[%s303 + $0x238] sm:$0xff]
      %v396 = vld [vmem:[%s1] sm:$0xff]
      %v397 = vld [vmem:[%s1 + $0x8] sm:$0xff]
      %v398 = vld [vmem:[%s1 + $0x10] sm:$0xff]
      %v399 = vld [vmem:[%s1 + $0x18] sm:$0xff]
      %v400 = vld [vmem:[%s1 + $0x20] sm:$0xff]
      %v401 = vld [vmem:[%s1 + $0x28] sm:$0xff]
      %v402 = vld [vmem:[%s1 + $0x30] sm:$0xff]
      %v403 = vld [vmem:[%s1 + $0x38] sm:$0xff]
      %v404 = vld [vmem:[%s1 + $0x40] sm:$0xff]
      %v405 = vld [vmem:[%s1 + $0x48] sm:$0xff]
      %v406 = vld [vmem:[%s1 + $0x50] sm:$0xff]
      %v407 = vld [vmem:[%s1 + $0x58] sm:$0xff]
      %v408 = vld [vmem:[%s1 + $0x60] sm:$0xff]
      %v409 = vld [vmem:[%s1 + $0x68] sm:$0xff]
      %v410 = vld [vmem:[%s1 + $0x70] sm:$0xff]
      %v411 = vld [vmem:[%s1 + $0x78] sm:$0xff]
      %v412 = vld [vmem:[%s1 + $0x80] sm:$0xff]
      %v413 = vld [vmem:[%s1 + $0x88] sm:$0xff]
      %v414 = vld [vmem:[%s1 + $0x90] sm:$0xff]
      %v415 = vld [vmem:[%s1 + $0x98] sm:$0xff]
      %v416 = vld [vmem:[%s1 + $0xa0] sm:$0xff]
      %v417 = vld [vmem:[%s1 + $0xa8] sm:$0xff]
      %v418 = vld [vmem:[%s1 + $0xb0] sm:$0xff]
      %v419 = vld [vmem:[%s1 + $0xb8] sm:$0xff]
      %v420 = vld [vmem:[%s1 + $0xc0] sm:$0xff]
      %v421 = vld [vmem:[%s1 + $0xc8] sm:$0xff]
      %v422 = vld [vmem:[%s1 + $0xd0] sm:$0xff]
      %v423 = vld [vmem:[%s1 + $0xd8] sm:$0xff]
      %v424 = vld [vmem:[%s1 + $0xe0] sm:$0xff]
      %v425 = vld [vmem:[%s1 + $0xe8] sm:$0xff]
      %v426 = vld [vmem:[%s1 + $0xf0] sm:$0xff]
      %v427 = vld [vmem:[%s1 + $0xf8] sm:$0xff]
      %v428 = vld [vmem:[%s1 + $0x100] sm:$0xff]
      %v429 = vld [vmem:[%s1 + $0x108] sm:$0xff]
      %v430 = vld [vmem:[%s1 + $0x110] sm:$0xff]
      %v431 = vld [vmem:[%s1 + $0x118] sm:$0xff]
      %v432 = vld [vmem:[%s1 + $0x120] sm:$0xff]
      %v433 = vld [vmem:[%s1 + $0x128] sm:$0xff]
      %v434 = vld [vmem:[%s1 + $0x130] sm:$0xff]
      %v435 = vld [vmem:[%s1 + $0x138] sm:$0xff]
      %v436 = vld [vmem:[%s1 + $0x140] sm:$0xff]
      %v437 = vld [vmem:[%s1 + $0x148] sm:$0xff]
      %v438 = vld [vmem:[%s1 + $0x150] sm:$0xff]
      %v439 = vld [vmem:[%s1 + $0x158] sm:$0xff]
      %v440 = vld [vmem:[%s1 + $0x160] sm:$0xff]
      %v441 = vld [vmem:[%s1 + $0x168] sm:$0xff]
      %v442 = vld [vmem:[%s1 + $0x170] sm:$0xff]
      %v443 = vld [vmem:[%s1 + $0x178] sm:$0xff]
      %v444 = vld [vmem:[%s1 + $0x180] sm:$0xff]
      %v445 = vld [vmem:[%s1 + $0x188] sm:$0xff]
      %v446 = vld [vmem:[%s2] sm:$0x1]
      %v448 = vlaneseq
      %v449 = vshrl.u32 %v448, 7
      %v450 = vsub.s32 0, %v449
      %v451 = vrot.slane %v446, %v450
      %vm453 = vcmask 130048
      %v455 = vsel %vm453, %v327, 0
      %v458 = vsel %vm453, %v331, 0
      %v461 = vsel %vm453, %v335, 0
      %v464 = vsel %vm453, %v339, 0
      %v467 = vsel %vm453, %v343, 0
      %v470 = vsel %vm453, %v347, 0
      %v473 = vsel %vm453, %v351, 0
      %v476 = vsel %vm453, %v355, 0
      %v479 = vsel %vm453, %v359, 0
      %v482 = vsel %vm453, %v363, 0
      %v485 = vsel %vm453, %v367, 0
      %v488 = vsel %vm453, %v371, 0
      %v491 = vsel %vm453, %v375, 0
      %v494 = vsel %vm453, %v379, 0
      %v497 = vsel %vm453, %v383, 0
      %v500 = vsel %vm453, %v387, 0
      %v503 = vsel %vm453, %v391, 0
      %v506 = vsel %vm453, %v395, 0
      %508 = vmatprep.subr.mxu0 0.0
      %509 = vmatpush1.msra.mxu0 %v396
      %510 = vmatprep.subr.mxu0 0.0
      %511 = vmatpush1.msra.mxu0 %v397
      %512 = vmatprep.subr.mxu0 0.0
      %513 = vmatpush1.msra.mxu0 %v398
      %514 = vmatprep.subr.mxu0 0.0
      %515 = vmatpush1.msra.mxu0 %v399
      %516 = vmatprep.subr.mxu0 0.0
      %517 = vmatpush1.msra.mxu0 %v400
      %518 = vmatprep.subr.mxu0 0.0
      %519 = vmatpush1.msra.mxu0 %v401
      %520 = vmatprep.subr.mxu0 0.0
      %521 = vmatpush1.msra.mxu0 %v402
      %522 = vmatprep.subr.mxu0 0.0
      %523 = vmatpush1.msra.mxu0 %v403
      %524 = vmatprep.subr.mxu0 0.0
      %525 = vmatpush1.msra.mxu0 %v404
      %526 = vmatprep.subr.mxu0 0.0
      %527 = vmatpush1.msra.mxu0 %v405
      %528 = vmatprep.subr.mxu0 0.0
      %529 = vmatpush1.msra.mxu0 %v406
      %530 = vmatprep.subr.mxu0 0.0
      %531 = vmatpush1.msra.mxu0 %v407
      %532 = vmatprep.subr.mxu0 0.0
      %533 = vmatpush1.msra.mxu0 %v408
      %534 = vmatprep.subr.mxu0 0.0
      %535 = vmatpush1.msra.mxu0 %v409
      %536 = vmatprep.subr.mxu0 0.0
      %537 = vmatpush1.msra.mxu0 %v410
      %538 = vmatprep.subr.mxu0 0.0
      %539 = vmatpush1.msra.mxu0 %v411
      %540 = vmatprep.subr.mxu0 0.0
      %541 = vmatpush1.msra.mxu0 %v412
      %542 = vmatprep.subr.mxu0 0.0
      %543 = vmatpush1.msra.mxu0 %v413
      %544 = vmatprep.subr.mxu0 0.0
      %545 = vmatpush1.msra.mxu0 %v414
      %546 = vmatprep.subr.mxu0 0.0
      %547 = vmatpush1.msra.mxu0 %v415
      %548 = vmatprep.subr.mxu0 0.0
      %549 = vmatpush1.msra.mxu0 %v416
      %550 = vmatprep.subr.mxu0 0.0
      %551 = vmatpush1.msra.mxu0 %v417
      %552 = vmatprep.subr.mxu0 0.0
      %553 = vmatpush1.msra.mxu0 %v418
      %554 = vmatprep.subr.mxu0 0.0
      %555 = vmatpush1.msra.mxu0 %v419
      %556 = vmatprep.subr.mxu0 0.0
      %557 = vmatpush1.msra.mxu0 %v420
      %558 = vmatprep.subr.mxu0 0.0
      %559 = vmatpush1.msra.mxu0 %v421
      %560 = vmatprep.subr.mxu0 0.0
      %561 = vmatpush1.msra.mxu0 %v422
      %562 = vmatprep.subr.mxu0 0.0
      %563 = vmatpush1.msra.mxu0 %v423
      %564 = vmatprep.subr.mxu0 0.0
      %565 = vmatpush1.msra.mxu0 %v424
      %566 = vmatprep.subr.mxu0 0.0
      %567 = vmatpush1.msra.mxu0 %v425
      %568 = vmatprep.subr.mxu0 0.0
      %569 = vmatpush1.msra.mxu0 %v426
      %570 = vmatprep.subr.mxu0 0.0
      %571 = vmatpush1.msra.mxu0 %v427
      %572 = vmatprep.mubr.f32.mxu0 %v325
      %573 = vmatmul.mubr.f32.gmra.mrb[0].mxu0 %v324
      %v574 = vpop.f32.mrb[0].mxu0
      %v575 = vadd.f32 %v451, %v574
      %v576 = vpop.f32.mrb[0].mxu0
      %577 = vmatprep.mubr.f32.mxu0 %v329
      %578 = vmatmul.mubr.f32.gmra.mrb[0].mxu0 %v328
      %v579 = vpop.f32.mrb[0].mxu0
      %v580 = vadd.f32 %v451, %v579
      %v581 = vpop.f32.mrb[0].mxu0
      %582 = vmatprep.mubr.f32.mxu0 %v333
      %583 = vmatmul.mubr.f32.gmra.mrb[0].mxu0 %v332
      %v584 = vpop.f32.mrb[0].mxu0
      %v585 = vadd.f32 %v451, %v584
      %v586 = vpop.f32.mrb[0].mxu0
      %587 = vmatprep.mubr.f32.mxu0 %v337
      %588 = vmatmul.mubr.f32.gmra.mrb[0].mxu0 %v336
      %v589 = vpop.f32.mrb[0].mxu0
      %v590 = vadd.f32 %v451, %v589
      %v591 = vpop.f32.mrb[0].mxu0
      %592 = vmatprep.mubr.f32.mxu0 %v341
      %593 = vmatmul.mubr.f32.gmra.mrb[0].mxu0 %v340
      %v594 = vpop.f32.mrb[0].mxu0
      %v595 = vadd.f32 %v451, %v594
      %v596 = vpop.f32.mrb[0].mxu0
      %597 = vmatprep.mubr.f32.mxu0 %v345
      %598 = vmatmul.mubr.f32.gmra.mrb[0].mxu0 %v344
      %v599 = vpop.f32.mrb[0].mxu0
      %v600 = vadd.f32 %v451, %v599
      %v601 = vpop.f32.mrb[0].mxu0
      %602 = vmatprep.mubr.f32.mxu0 %v349
      %603 = vmatmul.mubr.f32.gmra.mrb[0].mxu0 %v348
      %v604 = vpop.f32.mrb[0].mxu0
      %v605 = vadd.f32 %v451, %v604
      %v606 = vpop.f32.mrb[0].mxu0
      %607 = vmatprep.mubr.f32.mxu0 %v353
      %608 = vmatmul.mubr.f32.gmra.mrb[0].mxu0 %v352
      %v609 = vpop.f32.mrb[0].mxu0
      %v610 = vadd.f32 %v451, %v609
      %v611 = vpop.f32.mrb[0].mxu0
      %612 = vmatprep.mubr.f32.mxu0 %v357
      %613 = vmatmul.mubr.f32.gmra.mrb[0].mxu0 %v356
      %v614 = vpop.f32.mrb[0].mxu0
      %v615 = vadd.f32 %v451, %v614
      %v616 = vpop.f32.mrb[0].mxu0
      %617 = vmatprep.mubr.f32.mxu0 %v361
      %618 = vmatmul.mubr.f32.gmra.mrb[0].mxu0 %v360
      %v619 = vpop.f32.mrb[0].mxu0
      %v620 = vadd.f32 %v451, %v619
      %v621 = vpop.f32.mrb[0].mxu0
      %622 = vmatprep.mubr.f32.mxu0 %v365
      %623 = vmatmul.mubr.f32.gmra.mrb[0].mxu0 %v364
      %v624 = vpop.f32.mrb[0].mxu0
      %v625 = vadd.f32 %v451, %v624
      %v626 = vpop.f32.mrb[0].mxu0
      %627 = vmatprep.mubr.f32.mxu0 %v369
      %628 = vmatmul.mubr.f32.gmra.mrb[0].mxu0 %v368
      %v629 = vpop.f32.mrb[0].mxu0
      %v630 = vadd.f32 %v451, %v629
      %v631 = vpop.f32.mrb[0].mxu0
      %632 = vmatprep.mubr.f32.mxu0 %v373
      %633 = vmatmul.mubr.f32.gmra.mrb[0].mxu0 %v372
      %v634 = vpop.f32.mrb[0].mxu0
      %v635 = vadd.f32 %v451, %v634
      %v636 = vpop.f32.mrb[0].mxu0
      %637 = vmatprep.mubr.f32.mxu0 %v377
      %638 = vmatmul.mubr.f32.gmra.mrb[0].mxu0 %v376
      %v639 = vpop.f32.mrb[0].mxu0
      %v640 = vadd.f32 %v451, %v639
      %v641 = vpop.f32.mrb[0].mxu0
      %642 = vmatprep.mubr.f32.mxu0 %v381
      %643 = vmatmul.mubr.f32.gmra.mrb[0].mxu0 %v380
      %v644 = vpop.f32.mrb[0].mxu0
      %v645 = vadd.f32 %v451, %v644
      %v646 = vpop.f32.mrb[0].mxu0
      %647 = vmatprep.mubr.f32.mxu0 %v385
      %648 = vmatmul.mubr.f32.gmra.mrb[0].mxu0 %v384
      %v649 = vpop.f32.mrb[0].mxu0
      %v650 = vadd.f32 %v451, %v649
      %v651 = vpop.f32.mrb[0].mxu0
      %652 = vmatprep.mubr.f32.mxu0 %v389
      %653 = vmatmul.mubr.f32.gmra.mrb[0].mxu0 %v388
      %v654 = vpop.f32.mrb[0].mxu0
      %v655 = vadd.f32 %v451, %v654
      %v656 = vpop.f32.mrb[0].mxu0
      %657 = vmatprep.mubr.f32.mxu0 %v393
      %658 = vmatmul.mubr.f32.gmra.mrb[0].mxu0 %v392
      %v659 = vpop.f32.mrb[0].mxu0
      %v660 = vadd.f32 %v451, %v659
      %v661 = vpop.f32.mrb[0].mxu0
      %662 = vdwg.mxu0
      %663 = vmatprep.subr.mxu0 0.0
      %664 = vmatpush1.msra.mxu0 %v428
      %665 = vmatprep.subr.mxu0 0.0
      %666 = vmatpush1.msra.mxu0 %v429
      %667 = vmatprep.subr.mxu0 0.0
      %668 = vmatpush1.msra.mxu0 %v430
      %669 = vmatprep.subr.mxu0 0.0
      %670 = vmatpush1.msra.mxu0 %v431
      %671 = vmatprep.subr.mxu0 0.0
      %672 = vmatpush1.msra.mxu0 %v432
      %673 = vmatprep.subr.mxu0 0.0
      %674 = vmatpush1.msra.mxu0 %v433
      %675 = vmatprep.subr.mxu0 0.0
      %676 = vmatpush1.msra.mxu0 %v434
      %677 = vmatprep.subr.mxu0 0.0
      %678 = vmatpush1.msra.mxu0 %v435
      %679 = vmatprep.subr.mxu0 0.0
      %680 = vmatpush1.msra.mxu0 %v436
      %681 = vmatprep.subr.mxu0 0.0
      %682 = vmatpush1.msra.mxu0 %v437
      %683 = vmatprep.subr.mxu0 0.0
      %684 = vmatpush1.msra.mxu0 %v438
      %685 = vmatprep.subr.mxu0 0.0
      %686 = vmatpush1.msra.mxu0 %v439
      %687 = vmatprep.subr.mxu0 0.0
      %688 = vmatpush1.msra.mxu0 %v440
      %689 = vmatprep.subr.mxu0 0.0
      %690 = vmatpush1.msra.mxu0 %v441
      %691 = vmatprep.subr.mxu0 0.0
      %692 = vmatpush1.msra.mxu0 %v442
      %693 = vmatprep.subr.mxu0 0.0
      %694 = vmatpush1.msra.mxu0 %v443
      %695 = vmatprep.subr.mxu0 0.0
      %696 = vmatpush1.msra.mxu0 %v444
      %697 = vmatprep.subr.mxu0 0.0
      %698 = vmatpush1.msra.mxu0 %v445
      %699 = vmatprep.subr.mxu0 0.0
      %700 = vmatpush1.msra.mxu0 0.0
      %701 = vmatprep.subr.mxu0 0.0
      %702 = vmatpush1.msra.mxu0 0.0
      %703 = vmatprep.subr.mxu0 0.0
      %704 = vmatpush1.msra.mxu0 0.0
      %705 = vmatprep.subr.mxu0 0.0
      %706 = vmatpush1.msra.mxu0 0.0
      %707 = vmatprep.subr.mxu0 0.0
      %708 = vmatpush1.msra.mxu0 0.0
      %709 = vmatprep.subr.mxu0 0.0
      %710 = vmatpush1.msra.mxu0 0.0
      %711 = vmatprep.subr.mxu0 0.0
      %712 = vmatpush1.msra.mxu0 0.0
      %713 = vmatprep.subr.mxu0 0.0
      %714 = vmatpush1.msra.mxu0 0.0
      %715 = vmatprep.subr.mxu0 0.0
      %716 = vmatpush1.msra.mxu0 0.0
      %717 = vmatprep.subr.mxu0 0.0
      %718 = vmatpush1.msra.mxu0 0.0
      %719 = vmatprep.subr.mxu0 0.0
      %720 = vmatpush1.msra.mxu0 0.0
      %721 = vmatprep.subr.mxu0 0.0
      %722 = vmatpush1.msra.mxu0 0.0
      %723 = vmatprep.subr.mxu0 0.0
      %724 = vmatpush1.msra.mxu0 0.0
      %725 = vmatprep.subr.mxu0 0.0
      %726 = vmatpush1.msra.mxu0 0.0
      %727 = vmatprep.mubr.f32.mxu0 %v455
      %728 = vmatmul.mubr.f32.gmra.mrb[0].mxu0 %v326
      %v729 = vpop.f32.mrb[0].mxu0
      %v730 = vadd.f32 %v575, %v729
      %v731 = vpop.f32.mrb[0].mxu0
      %732 = vmatprep.mubr.f32.mxu0 %v458
      %733 = vmatmul.mubr.f32.gmra.mrb[0].mxu0 %v330
      %v734 = vpop.f32.mrb[0].mxu0
      %v735 = vadd.f32 %v580, %v734
      %v736 = vpop.f32.mrb[0].mxu0
      %737 = vmatprep.mubr.f32.mxu0 %v461
      %738 = vmatmul.mubr.f32.gmra.mrb[0].mxu0 %v334
      %v739 = vpop.f32.mrb[0].mxu0
      %v740 = vadd.f32 %v585, %v739
      %v741 = vpop.f32.mrb[0].mxu0
      %742 = vmatprep.mubr.f32.mxu0 %v464
      %743 = vmatmul.mubr.f32.gmra.mrb[0].mxu0 %v338
      %v744 = vpop.f32.mrb[0].mxu0
      %v745 = vadd.f32 %v590, %v744
      %v746 = vpop.f32.mrb[0].mxu0
      %747 = vmatprep.mubr.f32.mxu0 %v467
      %748 = vmatmul.mubr.f32.gmra.mrb[0].mxu0 %v342
      %v749 = vpop.f32.mrb[0].mxu0
      %v750 = vadd.f32 %v595, %v749
      %v751 = vpop.f32.mrb[0].mxu0
      %752 = vmatprep.mubr.f32.mxu0 %v470
      %753 = vmatmul.mubr.f32.gmra.mrb[0].mxu0 %v346
      %v754 = vpop.f32.mrb[0].mxu0
      %v755 = vadd.f32 %v600, %v754
      %v756 = vpop.f32.mrb[0].mxu0
      %757 = vmatprep.mubr.f32.mxu0 %v473
      %758 = vmatmul.mubr.f32.gmra.mrb[0].mxu0 %v350
      %v759 = vpop.f32.mrb[0].mxu0
      %v760 = vadd.f32 %v605, %v759
      %v761 = vpop.f32.mrb[0].mxu0
      %762 = vmatprep.mubr.f32.mxu0 %v476
      %763 = vmatmul.mubr.f32.gmra.mrb[0].mxu0 %v354
      %v764 = vpop.f32.mrb[0].mxu0
      %v765 = vadd.f32 %v610, %v764
      %v766 = vpop.f32.mrb[0].mxu0
      %767 = vmatprep.mubr.f32.mxu0 %v479
      %768 = vmatmul.mubr.f32.gmra.mrb[0].mxu0 %v358
      %v769 = vpop.f32.mrb[0].mxu0
      %v770 = vadd.f32 %v615, %v769
      %v771 = vpop.f32.mrb[0].mxu0
      %772 = vmatprep.mubr.f32.mxu0 %v482
      %773 = vmatmul.mubr.f32.gmra.mrb[0].mxu0 %v362
      %v774 = vpop.f32.mrb[0].mxu0
      %v775 = vadd.f32 %v620, %v774
      %v776 = vpop.f32.mrb[0].mxu0
      %777 = vmatprep.mubr.f32.mxu0 %v485
      %778 = vmatmul.mubr.f32.gmra.mrb[0].mxu0 %v366
      %v779 = vpop.f32.mrb[0].mxu0
      %v780 = vadd.f32 %v625, %v779
      %v781 = vpop.f32.mrb[0].mxu0
      %782 = vmatprep.mubr.f32.mxu0 %v488
      %783 = vmatmul.mubr.f32.gmra.mrb[0].mxu0 %v370
      %v784 = vpop.f32.mrb[0].mxu0
      %v785 = vadd.f32 %v630, %v784
      %v786 = vpop.f32.mrb[0].mxu0
      %787 = vmatprep.mubr.f32.mxu0 %v491
      %788 = vmatmul.mubr.f32.gmra.mrb[0].mxu0 %v374
      %v789 = vpop.f32.mrb[0].mxu0
      %v790 = vadd.f32 %v635, %v789
      %v791 = vpop.f32.mrb[0].mxu0
      %792 = vmatprep.mubr.f32.mxu0 %v494
      %793 = vmatmul.mubr.f32.gmra.mrb[0].mxu0 %v378
      %v794 = vpop.f32.mrb[0].mxu0
      %v795 = vadd.f32 %v640, %v794
      %v796 = vpop.f32.mrb[0].mxu0
      %797 = vmatprep.mubr.f32.mxu0 %v497
      %798 = vmatmul.mubr.f32.gmra.mrb[0].mxu0 %v382
      %v799 = vpop.f32.mrb[0].mxu0
      %v800 = vadd.f32 %v645, %v799
      %v801 = vpop.f32.mrb[0].mxu0
      %802 = vmatprep.mubr.f32.mxu0 %v500
      %803 = vmatmul.mubr.f32.gmra.mrb[0].mxu0 %v386
      %v804 = vpop.f32.mrb[0].mxu0
      %v805 = vadd.f32 %v650, %v804
      %v806 = vpop.f32.mrb[0].mxu0
      %807 = vmatprep.mubr.f32.mxu0 %v503
      %808 = vmatmul.mubr.f32.gmra.mrb[0].mxu0 %v390
      %v809 = vpop.f32.mrb[0].mxu0
      %v810 = vadd.f32 %v655, %v809
      %v811 = vpop.f32.mrb[0].mxu0
      %812 = vmatprep.mubr.f32.mxu0 %v506
      %813 = vmatmul.mubr.f32.gmra.mrb[0].mxu0 %v394
      %v814 = vpop.f32.mrb[0].mxu0
      %v815 = vadd.f32 %v660, %v814
      %v816 = vpop.f32.mrb[0].mxu0
      %817 = vdwg.mxu0
      %vm818 = vcmask 195584
      %819 = vst.msk [vmem:[%s316] sm:$0xff] %vm818, %v730
      %820 = vst.msk [vmem:[%s316 + $0x8] sm:$0xff] %vm818, %v735
      %821 = vst.msk [vmem:[%s316 + $0x10] sm:$0xff] %vm818, %v740
      %822 = vst.msk [vmem:[%s316 + $0x18] sm:$0xff] %vm818, %v745
      %823 = vst.msk [vmem:[%s316 + $0x20] sm:$0xff] %vm818, %v750
      %824 = vst.msk [vmem:[%s316 + $0x28] sm:$0xff] %vm818, %v755
      %825 = vst.msk [vmem:[%s316 + $0x30] sm:$0xff] %vm818, %v760
      %826 = vst.msk [vmem:[%s316 + $0x38] sm:$0xff] %vm818, %v765
      %827 = vst.msk [vmem:[%s316 + $0x40] sm:$0xff] %vm818, %v770
      %828 = vst.msk [vmem:[%s316 + $0x48] sm:$0xff] %vm818, %v775
      %829 = vst.msk [vmem:[%s316 + $0x50] sm:$0xff] %vm818, %v780
      %830 = vst.msk [vmem:[%s316 + $0x58] sm:$0xff] %vm818, %v785
      %831 = vst.msk [vmem:[%s316 + $0x60] sm:$0xff] %vm818, %v790
      %832 = vst.msk [vmem:[%s316 + $0x68] sm:$0xff] %vm818, %v795
      %833 = vst.msk [vmem:[%s316 + $0x70] sm:$0xff] %vm818, %v800
      %834 = vst.msk [vmem:[%s316 + $0x78] sm:$0xff] %vm818, %v805
      %835 = vst.msk [vmem:[%s316 + $0x80] sm:$0xff] %vm818, %v810
      %836 = vst.msk [vmem:[%s316 + $0x88] sm:$0xff] %vm818, %v815
      %v837 = vld [vmem:[%s310] sm:$0xff]
      %v838 = vld [vmem:[%s310 + $0x8] sm:$0xff]
      %v839 = vld [vmem:[%s310 + $0x10] sm:$0xff]
      %v840 = vld [vmem:[%s310 + $0x18] sm:$0xff]
      %v841 = vld [vmem:[%s310 + $0x20] sm:$0xff]
      %v842 = vld [vmem:[%s310 + $0x28] sm:$0xff]
      %v843 = vld [vmem:[%s310 + $0x30] sm:$0xff]
      %v844 = vld [vmem:[%s310 + $0x38] sm:$0xff]
      %v845 = vld [vmem:[%s310 + $0x40] sm:$0xff]
      %v846 = vld [vmem:[%s310 + $0x48] sm:$0xff]
      %v847 = vld [vmem:[%s310 + $0x50] sm:$0xff]
      %v848 = vld [vmem:[%s310 + $0x58] sm:$0xff]
      %v849 = vld [vmem:[%s310 + $0x60] sm:$0xff]
      %v850 = vld [vmem:[%s310 + $0x68] sm:$0xff]
      %v851 = vld [vmem:[%s310 + $0x70] sm:$0xff]
      %v852 = vld [vmem:[%s310 + $0x78] sm:$0xff]
      %v853 = vld [vmem:[%s310 + $0x80] sm:$0xff]
      %v854 = vld [vmem:[%s310 + $0x88] sm:$0xff]
      %v855 = vld [vmem:[%s310 + $0x90] sm:$0xff]
      %v856 = vld [vmem:[%s310 + $0x98] sm:$0xff]
      %v857 = vld [vmem:[%s310 + $0xa0] sm:$0xff]
      %v858 = vld [vmem:[%s310 + $0xa8] sm:$0xff]
      %v859 = vld [vmem:[%s310 + $0xb0] sm:$0xff]
      %v860 = vld [vmem:[%s310 + $0xb8] sm:$0xff]
      %v861 = vld [vmem:[%s310 + $0xc0] sm:$0xff]
      %v862 = vld [vmem:[%s310 + $0xc8] sm:$0xff]
      %v863 = vld [vmem:[%s310 + $0xd0] sm:$0xff]
      %v864 = vld [vmem:[%s310 + $0xd8] sm:$0xff]
      %v865 = vld [vmem:[%s310 + $0xe0] sm:$0xff]
      %v866 = vld [vmem:[%s310 + $0xe8] sm:$0xff]
      %v867 = vld [vmem:[%s310 + $0xf0] sm:$0xff]
      %v868 = vld [vmem:[%s310 + $0xf8] sm:$0xff]
      %v869 = vld [vmem:[%s310 + $0x100] sm:$0xff]
      %v870 = vld [vmem:[%s310 + $0x108] sm:$0xff]
      %v871 = vld [vmem:[%s310 + $0x110] sm:$0xff]
      %v872 = vld [vmem:[%s310 + $0x118] sm:$0xff]
      %v873 = vld [vmem:[%s4] sm:$0xff]
      %v874 = vld [vmem:[%s4 + $0x8] sm:$0xff]
      %v875 = vld [vmem:[%s4 + $0x10] sm:$0xff]
      %v876 = vld [vmem:[%s4 + $0x18] sm:$0xff]
      %v877 = vld [vmem:[%s4 + $0x20] sm:$0xff]
      %v878 = vld [vmem:[%s4 + $0x28] sm:$0xff]
      %v879 = vld [vmem:[%s4 + $0x30] sm:$0xff]
      %v880 = vld [vmem:[%s4 + $0x38] sm:$0xff]
      %v881 = vld [vmem:[%s4 + $0x40] sm:$0xff]
      %v882 = vld [vmem:[%s4 + $0x48] sm:$0xff]
      %v883 = vld [vmem:[%s4 + $0x50] sm:$0xff]
      %v884 = vld [vmem:[%s4 + $0x58] sm:$0xff]
      %v885 = vld [vmem:[%s4 + $0x60] sm:$0xff]
      %v886 = vld [vmem:[%s4 + $0x68] sm:$0xff]
      %v887 = vld [vmem:[%s4 + $0x70] sm:$0xff]
      %v888 = vld [vmem:[%s4 + $0x78] sm:$0xff]
      %v889 = vld [vmem:[%s4 + $0x80] sm:$0xff]
      %v890 = vld [vmem:[%s4 + $0x88] sm:$0xff]
      %v891 = vld [vmem:[%s5] sm:$0x1]
      %v893 = vlaneseq
      %v894 = vshrl.u32 %v893, 7
      %v895 = vsub.s32 0, %v894
      %v896 = vrot.slane %v891, %v895
      %v899 = vsel %vm453, %v838, 0
      %v902 = vsel %vm453, %v840, 0
      %v905 = vsel %vm453, %v842, 0
      %v908 = vsel %vm453, %v844, 0
      %v911 = vsel %vm453, %v846, 0
      %v914 = vsel %vm453, %v848, 0
      %v917 = vsel %vm453, %v850, 0
      %v920 = vsel %vm453, %v852, 0
      %v923 = vsel %vm453, %v854, 0
      %v926 = vsel %vm453, %v856, 0
      %v929 = vsel %vm453, %v858, 0
      %v932 = vsel %vm453, %v860, 0
      %v935 = vsel %vm453, %v862, 0
      %v938 = vsel %vm453, %v864, 0
      %v941 = vsel %vm453, %v866, 0
      %v944 = vsel %vm453, %v868, 0
      %v947 = vsel %vm453, %v870, 0
      %v950 = vsel %vm453, %v872, 0
      %952 = vmatprep.subr.mxu0 0.0
      %953 = vmatpush1.msra.mxu0 %v873
      %954 = vmatprep.subr.mxu0 0.0
      %955 = vmatpush1.msra.mxu0 %v874
      %956 = vmatprep.subr.mxu0 0.0
      %957 = vmatpush1.msra.mxu0 %v875
      %958 = vmatprep.subr.mxu0 0.0
      %959 = vmatpush1.msra.mxu0 %v876
      %960 = vmatprep.subr.mxu0 0.0
      %961 = vmatpush1.msra.mxu0 %v877
      %962 = vmatprep.subr.mxu0 0.0
      %963 = vmatpush1.msra.mxu0 %v878
      %964 = vmatprep.subr.mxu0 0.0
      %965 = vmatpush1.msra.mxu0 %v879
      %966 = vmatprep.subr.mxu0 0.0
      %967 = vmatpush1.msra.mxu0 %v880
      %968 = vmatprep.subr.mxu0 0.0
      %969 = vmatpush1.msra.mxu0 %v881
      %970 = vmatprep.subr.mxu0 0.0
      %971 = vmatpush1.msra.mxu0 %v882
      %972 = vmatprep.subr.mxu0 0.0
      %973 = vmatpush1.msra.mxu0 %v883
      %974 = vmatprep.subr.mxu0 0.0
      %975 = vmatpush1.msra.mxu0 %v884
      %976 = vmatprep.subr.mxu0 0.0
      %977 = vmatpush1.msra.mxu0 %v885
      %978 = vmatprep.subr.mxu0 0.0
      %979 = vmatpush1.msra.mxu0 %v886
      %980 = vmatprep.subr.mxu0 0.0
      %981 = vmatpush1.msra.mxu0 %v887
      %982 = vmatprep.subr.mxu0 0.0
      %983 = vmatpush1.msra.mxu0 %v888
      %984 = vmatprep.subr.mxu0 0.0
      %985 = vmatpush1.msra.mxu0 %v889
      %986 = vmatprep.subr.mxu0 0.0
      %987 = vmatpush1.msra.mxu0 %v890
      %988 = vmatprep.subr.mxu0 0.0
      %989 = vmatpush1.msra.mxu0 0.0
      %990 = vmatprep.subr.mxu0 0.0
      %991 = vmatpush1.msra.mxu0 0.0
      %992 = vmatprep.subr.mxu0 0.0
      %993 = vmatpush1.msra.mxu0 0.0
      %994 = vmatprep.subr.mxu0 0.0
      %995 = vmatpush1.msra.mxu0 0.0
      %996 = vmatprep.subr.mxu0 0.0
      %997 = vmatpush1.msra.mxu0 0.0
      %998 = vmatprep.subr.mxu0 0.0
      %999 = vmatpush1.msra.mxu0 0.0
      %1000 = vmatprep.subr.mxu0 0.0
      %1001 = vmatpush1.msra.mxu0 0.0
      %1002 = vmatprep.subr.mxu0 0.0
      %1003 = vmatpush1.msra.mxu0 0.0
      %1004 = vmatprep.subr.mxu0 0.0
      %1005 = vmatpush1.msra.mxu0 0.0
      %1006 = vmatprep.subr.mxu0 0.0
      %1007 = vmatpush1.msra.mxu0 0.0
      %1008 = vmatprep.subr.mxu0 0.0
      %1009 = vmatpush1.msra.mxu0 0.0
      %1010 = vmatprep.subr.mxu0 0.0
      %1011 = vmatpush1.msra.mxu0 0.0
      %1012 = vmatprep.subr.mxu0 0.0
      %1013 = vmatpush1.msra.mxu0 0.0
      %1014 = vmatprep.subr.mxu0 0.0
      %1015 = vmatpush1.msra.mxu0 0.0
      %1016 = vmatprep.mubr.f32.mxu0 %v899
      %1017 = vmatmul.mubr.f32.gmra.mrb[0].mxu0 %v837
      %v1018 = vpop.f32.mrb[0].mxu0
      %v1019 = vadd.f32 %v896, %v1018
      %v1020 = vpop.f32.mrb[0].mxu0
      %1021 = vmatprep.mubr.f32.mxu0 %v902
      %1022 = vmatmul.mubr.f32.gmra.mrb[0].mxu0 %v839
      %v1023 = vpop.f32.mrb[0].mxu0
      %v1024 = vadd.f32 %v896, %v1023
      %v1025 = vpop.f32.mrb[0].mxu0
      %1026 = vmatprep.mubr.f32.mxu0 %v905
      %1027 = vmatmul.mubr.f32.gmra.mrb[0].mxu0 %v841
      %v1028 = vpop.f32.mrb[0].mxu0
      %v1029 = vadd.f32 %v896, %v1028
      %v1030 = vpop.f32.mrb[0].mxu0
      %1031 = vmatprep.mubr.f32.mxu0 %v908
      %1032 = vmatmul.mubr.f32.gmra.mrb[0].mxu0 %v843
      %v1033 = vpop.f32.mrb[0].mxu0
      %v1034 = vadd.f32 %v896, %v1033
      %v1035 = vpop.f32.mrb[0].mxu0
      %1036 = vmatprep.mubr.f32.mxu0 %v911
      %1037 = vmatmul.mubr.f32.gmra.mrb[0].mxu0 %v845
      %v1038 = vpop.f32.mrb[0].mxu0
      %v1039 = vadd.f32 %v896, %v1038
      %v1040 = vpop.f32.mrb[0].mxu0
      %1041 = vmatprep.mubr.f32.mxu0 %v914
      %1042 = vmatmul.mubr.f32.gmra.mrb[0].mxu0 %v847
      %v1043 = vpop.f32.mrb[0].mxu0
      %v1044 = vadd.f32 %v896, %v1043
      %v1045 = vpop.f32.mrb[0].mxu0
      %1046 = vmatprep.mubr.f32.mxu0 %v917
      %1047 = vmatmul.mubr.f32.gmra.mrb[0].mxu0 %v849
      %v1048 = vpop.f32.mrb[0].mxu0
      %v1049 = vadd.f32 %v896, %v1048
      %v1050 = vpop.f32.mrb[0].mxu0
      %1051 = vmatprep.mubr.f32.mxu0 %v920
      %1052 = vmatmul.mubr.f32.gmra.mrb[0].mxu0 %v851
      %v1053 = vpop.f32.mrb[0].mxu0
      %v1054 = vadd.f32 %v896, %v1053
      %v1055 = vpop.f32.mrb[0].mxu0
      %1056 = vmatprep.mubr.f32.mxu0 %v923
      %1057 = vmatmul.mubr.f32.gmra.mrb[0].mxu0 %v853
      %v1058 = vpop.f32.mrb[0].mxu0
      %v1059 = vadd.f32 %v896, %v1058
      %v1060 = vpop.f32.mrb[0].mxu0
      %1061 = vmatprep.mubr.f32.mxu0 %v926
      %1062 = vmatmul.mubr.f32.gmra.mrb[0].mxu0 %v855
      %v1063 = vpop.f32.mrb[0].mxu0
      %v1064 = vadd.f32 %v896, %v1063
      %v1065 = vpop.f32.mrb[0].mxu0
      %1066 = vmatprep.mubr.f32.mxu0 %v929
      %1067 = vmatmul.mubr.f32.gmra.mrb[0].mxu0 %v857
      %v1068 = vpop.f32.mrb[0].mxu0
      %v1069 = vadd.f32 %v896, %v1068
      %v1070 = vpop.f32.mrb[0].mxu0
      %1071 = vmatprep.mubr.f32.mxu0 %v932
      %1072 = vmatmul.mubr.f32.gmra.mrb[0].mxu0 %v859
      %v1073 = vpop.f32.mrb[0].mxu0
      %v1074 = vadd.f32 %v896, %v1073
      %v1075 = vpop.f32.mrb[0].mxu0
      %1076 = vmatprep.mubr.f32.mxu0 %v935
      %1077 = vmatmul.mubr.f32.gmra.mrb[0].mxu0 %v861
      %v1078 = vpop.f32.mrb[0].mxu0
      %v1079 = vadd.f32 %v896, %v1078
      %v1080 = vpop.f32.mrb[0].mxu0
      %1081 = vmatprep.mubr.f32.mxu0 %v938
      %1082 = vmatmul.mubr.f32.gmra.mrb[0].mxu0 %v863
      %v1083 = vpop.f32.mrb[0].mxu0
      %v1084 = vadd.f32 %v896, %v1083
      %v1085 = vpop.f32.mrb[0].mxu0
      %1086 = vmatprep.mubr.f32.mxu0 %v941
      %1087 = vmatmul.mubr.f32.gmra.mrb[0].mxu0 %v865
      %v1088 = vpop.f32.mrb[0].mxu0
      %v1089 = vadd.f32 %v896, %v1088
      %v1090 = vpop.f32.mrb[0].mxu0
      %1091 = vmatprep.mubr.f32.mxu0 %v944
      %1092 = vmatmul.mubr.f32.gmra.mrb[0].mxu0 %v867
      %v1093 = vpop.f32.mrb[0].mxu0
      %v1094 = vadd.f32 %v896, %v1093
      %v1095 = vpop.f32.mrb[0].mxu0
      %1096 = vmatprep.mubr.f32.mxu0 %v947
      %1097 = vmatmul.mubr.f32.gmra.mrb[0].mxu0 %v869
      %v1098 = vpop.f32.mrb[0].mxu0
      %v1099 = vadd.f32 %v896, %v1098
      %v1100 = vpop.f32.mrb[0].mxu0
      %1101 = vmatprep.mubr.f32.mxu0 %v950
      %1102 = vmatmul.mubr.f32.gmra.mrb[0].mxu0 %v871
      %v1103 = vpop.f32.mrb[0].mxu0
      %v1104 = vadd.f32 %v896, %v1103
      %v1105 = vpop.f32.mrb[0].mxu0
      %1106 = vdwg.mxu0
      %1107 = vst.msk [vmem:[%s322] sm:$0xff] %vm818, %v1019
      %1108 = vst.msk [vmem:[%s322 + $0x8] sm:$0xff] %vm818, %v1024
      %1109 = vst.msk [vmem:[%s322 + $0x10] sm:$0xff] %vm818, %v1029
      %1110 = vst.msk [vmem:[%s322 + $0x18] sm:$0xff] %vm818, %v1034
      %1111 = vst.msk [vmem:[%s322 + $0x20] sm:$0xff] %vm818, %v1039
      %1112 = vst.msk [vmem:[%s322 + $0x28] sm:$0xff] %vm818, %v1044
      %1113 = vst.msk [vmem:[%s322 + $0x30] sm:$0xff] %vm818, %v1049
      %1114 = vst.msk [vmem:[%s322 + $0x38] sm:$0xff] %vm818, %v1054
      %1115 = vst.msk [vmem:[%s322 + $0x40] sm:$0xff] %vm818, %v1059
      %1116 = vst.msk [vmem:[%s322 + $0x48] sm:$0xff] %vm818, %v1064
      %1117 = vst.msk [vmem:[%s322 + $0x50] sm:$0xff] %vm818, %v1069
      %1118 = vst.msk [vmem:[%s322 + $0x58] sm:$0xff] %vm818, %v1074
      %1119 = vst.msk [vmem:[%s322 + $0x60] sm:$0xff] %vm818, %v1079
      %1120 = vst.msk [vmem:[%s322 + $0x68] sm:$0xff] %vm818, %v1084
      %1121 = vst.msk [vmem:[%s322 + $0x70] sm:$0xff] %vm818, %v1089
      %1122 = vst.msk [vmem:[%s322 + $0x78] sm:$0xff] %vm818, %v1094
      %1123 = vst.msk [vmem:[%s322 + $0x80] sm:$0xff] %vm818, %v1099
      %1124 = vst.msk [vmem:[%s322 + $0x88] sm:$0xff] %vm818, %v1104
      %s1125 = smul.u32 18, %s19
      %p1126 = scmp.lt.s32.totalorder %s1125, 35
      %s1127 = scalar_select %p1126, %s1125, 35
      %s1128 = smul.addr %s1127, 8
      %s1129 = scalar_lea.vmem %s6, %s1128
      %s1130 = smul.u32 18, %s19
      %p1131 = scmp.lt.s32.totalorder %s1130, 35
      %s1132 = scalar_select %p1131, %s1130, 35
      %s1133 = smul.addr %s1132, 8
      %s1134 = scalar_lea.vmem %s7, %s1133
      // Predicated region
      $region45: #{net_forward.11} parent=43 // pred_check
        %p1135 = pneg %p173
      $region46: #{net_forward.11} parent=43 // pred_check_branch
        %1137 = sbr.rel (%p1135) target = $region48
      $region47: #{net_forward.11} parent=43 // pred_region
        %s1138 = smul.u32 18, %s19
      $region48: #{net_forward.11} parent=43 // pred_fallthru
        _
      // Predicated region
      $region49: #{net_forward.11} parent=43 // pred_check
        %p1139 = pneg %p199
      $region50: #{net_forward.11} parent=43 // pred_check_branch
        %1141 = sbr.rel (%p1139) target = $region52
      $region51: #{net_forward.11} parent=43 // pred_region
        %s1142 = smul.u32 18, %s19
      $region52: #{net_forward.11} parent=43 // pred_fallthru
        _
    $region44: #{net_forward.11} parent=5 // pred_fallthru
      _
    %p1143 = scmp.le.s32.totalorder 2, %s14
    // Predicated region
    $region53: #{net_forward.11} parent=5 // pred_check
      %p1144 = pneg %p1143
    $region54: #{net_forward.11} parent=5 // pred_check_branch
      %1146 = sbr.rel (%p1144) target = $region56
    $region55: #{net_forward.11} parent=5 // pred_region
      %s1147 = ssub.s32 %s14, 2
      // Predicated region
      $region57: #{net_forward.11} parent=55 // pred_check
        %p1148 = pneg %p179
      $region58: #{net_forward.11} parent=55 // pred_check_branch
        %1150 = sbr.rel (%p1148) target = $region60
      $region59: #{net_forward.11} parent=55 // pred_region
        %s1151 = smul.u32 18, %s20
        %p1152 = scmp.lt.s32.totalorder %s1151, 35
        %s1153 = scalar_select %p1152, %s1151, 35
        %s1154 = smul.addr %s1153, 8
        %s1155 = scalar_lea.vmem %s6, %s1154
      $region60: #{net_forward.11} parent=55 // pred_fallthru
        _
      // Predicated region
      $region61: #{net_forward.11} parent=55 // pred_check
        %p1156 = pneg %p205
      $region62: #{net_forward.11} parent=55 // pred_check_branch
        %1158 = sbr.rel (%p1156) target = $region64
      $region63: #{net_forward.11} parent=55 // pred_region
        %s1159 = smul.u32 18, %s20
        %p1160 = scmp.lt.s32.totalorder %s1159, 35
        %s1161 = scalar_select %p1160, %s1159, 35
        %s1162 = smul.addr %s1161, 8
        %s1163 = scalar_lea.vmem %s7, %s1162
      $region64: #{net_forward.11} parent=55 // pred_fallthru
        _
    $region56: #{net_forward.11} parent=5 // pred_fallthru
      _
  $region6: #{net_forward.11} parent=0 // loop_footer
    %s18 = sadd.s32 1, %s14
  $region7: #{net_forward.11} parent=0 // loop_footer_branch
    %13 = sbr.rel target = $region3
  $region8: #{net_forward.11} parent=0 // loop_exit
    _

// kernel: net_forward.12
$region0: #{net_forward.12}
  #allocation0 [shape = 'u32[]', space=smem, size = 0x4, offset = 0x4, fixed_abs, tag = 'smem constant byte address 0x4 - core index']
  #allocation1 [shape = 'u32[144,128]{1,0:T(1,128)}', space=vmem, size = 0x12000, scoped, tag = 'internal scratch']
  %s0 = inlined_call_operand.vmem [shape: f32[288,216], index: 0, kind: input, shape index: {}]
  %s1 = inlined_call_operand.vmem [shape: f32[216,24], index: 1, kind: input, shape index: {}]
  %s2 = inlined_call_operand.vmem [shape: f32[1,24], index: 2, kind: input, shape index: {}]
  %s3 = inlined_call_operand.vmem [shape: f32[288,24], index: 3, kind: output, shape index: {}]
  %s4 = sld [smem:[#allocation0]]
  $region45: #{net_forward.12} parent=0
    _
  %s6 = ssub.s32 1, %s4
  %s7 = scalar_select 0, %s6, %s4
  loop: start=0, step=1, limit=4
  $region2: #{net_forward.12} parent=0 // loop_pre_header
    _
  $region3: #{net_forward.12} parent=0 // loop_header
    %s9 = sphi 0, %s13
    %p10 = scmp.ge.s32.totalorder %s9, 4
    %s19 = sphi 0, %s21
    %s22 = sphi 0, %s19
    %s23 = sphi 0, %s22
    %s39 = sphi 0, %s23
    %s43 = sphi 0, %s43
    %s45 = sphi 0, %s43
    %s46 = sphi 0, %s45
    %s60 = sphi 0, %s46
    %s64 = sphi 0, %s64
    %s66 = sphi 0, %s64
    %s67 = sphi 0, %s66
    %s81 = sphi 0, %s67
    %s87 = sphi 0, %s89
    %s90 = sphi 0, %s87
    %s91 = sphi 0, %s90
    %s107 = sphi 0, %s91
  $region4: #{net_forward.12} parent=0 // loop_header_branch
    %12 = sbr.rel (%p10) target = $region8
  $region5: #{net_forward.12} parent=0 // loop_body
    %s14 = ssub.s32 %s9, 1
    %s15 = ssub.s32 %s9, 2
    %s16 = sadd.s32 %s9, 1
    %s17 = ssub.s32 %s9, %s16
    %p18 = scmp.eq.s32.totalorder %s17, 0
    %s20 = sadd.s32 %s19, 1
    %s21 = scalar_select %p18, %s19, %s20
    %p24 = pneg %p18
    %p25 = scmp.eq.s32.totalorder %s9, 1
    %p26 = por %p24, %p25
    %p27 = scmp.ne.s32.totalorder %s19, %s22
    %p28 = scmp.eq.s32.totalorder %s9, 0
    %p29 = por %p27, %p28
    %p30 = scmp.ne.s32.totalorder %s19, %s22
    %p31 = scmp.eq.s32.totalorder %s14, 1
    %p32 = por %p30, %p31
    %p33 = scmp.ne.s32.totalorder %s22, %s23
    %p34 = scmp.eq.s32.totalorder %s14, 0
    %p35 = por %p33, %p34
    %p36 = scmp.ne.s32.totalorder %s22, %s23
    %p37 = scmp.eq.s32.totalorder %s15, 1
    %p38 = por %p36, %p37
    %p40 = scmp.ne.s32.totalorder %s23, %s39
    %p41 = scmp.eq.s32.totalorder %s15, 0
    %p42 = por %p40, %p41
    %s44 = sadd.s32 %s43, 1
    %p47 = scmp.eq.s32.totalorder %s9, 1
    %p48 = scmp.ne.s32.totalorder %s43, %s45
    %p49 = scmp.eq.s32.totalorder %s9, 0
    %p50 = por %p48, %p49
    %p51 = scmp.ne.s32.totalorder %s43, %s45
    %p52 = scmp.eq.s32.totalorder %s14, 1
    %p53 = por %p51, %p52
    %p54 = scmp.ne.s32.totalorder %s45, %s46
    %p55 = scmp.eq.s32.totalorder %s14, 0
    %p56 = por %p54, %p55
    %p57 = scmp.ne.s32.totalorder %s45, %s46
    %p58 = scmp.eq.s32.totalorder %s15, 1
    %p59 = por %p57, %p58
    %p61 = scmp.ne.s32.totalorder %s46, %s60
    %p62 = scmp.eq.s32.totalorder %s15, 0
    %p63 = por %p61, %p62
    %s65 = sadd.s32 %s64, 1
    %p68 = scmp.eq.s32.totalorder %s9, 1
    %p69 = scmp.ne.s32.totalorder %s64, %s66
    %p70 = scmp.eq.s32.totalorder %s9, 0
    %p71 = por %p69, %p70
    %p72 = scmp.ne.s32.totalorder %s64, %s66
    %p73 = scmp.eq.s32.totalorder %s14, 1
    %p74 = por %p72, %p73
    %p75 = scmp.ne.s32.totalorder %s66, %s67
    %p76 = scmp.eq.s32.totalorder %s14, 0
    %p77 = por %p75, %p76
    %p78 = scmp.ne.s32.totalorder %s66, %s67
    %p79 = scmp.eq.s32.totalorder %s15, 1
    %p80 = por %p78, %p79
    %p82 = scmp.ne.s32.totalorder %s67, %s81
    %p83 = scmp.eq.s32.totalorder %s15, 0
    %p84 = por %p82, %p83
    %s85 = ssub.s32 %s9, %s16
    %p86 = scmp.eq.s32.totalorder %s85, 0
    %s88 = sadd.s32 %s87, 1
    %s89 = scalar_select %p86, %s87, %s88
    %p92 = pneg %p86
    %p93 = scmp.eq.s32.totalorder %s9, 1
    %p94 = por %p92, %p93
    %p95 = scmp.ne.s32.totalorder %s87, %s90
    %p96 = scmp.eq.s32.totalorder %s9, 0
    %p97 = por %p95, %p96
    %p98 = scmp.ne.s32.totalorder %s87, %s90
    %p99 = scmp.eq.s32.totalorder %s14, 1
    %p100 = por %p98, %p99
    %p101 = scmp.ne.s32.totalorder %s90, %s91
    %p102 = scmp.eq.s32.totalorder %s14, 0
    %p103 = por %p101, %p102
    %p104 = scmp.ne.s32.totalorder %s90, %s91
    %p105 = scmp.eq.s32.totalorder %s15, 1
    %p106 = por %p104, %p105
    %p108 = scmp.ne.s32.totalorder %s91, %s107
    %p109 = scmp.eq.s32.totalorder %s15, 0
    %p110 = por %p108, %p109
    %p111 = scmp.le.s32.totalorder 1, %s9
    %p112 = scmp.lt.s32.totalorder %s9, 3
    %p113 = pnand %p111, %p112
    %p114 = pneg %p113
    // Predicated region
    $region9: #{net_forward.12} parent=5 // pred_check
      _
    $region10: #{net_forward.12} parent=5 // pred_check_branch
      %116 = sbr.rel (%p113) target = $region12
    $region11: #{net_forward.12} parent=5 // pred_region
      %s117 = ssub.s32 %s9, 1
      // Predicated region
      $region13: #{net_forward.12} parent=11 // pred_check
        %p118 = pneg %p56
      $region14: #{net_forward.12} parent=11 // pred_check_branch
        %120 = sbr.rel (%p118) target = $region16
      $region15: #{net_forward.12} parent=11 // pred_region
        _
      $region16: #{net_forward.12} parent=11 // pred_fallthru
        _
      // Predicated region
      $region17: #{net_forward.12} parent=11 // pred_check
        %p121 = pneg %p77
      $region18: #{net_forward.12} parent=11 // pred_check_branch
        %123 = sbr.rel (%p121) target = $region20
      $region19: #{net_forward.12} parent=11 // pred_region
        _
      $region20: #{net_forward.12} parent=11 // pred_fallthru
        _
    $region12: #{net_forward.12} parent=5 // pred_fallthru
      _
    %p124 = scmp.lt.s32.totalorder %s9, 2
    // Predicated region
    $region21: #{net_forward.12} parent=5 // pred_check
      %p125 = pneg %p124
    $region22: #{net_forward.12} parent=5 // pred_check_branch
      %127 = sbr.rel (%p125) target = $region24
    $region23: #{net_forward.12} parent=5 // pred_region
      // Predicated region
      $region25: #{net_forward.12} parent=23 // pred_check
        %p128 = pneg %p29
      $region26: #{net_forward.12} parent=23 // pred_check_branch
        %130 = sbr.rel (%p128) target = $region28
      $region27: #{net_forward.12} parent=23 // pred_region
        %s131 = smul.u32 18, %s9
        %p132 = scmp.lt.s32.totalorder %s131, 35
        %s133 = scalar_select %p132, %s131, 35
        %s134 = smul.addr %s133, 2
        %s135 = smul.addr %s134, 8
        %s136 = scalar_lea.vmem %s0, %s135
        %s137 = smul.u32 18, %s9
      $region28: #{net_forward.12} parent=23 // pred_fallthru
        _
    $region24: #{net_forward.12} parent=5 // pred_fallthru
      _
    %p138 = scmp.le.s32.totalorder 1, %s9
    %p139 = scmp.lt.s32.totalorder %s9, 3
    %p140 = pnand %p138, %p139
    %p141 = pneg %p140
    // Predicated region
    $region29: #{net_forward.12} parent=5 // pred_check
      _
    $region30: #{net_forward.12} parent=5 // pred_check_branch
      %143 = sbr.rel (%p140) target = $region32
    $region31: #{net_forward.12} parent=5 // pred_region
      %s144 = ssub.s32 %s9, 1
      %s145 = smul.u32 18, %s14
      %p146 = scmp.lt.s32.totalorder %s145, 35
      %s147 = scalar_select %p146, %s145, 35
      %s148 = smul.addr %s147, 2
      %s149 = smul.addr %s148, 8
      %s150 = scalar_lea.vmem %s0, %s149
      %p151 = pneg %p35
      %p152 = pneg %p32
      %p153 = pneg %p56
      %p154 = pneg %p53
      %p155 = pneg %p77
      %p156 = pneg %p74
      %p157 = pneg %p103
      %p158 = pneg %p100
      %s159 = smul.u32 18, %s14
      %p160 = scmp.lt.s32.totalorder %s159, 35
      %s161 = scalar_select %p160, %s159, 35
      %s162 = smul.addr %s161, 8
      %s163 = scalar_lea.vmem %s3, %s162
      %s164 = smul.u32 18, %s14
      %p165 = scmp.lt.s32.totalorder %s164, 35
      %s166 = scalar_select %p165, %s164, 35
      %s167 = smul.addr %s166, 2
      %s168 = smul.addr %s167, 8
      %s169 = scalar_lea.vmem %s0, %s168
      %s170 = smul.u32 18, %s14
      %s171 = smul.u32 18, %s14
      %p172 = scmp.lt.s32.totalorder %s171, 35
      %s173 = scalar_select %p172, %s171, 35
      %s174 = smul.addr %s173, 8
      %s175 = scalar_lea.vmem %s3, %s174
      %s176 = smul.u32 18, %s14
      %v177 = vld [vmem:[%s169] sm:$0xff]
      %v178 = vld [vmem:[%s169 + $0x8] sm:$0xff]
      %v179 = vld [vmem:[%s169 + $0x10] sm:$0xff]
      %v180 = vld [vmem:[%s169 + $0x18] sm:$0xff]
      %v181 = vld [vmem:[%s169 + $0x20] sm:$0xff]
      %v182 = vld [vmem:[%s169 + $0x28] sm:$0xff]
      %v183 = vld [vmem:[%s169 + $0x30] sm:$0xff]
      %v184 = vld [vmem:[%s169 + $0x38] sm:$0xff]
      %v185 = vld [vmem:[%s169 + $0x40] sm:$0xff]
      %v186 = vld [vmem:[%s169 + $0x48] sm:$0xff]
      %v187 = vld [vmem:[%s169 + $0x50] sm:$0xff]
      %v188 = vld [vmem:[%s169 + $0x58] sm:$0xff]
      %v189 = vld [vmem:[%s169 + $0x60] sm:$0xff]
      %v190 = vld [vmem:[%s169 + $0x68] sm:$0xff]
      %v191 = vld [vmem:[%s169 + $0x70] sm:$0xff]
      %v192 = vld [vmem:[%s169 + $0x78] sm:$0xff]
      %v193 = vld [vmem:[%s169 + $0x80] sm:$0xff]
      %v194 = vld [vmem:[%s169 + $0x88] sm:$0xff]
      %v195 = vld [vmem:[%s169 + $0x90] sm:$0xff]
      %v196 = vld [vmem:[%s169 + $0x98] sm:$0xff]
      %v197 = vld [vmem:[%s169 + $0xa0] sm:$0xff]
      %v198 = vld [vmem:[%s169 + $0xa8] sm:$0xff]
      %v199 = vld [vmem:[%s169 + $0xb0] sm:$0xff]
      %v200 = vld [vmem:[%s169 + $0xb8] sm:$0xff]
      %v201 = vld [vmem:[%s169 + $0xc0] sm:$0xff]
      %v202 = vld [vmem:[%s169 + $0xc8] sm:$0xff]
      %v203 = vld [vmem:[%s169 + $0xd0] sm:$0xff]
      %v204 = vld [vmem:[%s169 + $0xd8] sm:$0xff]
      %v205 = vld [vmem:[%s169 + $0xe0] sm:$0xff]
      %v206 = vld [vmem:[%s169 + $0xe8] sm:$0xff]
      %v207 = vld [vmem:[%s169 + $0xf0] sm:$0xff]
      %v208 = vld [vmem:[%s169 + $0xf8] sm:$0xff]
      %v209 = vld [vmem:[%s169 + $0x100] sm:$0xff]
      %v210 = vld [vmem:[%s169 + $0x108] sm:$0xff]
      %v211 = vld [vmem:[%s169 + $0x110] sm:$0xff]
      %v212 = vld [vmem:[%s169 + $0x118] sm:$0xff]
      %v213 = vld [vmem:[%s1] sm:$0xff]
      %v214 = vld [vmem:[%s1 + $0x8] sm:$0xff]
      %v215 = vld [vmem:[%s1 + $0x10] sm:$0xff]
      %v216 = vld [vmem:[%s1 + $0x18] sm:$0xff]
      %v217 = vld [vmem:[%s1 + $0x20] sm:$0xff]
      %v218 = vld [vmem:[%s1 + $0x28] sm:$0xff]
      %v219 = vld [vmem:[%s1 + $0x30] sm:$0xff]
      %v220 = vld [vmem:[%s1 + $0x38] sm:$0xff]
      %v221 = vld [vmem:[%s1 + $0x40] sm:$0xff]
      %v222 = vld [vmem:[%s1 + $0x48] sm:$0xff]
      %v223 = vld [vmem:[%s1 + $0x50] sm:$0xff]
      %v224 = vld [vmem:[%s1 + $0x58] sm:$0xff]
      %v225 = vld [vmem:[%s1 + $0x60] sm:$0xff]
      %v226 = vld [vmem:[%s1 + $0x68] sm:$0xff]
      %v227 = vld [vmem:[%s1 + $0x70] sm:$0xff]
      %v228 = vld [vmem:[%s1 + $0x78] sm:$0xff]
      %v229 = vld [vmem:[%s1 + $0x80] sm:$0xff]
      %v230 = vld [vmem:[%s1 + $0x88] sm:$0xff]
      %v231 = vld [vmem:[%s1 + $0x90] sm:$0xff]
      %v232 = vld [vmem:[%s1 + $0x98] sm:$0xff]
      %v233 = vld [vmem:[%s1 + $0xa0] sm:$0xff]
      %v234 = vld [vmem:[%s1 + $0xa8] sm:$0xff]
      %v235 = vld [vmem:[%s1 + $0xb0] sm:$0xff]
      %v236 = vld [vmem:[%s1 + $0xb8] sm:$0xff]
      %v237 = vld [vmem:[%s1 + $0xc0] sm:$0xff]
      %v238 = vld [vmem:[%s1 + $0xc8] sm:$0xff]
      %v239 = vld [vmem:[%s1 + $0xd0] sm:$0xff]
      %v240 = vld [vmem:[%s2] sm:$0x1]
      %v242 = vlaneseq
      %v243 = vshrl.u32 %v242, 7
      %v244 = vsub.s32 0, %v243
      %v245 = vrot.slane %v240, %v244
      %vm247 = vcmask 719872
      %v249 = vsel %vm247, %v178, 0
      %v252 = vsel %vm247, %v180, 0
      %v255 = vsel %vm247, %v182, 0
      %v258 = vsel %vm247, %v184, 0
      %v261 = vsel %vm247, %v186, 0
      %v264 = vsel %vm247, %v188, 0
      %v267 = vsel %vm247, %v190, 0
      %v270 = vsel %vm247, %v192, 0
      %v273 = vsel %vm247, %v194, 0
      %v276 = vsel %vm247, %v196, 0
      %v279 = vsel %vm247, %v198, 0
      %v282 = vsel %vm247, %v200, 0
      %v285 = vsel %vm247, %v202, 0
      %v288 = vsel %vm247, %v204, 0
      %v291 = vsel %vm247, %v206, 0
      %v294 = vsel %vm247, %v208, 0
      %v297 = vsel %vm247, %v210, 0
      %v300 = vsel %vm247, %v212, 0
      %302 = vmatprep.subr.mxu0 0.0
      %303 = vmatpush1.msra.mxu0 %v213
      %304 = vmatprep.subr.mxu0 0.0
      %305 = vmatpush1.msra.mxu0 %v214
      %306 = vmatprep.subr.mxu0 0.0
      %307 = vmatpush1.msra.mxu0 %v215
      %308 = vmatprep.subr.mxu0 0.0
      %309 = vmatpush1.msra.mxu0 %v216
      %310 = vmatprep.subr.mxu0 0.0
      %311 = vmatpush1.msra.mxu0 %v217
      %312 = vmatprep.subr.mxu0 0.0
      %313 = vmatpush1.msra.mxu0 %v218
      %314 = vmatprep.subr.mxu0 0.0
      %315 = vmatpush1.msra.mxu0 %v219
      %316 = vmatprep.subr.mxu0 0.0
      %317 = vmatpush1.msra.mxu0 %v220
      %318 = vmatprep.subr.mxu0 0.0
      %319 = vmatpush1.msra.mxu0 %v221
      %320 = vmatprep.subr.mxu0 0.0
      %321 = vmatpush1.msra.mxu0 %v222
      %322 = vmatprep.subr.mxu0 0.0
      %323 = vmatpush1.msra.mxu0 %v223
      %324 = vmatprep.subr.mxu0 0.0
      %325 = vmatpush1.msra.mxu0 %v224
      %326 = vmatprep.subr.mxu0 0.0
      %327 = vmatpush1.msra.mxu0 %v225
      %328 = vmatprep.subr.mxu0 0.0
      %329 = vmatpush1.msra.mxu0 %v226
      %330 = vmatprep.subr.mxu0 0.0
      %331 = vmatpush1.msra.mxu0 %v227
      %332 = vmatprep.subr.mxu0 0.0
      %333 = vmatpush1.msra.mxu0 %v228
      %334 = vmatprep.subr.mxu0 0.0
      %335 = vmatpush1.msra.mxu0 %v229
      %336 = vmatprep.subr.mxu0 0.0
      %337 = vmatpush1.msra.mxu0 %v230
      %338 = vmatprep.subr.mxu0 0.0
      %339 = vmatpush1.msra.mxu0 %v231
      %340 = vmatprep.subr.mxu0 0.0
      %341 = vmatpush1.msra.mxu0 %v232
      %342 = vmatprep.subr.mxu0 0.0
      %343 = vmatpush1.msra.mxu0 %v233
      %344 = vmatprep.subr.mxu0 0.0
      %345 = vmatpush1.msra.mxu0 %v234
      %346 = vmatprep.subr.mxu0 0.0
      %347 = vmatpush1.msra.mxu0 %v235
      %348 = vmatprep.subr.mxu0 0.0
      %349 = vmatpush1.msra.mxu0 %v236
      %350 = vmatprep.subr.mxu0 0.0
      %351 = vmatpush1.msra.mxu0 %v237
      %352 = vmatprep.subr.mxu0 0.0
      %353 = vmatpush1.msra.mxu0 %v238
      %354 = vmatprep.subr.mxu0 0.0
      %355 = vmatpush1.msra.mxu0 %v239
      %356 = vmatprep.subr.mxu0 0.0
      %357 = vmatpush1.msra.mxu0 0.0
      %358 = vmatprep.subr.mxu0 0.0
      %359 = vmatpush1.msra.mxu0 0.0
      %360 = vmatprep.subr.mxu0 0.0
      %361 = vmatpush1.msra.mxu0 0.0
      %362 = vmatprep.subr.mxu0 0.0
      %363 = vmatpush1.msra.mxu0 0.0
      %364 = vmatprep.subr.mxu0 0.0
      %365 = vmatpush1.msra.mxu0 0.0
      %366 = vmatprep.mubr.f32.mxu0 %v249
      %367 = vmatmul.mubr.f32.gmra.mrb[0].mxu0 %v177
      %v368 = vpop.f32.mrb[0].mxu0
      %v369 = vadd.f32 %v245, %v368
      %v370 = vpop.f32.mrb[0].mxu0
      %371 = vmatprep.mubr.f32.mxu0 %v252
      %372 = vmatmul.mubr.f32.gmra.mrb[0].mxu0 %v179
      %v373 = vpop.f32.mrb[0].mxu0
      %v374 = vadd.f32 %v245, %v373
      %v375 = vpop.f32.mrb[0].mxu0
      %376 = vmatprep.mubr.f32.mxu0 %v255
      %377 = vmatmul.mubr.f32.gmra.mrb[0].mxu0 %v181
      %v378 = vpop.f32.mrb[0].mxu0
      %v379 = vadd.f32 %v245, %v378
      %v380 = vpop.f32.mrb[0].mxu0
      %381 = vmatprep.mubr.f32.mxu0 %v258
      %382 = vmatmul.mubr.f32.gmra.mrb[0].mxu0 %v183
      %v383 = vpop.f32.mrb[0].mxu0
      %v384 = vadd.f32 %v245, %v383
      %v385 = vpop.f32.mrb[0].mxu0
      %386 = vmatprep.mubr.f32.mxu0 %v261
      %387 = vmatmul.mubr.f32.gmra.mrb[0].mxu0 %v185
      %v388 = vpop.f32.mrb[0].mxu0
      %v389 = vadd.f32 %v245, %v388
      %v390 = vpop.f32.mrb[0].mxu0
      %391 = vmatprep.mubr.f32.mxu0 %v264
      %392 = vmatmul.mubr.f32.gmra.mrb[0].mxu0 %v187
      %v393 = vpop.f32.mrb[0].mxu0
      %v394 = vadd.f32 %v245, %v393
      %v395 = vpop.f32.mrb[0].mxu0
      %396 = vmatprep.mubr.f32.mxu0 %v267
      %397 = vmatmul.mubr.f32.gmra.mrb[0].mxu0 %v189
      %v398 = vpop.f32.mrb[0].mxu0
      %v399 = vadd.f32 %v245, %v398
      %v400 = vpop.f32.mrb[0].mxu0
      %401 = vmatprep.mubr.f32.mxu0 %v270
      %402 = vmatmul.mubr.f32.gmra.mrb[0].mxu0 %v191
      %v403 = vpop.f32.mrb[0].mxu0
      %v404 = vadd.f32 %v245, %v403
      %v405 = vpop.f32.mrb[0].mxu0
      %406 = vmatprep.mubr.f32.mxu0 %v273
      %407 = vmatmul.mubr.f32.gmra.mrb[0].mxu0 %v193
      %v408 = vpop.f32.mrb[0].mxu0
      %v409 = vadd.f32 %v245, %v408
      %v410 = vpop.f32.mrb[0].mxu0
      %411 = vmatprep.mubr.f32.mxu0 %v276
      %412 = vmatmul.mubr.f32.gmra.mrb[0].mxu0 %v195
      %v413 = vpop.f32.mrb[0].mxu0
      %v414 = vadd.f32 %v245, %v413
      %v415 = vpop.f32.mrb[0].mxu0
      %416 = vmatprep.mubr.f32.mxu0 %v279
      %417 = vmatmul.mubr.f32.gmra.mrb[0].mxu0 %v197
      %v418 = vpop.f32.mrb[0].mxu0
      %v419 = vadd.f32 %v245, %v418
      %v420 = vpop.f32.mrb[0].mxu0
      %421 = vmatprep.mubr.f32.mxu0 %v282
      %422 = vmatmul.mubr.f32.gmra.mrb[0].mxu0 %v199
      %v423 = vpop.f32.mrb[0].mxu0
      %v424 = vadd.f32 %v245, %v423
      %v425 = vpop.f32.mrb[0].mxu0
      %426 = vmatprep.mubr.f32.mxu0 %v285
      %427 = vmatmul.mubr.f32.gmra.mrb[0].mxu0 %v201
      %v428 = vpop.f32.mrb[0].mxu0
      %v429 = vadd.f32 %v245, %v428
      %v430 = vpop.f32.mrb[0].mxu0
      %431 = vmatprep.mubr.f32.mxu0 %v288
      %432 = vmatmul.mubr.f32.gmra.mrb[0].mxu0 %v203
      %v433 = vpop.f32.mrb[0].mxu0
      %v434 = vadd.f32 %v245, %v433
      %v435 = vpop.f32.mrb[0].mxu0
      %436 = vmatprep.mubr.f32.mxu0 %v291
      %437 = vmatmul.mubr.f32.gmra.mrb[0].mxu0 %v205
      %v438 = vpop.f32.mrb[0].mxu0
      %v439 = vadd.f32 %v245, %v438
      %v440 = vpop.f32.mrb[0].mxu0
      %441 = vmatprep.mubr.f32.mxu0 %v294
      %442 = vmatmul.mubr.f32.gmra.mrb[0].mxu0 %v207
      %v443 = vpop.f32.mrb[0].mxu0
      %v444 = vadd.f32 %v245, %v443
      %v445 = vpop.f32.mrb[0].mxu0
      %446 = vmatprep.mubr.f32.mxu0 %v297
      %447 = vmatmul.mubr.f32.gmra.mrb[0].mxu0 %v209
      %v448 = vpop.f32.mrb[0].mxu0
      %v449 = vadd.f32 %v245, %v448
      %v450 = vpop.f32.mrb[0].mxu0
      %451 = vmatprep.mubr.f32.mxu0 %v300
      %452 = vmatmul.mubr.f32.gmra.mrb[0].mxu0 %v211
      %v453 = vpop.f32.mrb[0].mxu0
      %v454 = vadd.f32 %v245, %v453
      %v455 = vpop.f32.mrb[0].mxu0
      %456 = vdwg.mxu0
      %vm457 = vcmask 195584
      %458 = vst.msk [vmem:[%s175] sm:$0xff] %vm457, %v369
      %459 = vst.msk [vmem:[%s175 + $0x8] sm:$0xff] %vm457, %v374
      %460 = vst.msk [vmem:[%s175 + $0x10] sm:$0xff] %vm457, %v379
      %461 = vst.msk [vmem:[%s175 + $0x18] sm:$0xff] %vm457, %v384
      %462 = vst.msk [vmem:[%s175 + $0x20] sm:$0xff] %vm457, %v389
      %463 = vst.msk [vmem:[%s175 + $0x28] sm:$0xff] %vm457, %v394
      %464 = vst.msk [vmem:[%s175 + $0x30] sm:$0xff] %vm457, %v399
      %465 = vst.msk [vmem:[%s175 + $0x38] sm:$0xff] %vm457, %v404
      %466 = vst.msk [vmem:[%s175 + $0x40] sm:$0xff] %vm457, %v409
      %467 = vst.msk [vmem:[%s175 + $0x48] sm:$0xff] %vm457, %v414
      %468 = vst.msk [vmem:[%s175 + $0x50] sm:$0xff] %vm457, %v419
      %469 = vst.msk [vmem:[%s175 + $0x58] sm:$0xff] %vm457, %v424
      %470 = vst.msk [vmem:[%s175 + $0x60] sm:$0xff] %vm457, %v429
      %471 = vst.msk [vmem:[%s175 + $0x68] sm:$0xff] %vm457, %v434
      %472 = vst.msk [vmem:[%s175 + $0x70] sm:$0xff] %vm457, %v439
      %473 = vst.msk [vmem:[%s175 + $0x78] sm:$0xff] %vm457, %v444
      %474 = vst.msk [vmem:[%s175 + $0x80] sm:$0xff] %vm457, %v449
      %475 = vst.msk [vmem:[%s175 + $0x88] sm:$0xff] %vm457, %v454
      %s476 = smul.u32 18, %s14
      %p477 = scmp.lt.s32.totalorder %s476, 35
      %s478 = scalar_select %p477, %s476, 35
      %s479 = smul.addr %s478, 8
      %s480 = scalar_lea.vmem %s3, %s479
      // Predicated region
      $region33: #{net_forward.12} parent=31 // pred_check
        %p481 = pneg %p100
      $region34: #{net_forward.12} parent=31 // pred_check_branch
        %483 = sbr.rel (%p481) target = $region36
      $region35: #{net_forward.12} parent=31 // pred_region
        %s484 = smul.u32 18, %s14
      $region36: #{net_forward.12} parent=31 // pred_fallthru
        _
    $region32: #{net_forward.12} parent=5 // pred_fallthru
      _
    %p485 = scmp.le.s32.totalorder 2, %s9
    // Predicated region
    $region37: #{net_forward.12} parent=5 // pred_check
      %p486 = pneg %p485
    $region38: #{net_forward.12} parent=5 // pred_check_branch
      %488 = sbr.rel (%p486) target = $region40
    $region39: #{net_forward.12} parent=5 // pred_region
      %s489 = ssub.s32 %s9, 2
      // Predicated region
      $region41: #{net_forward.12} parent=39 // pred_check
        %p490 = pneg %p106
      $region42: #{net_forward.12} parent=39 // pred_check_branch
        %492 = sbr.rel (%p490) target = $region44
      $region43: #{net_forward.12} parent=39 // pred_region
        %s493 = smul.u32 18, %s15
        %p494 = scmp.lt.s32.totalorder %s493, 35
        %s495 = scalar_select %p494, %s493, 35
        %s496 = smul.addr %s495, 8
        %s497 = scalar_lea.vmem %s3, %s496
      $region44: #{net_forward.12} parent=39 // pred_fallthru
        _
    $region40: #{net_forward.12} parent=5 // pred_fallthru
      _
  $region6: #{net_forward.12} parent=0 // loop_footer
    %s13 = sadd.s32 1, %s9
  $region7: #{net_forward.12} parent=0 // loop_footer_branch
    %8 = sbr.rel target = $region3
  $region8: #{net_forward.12} parent=0 // loop_exit
    _

// kernel: tile.19
$region0: #{tile.19}
  %s0 = inlined_call_operand.vmem [shape: f32[9,20,24], index: 0, kind: input, shape index: {}]
  %s1 = inlined_call_operand.vmem [shape: f32[180,24], index: 1, kind: output, shape index: {}]
  %v2 = vld [vmem:[%s0] sm:$0xff]
  %vm3 = vcmask 195584
  %4 = vst.msk [vmem:[%s1] sm:$0xff] %vm3, %v2
  %s5 = scalar_lea.vmem %s0, 8
  %v6 = vld [vmem:[%s5] sm:$0xff]
  %vm7 = vcmask 195584
  %s8 = scalar_lea.vmem %s1, 8
  %9 = vst.msk [vmem:[%s8] sm:$0xff] %vm7, %v6
  %s10 = scalar_lea.vmem %s0, 16
  %v11 = vld [vmem:[%s10] sm:$0xf]
  %vm12 = vcmask 195584
  %s13 = scalar_lea.vmem %s1, 16
  %14 = vst.msk [vmem:[%s13] sm:$0xf] %vm12, %v11
  %s15 = scalar_lea.vmem %s0, 24
  %v16 = vld [vmem:[%s15] sm:$0xff]
  %vm17 = vcmask 195584
  %s18 = scalar_lea.vmem %s1, 20
  %19 = vst.msk [vmem:[%s18] sm:$0xff] %vm17, %v16
  %s20 = scalar_lea.vmem %s0, 32
  %v21 = vld [vmem:[%s20] sm:$0xff]
  %vm22 = vcmask 195584
  %s23 = scalar_lea.vmem %s1, 28
  %24 = vst.msk [vmem:[%s23] sm:$0xff] %vm22, %v21
  %s25 = scalar_lea.vmem %s0, 40
  %v26 = vld [vmem:[%s25] sm:$0xf]
  %vm27 = vcmask 195584
  %s28 = scalar_lea.vmem %s1, 36
  %29 = vst.msk [vmem:[%s28] sm:$0xf] %vm27, %v26
  %s30 = scalar_lea.vmem %s0, 48
  %v31 = vld [vmem:[%s30] sm:$0xff]
  %vm32 = vcmask 195584
  %s33 = scalar_lea.vmem %s1, 40
  %34 = vst.msk [vmem:[%s33] sm:$0xff] %vm32, %v31
  %s35 = scalar_lea.vmem %s0, 56
  %v36 = vld [vmem:[%s35] sm:$0xff]
  %vm37 = vcmask 195584
  %s38 = scalar_lea.vmem %s1, 48
  %39 = vst.msk [vmem:[%s38] sm:$0xff] %vm37, %v36
  %s40 = scalar_lea.vmem %s0, 64
  %v41 = vld [vmem:[%s40] sm:$0xf]
  %vm42 = vcmask 195584
  %s43 = scalar_lea.vmem %s1, 56
  %44 = vst.msk [vmem:[%s43] sm:$0xf] %vm42, %v41
  %s45 = scalar_lea.vmem %s0, 72
  %v46 = vld [vmem:[%s45] sm:$0xff]
  %vm47 = vcmask 195584
  %s48 = scalar_lea.vmem %s1, 60
  %49 = vst.msk [vmem:[%s48] sm:$0xff] %vm47, %v46
  %s50 = scalar_lea.vmem %s0, 80
  %v51 = vld [vmem:[%s50] sm:$0xff]
  %vm52 = vcmask 195584
  %s53 = scalar_lea.vmem %s1, 68
  %54 = vst.msk [vmem:[%s53] sm:$0xff] %vm52, %v51
  %s55 = scalar_lea.vmem %s0, 88
  %v56 = vld [vmem:[%s55] sm:$0xf]
  %vm57 = vcmask 195584
  %s58 = scalar_lea.vmem %s1, 76
  %59 = vst.msk [vmem:[%s58] sm:$0xf] %vm57, %v56
  %s60 = scalar_lea.vmem %s0, 96
  %v61 = vld [vmem:[%s60] sm:$0xff]
  %vm62 = vcmask 195584
  %s63 = scalar_lea.vmem %s1, 80
  %64 = vst.msk [vmem:[%s63] sm:$0xff] %vm62, %v61
  %s65 = scalar_lea.vmem %s0, 104
  %v66 = vld [vmem:[%s65] sm:$0xff]
  %vm67 = vcmask 195584
  %s68 = scalar_lea.vmem %s1, 88
  %69 = vst.msk [vmem:[%s68] sm:$0xff] %vm67, %v66
  %s70 = scalar_lea.vmem %s0, 112
  %v71 = vld [vmem:[%s70] sm:$0xf]
  %vm72 = vcmask 195584
  %s73 = scalar_lea.vmem %s1, 96
  %74 = vst.msk [vmem:[%s73] sm:$0xf] %vm72, %v71
  %s75 = scalar_lea.vmem %s0, 120
  %v76 = vld [vmem:[%s75] sm:$0xff]
  %vm77 = vcmask 195584
  %s78 = scalar_lea.vmem %s1, 100
  %79 = vst.msk [vmem:[%s78] sm:$0xff] %vm77, %v76
  %s80 = scalar_lea.vmem %s0, 128
  %v81 = vld [vmem:[%s80] sm:$0xff]
  %vm82 = vcmask 195584
  %s83 = scalar_lea.vmem %s1, 108
  %84 = vst.msk [vmem:[%s83] sm:$0xff] %vm82, %v81
  %s85 = scalar_lea.vmem %s0, 136
  %v86 = vld [vmem:[%s85] sm:$0xf]
  %vm87 = vcmask 195584
  %s88 = scalar_lea.vmem %s1, 116
  %89 = vst.msk [vmem:[%s88] sm:$0xf] %vm87, %v86
  %s90 = scalar_lea.vmem %s0, 144
  %v91 = vld [vmem:[%s90] sm:$0xff]
  %vm92 = vcmask 195584
  %s93 = scalar_lea.vmem %s1, 120
  %94 = vst.msk [vmem:[%s93] sm:$0xff] %vm92, %v91
  %s95 = scalar_lea.vmem %s0, 152
  %v96 = vld [vmem:[%s95] sm:$0xff]
  %vm97 = vcmask 195584
  %s98 = scalar_lea.vmem %s1, 128
  %99 = vst.msk [vmem:[%s98] sm:$0xff] %vm97, %v96
  %s100 = scalar_lea.vmem %s0, 160
  %v101 = vld [vmem:[%s100] sm:$0xf]
  %vm102 = vcmask 195584
  %s103 = scalar_lea.vmem %s1, 136
  %104 = vst.msk [vmem:[%s103] sm:$0xf] %vm102, %v101
  %s105 = scalar_lea.vmem %s0, 168
  %v106 = vld [vmem:[%s105] sm:$0xff]
  %vm107 = vcmask 195584
  %s108 = scalar_lea.vmem %s1, 140
  %109 = vst.msk [vmem:[%s108] sm:$0xff] %vm107, %v106
  %s110 = scalar_lea.vmem %s0, 176
  %v111 = vld [vmem:[%s110] sm:$0xff]
  %vm112 = vcmask 195584
  %s113 = scalar_lea.vmem %s1, 148
  %114 = vst.msk [vmem:[%s113] sm:$0xff] %vm112, %v111
  %s115 = scalar_lea.vmem %s0, 184
  %v116 = vld [vmem:[%s115] sm:$0xf]
  %vm117 = vcmask 195584
  %s118 = scalar_lea.vmem %s1, 156
  %119 = vst.msk [vmem:[%s118] sm:$0xf] %vm117, %v116
  %s120 = scalar_lea.vmem %s0, 192
  %v121 = vld [vmem:[%s120] sm:$0xff]
  %vm122 = vcmask 195584
  %s123 = scalar_lea.vmem %s1, 160
  %124 = vst.msk [vmem:[%s123] sm:$0xff] %vm122, %v121
  %s125 = scalar_lea.vmem %s0, 200
  %v126 = vld [vmem:[%s125] sm:$0xff]
  %vm127 = vcmask 195584
  %s128 = scalar_lea.vmem %s1, 168
  %129 = vst.msk [vmem:[%s128] sm:$0xff] %vm127, %v126
  %s130 = scalar_lea.vmem %s0, 208
  %v131 = vld [vmem:[%s130] sm:$0xf]
  %vm132 = vcmask 195584
  %s133 = scalar_lea.vmem %s1, 176
  %134 = vst.msk [vmem:[%s133] sm:$0xf] %vm132, %v131

// kernel: net_forward.14
$region0: #{net_forward.14}
  #allocation0 [shape = 'u32[]', space=smem, size = 0x4, offset = 0x4, fixed_abs, tag = 'smem constant byte address 0x4 - core index']
  #allocation1 [shape = 'u32[144,128]{1,0:T(1,128)}', space=vmem, size = 0x12000, scoped, tag = 'internal scratch']
  %s0 = inlined_call_operand.vmem [shape: f32[32,24], index: 0, kind: input, shape index: {}]
  %s1 = inlined_call_operand.vmem [shape: f32[32,184], index: 1, kind: input, shape index: {}]
  %s2 = inlined_call_operand.vmem [shape: f32[24,48], index: 2, kind: input, shape index: {}]
  %s3 = inlined_call_operand.vmem [shape: f32[1,48], index: 3, kind: input, shape index: {}]
  %s4 = inlined_call_operand.vmem [shape: f32[184,24], index: 4, kind: input, shape index: {}]
  %s5 = inlined_call_operand.vmem [shape: f32[1,24], index: 5, kind: input, shape index: {}]
  %s6 = inlined_call_operand.vmem [shape: f32[32,48], index: 6, kind: output, shape index: {0}]
  %s7 = inlined_call_operand.vmem [shape: f32[32,24], index: 7, kind: output, shape index: {1}]
  %8 = xla_tuple %s6, %s7
  %s9 = sld [smem:[#allocation0]]
  $region42: #{net_forward.14} parent=0
    _
  %s11 = ssub.s32 1, %s9
  %s12 = scalar_select 0, %s11, %s9
  // Predicated region
  $region2: #{net_forward.14} parent=0 // pred_check
    _
  $region3: #{net_forward.14} parent=0 // pred_check_branch
    %14 = sbr.rel (0) target = $region5
  $region4: #{net_forward.14} parent=0 // pred_region
    _
  $region5: #{net_forward.14} parent=0 // pred_fallthru
    _
  // Predicated region
  $region6: #{net_forward.14} parent=0 // pred_check
    _
  $region7: #{net_forward.14} parent=0 // pred_check_branch
    %16 = sbr.rel (0) target = $region9
  $region8: #{net_forward.14} parent=0 // pred_region
    _
  $region9: #{net_forward.14} parent=0 // pred_fallthru
    _
  // Predicated region
  $region10: #{net_forward.14} parent=0 // pred_check
    _
  $region11: #{net_forward.14} parent=0 // pred_check_branch
    %18 = sbr.rel (0) target = $region13
  $region12: #{net_forward.14} parent=0 // pred_region
    _
  $region13: #{net_forward.14} parent=0 // pred_fallthru
    _
  // Predicated region
  $region14: #{net_forward.14} parent=0 // pred_check
    _
  $region15: #{net_forward.14} parent=0 // pred_check_branch
    %20 = sbr.rel (0) target = $region17
  $region16: #{net_forward.14} parent=0 // pred_region
    _
  $region17: #{net_forward.14} parent=0 // pred_fallthru
    _
  // Predicated region
  $region18: #{net_forward.14} parent=0 // pred_check
    _
  $region19: #{net_forward.14} parent=0 // pred_check_branch
    %22 = sbr.rel (0) target = $region21
  $region20: #{net_forward.14} parent=0 // pred_region
    _
  $region21: #{net_forward.14} parent=0 // pred_fallthru
    _
  // Predicated region
  $region22: #{net_forward.14} parent=0 // pred_check
    _
  $region23: #{net_forward.14} parent=0 // pred_check_branch
    %24 = sbr.rel (0) target = $region25
  $region24: #{net_forward.14} parent=0 // pred_region
    _
  $region25: #{net_forward.14} parent=0 // pred_fallthru
    _
  %v25 = vld [vmem:[%s0] sm:$0xff]
  %v26 = vld [vmem:[%s0 + $0x8] sm:$0xff]
  %v27 = vld [vmem:[%s0 + $0x10] sm:$0xff]
  %v28 = vld [vmem:[%s0 + $0x18] sm:$0xff]
  %v29 = vld [vmem:[%s2] sm:$0xff]
  %v30 = vld [vmem:[%s2 + $0x8] sm:$0xff]
  %v31 = vld [vmem:[%s2 + $0x10] sm:$0xff]
  %v32 = vld [vmem:[%s3] sm:$0x1]
  %v34 = vlaneseq
  %v35 = vshrl.u32 %v34, 7
  %v36 = vsub.s32 0, %v35
  %v37 = vrot.slane %v32, %v36
  %vm39 = vcmask 195584
  %v41 = vsel %vm39, %v25, 0
  %v44 = vsel %vm39, %v26, 0
  %v47 = vsel %vm39, %v27, 0
  %v50 = vsel %vm39, %v28, 0
  %52 = vmatprep.subr.mxu0 0.0
  %53 = vmatpush1.msra.mxu0 %v29
  %54 = vmatprep.subr.mxu0 0.0
  %55 = vmatpush1.msra.mxu0 %v30
  %56 = vmatprep.subr.mxu0 0.0
  %57 = vmatpush1.msra.mxu0 %v31
  %58 = vmatprep.subr.mxu0 0.0
  %59 = vmatpush1.msra.mxu0 0.0
  %60 = vmatprep.subr.mxu0 0.0
  %61 = vmatpush1.msra.mxu0 0.0
  %62 = vmatprep.subr.mxu0 0.0
  %63 = vmatpush1.msra.mxu0 0.0
  %64 = vmatprep.subr.mxu0 0.0
  %65 = vmatpush1.msra.mxu0 0.0
  %66 = vmatprep.subr.mxu0 0.0
  %67 = vmatpush1.msra.mxu0 0.0
  %68 = vmatprep.subr.mxu0 0.0
  %69 = vmatpush1.msra.mxu0 0.0
  %70 = vmatprep.subr.mxu0 0.0
  %71 = vmatpush1.msra.mxu0 0.0
  %72 = vmatprep.subr.mxu0 0.0
  %73 = vmatpush1.msra.mxu0 0.0
  %74 = vmatprep.subr.mxu0 0.0
  %75 = vmatpush1.msra.mxu0 0.0
  %76 = vmatprep.subr.mxu0 0.0
  %77 = vmatpush1.msra.mxu0 0.0
  %78 = vmatprep.subr.mxu0 0.0
  %79 = vmatpush1.msra.mxu0 0.0
  %80 = vmatprep.subr.mxu0 0.0
  %81 = vmatpush1.msra.mxu0 0.0
  %82 = vmatprep.subr.mxu0 0.0
  %83 = vmatpush1.msra.mxu0 0.0
  %84 = vmatprep.subr.mxu0 0.0
  %85 = vmatpush1.msra.mxu0 0.0
  %86 = vmatprep.subr.mxu0 0.0
  %87 = vmatpush1.msra.mxu0 0.0
  %88 = vmatprep.subr.mxu0 0.0
  %89 = vmatpush1.msra.mxu0 0.0
  %90 = vmatprep.subr.mxu0 0.0
  %91 = vmatpush1.msra.mxu0 0.0
  %92 = vmatprep.subr.mxu0 0.0
  %93 = vmatpush1.msra.mxu0 0.0
  %94 = vmatprep.subr.mxu0 0.0
  %95 = vmatpush1.msra.mxu0 0.0
  %96 = vmatprep.subr.mxu0 0.0
  %97 = vmatpush1.msra.mxu0 0.0
  %98 = vmatprep.subr.mxu0 0.0
  %99 = vmatpush1.msra.mxu0 0.0
  %100 = vmatprep.subr.mxu0 0.0
  %101 = vmatpush1.msra.mxu0 0.0
  %102 = vmatprep.subr.mxu0 0.0
  %103 = vmatpush1.msra.mxu0 0.0
  %104 = vmatprep.subr.mxu0 0.0
  %105 = vmatpush1.msra.mxu0 0.0
  %106 = vmatprep.subr.mxu0 0.0
  %107 = vmatpush1.msra.mxu0 0.0
  %108 = vmatprep.subr.mxu0 0.0
  %109 = vmatpush1.msra.mxu0 0.0
  %110 = vmatprep.subr.mxu0 0.0
  %111 = vmatpush1.msra.mxu0 0.0
  %112 = vmatprep.subr.mxu0 0.0
  %113 = vmatpush1.msra.mxu0 0.0
  %114 = vmatprep.subr.mxu0 0.0
  %115 = vmatpush1.msra.mxu0 0.0
  %116 = vmatprep.mubr.f32.mxu0 0.0
  %117 = vmatmul.mubr.f32.gmra.mrb[0].mxu0 %v41
  %v118 = vpop.f32.mrb[0].mxu0
  %v119 = vadd.f32 %v37, %v118
  %v120 = vpop.f32.mrb[0].mxu0
  %121 = vmatprep.mubr.f32.mxu0 0.0
  %122 = vmatmul.mubr.f32.gmra.mrb[0].mxu0 %v44
  %v123 = vpop.f32.mrb[0].mxu0
  %v124 = vadd.f32 %v37, %v123
  %v125 = vpop.f32.mrb[0].mxu0
  %126 = vmatprep.mubr.f32.mxu0 0.0
  %127 = vmatmul.mubr.f32.gmra.mrb[0].mxu0 %v47
  %v128 = vpop.f32.mrb[0].mxu0
  %v129 = vadd.f32 %v37, %v128
  %v130 = vpop.f32.mrb[0].mxu0
  %131 = vmatprep.mubr.f32.mxu0 0.0
  %132 = vmatmul.mubr.f32.gmra.mrb[0].mxu0 %v50
  %v133 = vpop.f32.mrb[0].mxu0
  %v134 = vadd.f32 %v37, %v133
  %v135 = vpop.f32.mrb[0].mxu0
  %136 = vdwg.mxu0
  %vm137 = vcmask 392192
  %138 = vst.msk [vmem:[%s6] sm:$0xff] %vm137, %v119
  %139 = vst.msk [vmem:[%s6 + $0x8] sm:$0xff] %vm137, %v124
  %140 = vst.msk [vmem:[%s6 + $0x10] sm:$0xff] %vm137, %v129
  %141 = vst.msk [vmem:[%s6 + $0x18] sm:$0xff] %vm137, %v134
  %v142 = vld [vmem:[%s1] sm:$0xff]
  %v143 = vld [vmem:[%s1 + $0x8] sm:$0xff]
  %v144 = vld [vmem:[%s1 + $0x10] sm:$0xff]
  %v145 = vld [vmem:[%s1 + $0x18] sm:$0xff]
  %v146 = vld [vmem:[%s1 + $0x20] sm:$0xff]
  %v147 = vld [vmem:[%s1 + $0x28] sm:$0xff]
  %v148 = vld [vmem:[%s1 + $0x30] sm:$0xff]
  %v149 = vld [vmem:[%s1 + $0x38] sm:$0xff]
  %v150 = vld [vmem:[%s4] sm:$0xff]
  %v151 = vld [vmem:[%s4 + $0x8] sm:$0xff]
  %v152 = vld [vmem:[%s4 + $0x10] sm:$0xff]
  %v153 = vld [vmem:[%s4 + $0x18] sm:$0xff]
  %v154 = vld [vmem:[%s4 + $0x20] sm:$0xff]
  %v155 = vld [vmem:[%s4 + $0x28] sm:$0xff]
  %v156 = vld [vmem:[%s4 + $0x30] sm:$0xff]
  %v157 = vld [vmem:[%s4 + $0x38] sm:$0xff]
  %v158 = vld [vmem:[%s4 + $0x40] sm:$0xff]
  %v159 = vld [vmem:[%s4 + $0x48] sm:$0xff]
  %v160 = vld [vmem:[%s4 + $0x50] sm:$0xff]
  %v161 = vld [vmem:[%s4 + $0x58] sm:$0xff]
  %v162 = vld [vmem:[%s4 + $0x60] sm:$0xff]
  %v163 = vld [vmem:[%s4 + $0x68] sm:$0xff]
  %v164 = vld [vmem:[%s4 + $0x70] sm:$0xff]
  %v165 = vld [vmem:[%s4 + $0x78] sm:$0xff]
  %v166 = vld [vmem:[%s4 + $0x80] sm:$0xff]
  %v167 = vld [vmem:[%s4 + $0x88] sm:$0xff]
  %v168 = vld [vmem:[%s4 + $0x90] sm:$0xff]
  %v169 = vld [vmem:[%s4 + $0x98] sm:$0xff]
  %v170 = vld [vmem:[%s4 + $0xa0] sm:$0xff]
  %v171 = vld [vmem:[%s4 + $0xa8] sm:$0xff]
  %v172 = vld [vmem:[%s4 + $0xb0] sm:$0xff]
  %v173 = vld [vmem:[%s5] sm:$0x1]
  %v175 = vlaneseq
  %v176 = vshrl.u32 %v175, 7
  %v177 = vsub.s32 0, %v176
  %v178 = vrot.slane %v173, %v177
  %vm180 = vcmask 457728
  %v182 = vsel %vm180, %v143, 0
  %v185 = vsel %vm180, %v145, 0
  %v188 = vsel %vm180, %v147, 0
  %v191 = vsel %vm180, %v149, 0
  %193 = vmatprep.subr.mxu0 0.0
  %194 = vmatpush1.msra.mxu0 %v150
  %195 = vmatprep.subr.mxu0 0.0
  %196 = vmatpush1.msra.mxu0 %v151
  %197 = vmatprep.subr.mxu0 0.0
  %198 = vmatpush1.msra.mxu0 %v152
  %199 = vmatprep.subr.mxu0 0.0
  %200 = vmatpush1.msra.mxu0 %v153
  %201 = vmatprep.subr.mxu0 0.0
  %202 = vmatpush1.msra.mxu0 %v154
  %203 = vmatprep.subr.mxu0 0.0
  %204 = vmatpush1.msra.mxu0 %v155
  %205 = vmatprep.subr.mxu0 0.0
  %206 = vmatpush1.msra.mxu0 %v156
  %207 = vmatprep.subr.mxu0 0.0
  %208 = vmatpush1.msra.mxu0 %v157
  %209 = vmatprep.subr.mxu0 0.0
  %210 = vmatpush1.msra.mxu0 %v158
  %211 = vmatprep.subr.mxu0 0.0
  %212 = vmatpush1.msra.mxu0 %v159
  %213 = vmatprep.subr.mxu0 0.0
  %214 = vmatpush1.msra.mxu0 %v160
  %215 = vmatprep.subr.mxu0 0.0
  %216 = vmatpush1.msra.mxu0 %v161
  %217 = vmatprep.subr.mxu0 0.0
  %218 = vmatpush1.msra.mxu0 %v162
  %219 = vmatprep.subr.mxu0 0.0
  %220 = vmatpush1.msra.mxu0 %v163
  %221 = vmatprep.subr.mxu0 0.0
  %222 = vmatpush1.msra.mxu0 %v164
  %223 = vmatprep.subr.mxu0 0.0
  %224 = vmatpush1.msra.mxu0 %v165
  %225 = vmatprep.subr.mxu0 0.0
  %226 = vmatpush1.msra.mxu0 %v166
  %227 = vmatprep.subr.mxu0 0.0
  %228 = vmatpush1.msra.mxu0 %v167
  %229 = vmatprep.subr.mxu0 0.0
  %230 = vmatpush1.msra.mxu0 %v168
  %231 = vmatprep.subr.mxu0 0.0
  %232 = vmatpush1.msra.mxu0 %v169
  %233 = vmatprep.subr.mxu0 0.0
  %234 = vmatpush1.msra.mxu0 %v170
  %235 = vmatprep.subr.mxu0 0.0
  %236 = vmatpush1.msra.mxu0 %v171
  %237 = vmatprep.subr.mxu0 0.0
  %238 = vmatpush1.msra.mxu0 %v172
  %239 = vmatprep.subr.mxu0 0.0
  %240 = vmatpush1.msra.mxu0 0.0
  %241 = vmatprep.subr.mxu0 0.0
  %242 = vmatpush1.msra.mxu0 0.0
  %243 = vmatprep.subr.mxu0 0.0
  %244 = vmatpush1.msra.mxu0 0.0
  %245 = vmatprep.subr.mxu0 0.0
  %246 = vmatpush1.msra.mxu0 0.0
  %247 = vmatprep.subr.mxu0 0.0
  %248 = vmatpush1.msra.mxu0 0.0
  %249 = vmatprep.subr.mxu0 0.0
  %250 = vmatpush1.msra.mxu0 0.0
  %251 = vmatprep.subr.mxu0 0.0
  %252 = vmatpush1.msra.mxu0 0.0
  %253 = vmatprep.subr.mxu0 0.0
  %254 = vmatpush1.msra.mxu0 0.0
  %255 = vmatprep.subr.mxu0 0.0
  %256 = vmatpush1.msra.mxu0 0.0
  %257 = vmatprep.mubr.f32.mxu0 %v182
  %258 = vmatmul.mubr.f32.gmra.mrb[0].mxu0 %v142
  %v259 = vpop.f32.mrb[0].mxu0
  %v260 = vadd.f32 %v178, %v259
  %v261 = vpop.f32.mrb[0].mxu0
  %262 = vmatprep.mubr.f32.mxu0 %v185
  %263 = vmatmul.mubr.f32.gmra.mrb[0].mxu0 %v144
  %v264 = vpop.f32.mrb[0].mxu0
  %v265 = vadd.f32 %v178, %v264
  %v266 = vpop.f32.mrb[0].mxu0
  %267 = vmatprep.mubr.f32.mxu0 %v188
  %268 = vmatmul.mubr.f32.gmra.mrb[0].mxu0 %v146
  %v269 = vpop.f32.mrb[0].mxu0
  %v270 = vadd.f32 %v178, %v269
  %v271 = vpop.f32.mrb[0].mxu0
  %272 = vmatprep.mubr.f32.mxu0 %v191
  %273 = vmatmul.mubr.f32.gmra.mrb[0].mxu0 %v148
  %v274 = vpop.f32.mrb[0].mxu0
  %v275 = vadd.f32 %v178, %v274
  %v276 = vpop.f32.mrb[0].mxu0
  %277 = vdwg.mxu0
  %278 = vst.msk [vmem:[%s7] sm:$0xff] %vm39, %v260
  %279 = vst.msk [vmem:[%s7 + $0x8] sm:$0xff] %vm39, %v265
  %280 = vst.msk [vmem:[%s7 + $0x10] sm:$0xff] %vm39, %v270
  %281 = vst.msk [vmem:[%s7 + $0x18] sm:$0xff] %vm39, %v275
  // Predicated region
  $region26: #{net_forward.14} parent=0 // pred_check
    _
  $region27: #{net_forward.14} parent=0 // pred_check_branch
    %283 = sbr.rel (0) target = $region29
  $region28: #{net_forward.14} parent=0 // pred_region
    _
  $region29: #{net_forward.14} parent=0 // pred_fallthru
    _
  // Predicated region
  $region30: #{net_forward.14} parent=0 // pred_check
    _
  $region31: #{net_forward.14} parent=0 // pred_check_branch
    %285 = sbr.rel (0) target = $region33
  $region32: #{net_forward.14} parent=0 // pred_region
    _
  $region33: #{net_forward.14} parent=0 // pred_fallthru
    _
  // Predicated region
  $region34: #{net_forward.14} parent=0 // pred_check
    _
  $region35: #{net_forward.14} parent=0 // pred_check_branch
    %287 = sbr.rel (0) target = $region37
  $region36: #{net_forward.14} parent=0 // pred_region
    _
  $region37: #{net_forward.14} parent=0 // pred_fallthru
    _
  // Predicated region
  $region38: #{net_forward.14} parent=0 // pred_check
    _
  $region39: #{net_forward.14} parent=0 // pred_check_branch
    %289 = sbr.rel (0) target = $region41
  $region40: #{net_forward.14} parent=0 // pred_region
    _
  $region41: #{net_forward.14} parent=0 // pred_fallthru
    _

// kernel: net_forward.15
$region0: #{net_forward.15}
  #allocation0 [shape = 'u32[]', space=smem, size = 0x4, offset = 0x4, fixed_abs, tag = 'smem constant byte address 0x4 - core index']
  #allocation1 [shape = 'u32[144,128]{1,0:T(1,128)}', space=vmem, size = 0x12000, scoped, tag = 'internal scratch']
  %s0 = inlined_call_operand.vmem [shape: f32[32,400], index: 0, kind: input, shape index: {}]
  %s1 = inlined_call_operand.vmem [shape: f32[400,24], index: 1, kind: input, shape index: {}]
  %s2 = inlined_call_operand.vmem [shape: f32[1,24], index: 2, kind: input, shape index: {}]
  %s3 = inlined_call_operand.vmem [shape: f32[32,144], index: 3, kind: input, shape index: {}]
  %s4 = inlined_call_operand.vmem [shape: f32[144,24], index: 4, kind: input, shape index: {}]
  %s5 = inlined_call_operand.vmem [shape: f32[1,24], index: 5, kind: input, shape index: {}]
  %s6 = inlined_call_operand.vmem [shape: f32[32,24], index: 6, kind: output, shape index: {0}]
  %s7 = inlined_call_operand.vmem [shape: f32[32,24], index: 7, kind: output, shape index: {1}]
  %8 = xla_tuple %s6, %s7
  %s9 = sld [smem:[#allocation0]]
  $region42: #{net_forward.15} parent=0
    _
  %s11 = ssub.s32 1, %s9
  %s12 = scalar_select 0, %s11, %s9
  // Predicated region
  $region2: #{net_forward.15} parent=0 // pred_check
    _
  $region3: #{net_forward.15} parent=0 // pred_check_branch
    %14 = sbr.rel (0) target = $region5
  $region4: #{net_forward.15} parent=0 // pred_region
    _
  $region5: #{net_forward.15} parent=0 // pred_fallthru
    _
  // Predicated region
  $region6: #{net_forward.15} parent=0 // pred_check
    _
  $region7: #{net_forward.15} parent=0 // pred_check_branch
    %16 = sbr.rel (0) target = $region9
  $region8: #{net_forward.15} parent=0 // pred_region
    _
  $region9: #{net_forward.15} parent=0 // pred_fallthru
    _
  // Predicated region
  $region10: #{net_forward.15} parent=0 // pred_check
    _
  $region11: #{net_forward.15} parent=0 // pred_check_branch
    %18 = sbr.rel (0) target = $region13
  $region12: #{net_forward.15} parent=0 // pred_region
    _
  $region13: #{net_forward.15} parent=0 // pred_fallthru
    _
  // Predicated region
  $region14: #{net_forward.15} parent=0 // pred_check
    _
  $region15: #{net_forward.15} parent=0 // pred_check_branch
    %20 = sbr.rel (0) target = $region17
  $region16: #{net_forward.15} parent=0 // pred_region
    _
  $region17: #{net_forward.15} parent=0 // pred_fallthru
    _
  // Predicated region
  $region18: #{net_forward.15} parent=0 // pred_check
    _
  $region19: #{net_forward.15} parent=0 // pred_check_branch
    %22 = sbr.rel (0) target = $region21
  $region20: #{net_forward.15} parent=0 // pred_region
    _
  $region21: #{net_forward.15} parent=0 // pred_fallthru
    _
  // Predicated region
  $region22: #{net_forward.15} parent=0 // pred_check
    _
  $region23: #{net_forward.15} parent=0 // pred_check_branch
    %24 = sbr.rel (0) target = $region25
  $region24: #{net_forward.15} parent=0 // pred_region
    _
  $region25: #{net_forward.15} parent=0 // pred_fallthru
    _
  %v25 = vld [vmem:[%s0] sm:$0xff]
  %v26 = vld [vmem:[%s0 + $0x8] sm:$0xff]
  %v27 = vld [vmem:[%s0 + $0x10] sm:$0xff]
  %v28 = vld [vmem:[%s0 + $0x18] sm:$0xff]
  %v29 = vld [vmem:[%s0 + $0x20] sm:$0xff]
  %v30 = vld [vmem:[%s0 + $0x28] sm:$0xff]
  %v31 = vld [vmem:[%s0 + $0x30] sm:$0xff]
  %v32 = vld [vmem:[%s0 + $0x38] sm:$0xff]
  %v33 = vld [vmem:[%s0 + $0x40] sm:$0xff]
  %v34 = vld [vmem:[%s0 + $0x48] sm:$0xff]
  %v35 = vld [vmem:[%s0 + $0x50] sm:$0xff]
  %v36 = vld [vmem:[%s0 + $0x58] sm:$0xff]
  %v37 = vld [vmem:[%s0 + $0x60] sm:$0xff]
  %v38 = vld [vmem:[%s0 + $0x68] sm:$0xff]
  %v39 = vld [vmem:[%s0 + $0x70] sm:$0xff]
  %v40 = vld [vmem:[%s0 + $0x78] sm:$0xff]
  %v41 = vld [vmem:[%s1] sm:$0xff]
  %v42 = vld [vmem:[%s1 + $0x8] sm:$0xff]
  %v43 = vld [vmem:[%s1 + $0x10] sm:$0xff]
  %v44 = vld [vmem:[%s1 + $0x18] sm:$0xff]
  %v45 = vld [vmem:[%s1 + $0x20] sm:$0xff]
  %v46 = vld [vmem:[%s1 + $0x28] sm:$0xff]
  %v47 = vld [vmem:[%s1 + $0x30] sm:$0xff]
  %v48 = vld [vmem:[%s1 + $0x38] sm:$0xff]
  %v49 = vld [vmem:[%s1 + $0x40] sm:$0xff]
  %v50 = vld [vmem:[%s1 + $0x48] sm:$0xff]
  %v51 = vld [vmem:[%s1 + $0x50] sm:$0xff]
  %v52 = vld [vmem:[%s1 + $0x58] sm:$0xff]
  %v53 = vld [vmem:[%s1 + $0x60] sm:$0xff]
  %v54 = vld [vmem:[%s1 + $0x68] sm:$0xff]
  %v55 = vld [vmem:[%s1 + $0x70] sm:$0xff]
  %v56 = vld [vmem:[%s1 + $0x78] sm:$0xff]
  %v57 = vld [vmem:[%s1 + $0x80] sm:$0xff]
  %v58 = vld [vmem:[%s1 + $0x88] sm:$0xff]
  %v59 = vld [vmem:[%s1 + $0x90] sm:$0xff]
  %v60 = vld [vmem:[%s1 + $0x98] sm:$0xff]
  %v61 = vld [vmem:[%s1 + $0xa0] sm:$0xff]
  %v62 = vld [vmem:[%s1 + $0xa8] sm:$0xff]
  %v63 = vld [vmem:[%s1 + $0xb0] sm:$0xff]
  %v64 = vld [vmem:[%s1 + $0xb8] sm:$0xff]
  %v65 = vld [vmem:[%s1 + $0xc0] sm:$0xff]
  %v66 = vld [vmem:[%s1 + $0xc8] sm:$0xff]
  %v67 = vld [vmem:[%s1 + $0xd0] sm:$0xff]
  %v68 = vld [vmem:[%s1 + $0xd8] sm:$0xff]
  %v69 = vld [vmem:[%s1 + $0xe0] sm:$0xff]
  %v70 = vld [vmem:[%s1 + $0xe8] sm:$0xff]
  %v71 = vld [vmem:[%s1 + $0xf0] sm:$0xff]
  %v72 = vld [vmem:[%s1 + $0xf8] sm:$0xff]
  %v73 = vld [vmem:[%s1 + $0x100] sm:$0xff]
  %v74 = vld [vmem:[%s1 + $0x108] sm:$0xff]
  %v75 = vld [vmem:[%s1 + $0x110] sm:$0xff]
  %v76 = vld [vmem:[%s1 + $0x118] sm:$0xff]
  %v77 = vld [vmem:[%s1 + $0x120] sm:$0xff]
  %v78 = vld [vmem:[%s1 + $0x128] sm:$0xff]
  %v79 = vld [vmem:[%s1 + $0x130] sm:$0xff]
  %v80 = vld [vmem:[%s1 + $0x138] sm:$0xff]
  %v81 = vld [vmem:[%s1 + $0x140] sm:$0xff]
  %v82 = vld [vmem:[%s1 + $0x148] sm:$0xff]
  %v83 = vld [vmem:[%s1 + $0x150] sm:$0xff]
  %v84 = vld [vmem:[%s1 + $0x158] sm:$0xff]
  %v85 = vld [vmem:[%s1 + $0x160] sm:$0xff]
  %v86 = vld [vmem:[%s1 + $0x168] sm:$0xff]
  %v87 = vld [vmem:[%s1 + $0x170] sm:$0xff]
  %v88 = vld [vmem:[%s1 + $0x178] sm:$0xff]
  %v89 = vld [vmem:[%s1 + $0x180] sm:$0xff]
  %v90 = vld [vmem:[%s1 + $0x188] sm:$0xff]
  %v91 = vld [vmem:[%s2] sm:$0x1]
  %v93 = vlaneseq
  %v94 = vshrl.u32 %v93, 7
  %v95 = vsub.s32 0, %v94
  %v96 = vrot.slane %v91, %v95
  %vm98 = vcmask 130048
  %v100 = vsel %vm98, %v28, 0
  %v103 = vsel %vm98, %v32, 0
  %v106 = vsel %vm98, %v36, 0
  %v109 = vsel %vm98, %v40, 0
  %111 = vmatprep.subr.mxu0 0.0
  %112 = vmatpush1.msra.mxu0 %v41
  %113 = vmatprep.subr.mxu0 0.0
  %114 = vmatpush1.msra.mxu0 %v42
  %115 = vmatprep.subr.mxu0 0.0
  %116 = vmatpush1.msra.mxu0 %v43
  %117 = vmatprep.subr.mxu0 0.0
  %118 = vmatpush1.msra.mxu0 %v44
  %119 = vmatprep.subr.mxu0 0.0
  %120 = vmatpush1.msra.mxu0 %v45
  %121 = vmatprep.subr.mxu0 0.0
  %122 = vmatpush1.msra.mxu0 %v46
  %123 = vmatprep.subr.mxu0 0.0
  %124 = vmatpush1.msra.mxu0 %v47
  %125 = vmatprep.subr.mxu0 0.0
  %126 = vmatpush1.msra.mxu0 %v48
  %127 = vmatprep.subr.mxu0 0.0
  %128 = vmatpush1.msra.mxu0 %v49
  %129 = vmatprep.subr.mxu0 0.0
  %130 = vmatpush1.msra.mxu0 %v50
  %131 = vmatprep.subr.mxu0 0.0
  %132 = vmatpush1.msra.mxu0 %v51
  %133 = vmatprep.subr.mxu0 0.0
  %134 = vmatpush1.msra.mxu0 %v52
  %135 = vmatprep.subr.mxu0 0.0
  %136 = vmatpush1.msra.mxu0 %v53
  %137 = vmatprep.subr.mxu0 0.0
  %138 = vmatpush1.msra.mxu0 %v54
  %139 = vmatprep.subr.mxu0 0.0
  %140 = vmatpush1.msra.mxu0 %v55
  %141 = vmatprep.subr.mxu0 0.0
  %142 = vmatpush1.msra.mxu0 %v56
  %143 = vmatprep.subr.mxu0 0.0
  %144 = vmatpush1.msra.mxu0 %v57
  %145 = vmatprep.subr.mxu0 0.0
  %146 = vmatpush1.msra.mxu0 %v58
  %147 = vmatprep.subr.mxu0 0.0
  %148 = vmatpush1.msra.mxu0 %v59
  %149 = vmatprep.subr.mxu0 0.0
  %150 = vmatpush1.msra.mxu0 %v60
  %151 = vmatprep.subr.mxu0 0.0
  %152 = vmatpush1.msra.mxu0 %v61
  %153 = vmatprep.subr.mxu0 0.0
  %154 = vmatpush1.msra.mxu0 %v62
  %155 = vmatprep.subr.mxu0 0.0
  %156 = vmatpush1.msra.mxu0 %v63
  %157 = vmatprep.subr.mxu0 0.0
  %158 = vmatpush1.msra.mxu0 %v64
  %159 = vmatprep.subr.mxu0 0.0
  %160 = vmatpush1.msra.mxu0 %v65
  %161 = vmatprep.subr.mxu0 0.0
  %162 = vmatpush1.msra.mxu0 %v66
  %163 = vmatprep.subr.mxu0 0.0
  %164 = vmatpush1.msra.mxu0 %v67
  %165 = vmatprep.subr.mxu0 0.0
  %166 = vmatpush1.msra.mxu0 %v68
  %167 = vmatprep.subr.mxu0 0.0
  %168 = vmatpush1.msra.mxu0 %v69
  %169 = vmatprep.subr.mxu0 0.0
  %170 = vmatpush1.msra.mxu0 %v70
  %171 = vmatprep.subr.mxu0 0.0
  %172 = vmatpush1.msra.mxu0 %v71
  %173 = vmatprep.subr.mxu0 0.0
  %174 = vmatpush1.msra.mxu0 %v72
  %175 = vmatprep.mubr.f32.mxu0 %v26
  %176 = vmatmul.mubr.f32.gmra.mrb[0].mxu0 %v25
  %v177 = vpop.f32.mrb[0].mxu0
  %v178 = vadd.f32 %v96, %v177
  %v179 = vpop.f32.mrb[0].mxu0
  %180 = vmatprep.mubr.f32.mxu0 %v30
  %181 = vmatmul.mubr.f32.gmra.mrb[0].mxu0 %v29
  %v182 = vpop.f32.mrb[0].mxu0
  %v183 = vadd.f32 %v96, %v182
  %v184 = vpop.f32.mrb[0].mxu0
  %185 = vmatprep.mubr.f32.mxu0 %v34
  %186 = vmatmul.mubr.f32.gmra.mrb[0].mxu0 %v33
  %v187 = vpop.f32.mrb[0].mxu0
  %v188 = vadd.f32 %v96, %v187
  %v189 = vpop.f32.mrb[0].mxu0
  %190 = vmatprep.mubr.f32.mxu0 %v38
  %191 = vmatmul.mubr.f32.gmra.mrb[0].mxu0 %v37
  %v192 = vpop.f32.mrb[0].mxu0
  %v193 = vadd.f32 %v96, %v192
  %v194 = vpop.f32.mrb[0].mxu0
  %195 = vdwg.mxu0
  %196 = vmatprep.subr.mxu0 0.0
  %197 = vmatpush1.msra.mxu0 %v73
  %198 = vmatprep.subr.mxu0 0.0
  %199 = vmatpush1.msra.mxu0 %v74
  %200 = vmatprep.subr.mxu0 0.0
  %201 = vmatpush1.msra.mxu0 %v75
  %202 = vmatprep.subr.mxu0 0.0
  %203 = vmatpush1.msra.mxu0 %v76
  %204 = vmatprep.subr.mxu0 0.0
  %205 = vmatpush1.msra.mxu0 %v77
  %206 = vmatprep.subr.mxu0 0.0
  %207 = vmatpush1.msra.mxu0 %v78
  %208 = vmatprep.subr.mxu0 0.0
  %209 = vmatpush1.msra.mxu0 %v79
  %210 = vmatprep.subr.mxu0 0.0
  %211 = vmatpush1.msra.mxu0 %v80
  %212 = vmatprep.subr.mxu0 0.0
  %213 = vmatpush1.msra.mxu0 %v81
  %214 = vmatprep.subr.mxu0 0.0
  %215 = vmatpush1.msra.mxu0 %v82
  %216 = vmatprep.subr.mxu0 0.0
  %217 = vmatpush1.msra.mxu0 %v83
  %218 = vmatprep.subr.mxu0 0.0
  %219 = vmatpush1.msra.mxu0 %v84
  %220 = vmatprep.subr.mxu0 0.0
  %221 = vmatpush1.msra.mxu0 %v85
  %222 = vmatprep.subr.mxu0 0.0
  %223 = vmatpush1.msra.mxu0 %v86
  %224 = vmatprep.subr.mxu0 0.0
  %225 = vmatpush1.msra.mxu0 %v87
  %226 = vmatprep.subr.mxu0 0.0
  %227 = vmatpush1.msra.mxu0 %v88
  %228 = vmatprep.subr.mxu0 0.0
  %229 = vmatpush1.msra.mxu0 %v89
  %230 = vmatprep.subr.mxu0 0.0
  %231 = vmatpush1.msra.mxu0 %v90
  %232 = vmatprep.subr.mxu0 0.0
  %233 = vmatpush1.msra.mxu0 0.0
  %234 = vmatprep.subr.mxu0 0.0
  %235 = vmatpush1.msra.mxu0 0.0
  %236 = vmatprep.subr.mxu0 0.0
  %237 = vmatpush1.msra.mxu0 0.0
  %238 = vmatprep.subr.mxu0 0.0
  %239 = vmatpush1.msra.mxu0 0.0
  %240 = vmatprep.subr.mxu0 0.0
  %241 = vmatpush1.msra.mxu0 0.0
  %242 = vmatprep.subr.mxu0 0.0
  %243 = vmatpush1.msra.mxu0 0.0
  %244 = vmatprep.subr.mxu0 0.0
  %245 = vmatpush1.msra.mxu0 0.0
  %246 = vmatprep.subr.mxu0 0.0
  %247 = vmatpush1.msra.mxu0 0.0
  %248 = vmatprep.subr.mxu0 0.0
  %249 = vmatpush1.msra.mxu0 0.0
  %250 = vmatprep.subr.mxu0 0.0
  %251 = vmatpush1.msra.mxu0 0.0
  %252 = vmatprep.subr.mxu0 0.0
  %253 = vmatpush1.msra.mxu0 0.0
  %254 = vmatprep.subr.mxu0 0.0
  %255 = vmatpush1.msra.mxu0 0.0
  %256 = vmatprep.subr.mxu0 0.0
  %257 = vmatpush1.msra.mxu0 0.0
  %258 = vmatprep.subr.mxu0 0.0
  %259 = vmatpush1.msra.mxu0 0.0
  %260 = vmatprep.mubr.f32.mxu0 %v100
  %261 = vmatmul.mubr.f32.gmra.mrb[0].mxu0 %v27
  %v262 = vpop.f32.mrb[0].mxu0
  %v263 = vadd.f32 %v178, %v262
  %v264 = vpop.f32.mrb[0].mxu0
  %265 = vmatprep.mubr.f32.mxu0 %v103
  %266 = vmatmul.mubr.f32.gmra.mrb[0].mxu0 %v31
  %v267 = vpop.f32.mrb[0].mxu0
  %v268 = vadd.f32 %v183, %v267
  %v269 = vpop.f32.mrb[0].mxu0
  %270 = vmatprep.mubr.f32.mxu0 %v106
  %271 = vmatmul.mubr.f32.gmra.mrb[0].mxu0 %v35
  %v272 = vpop.f32.mrb[0].mxu0
  %v273 = vadd.f32 %v188, %v272
  %v274 = vpop.f32.mrb[0].mxu0
  %275 = vmatprep.mubr.f32.mxu0 %v109
  %276 = vmatmul.mubr.f32.gmra.mrb[0].mxu0 %v39
  %v277 = vpop.f32.mrb[0].mxu0
  %v278 = vadd.f32 %v193, %v277
  %v279 = vpop.f32.mrb[0].mxu0
  %280 = vdwg.mxu0
  %vm281 = vcmask 195584
  %282 = vst.msk [vmem:[%s6] sm:$0xff] %vm281, %v263
  %283 = vst.msk [vmem:[%s6 + $0x8] sm:$0xff] %vm281, %v268
  %284 = vst.msk [vmem:[%s6 + $0x10] sm:$0xff] %vm281, %v273
  %285 = vst.msk [vmem:[%s6 + $0x18] sm:$0xff] %vm281, %v278
  %v286 = vld [vmem:[%s3] sm:$0xff]
  %v287 = vld [vmem:[%s3 + $0x8] sm:$0xff]
  %v288 = vld [vmem:[%s3 + $0x10] sm:$0xff]
  %v289 = vld [vmem:[%s3 + $0x18] sm:$0xff]
  %v290 = vld [vmem:[%s3 + $0x20] sm:$0xff]
  %v291 = vld [vmem:[%s3 + $0x28] sm:$0xff]
  %v292 = vld [vmem:[%s3 + $0x30] sm:$0xff]
  %v293 = vld [vmem:[%s3 + $0x38] sm:$0xff]
  %v294 = vld [vmem:[%s4] sm:$0xff]
  %v295 = vld [vmem:[%s4 + $0x8] sm:$0xff]
  %v296 = vld [vmem:[%s4 + $0x10] sm:$0xff]
  %v297 = vld [vmem:[%s4 + $0x18] sm:$0xff]
  %v298 = vld [vmem:[%s4 + $0x20] sm:$0xff]
  %v299 = vld [vmem:[%s4 + $0x28] sm:$0xff]
  %v300 = vld [vmem:[%s4 + $0x30] sm:$0xff]
  %v301 = vld [vmem:[%s4 + $0x38] sm:$0xff]
  %v302 = vld [vmem:[%s4 + $0x40] sm:$0xff]
  %v303 = vld [vmem:[%s4 + $0x48] sm:$0xff]
  %v304 = vld [vmem:[%s4 + $0x50] sm:$0xff]
  %v305 = vld [vmem:[%s4 + $0x58] sm:$0xff]
  %v306 = vld [vmem:[%s4 + $0x60] sm:$0xff]
  %v307 = vld [vmem:[%s4 + $0x68] sm:$0xff]
  %v308 = vld [vmem:[%s4 + $0x70] sm:$0xff]
  %v309 = vld [vmem:[%s4 + $0x78] sm:$0xff]
  %v310 = vld [vmem:[%s4 + $0x80] sm:$0xff]
  %v311 = vld [vmem:[%s4 + $0x88] sm:$0xff]
  %v312 = vld [vmem:[%s5] sm:$0x1]
  %v314 = vlaneseq
  %v315 = vshrl.u32 %v314, 7
  %v316 = vsub.s32 0, %v315
  %v317 = vrot.slane %v312, %v316
  %v320 = vsel %vm98, %v287, 0
  %v323 = vsel %vm98, %v289, 0
  %v326 = vsel %vm98, %v291, 0
  %v329 = vsel %vm98, %v293, 0
  %331 = vmatprep.subr.mxu0 0.0
  %332 = vmatpush1.msra.mxu0 %v294
  %333 = vmatprep.subr.mxu0 0.0
  %334 = vmatpush1.msra.mxu0 %v295
  %335 = vmatprep.subr.mxu0 0.0
  %336 = vmatpush1.msra.mxu0 %v296
  %337 = vmatprep.subr.mxu0 0.0
  %338 = vmatpush1.msra.mxu0 %v297
  %339 = vmatprep.subr.mxu0 0.0
  %340 = vmatpush1.msra.mxu0 %v298
  %341 = vmatprep.subr.mxu0 0.0
  %342 = vmatpush1.msra.mxu0 %v299
  %343 = vmatprep.subr.mxu0 0.0
  %344 = vmatpush1.msra.mxu0 %v300
  %345 = vmatprep.subr.mxu0 0.0
  %346 = vmatpush1.msra.mxu0 %v301
  %347 = vmatprep.subr.mxu0 0.0
  %348 = vmatpush1.msra.mxu0 %v302
  %349 = vmatprep.subr.mxu0 0.0
  %350 = vmatpush1.msra.mxu0 %v303
  %351 = vmatprep.subr.mxu0 0.0
  %352 = vmatpush1.msra.mxu0 %v304
  %353 = vmatprep.subr.mxu0 0.0
  %354 = vmatpush1.msra.mxu0 %v305
  %355 = vmatprep.subr.mxu0 0.0
  %356 = vmatpush1.msra.mxu0 %v306
  %357 = vmatprep.subr.mxu0 0.0
  %358 = vmatpush1.msra.mxu0 %v307
  %359 = vmatprep.subr.mxu0 0.0
  %360 = vmatpush1.msra.mxu0 %v308
  %361 = vmatprep.subr.mxu0 0.0
  %362 = vmatpush1.msra.mxu0 %v309
  %363 = vmatprep.subr.mxu0 0.0
  %364 = vmatpush1.msra.mxu0 %v310
  %365 = vmatprep.subr.mxu0 0.0
  %366 = vmatpush1.msra.mxu0 %v311
  %367 = vmatprep.subr.mxu0 0.0
  %368 = vmatpush1.msra.mxu0 0.0
  %369 = vmatprep.subr.mxu0 0.0
  %370 = vmatpush1.msra.mxu0 0.0
  %371 = vmatprep.subr.mxu0 0.0
  %372 = vmatpush1.msra.mxu0 0.0
  %373 = vmatprep.subr.mxu0 0.0
  %374 = vmatpush1.msra.mxu0 0.0
  %375 = vmatprep.subr.mxu0 0.0
  %376 = vmatpush1.msra.mxu0 0.0
  %377 = vmatprep.subr.mxu0 0.0
  %378 = vmatpush1.msra.mxu0 0.0
  %379 = vmatprep.subr.mxu0 0.0
  %380 = vmatpush1.msra.mxu0 0.0
  %381 = vmatprep.subr.mxu0 0.0
  %382 = vmatpush1.msra.mxu0 0.0
  %383 = vmatprep.subr.mxu0 0.0
  %384 = vmatpush1.msra.mxu0 0.0
  %385 = vmatprep.subr.mxu0 0.0
  %386 = vmatpush1.msra.mxu0 0.0
  %387 = vmatprep.subr.mxu0 0.0
  %388 = vmatpush1.msra.mxu0 0.0
  %389 = vmatprep.subr.mxu0 0.0
  %390 = vmatpush1.msra.mxu0 0.0
  %391 = vmatprep.subr.mxu0 0.0
  %392 = vmatpush1.msra.mxu0 0.0
  %393 = vmatprep.subr.mxu0 0.0
  %394 = vmatpush1.msra.mxu0 0.0
  %395 = vmatprep.mubr.f32.mxu0 %v320
  %396 = vmatmul.mubr.f32.gmra.mrb[0].mxu0 %v286
  %v397 = vpop.f32.mrb[0].mxu0
  %v398 = vadd.f32 %v317, %v397
  %v399 = vpop.f32.mrb[0].mxu0
  %400 = vmatprep.mubr.f32.mxu0 %v323
  %401 = vmatmul.mubr.f32.gmra.mrb[0].mxu0 %v288
  %v402 = vpop.f32.mrb[0].mxu0
  %v403 = vadd.f32 %v317, %v402
  %v404 = vpop.f32.mrb[0].mxu0
  %405 = vmatprep.mubr.f32.mxu0 %v326
  %406 = vmatmul.mubr.f32.gmra.mrb[0].mxu0 %v290
  %v407 = vpop.f32.mrb[0].mxu0
  %v408 = vadd.f32 %v317, %v407
  %v409 = vpop.f32.mrb[0].mxu0
  %410 = vmatprep.mubr.f32.mxu0 %v329
  %411 = vmatmul.mubr.f32.gmra.mrb[0].mxu0 %v292
  %v412 = vpop.f32.mrb[0].mxu0
  %v413 = vadd.f32 %v317, %v412
  %v414 = vpop.f32.mrb[0].mxu0
  %415 = vdwg.mxu0
  %416 = vst.msk [vmem:[%s7] sm:$0xff] %vm281, %v398
  %417 = vst.msk [vmem:[%s7 + $0x8] sm:$0xff] %vm281, %v403
  %418 = vst.msk [vmem:[%s7 + $0x10] sm:$0xff] %vm281, %v408
  %419 = vst.msk [vmem:[%s7 + $0x18] sm:$0xff] %vm281, %v413
  // Predicated region
  $region26: #{net_forward.15} parent=0 // pred_check
    _
  $region27: #{net_forward.15} parent=0 // pred_check_branch
    %421 = sbr.rel (0) target = $region29
  $region28: #{net_forward.15} parent=0 // pred_region
    _
  $region29: #{net_forward.15} parent=0 // pred_fallthru
    _
  // Predicated region
  $region30: #{net_forward.15} parent=0 // pred_check
    _
  $region31: #{net_forward.15} parent=0 // pred_check_branch
    %423 = sbr.rel (0) target = $region33
  $region32: #{net_forward.15} parent=0 // pred_region
    _
  $region33: #{net_forward.15} parent=0 // pred_fallthru
    _
  // Predicated region
  $region34: #{net_forward.15} parent=0 // pred_check
    _
  $region35: #{net_forward.15} parent=0 // pred_check_branch
    %425 = sbr.rel (0) target = $region37
  $region36: #{net_forward.15} parent=0 // pred_region
    _
  $region37: #{net_forward.15} parent=0 // pred_fallthru
    _
  // Predicated region
  $region38: #{net_forward.15} parent=0 // pred_check
    _
  $region39: #{net_forward.15} parent=0 // pred_check_branch
    %427 = sbr.rel (0) target = $region41
  $region40: #{net_forward.15} parent=0 // pred_region
    _
  $region41: #{net_forward.15} parent=0 // pred_fallthru
    _

// kernel: net_forward.16
$region0: #{net_forward.16}
  #allocation0 [shape = 'u32[]', space=smem, size = 0x4, offset = 0x4, fixed_abs, tag = 'smem constant byte address 0x4 - core index']
  #allocation1 [shape = 'u32[144,128]{1,0:T(1,128)}', space=vmem, size = 0x12000, scoped, tag = 'internal scratch']
  %s0 = inlined_call_operand.vmem [shape: f32[32,216], index: 0, kind: input, shape index: {}]
  %s1 = inlined_call_operand.vmem [shape: f32[216,24], index: 1, kind: input, shape index: {}]
  %s2 = inlined_call_operand.vmem [shape: f32[1,24], index: 2, kind: input, shape index: {}]
  %s3 = inlined_call_operand.vmem [shape: f32[32,24], index: 3, kind: output, shape index: {}]
  %s4 = sld [smem:[#allocation0]]
  $region22: #{net_forward.16} parent=0
    _
  %s6 = ssub.s32 1, %s4
  %s7 = scalar_select 0, %s6, %s4
  // Predicated region
  $region2: #{net_forward.16} parent=0 // pred_check
    _
  $region3: #{net_forward.16} parent=0 // pred_check_branch
    %9 = sbr.rel (0) target = $region5
  $region4: #{net_forward.16} parent=0 // pred_region
    _
  $region5: #{net_forward.16} parent=0 // pred_fallthru
    _
  // Predicated region
  $region6: #{net_forward.16} parent=0 // pred_check
    _
  $region7: #{net_forward.16} parent=0 // pred_check_branch
    %11 = sbr.rel (0) target = $region9
  $region8: #{net_forward.16} parent=0 // pred_region
    _
  $region9: #{net_forward.16} parent=0 // pred_fallthru
    _
  // Predicated region
  $region10: #{net_forward.16} parent=0 // pred_check
    _
  $region11: #{net_forward.16} parent=0 // pred_check_branch
    %13 = sbr.rel (0) target = $region13
  $region12: #{net_forward.16} parent=0 // pred_region
    _
  $region13: #{net_forward.16} parent=0 // pred_fallthru
    _
  %v14 = vld [vmem:[%s0] sm:$0xff]
  %v15 = vld [vmem:[%s0 + $0x8] sm:$0xff]
  %v16 = vld [vmem:[%s0 + $0x10] sm:$0xff]
  %v17 = vld [vmem:[%s0 + $0x18] sm:$0xff]
  %v18 = vld [vmem:[%s0 + $0x20] sm:$0xff]
  %v19 = vld [vmem:[%s0 + $0x28] sm:$0xff]
  %v20 = vld [vmem:[%s0 + $0x30] sm:$0xff]
  %v21 = vld [vmem:[%s0 + $0x38] sm:$0xff]
  %v22 = vld [vmem:[%s1] sm:$0xff]
  %v23 = vld [vmem:[%s1 + $0x8] sm:$0xff]
  %v24 = vld [vmem:[%s1 + $0x10] sm:$0xff]
  %v25 = vld [vmem:[%s1 + $0x18] sm:$0xff]
  %v26 = vld [vmem:[%s1 + $0x20] sm:$0xff]
  %v27 = vld [vmem:[%s1 + $0x28] sm:$0xff]
  %v28 = vld [vmem:[%s1 + $0x30] sm:$0xff]
  %v29 = vld [vmem:[%s1 + $0x38] sm:$0xff]
  %v30 = vld [vmem:[%s1 + $0x40] sm:$0xff]
  %v31 = vld [vmem:[%s1 + $0x48] sm:$0xff]
  %v32 = vld [vmem:[%s1 + $0x50] sm:$0xff]
  %v33 = vld [vmem:[%s1 + $0x58] sm:$0xff]
  %v34 = vld [vmem:[%s1 + $0x60] sm:$0xff]
  %v35 = vld [vmem:[%s1 + $0x68] sm:$0xff]
  %v36 = vld [vmem:[%s1 + $0x70] sm:$0xff]
  %v37 = vld [vmem:[%s1 + $0x78] sm:$0xff]
  %v38 = vld [vmem:[%s1 + $0x80] sm:$0xff]
  %v39 = vld [vmem:[%s1 + $0x88] sm:$0xff]
  %v40 = vld [vmem:[%s1 + $0x90] sm:$0xff]
  %v41 = vld [vmem:[%s1 + $0x98] sm:$0xff]
  %v42 = vld [vmem:[%s1 + $0xa0] sm:$0xff]
  %v43 = vld [vmem:[%s1 + $0xa8] sm:$0xff]
  %v44 = vld [vmem:[%s1 + $0xb0] sm:$0xff]
  %v45 = vld [vmem:[%s1 + $0xb8] sm:$0xff]
  %v46 = vld [vmem:[%s1 + $0xc0] sm:$0xff]
  %v47 = vld [vmem:[%s1 + $0xc8] sm:$0xff]
  %v48 = vld [vmem:[%s1 + $0xd0] sm:$0xff]
  %v49 = vld [vmem:[%s2] sm:$0x1]
  %v51 = vlaneseq
  %v52 = vshrl.u32 %v51, 7
  %v53 = vsub.s32 0, %v52
  %v54 = vrot.slane %v49, %v53
  %vm56 = vcmask 719872
  %v58 = vsel %vm56, %v15, 0
  %v61 = vsel %vm56, %v17, 0
  %v64 = vsel %vm56, %v19, 0
  %v67 = vsel %vm56, %v21, 0
  %69 = vmatprep.subr.mxu0 0.0
  %70 = vmatpush1.msra.mxu0 %v22
  %71 = vmatprep.subr.mxu0 0.0
  %72 = vmatpush1.msra.mxu0 %v23
  %73 = vmatprep.subr.mxu0 0.0
  %74 = vmatpush1.msra.mxu0 %v24
  %75 = vmatprep.subr.mxu0 0.0
  %76 = vmatpush1.msra.mxu0 %v25
  %77 = vmatprep.subr.mxu0 0.0
  %78 = vmatpush1.msra.mxu0 %v26
  %79 = vmatprep.subr.mxu0 0.0
  %80 = vmatpush1.msra.mxu0 %v27
  %81 = vmatprep.subr.mxu0 0.0
  %82 = vmatpush1.msra.mxu0 %v28
  %83 = vmatprep.subr.mxu0 0.0
  %84 = vmatpush1.msra.mxu0 %v29
  %85 = vmatprep.subr.mxu0 0.0
  %86 = vmatpush1.msra.mxu0 %v30
  %87 = vmatprep.subr.mxu0 0.0
  %88 = vmatpush1.msra.mxu0 %v31
  %89 = vmatprep.subr.mxu0 0.0
  %90 = vmatpush1.msra.mxu0 %v32
  %91 = vmatprep.subr.mxu0 0.0
  %92 = vmatpush1.msra.mxu0 %v33
  %93 = vmatprep.subr.mxu0 0.0
  %94 = vmatpush1.msra.mxu0 %v34
  %95 = vmatprep.subr.mxu0 0.0
  %96 = vmatpush1.msra.mxu0 %v35
  %97 = vmatprep.subr.mxu0 0.0
  %98 = vmatpush1.msra.mxu0 %v36
  %99 = vmatprep.subr.mxu0 0.0
  %100 = vmatpush1.msra.mxu0 %v37
  %101 = vmatprep.subr.mxu0 0.0
  %102 = vmatpush1.msra.mxu0 %v38
  %103 = vmatprep.subr.mxu0 0.0
  %104 = vmatpush1.msra.mxu0 %v39
  %105 = vmatprep.subr.mxu0 0.0
  %106 = vmatpush1.msra.mxu0 %v40
  %107 = vmatprep.subr.mxu0 0.0
  %108 = vmatpush1.msra.mxu0 %v41
  %109 = vmatprep.subr.mxu0 0.0
  %110 = vmatpush1.msra.mxu0 %v42
  %111 = vmatprep.subr.mxu0 0.0
  %112 = vmatpush1.msra.mxu0 %v43
  %113 = vmatprep.subr.mxu0 0.0
  %114 = vmatpush1.msra.mxu0 %v44
  %115 = vmatprep.subr.mxu0 0.0
  %116 = vmatpush1.msra.mxu0 %v45
  %117 = vmatprep.subr.mxu0 0.0
  %118 = vmatpush1.msra.mxu0 %v46
  %119 = vmatprep.subr.mxu0 0.0
  %120 = vmatpush1.msra.mxu0 %v47
  %121 = vmatprep.subr.mxu0 0.0
  %122 = vmatpush1.msra.mxu0 %v48
  %123 = vmatprep.subr.mxu0 0.0
  %124 = vmatpush1.msra.mxu0 0.0
  %125 = vmatprep.subr.mxu0 0.0
  %126 = vmatpush1.msra.mxu0 0.0
  %127 = vmatprep.subr.mxu0 0.0
  %128 = vmatpush1.msra.mxu0 0.0
  %129 = vmatprep.subr.mxu0 0.0
  %130 = vmatpush1.msra.mxu0 0.0
  %131 = vmatprep.subr.mxu0 0.0
  %132 = vmatpush1.msra.mxu0 0.0
  %133 = vmatprep.mubr.f32.mxu0 %v58
  %134 = vmatmul.mubr.f32.gmra.mrb[0].mxu0 %v14
  %v135 = vpop.f32.mrb[0].mxu0
  %v136 = vadd.f32 %v54, %v135
  %v137 = vpop.f32.mrb[0].mxu0
  %138 = vmatprep.mubr.f32.mxu0 %v61
  %139 = vmatmul.mubr.f32.gmra.mrb[0].mxu0 %v16
  %v140 = vpop.f32.mrb[0].mxu0
  %v141 = vadd.f32 %v54, %v140
  %v142 = vpop.f32.mrb[0].mxu0
  %143 = vmatprep.mubr.f32.mxu0 %v64
  %144 = vmatmul.mubr.f32.gmra.mrb[0].mxu0 %v18
  %v145 = vpop.f32.mrb[0].mxu0
  %v146 = vadd.f32 %v54, %v145
  %v147 = vpop.f32.mrb[0].mxu0
  %148 = vmatprep.mubr.f32.mxu0 %v67
  %149 = vmatmul.mubr.f32.gmra.mrb[0].mxu0 %v20
  %v150 = vpop.f32.mrb[0].mxu0
  %v151 = vadd.f32 %v54, %v150
  %v152 = vpop.f32.mrb[0].mxu0
  %153 = vdwg.mxu0
  %vm154 = vcmask 195584
  %155 = vst.msk [vmem:[%s3] sm:$0xff] %vm154, %v136
  %156 = vst.msk [vmem:[%s3 + $0x8] sm:$0xff] %vm154, %v141
  %157 = vst.msk [vmem:[%s3 + $0x10] sm:$0xff] %vm154, %v146
  %158 = vst.msk [vmem:[%s3 + $0x18] sm:$0xff] %vm154, %v151
  // Predicated region
  $region14: #{net_forward.16} parent=0 // pred_check
    _
  $region15: #{net_forward.16} parent=0 // pred_check_branch
    %160 = sbr.rel (0) target = $region17
  $region16: #{net_forward.16} parent=0 // pred_region
    _
  $region17: #{net_forward.16} parent=0 // pred_fallthru
    _
  // Predicated region
  $region18: #{net_forward.16} parent=0 // pred_check
    _
  $region19: #{net_forward.16} parent=0 // pred_check_branch
    %162 = sbr.rel (0) target = $region21
  $region20: #{net_forward.16} parent=0 // pred_region
    _
  $region21: #{net_forward.16} parent=0 // pred_fallthru
    _

// kernel: net_forward.13
$region0: #{net_forward.13}
  #allocation0 [shape = 'u32[]', space=smem, size = 0x4, offset = 0x4, fixed_abs, tag = 'smem constant byte address 0x4 - core index']
  #allocation1 [shape = 'u32[144,128]{1,0:T(1,128)}', space=vmem, size = 0x12000, scoped, tag = 'internal scratch']
  %s0 = inlined_call_operand.vmem [shape: f32[4,32,2200], index: 0, kind: input, shape index: {}]
  %s1 = inlined_call_operand.vmem [shape: f32[2200,20], index: 1, kind: input, shape index: {}]
  %s2 = inlined_call_operand.vmem [shape: f32[1,20], index: 2, kind: input, shape index: {}]
  %s3 = inlined_call_operand.vmem [shape: f32[32,20], index: 3, kind: output, shape index: {}]
  %s4 = sld [smem:[#allocation0]]
  $region22: #{net_forward.13} parent=0
    _
  %s6 = ssub.s32 1, %s4
  %s7 = scalar_select 0, %s6, %s4
  // Predicated region
  $region2: #{net_forward.13} parent=0 // pred_check
    _
  $region3: #{net_forward.13} parent=0 // pred_check_branch
    %9 = sbr.rel (0) target = $region5
  $region4: #{net_forward.13} parent=0 // pred_region
    _
  $region5: #{net_forward.13} parent=0 // pred_fallthru
    _
  // Predicated region
  $region6: #{net_forward.13} parent=0 // pred_check
    _
  $region7: #{net_forward.13} parent=0 // pred_check_branch
    %11 = sbr.rel (0) target = $region9
  $region8: #{net_forward.13} parent=0 // pred_region
    _
  $region9: #{net_forward.13} parent=0 // pred_fallthru
    _
  // Predicated region
  $region10: #{net_forward.13} parent=0 // pred_check
    _
  $region11: #{net_forward.13} parent=0 // pred_check_branch
    %13 = sbr.rel (0) target = $region13
  $region12: #{net_forward.13} parent=0 // pred_region
    _
  $region13: #{net_forward.13} parent=0 // pred_fallthru
    _
  %v14 = vld [vmem:[%s0] sm:$0xff]
  %v15 = vld [vmem:[%s0 + $0x8] sm:$0xff]
  %v16 = vld [vmem:[%s0 + $0x10] sm:$0xff]
  %v17 = vld [vmem:[%s0 + $0x18] sm:$0xff]
  %v18 = vld [vmem:[%s0 + $0x20] sm:$0xff]
  %v19 = vld [vmem:[%s0 + $0x28] sm:$0xff]
  %v20 = vld [vmem:[%s0 + $0x30] sm:$0xff]
  %v21 = vld [vmem:[%s0 + $0x38] sm:$0xff]
  %v22 = vld [vmem:[%s0 + $0x40] sm:$0xff]
  %v23 = vld [vmem:[%s0 + $0x48] sm:$0xff]
  %v24 = vld [vmem:[%s0 + $0x50] sm:$0xff]
  %v25 = vld [vmem:[%s0 + $0x58] sm:$0xff]
  %v26 = vld [vmem:[%s0 + $0x60] sm:$0xff]
  %v27 = vld [vmem:[%s0 + $0x68] sm:$0xff]
  %v28 = vld [vmem:[%s0 + $0x70] sm:$0xff]
  %v29 = vld [vmem:[%s0 + $0x78] sm:$0xff]
  %v30 = vld [vmem:[%s0 + $0x80] sm:$0xff]
  %v31 = vld [vmem:[%s0 + $0x88] sm:$0xff]
  %v32 = vld [vmem:[%s0 + $0x90] sm:$0xff]
  %v33 = vld [vmem:[%s0 + $0x98] sm:$0xff]
  %v34 = vld [vmem:[%s0 + $0xa0] sm:$0xff]
  %v35 = vld [vmem:[%s0 + $0xa8] sm:$0xff]
  %v36 = vld [vmem:[%s0 + $0xb0] sm:$0xff]
  %v37 = vld [vmem:[%s0 + $0xb8] sm:$0xff]
  %v38 = vld [vmem:[%s0 + $0xc0] sm:$0xff]
  %v39 = vld [vmem:[%s0 + $0xc8] sm:$0xff]
  %v40 = vld [vmem:[%s0 + $0xd0] sm:$0xff]
  %v41 = vld [vmem:[%s0 + $0xd8] sm:$0xff]
  %v42 = vld [vmem:[%s0 + $0xe0] sm:$0xff]
  %v43 = vld [vmem:[%s0 + $0xe8] sm:$0xff]
  %v44 = vld [vmem:[%s0 + $0xf0] sm:$0xff]
  %v45 = vld [vmem:[%s0 + $0xf8] sm:$0xff]
  %v46 = vld [vmem:[%s0 + $0x100] sm:$0xff]
  %v47 = vld [vmem:[%s0 + $0x108] sm:$0xff]
  %v48 = vld [vmem:[%s0 + $0x110] sm:$0xff]
  %v49 = vld [vmem:[%s0 + $0x118] sm:$0xff]
  %v50 = vld [vmem:[%s0 + $0x120] sm:$0xff]
  %v51 = vld [vmem:[%s0 + $0x128] sm:$0xff]
  %v52 = vld [vmem:[%s0 + $0x130] sm:$0xff]
  %v53 = vld [vmem:[%s0 + $0x138] sm:$0xff]
  %v54 = vld [vmem:[%s0 + $0x140] sm:$0xff]
  %v55 = vld [vmem:[%s0 + $0x148] sm:$0xff]
  %v56 = vld [vmem:[%s0 + $0x150] sm:$0xff]
  %v57 = vld [vmem:[%s0 + $0x158] sm:$0xff]
  %v58 = vld [vmem:[%s0 + $0x160] sm:$0xff]
  %v59 = vld [vmem:[%s0 + $0x168] sm:$0xff]
  %v60 = vld [vmem:[%s0 + $0x170] sm:$0xff]
  %v61 = vld [vmem:[%s0 + $0x178] sm:$0xff]
  %v62 = vld [vmem:[%s0 + $0x180] sm:$0xff]
  %v63 = vld [vmem:[%s0 + $0x188] sm:$0xff]
  %v64 = vld [vmem:[%s0 + $0x190] sm:$0xff]
  %v65 = vld [vmem:[%s0 + $0x198] sm:$0xff]
  %v66 = vld [vmem:[%s0 + $0x1a0] sm:$0xff]
  %v67 = vld [vmem:[%s0 + $0x1a8] sm:$0xff]
  %v68 = vld [vmem:[%s0 + $0x1b0] sm:$0xff]
  %v69 = vld [vmem:[%s0 + $0x1b8] sm:$0xff]
  %v70 = vld [vmem:[%s0 + $0x1c0] sm:$0xff]
  %v71 = vld [vmem:[%s0 + $0x1c8] sm:$0xff]
  %v72 = vld [vmem:[%s0 + $0x1d0] sm:$0xff]
  %v73 = vld [vmem:[%s0 + $0x1d8] sm:$0xff]
  %v74 = vld [vmem:[%s0 + $0x1e0] sm:$0xff]
  %v75 = vld [vmem:[%s0 + $0x1e8] sm:$0xff]
  %v76 = vld [vmem:[%s0 + $0x1f0] sm:$0xff]
  %v77 = vld [vmem:[%s0 + $0x1f8] sm:$0xff]
  %v78 = vld [vmem:[%s0 + $0x200] sm:$0xff]
  %v79 = vld [vmem:[%s0 + $0x208] sm:$0xff]
  %v80 = vld [vmem:[%s0 + $0x210] sm:$0xff]
  %v81 = vld [vmem:[%s0 + $0x218] sm:$0xff]
  %v82 = vld [vmem:[%s0 + $0x220] sm:$0xff]
  %v83 = vld [vmem:[%s0 + $0x228] sm:$0xff]
  %v84 = vld [vmem:[%s0 + $0x230] sm:$0xff]
  %v85 = vld [vmem:[%s0 + $0x238] sm:$0xff]
  %v86 = vld [vmem:[%s1] sm:$0xff]
  %v87 = vld [vmem:[%s1 + $0x8] sm:$0xff]
  %v88 = vld [vmem:[%s1 + $0x10] sm:$0xff]
  %v89 = vld [vmem:[%s1 + $0x18] sm:$0xff]
  %v90 = vld [vmem:[%s1 + $0x20] sm:$0xff]
  %v91 = vld [vmem:[%s1 + $0x28] sm:$0xff]
  %v92 = vld [vmem:[%s1 + $0x30] sm:$0xff]
  %v93 = vld [vmem:[%s1 + $0x38] sm:$0xff]
  %v94 = vld [vmem:[%s1 + $0x40] sm:$0xff]
  %v95 = vld [vmem:[%s1 + $0x48] sm:$0xff]
  %v96 = vld [vmem:[%s1 + $0x50] sm:$0xff]
  %v97 = vld [vmem:[%s1 + $0x58] sm:$0xff]
  %v98 = vld [vmem:[%s1 + $0x60] sm:$0xff]
  %v99 = vld [vmem:[%s1 + $0x68] sm:$0xff]
  %v100 = vld [vmem:[%s1 + $0x70] sm:$0xff]
  %v101 = vld [vmem:[%s1 + $0x78] sm:$0xff]
  %v102 = vld [vmem:[%s1 + $0x80] sm:$0xff]
  %v103 = vld [vmem:[%s1 + $0x88] sm:$0xff]
  %v104 = vld [vmem:[%s1 + $0x90] sm:$0xff]
  %v105 = vld [vmem:[%s1 + $0x98] sm:$0xff]
  %v106 = vld [vmem:[%s1 + $0xa0] sm:$0xff]
  %v107 = vld [vmem:[%s1 + $0xa8] sm:$0xff]
  %v108 = vld [vmem:[%s1 + $0xb0] sm:$0xff]
  %v109 = vld [vmem:[%s1 + $0xb8] sm:$0xff]
  %v110 = vld [vmem:[%s1 + $0xc0] sm:$0xff]
  %v111 = vld [vmem:[%s1 + $0xc8] sm:$0xff]
  %v112 = vld [vmem:[%s1 + $0xd0] sm:$0xff]
  %v113 = vld [vmem:[%s1 + $0xd8] sm:$0xff]
  %v114 = vld [vmem:[%s1 + $0xe0] sm:$0xff]
  %v115 = vld [vmem:[%s1 + $0xe8] sm:$0xff]
  %v116 = vld [vmem:[%s1 + $0xf0] sm:$0xff]
  %v117 = vld [vmem:[%s1 + $0xf8] sm:$0xff]
  %v118 = vld [vmem:[%s1 + $0x100] sm:$0xff]
  %v119 = vld [vmem:[%s1 + $0x108] sm:$0xff]
  %v120 = vld [vmem:[%s1 + $0x110] sm:$0xff]
  %v121 = vld [vmem:[%s1 + $0x118] sm:$0xff]
  %v122 = vld [vmem:[%s1 + $0x120] sm:$0xff]
  %v123 = vld [vmem:[%s1 + $0x128] sm:$0xff]
  %v124 = vld [vmem:[%s1 + $0x130] sm:$0xff]
  %v125 = vld [vmem:[%s1 + $0x138] sm:$0xff]
  %v126 = vld [vmem:[%s1 + $0x140] sm:$0xff]
  %v127 = vld [vmem:[%s1 + $0x148] sm:$0xff]
  %v128 = vld [vmem:[%s1 + $0x150] sm:$0xff]
  %v129 = vld [vmem:[%s1 + $0x158] sm:$0xff]
  %v130 = vld [vmem:[%s1 + $0x160] sm:$0xff]
  %v131 = vld [vmem:[%s1 + $0x168] sm:$0xff]
  %v132 = vld [vmem:[%s1 + $0x170] sm:$0xff]
  %v133 = vld [vmem:[%s1 + $0x178] sm:$0xff]
  %v134 = vld [vmem:[%s1 + $0x180] sm:$0xff]
  %v135 = vld [vmem:[%s1 + $0x188] sm:$0xff]
  %v136 = vld [vmem:[%s1 + $0x190] sm:$0xff]
  %v137 = vld [vmem:[%s1 + $0x198] sm:$0xff]
  %v138 = vld [vmem:[%s1 + $0x1a0] sm:$0xff]
  %v139 = vld [vmem:[%s1 + $0x1a8] sm:$0xff]
  %v140 = vld [vmem:[%s1 + $0x1b0] sm:$0xff]
  %v141 = vld [vmem:[%s1 + $0x1b8] sm:$0xff]
  %v142 = vld [vmem:[%s1 + $0x1c0] sm:$0xff]
  %v143 = vld [vmem:[%s1 + $0x1c8] sm:$0xff]
  %v144 = vld [vmem:[%s1 + $0x1d0] sm:$0xff]
  %v145 = vld [vmem:[%s1 + $0x1d8] sm:$0xff]
  %v146 = vld [vmem:[%s1 + $0x1e0] sm:$0xff]
  %v147 = vld [vmem:[%s1 + $0x1e8] sm:$0xff]
  %v148 = vld [vmem:[%s1 + $0x1f0] sm:$0xff]
  %v149 = vld [vmem:[%s1 + $0x1f8] sm:$0xff]
  %v150 = vld [vmem:[%s1 + $0x200] sm:$0xff]
  %v151 = vld [vmem:[%s1 + $0x208] sm:$0xff]
  %v152 = vld [vmem:[%s1 + $0x210] sm:$0xff]
  %v153 = vld [vmem:[%s1 + $0x218] sm:$0xff]
  %v154 = vld [vmem:[%s1 + $0x220] sm:$0xff]
  %v155 = vld [vmem:[%s1 + $0x228] sm:$0xff]
  %v156 = vld [vmem:[%s1 + $0x230] sm:$0xff]
  %v157 = vld [vmem:[%s1 + $0x238] sm:$0xff]
  %v158 = vld [vmem:[%s1 + $0x240] sm:$0xff]
  %v159 = vld [vmem:[%s1 + $0x248] sm:$0xff]
  %v160 = vld [vmem:[%s1 + $0x250] sm:$0xff]
  %v161 = vld [vmem:[%s1 + $0x258] sm:$0xff]
  %v162 = vld [vmem:[%s1 + $0x260] sm:$0xff]
  %v163 = vld [vmem:[%s1 + $0x268] sm:$0xff]
  %v164 = vld [vmem:[%s1 + $0x270] sm:$0xff]
  %v165 = vld [vmem:[%s1 + $0x278] sm:$0xff]
  %v166 = vld [vmem:[%s1 + $0x280] sm:$0xff]
  %v167 = vld [vmem:[%s1 + $0x288] sm:$0xff]
  %v168 = vld [vmem:[%s1 + $0x290] sm:$0xff]
  %v169 = vld [vmem:[%s1 + $0x298] sm:$0xff]
  %v170 = vld [vmem:[%s1 + $0x2a0] sm:$0xff]
  %v171 = vld [vmem:[%s1 + $0x2a8] sm:$0xff]
  %v172 = vld [vmem:[%s1 + $0x2b0] sm:$0xff]
  %v173 = vld [vmem:[%s1 + $0x2b8] sm:$0xff]
  %v174 = vld [vmem:[%s1 + $0x2c0] sm:$0xff]
  %v175 = vld [vmem:[%s1 + $0x2c8] sm:$0xff]
  %v176 = vld [vmem:[%s1 + $0x2d0] sm:$0xff]
  %v177 = vld [vmem:[%s1 + $0x2d8] sm:$0xff]
  %v178 = vld [vmem:[%s1 + $0x2e0] sm:$0xff]
  %v179 = vld [vmem:[%s1 + $0x2e8] sm:$0xff]
  %v180 = vld [vmem:[%s1 + $0x2f0] sm:$0xff]
  %v181 = vld [vmem:[%s1 + $0x2f8] sm:$0xff]
  %v182 = vld [vmem:[%s1 + $0x300] sm:$0xff]
  %v183 = vld [vmem:[%s1 + $0x308] sm:$0xff]
  %v184 = vld [vmem:[%s1 + $0x310] sm:$0xff]
  %v185 = vld [vmem:[%s1 + $0x318] sm:$0xff]
  %v186 = vld [vmem:[%s1 + $0x320] sm:$0xff]
  %v187 = vld [vmem:[%s1 + $0x328] sm:$0xff]
  %v188 = vld [vmem:[%s1 + $0x330] sm:$0xff]
  %v189 = vld [vmem:[%s1 + $0x338] sm:$0xff]
  %v190 = vld [vmem:[%s1 + $0x340] sm:$0xff]
  %v191 = vld [vmem:[%s1 + $0x348] sm:$0xff]
  %v192 = vld [vmem:[%s1 + $0x350] sm:$0xff]
  %v193 = vld [vmem:[%s1 + $0x358] sm:$0xff]
  %v194 = vld [vmem:[%s1 + $0x360] sm:$0xff]
  %v195 = vld [vmem:[%s1 + $0x368] sm:$0xff]
  %v196 = vld [vmem:[%s1 + $0x370] sm:$0xff]
  %v197 = vld [vmem:[%s1 + $0x378] sm:$0xff]
  %v198 = vld [vmem:[%s1 + $0x380] sm:$0xff]
  %v199 = vld [vmem:[%s1 + $0x388] sm:$0xff]
  %v200 = vld [vmem:[%s1 + $0x390] sm:$0xff]
  %v201 = vld [vmem:[%s1 + $0x398] sm:$0xff]
  %v202 = vld [vmem:[%s1 + $0x3a0] sm:$0xff]
  %v203 = vld [vmem:[%s1 + $0x3a8] sm:$0xff]
  %v204 = vld [vmem:[%s1 + $0x3b0] sm:$0xff]
  %v205 = vld [vmem:[%s1 + $0x3b8] sm:$0xff]
  %v206 = vld [vmem:[%s1 + $0x3c0] sm:$0xff]
  %v207 = vld [vmem:[%s1 + $0x3c8] sm:$0xff]
  %v208 = vld [vmem:[%s1 + $0x3d0] sm:$0xff]
  %v209 = vld [vmem:[%s1 + $0x3d8] sm:$0xff]
  %v210 = vld [vmem:[%s1 + $0x3e0] sm:$0xff]
  %v211 = vld [vmem:[%s1 + $0x3e8] sm:$0xff]
  %v212 = vld [vmem:[%s1 + $0x3f0] sm:$0xff]
  %v213 = vld [vmem:[%s1 + $0x3f8] sm:$0xff]
  %v214 = vld [vmem:[%s1 + $0x400] sm:$0xff]
  %v215 = vld [vmem:[%s1 + $0x408] sm:$0xff]
  %v216 = vld [vmem:[%s1 + $0x410] sm:$0xff]
  %v217 = vld [vmem:[%s1 + $0x418] sm:$0xff]
  %v218 = vld [vmem:[%s1 + $0x420] sm:$0xff]
  %v219 = vld [vmem:[%s1 + $0x428] sm:$0xff]
  %v220 = vld [vmem:[%s1 + $0x430] sm:$0xff]
  %v221 = vld [vmem:[%s1 + $0x438] sm:$0xff]
  %v222 = vld [vmem:[%s1 + $0x440] sm:$0xff]
  %v223 = vld [vmem:[%s1 + $0x448] sm:$0xff]
  %v224 = vld [vmem:[%s1 + $0x450] sm:$0xff]
  %v225 = vld [vmem:[%s1 + $0x458] sm:$0xff]
  %v226 = vld [vmem:[%s1 + $0x460] sm:$0xff]
  %v227 = vld [vmem:[%s1 + $0x468] sm:$0xff]
  %v228 = vld [vmem:[%s1 + $0x470] sm:$0xff]
  %v229 = vld [vmem:[%s1 + $0x478] sm:$0xff]
  %v230 = vld [vmem:[%s1 + $0x480] sm:$0xff]
  %v231 = vld [vmem:[%s1 + $0x488] sm:$0xff]
  %v232 = vld [vmem:[%s1 + $0x490] sm:$0xff]
  %v233 = vld [vmem:[%s1 + $0x498] sm:$0xff]
  %v234 = vld [vmem:[%s1 + $0x4a0] sm:$0xff]
  %v235 = vld [vmem:[%s1 + $0x4a8] sm:$0xff]
  %v236 = vld [vmem:[%s1 + $0x4b0] sm:$0xff]
  %v237 = vld [vmem:[%s1 + $0x4b8] sm:$0xff]
  %v238 = vld [vmem:[%s1 + $0x4c0] sm:$0xff]
  %v239 = vld [vmem:[%s1 + $0x4c8] sm:$0xff]
  %v240 = vld [vmem:[%s1 + $0x4d0] sm:$0xff]
  %v241 = vld [vmem:[%s1 + $0x4d8] sm:$0xff]
  %v242 = vld [vmem:[%s1 + $0x4e0] sm:$0xff]
  %v243 = vld [vmem:[%s1 + $0x4e8] sm:$0xff]
  %v244 = vld [vmem:[%s1 + $0x4f0] sm:$0xff]
  %v245 = vld [vmem:[%s1 + $0x4f8] sm:$0xff]
  %v246 = vld [vmem:[%s1 + $0x500] sm:$0xff]
  %v247 = vld [vmem:[%s1 + $0x508] sm:$0xff]
  %v248 = vld [vmem:[%s1 + $0x510] sm:$0xff]
  %v249 = vld [vmem:[%s1 + $0x518] sm:$0xff]
  %v250 = vld [vmem:[%s1 + $0x520] sm:$0xff]
  %v251 = vld [vmem:[%s1 + $0x528] sm:$0xff]
  %v252 = vld [vmem:[%s1 + $0x530] sm:$0xff]
  %v253 = vld [vmem:[%s1 + $0x538] sm:$0xff]
  %v254 = vld [vmem:[%s1 + $0x540] sm:$0xff]
  %v255 = vld [vmem:[%s1 + $0x548] sm:$0xff]
  %v256 = vld [vmem:[%s1 + $0x550] sm:$0xff]
  %v257 = vld [vmem:[%s1 + $0x558] sm:$0xff]
  %v258 = vld [vmem:[%s1 + $0x560] sm:$0xff]
  %v259 = vld [vmem:[%s1 + $0x568] sm:$0xff]
  %v260 = vld [vmem:[%s1 + $0x570] sm:$0xff]
  %v261 = vld [vmem:[%s1 + $0x578] sm:$0xff]
  %v262 = vld [vmem:[%s1 + $0x580] sm:$0xff]
  %v263 = vld [vmem:[%s1 + $0x588] sm:$0xff]
  %v264 = vld [vmem:[%s1 + $0x590] sm:$0xff]
  %v265 = vld [vmem:[%s1 + $0x598] sm:$0xff]
  %v266 = vld [vmem:[%s1 + $0x5a0] sm:$0xff]
  %v267 = vld [vmem:[%s1 + $0x5a8] sm:$0xff]
  %v268 = vld [vmem:[%s1 + $0x5b0] sm:$0xff]
  %v269 = vld [vmem:[%s1 + $0x5b8] sm:$0xff]
  %v270 = vld [vmem:[%s1 + $0x5c0] sm:$0xff]
  %v271 = vld [vmem:[%s1 + $0x5c8] sm:$0xff]
  %v272 = vld [vmem:[%s1 + $0x5d0] sm:$0xff]
  %v273 = vld [vmem:[%s1 + $0x5d8] sm:$0xff]
  %v274 = vld [vmem:[%s1 + $0x5e0] sm:$0xff]
  %v275 = vld [vmem:[%s1 + $0x5e8] sm:$0xff]
  %v276 = vld [vmem:[%s1 + $0x5f0] sm:$0xff]
  %v277 = vld [vmem:[%s1 + $0x5f8] sm:$0xff]
  %v278 = vld [vmem:[%s1 + $0x600] sm:$0xff]
  %v279 = vld [vmem:[%s1 + $0x608] sm:$0xff]
  %v280 = vld [vmem:[%s1 + $0x610] sm:$0xff]
  %v281 = vld [vmem:[%s1 + $0x618] sm:$0xff]
  %v282 = vld [vmem:[%s1 + $0x620] sm:$0xff]
  %v283 = vld [vmem:[%s1 + $0x628] sm:$0xff]
  %v284 = vld [vmem:[%s1 + $0x630] sm:$0xff]
  %v285 = vld [vmem:[%s1 + $0x638] sm:$0xff]
  %v286 = vld [vmem:[%s1 + $0x640] sm:$0xff]
  %v287 = vld [vmem:[%s1 + $0x648] sm:$0xff]
  %v288 = vld [vmem:[%s1 + $0x650] sm:$0xff]
  %v289 = vld [vmem:[%s1 + $0x658] sm:$0xff]
  %v290 = vld [vmem:[%s1 + $0x660] sm:$0xff]
  %v291 = vld [vmem:[%s1 + $0x668] sm:$0xff]
  %v292 = vld [vmem:[%s1 + $0x670] sm:$0xff]
  %v293 = vld [vmem:[%s1 + $0x678] sm:$0xff]
  %v294 = vld [vmem:[%s1 + $0x680] sm:$0xff]
  %v295 = vld [vmem:[%s1 + $0x688] sm:$0xff]
  %v296 = vld [vmem:[%s1 + $0x690] sm:$0xff]
  %v297 = vld [vmem:[%s1 + $0x698] sm:$0xff]
  %v298 = vld [vmem:[%s1 + $0x6a0] sm:$0xff]
  %v299 = vld [vmem:[%s1 + $0x6a8] sm:$0xff]
  %v300 = vld [vmem:[%s1 + $0x6b0] sm:$0xff]
  %v301 = vld [vmem:[%s1 + $0x6b8] sm:$0xff]
  %v302 = vld [vmem:[%s1 + $0x6c0] sm:$0xff]
  %v303 = vld [vmem:[%s1 + $0x6c8] sm:$0xff]
  %v304 = vld [vmem:[%s1 + $0x6d0] sm:$0xff]
  %v305 = vld [vmem:[%s1 + $0x6d8] sm:$0xff]
  %v306 = vld [vmem:[%s1 + $0x6e0] sm:$0xff]
  %v307 = vld [vmem:[%s1 + $0x6e8] sm:$0xff]
  %v308 = vld [vmem:[%s1 + $0x6f0] sm:$0xff]
  %v309 = vld [vmem:[%s1 + $0x6f8] sm:$0xff]
  %v310 = vld [vmem:[%s1 + $0x700] sm:$0xff]
  %v311 = vld [vmem:[%s1 + $0x708] sm:$0xff]
  %v312 = vld [vmem:[%s1 + $0x710] sm:$0xff]
  %v313 = vld [vmem:[%s1 + $0x718] sm:$0xff]
  %v314 = vld [vmem:[%s1 + $0x720] sm:$0xff]
  %v315 = vld [vmem:[%s1 + $0x728] sm:$0xff]
  %v316 = vld [vmem:[%s1 + $0x730] sm:$0xff]
  %v317 = vld [vmem:[%s1 + $0x738] sm:$0xff]
  %v318 = vld [vmem:[%s1 + $0x740] sm:$0xff]
  %v319 = vld [vmem:[%s1 + $0x748] sm:$0xff]
  %v320 = vld [vmem:[%s1 + $0x750] sm:$0xff]
  %v321 = vld [vmem:[%s1 + $0x758] sm:$0xff]
  %v322 = vld [vmem:[%s1 + $0x760] sm:$0xff]
  %v323 = vld [vmem:[%s1 + $0x768] sm:$0xff]
  %v324 = vld [vmem:[%s1 + $0x770] sm:$0xff]
  %v325 = vld [vmem:[%s1 + $0x778] sm:$0xff]
  %v326 = vld [vmem:[%s1 + $0x780] sm:$0xff]
  %v327 = vld [vmem:[%s1 + $0x788] sm:$0xff]
  %v328 = vld [vmem:[%s1 + $0x790] sm:$0xff]
  %v329 = vld [vmem:[%s1 + $0x798] sm:$0xff]
  %v330 = vld [vmem:[%s1 + $0x7a0] sm:$0xff]
  %v331 = vld [vmem:[%s1 + $0x7a8] sm:$0xff]
  %v332 = vld [vmem:[%s1 + $0x7b0] sm:$0xff]
  %v333 = vld [vmem:[%s1 + $0x7b8] sm:$0xff]
  %v334 = vld [vmem:[%s1 + $0x7c0] sm:$0xff]
  %v335 = vld [vmem:[%s1 + $0x7c8] sm:$0xff]
  %v336 = vld [vmem:[%s1 + $0x7d0] sm:$0xff]
  %v337 = vld [vmem:[%s1 + $0x7d8] sm:$0xff]
  %v338 = vld [vmem:[%s1 + $0x7e0] sm:$0xff]
  %v339 = vld [vmem:[%s1 + $0x7e8] sm:$0xff]
  %v340 = vld [vmem:[%s1 + $0x7f0] sm:$0xff]
  %v341 = vld [vmem:[%s1 + $0x7f8] sm:$0xff]
  %v342 = vld [vmem:[%s1 + $0x800] sm:$0xff]
  %v343 = vld [vmem:[%s1 + $0x808] sm:$0xff]
  %v344 = vld [vmem:[%s1 + $0x810] sm:$0xff]
  %v345 = vld [vmem:[%s1 + $0x818] sm:$0xff]
  %v346 = vld [vmem:[%s1 + $0x820] sm:$0xff]
  %v347 = vld [vmem:[%s1 + $0x828] sm:$0xff]
  %v348 = vld [vmem:[%s1 + $0x830] sm:$0xff]
  %v349 = vld [vmem:[%s1 + $0x838] sm:$0xff]
  %v350 = vld [vmem:[%s1 + $0x840] sm:$0xff]
  %v351 = vld [vmem:[%s1 + $0x848] sm:$0xff]
  %v352 = vld [vmem:[%s1 + $0x850] sm:$0xff]
  %v353 = vld [vmem:[%s1 + $0x858] sm:$0xff]
  %v354 = vld [vmem:[%s1 + $0x860] sm:$0xff]
  %v355 = vld [vmem:[%s1 + $0x868] sm:$0xff]
  %v356 = vld [vmem:[%s1 + $0x870] sm:$0xff]
  %v357 = vld [vmem:[%s1 + $0x878] sm:$0xff]
  %v358 = vld [vmem:[%s1 + $0x880] sm:$0xff]
  %v359 = vld [vmem:[%s1 + $0x888] sm:$0xff]
  %v360 = vld [vmem:[%s1 + $0x890] sm:$0xff]
  %vm361 = vcmask 195584
  %v363 = vsel %vm361, %v31, 0
  %v366 = vsel %vm361, %v49, 0
  %v369 = vsel %vm361, %v67, 0
  %v372 = vsel %vm361, %v85, 0
  %374 = vmatprep.subr.mxu0 0.0
  %375 = vmatpush1.msra.mxu0 %v86
  %376 = vmatprep.subr.mxu0 0.0
  %377 = vmatpush1.msra.mxu0 %v87
  %378 = vmatprep.subr.mxu0 0.0
  %379 = vmatpush1.msra.mxu0 %v88
  %380 = vmatprep.subr.mxu0 0.0
  %381 = vmatpush1.msra.mxu0 %v89
  %382 = vmatprep.subr.mxu0 0.0
  %383 = vmatpush1.msra.mxu0 %v90
  %384 = vmatprep.subr.mxu0 0.0
  %385 = vmatpush1.msra.mxu0 %v91
  %386 = vmatprep.subr.mxu0 0.0
  %387 = vmatpush1.msra.mxu0 %v92
  %388 = vmatprep.subr.mxu0 0.0
  %389 = vmatpush1.msra.mxu0 %v93
  %390 = vmatprep.subr.mxu0 0.0
  %391 = vmatpush1.msra.mxu0 %v94
  %392 = vmatprep.subr.mxu0 0.0
  %393 = vmatpush1.msra.mxu0 %v95
  %394 = vmatprep.subr.mxu0 0.0
  %395 = vmatpush1.msra.mxu0 %v96
  %396 = vmatprep.subr.mxu0 0.0
  %397 = vmatpush1.msra.mxu0 %v97
  %398 = vmatprep.subr.mxu0 0.0
  %399 = vmatpush1.msra.mxu0 %v98
  %400 = vmatprep.subr.mxu0 0.0
  %401 = vmatpush1.msra.mxu0 %v99
  %402 = vmatprep.subr.mxu0 0.0
  %403 = vmatpush1.msra.mxu0 %v100
  %404 = vmatprep.subr.mxu0 0.0
  %405 = vmatpush1.msra.mxu0 %v101
  %406 = vmatprep.subr.mxu0 0.0
  %407 = vmatpush1.msra.mxu0 %v102
  %408 = vmatprep.subr.mxu0 0.0
  %409 = vmatpush1.msra.mxu0 %v103
  %410 = vmatprep.subr.mxu0 0.0
  %411 = vmatpush1.msra.mxu0 %v104
  %412 = vmatprep.subr.mxu0 0.0
  %413 = vmatpush1.msra.mxu0 %v105
  %414 = vmatprep.subr.mxu0 0.0
  %415 = vmatpush1.msra.mxu0 %v106
  %416 = vmatprep.subr.mxu0 0.0
  %417 = vmatpush1.msra.mxu0 %v107
  %418 = vmatprep.subr.mxu0 0.0
  %419 = vmatpush1.msra.mxu0 %v108
  %420 = vmatprep.subr.mxu0 0.0
  %421 = vmatpush1.msra.mxu0 %v109
  %422 = vmatprep.subr.mxu0 0.0
  %423 = vmatpush1.msra.mxu0 %v110
  %424 = vmatprep.subr.mxu0 0.0
  %425 = vmatpush1.msra.mxu0 %v111
  %426 = vmatprep.subr.mxu0 0.0
  %427 = vmatpush1.msra.mxu0 %v112
  %428 = vmatprep.subr.mxu0 0.0
  %429 = vmatpush1.msra.mxu0 %v113
  %430 = vmatprep.subr.mxu0 0.0
  %431 = vmatpush1.msra.mxu0 %v114
  %432 = vmatprep.subr.mxu0 0.0
  %433 = vmatpush1.msra.mxu0 %v115
  %434 = vmatprep.subr.mxu0 0.0
  %435 = vmatpush1.msra.mxu0 %v116
  %436 = vmatprep.subr.mxu0 0.0
  %437 = vmatpush1.msra.mxu0 %v117
  %438 = vmatprep.mubr.f32.mxu0 %v15
  %439 = vmatmul.mubr.f32.gmra.mrb[0].mxu0 %v14
  %v440 = vpop.f32.mrb[0].mxu0
  %v441 = vadd.f32 0.0, %v440
  %v442 = vpop.f32.mrb[0].mxu0
  %443 = vmatprep.mubr.f32.mxu0 %v33
  %444 = vmatmul.mubr.f32.gmra.mrb[0].mxu0 %v32
  %v445 = vpop.f32.mrb[0].mxu0
  %v446 = vadd.f32 0.0, %v445
  %v447 = vpop.f32.mrb[0].mxu0
  %448 = vmatprep.mubr.f32.mxu0 %v51
  %449 = vmatmul.mubr.f32.gmra.mrb[0].mxu0 %v50
  %v450 = vpop.f32.mrb[0].mxu0
  %v451 = vadd.f32 0.0, %v450
  %v452 = vpop.f32.mrb[0].mxu0
  %453 = vmatprep.mubr.f32.mxu0 %v69
  %454 = vmatmul.mubr.f32.gmra.mrb[0].mxu0 %v68
  %v455 = vpop.f32.mrb[0].mxu0
  %v456 = vadd.f32 0.0, %v455
  %v457 = vpop.f32.mrb[0].mxu0
  %458 = vdwg.mxu0
  %459 = vmatprep.subr.mxu0 0.0
  %460 = vmatpush1.msra.mxu0 %v118
  %461 = vmatprep.subr.mxu0 0.0
  %462 = vmatpush1.msra.mxu0 %v119
  %463 = vmatprep.subr.mxu0 0.0
  %464 = vmatpush1.msra.mxu0 %v120
  %465 = vmatprep.subr.mxu0 0.0
  %466 = vmatpush1.msra.mxu0 %v121
  %467 = vmatprep.subr.mxu0 0.0
  %468 = vmatpush1.msra.mxu0 %v122
  %469 = vmatprep.subr.mxu0 0.0
  %470 = vmatpush1.msra.mxu0 %v123
  %471 = vmatprep.subr.mxu0 0.0
  %472 = vmatpush1.msra.mxu0 %v124
  %473 = vmatprep.subr.mxu0 0.0
  %474 = vmatpush1.msra.mxu0 %v125
  %475 = vmatprep.subr.mxu0 0.0
  %476 = vmatpush1.msra.mxu0 %v126
  %477 = vmatprep.subr.mxu0 0.0
  %478 = vmatpush1.msra.mxu0 %v127
  %479 = vmatprep.subr.mxu0 0.0
  %480 = vmatpush1.msra.mxu0 %v128
  %481 = vmatprep.subr.mxu0 0.0
  %482 = vmatpush1.msra.mxu0 %v129
  %483 = vmatprep.subr.mxu0 0.0
  %484 = vmatpush1.msra.mxu0 %v130
  %485 = vmatprep.subr.mxu0 0.0
  %486 = vmatpush1.msra.mxu0 %v131
  %487 = vmatprep.subr.mxu0 0.0
  %488 = vmatpush1.msra.mxu0 %v132
  %489 = vmatprep.subr.mxu0 0.0
  %490 = vmatpush1.msra.mxu0 %v133
  %491 = vmatprep.subr.mxu0 0.0
  %492 = vmatpush1.msra.mxu0 %v134
  %493 = vmatprep.subr.mxu0 0.0
  %494 = vmatpush1.msra.mxu0 %v135
  %495 = vmatprep.subr.mxu0 0.0
  %496 = vmatpush1.msra.mxu0 %v136
  %497 = vmatprep.subr.mxu0 0.0
  %498 = vmatpush1.msra.mxu0 %v137
  %499 = vmatprep.subr.mxu0 0.0
  %500 = vmatpush1.msra.mxu0 %v138
  %501 = vmatprep.subr.mxu0 0.0
  %502 = vmatpush1.msra.mxu0 %v139
  %503 = vmatprep.subr.mxu0 0.0
  %504 = vmatpush1.msra.mxu0 %v140
  %505 = vmatprep.subr.mxu0 0.0
  %506 = vmatpush1.msra.mxu0 %v141
  %507 = vmatprep.subr.mxu0 0.0
  %508 = vmatpush1.msra.mxu0 %v142
  %509 = vmatprep.subr.mxu0 0.0
  %510 = vmatpush1.msra.mxu0 %v143
  %511 = vmatprep.subr.mxu0 0.0
  %512 = vmatpush1.msra.mxu0 %v144
  %513 = vmatprep.subr.mxu0 0.0
  %514 = vmatpush1.msra.mxu0 %v145
  %515 = vmatprep.subr.mxu0 0.0
  %516 = vmatpush1.msra.mxu0 %v146
  %517 = vmatprep.subr.mxu0 0.0
  %518 = vmatpush1.msra.mxu0 %v147
  %519 = vmatprep.subr.mxu0 0.0
  %520 = vmatpush1.msra.mxu0 %v148
  %521 = vmatprep.subr.mxu0 0.0
  %522 = vmatpush1.msra.mxu0 %v149
  %523 = vmatprep.mubr.f32.mxu0 %v17
  %524 = vmatmul.mubr.f32.gmra.mrb[0].mxu0 %v16
  %v525 = vpop.f32.mrb[0].mxu0
  %v526 = vadd.f32 %v441, %v525
  %v527 = vpop.f32.mrb[0].mxu0
  %528 = vmatprep.mubr.f32.mxu0 %v35
  %529 = vmatmul.mubr.f32.gmra.mrb[0].mxu0 %v34
  %v530 = vpop.f32.mrb[0].mxu0
  %v531 = vadd.f32 %v446, %v530
  %v532 = vpop.f32.mrb[0].mxu0
  %533 = vmatprep.mubr.f32.mxu0 %v53
  %534 = vmatmul.mubr.f32.gmra.mrb[0].mxu0 %v52
  %v535 = vpop.f32.mrb[0].mxu0
  %v536 = vadd.f32 %v451, %v535
  %v537 = vpop.f32.mrb[0].mxu0
  %538 = vmatprep.mubr.f32.mxu0 %v71
  %539 = vmatmul.mubr.f32.gmra.mrb[0].mxu0 %v70
  %v540 = vpop.f32.mrb[0].mxu0
  %v541 = vadd.f32 %v456, %v540
  %v542 = vpop.f32.mrb[0].mxu0
  %543 = vdwg.mxu0
  %544 = vmatprep.subr.mxu0 0.0
  %545 = vmatpush1.msra.mxu0 %v150
  %546 = vmatprep.subr.mxu0 0.0
  %547 = vmatpush1.msra.mxu0 %v151
  %548 = vmatprep.subr.mxu0 0.0
  %549 = vmatpush1.msra.mxu0 %v152
  %550 = vmatprep.subr.mxu0 0.0
  %551 = vmatpush1.msra.mxu0 %v153
  %552 = vmatprep.subr.mxu0 0.0
  %553 = vmatpush1.msra.mxu0 %v154
  %554 = vmatprep.subr.mxu0 0.0
  %555 = vmatpush1.msra.mxu0 %v155
  %556 = vmatprep.subr.mxu0 0.0
  %557 = vmatpush1.msra.mxu0 %v156
  %558 = vmatprep.subr.mxu0 0.0
  %559 = vmatpush1.msra.mxu0 %v157
  %560 = vmatprep.subr.mxu0 0.0
  %561 = vmatpush1.msra.mxu0 %v158
  %562 = vmatprep.subr.mxu0 0.0
  %563 = vmatpush1.msra.mxu0 %v159
  %564 = vmatprep.subr.mxu0 0.0
  %565 = vmatpush1.msra.mxu0 %v160
  %566 = vmatprep.subr.mxu0 0.0
  %567 = vmatpush1.msra.mxu0 %v161
  %568 = vmatprep.subr.mxu0 0.0
  %569 = vmatpush1.msra.mxu0 %v162
  %570 = vmatprep.subr.mxu0 0.0
  %571 = vmatpush1.msra.mxu0 %v163
  %572 = vmatprep.subr.mxu0 0.0
  %573 = vmatpush1.msra.mxu0 %v164
  %574 = vmatprep.subr.mxu0 0.0
  %575 = vmatpush1.msra.mxu0 %v165
  %576 = vmatprep.subr.mxu0 0.0
  %577 = vmatpush1.msra.mxu0 %v166
  %578 = vmatprep.subr.mxu0 0.0
  %579 = vmatpush1.msra.mxu0 %v167
  %580 = vmatprep.subr.mxu0 0.0
  %581 = vmatpush1.msra.mxu0 %v168
  %582 = vmatprep.subr.mxu0 0.0
  %583 = vmatpush1.msra.mxu0 %v169
  %584 = vmatprep.subr.mxu0 0.0
  %585 = vmatpush1.msra.mxu0 %v170
  %586 = vmatprep.subr.mxu0 0.0
  %587 = vmatpush1.msra.mxu0 %v171
  %588 = vmatprep.subr.mxu0 0.0
  %589 = vmatpush1.msra.mxu0 %v172
  %590 = vmatprep.subr.mxu0 0.0
  %591 = vmatpush1.msra.mxu0 %v173
  %592 = vmatprep.subr.mxu0 0.0
  %593 = vmatpush1.msra.mxu0 %v174
  %594 = vmatprep.subr.mxu0 0.0
  %595 = vmatpush1.msra.mxu0 %v175
  %596 = vmatprep.subr.mxu0 0.0
  %597 = vmatpush1.msra.mxu0 %v176
  %598 = vmatprep.subr.mxu0 0.0
  %599 = vmatpush1.msra.mxu0 %v177
  %600 = vmatprep.subr.mxu0 0.0
  %601 = vmatpush1.msra.mxu0 %v178
  %602 = vmatprep.subr.mxu0 0.0
  %603 = vmatpush1.msra.mxu0 %v179
  %604 = vmatprep.subr.mxu0 0.0
  %605 = vmatpush1.msra.mxu0 %v180
  %606 = vmatprep.subr.mxu0 0.0
  %607 = vmatpush1.msra.mxu0 %v181
  %608 = vmatprep.mubr.f32.mxu0 %v19
  %609 = vmatmul.mubr.f32.gmra.mrb[0].mxu0 %v18
  %v610 = vpop.f32.mrb[0].mxu0
  %v611 = vadd.f32 %v526, %v610
  %v612 = vpop.f32.mrb[0].mxu0
  %613 = vmatprep.mubr.f32.mxu0 %v37
  %614 = vmatmul.mubr.f32.gmra.mrb[0].mxu0 %v36
  %v615 = vpop.f32.mrb[0].mxu0
  %v616 = vadd.f32 %v531, %v615
  %v617 = vpop.f32.mrb[0].mxu0
  %618 = vmatprep.mubr.f32.mxu0 %v55
  %619 = vmatmul.mubr.f32.gmra.mrb[0].mxu0 %v54
  %v620 = vpop.f32.mrb[0].mxu0
  %v621 = vadd.f32 %v536, %v620
  %v622 = vpop.f32.mrb[0].mxu0
  %623 = vmatprep.mubr.f32.mxu0 %v73
  %624 = vmatmul.mubr.f32.gmra.mrb[0].mxu0 %v72
  %v625 = vpop.f32.mrb[0].mxu0
  %v626 = vadd.f32 %v541, %v625
  %v627 = vpop.f32.mrb[0].mxu0
  %628 = vdwg.mxu0
  %629 = vmatprep.subr.mxu0 0.0
  %630 = vmatpush1.msra.mxu0 %v182
  %631 = vmatprep.subr.mxu0 0.0
  %632 = vmatpush1.msra.mxu0 %v183
  %633 = vmatprep.subr.mxu0 0.0
  %634 = vmatpush1.msra.mxu0 %v184
  %635 = vmatprep.subr.mxu0 0.0
  %636 = vmatpush1.msra.mxu0 %v185
  %637 = vmatprep.subr.mxu0 0.0
  %638 = vmatpush1.msra.mxu0 %v186
  %639 = vmatprep.subr.mxu0 0.0
  %640 = vmatpush1.msra.mxu0 %v187
  %641 = vmatprep.subr.mxu0 0.0
  %642 = vmatpush1.msra.mxu0 %v188
  %643 = vmatprep.subr.mxu0 0.0
  %644 = vmatpush1.msra.mxu0 %v189
  %645 = vmatprep.subr.mxu0 0.0
  %646 = vmatpush1.msra.mxu0 %v190
  %647 = vmatprep.subr.mxu0 0.0
  %648 = vmatpush1.msra.mxu0 %v191
  %649 = vmatprep.subr.mxu0 0.0
  %650 = vmatpush1.msra.mxu0 %v192
  %651 = vmatprep.subr.mxu0 0.0
  %652 = vmatpush1.msra.mxu0 %v193
  %653 = vmatprep.subr.mxu0 0.0
  %654 = vmatpush1.msra.mxu0 %v194
  %655 = vmatprep.subr.mxu0 0.0
  %656 = vmatpush1.msra.mxu0 %v195
  %657 = vmatprep.subr.mxu0 0.0
  %658 = vmatpush1.msra.mxu0 %v196
  %659 = vmatprep.subr.mxu0 0.0
  %660 = vmatpush1.msra.mxu0 %v197
  %661 = vmatprep.subr.mxu0 0.0
  %662 = vmatpush1.msra.mxu0 %v198
  %663 = vmatprep.subr.mxu0 0.0
  %664 = vmatpush1.msra.mxu0 %v199
  %665 = vmatprep.subr.mxu0 0.0
  %666 = vmatpush1.msra.mxu0 %v200
  %667 = vmatprep.subr.mxu0 0.0
  %668 = vmatpush1.msra.mxu0 %v201
  %669 = vmatprep.subr.mxu0 0.0
  %670 = vmatpush1.msra.mxu0 %v202
  %671 = vmatprep.subr.mxu0 0.0
  %672 = vmatpush1.msra.mxu0 %v203
  %673 = vmatprep.subr.mxu0 0.0
  %674 = vmatpush1.msra.mxu0 %v204
  %675 = vmatprep.subr.mxu0 0.0
  %676 = vmatpush1.msra.mxu0 %v205
  %677 = vmatprep.subr.mxu0 0.0
  %678 = vmatpush1.msra.mxu0 %v206
  %679 = vmatprep.subr.mxu0 0.0
  %680 = vmatpush1.msra.mxu0 %v207
  %681 = vmatprep.subr.mxu0 0.0
  %682 = vmatpush1.msra.mxu0 %v208
  %683 = vmatprep.subr.mxu0 0.0
  %684 = vmatpush1.msra.mxu0 %v209
  %685 = vmatprep.subr.mxu0 0.0
  %686 = vmatpush1.msra.mxu0 %v210
  %687 = vmatprep.subr.mxu0 0.0
  %688 = vmatpush1.msra.mxu0 %v211
  %689 = vmatprep.subr.mxu0 0.0
  %690 = vmatpush1.msra.mxu0 %v212
  %691 = vmatprep.subr.mxu0 0.0
  %692 = vmatpush1.msra.mxu0 %v213
  %693 = vmatprep.mubr.f32.mxu0 %v21
  %694 = vmatmul.mubr.f32.gmra.mrb[0].mxu0 %v20
  %v695 = vpop.f32.mrb[0].mxu0
  %v696 = vadd.f32 %v611, %v695
  %v697 = vpop.f32.mrb[0].mxu0
  %698 = vmatprep.mubr.f32.mxu0 %v39
  %699 = vmatmul.mubr.f32.gmra.mrb[0].mxu0 %v38
  %v700 = vpop.f32.mrb[0].mxu0
  %v701 = vadd.f32 %v616, %v700
  %v702 = vpop.f32.mrb[0].mxu0
  %703 = vmatprep.mubr.f32.mxu0 %v57
  %704 = vmatmul.mubr.f32.gmra.mrb[0].mxu0 %v56
  %v705 = vpop.f32.mrb[0].mxu0
  %v706 = vadd.f32 %v621, %v705
  %v707 = vpop.f32.mrb[0].mxu0
  %708 = vmatprep.mubr.f32.mxu0 %v75
  %709 = vmatmul.mubr.f32.gmra.mrb[0].mxu0 %v74
  %v710 = vpop.f32.mrb[0].mxu0
  %v711 = vadd.f32 %v626, %v710
  %v712 = vpop.f32.mrb[0].mxu0
  %713 = vdwg.mxu0
  %714 = vmatprep.subr.mxu0 0.0
  %715 = vmatpush1.msra.mxu0 %v214
  %716 = vmatprep.subr.mxu0 0.0
  %717 = vmatpush1.msra.mxu0 %v215
  %718 = vmatprep.subr.mxu0 0.0
  %719 = vmatpush1.msra.mxu0 %v216
  %720 = vmatprep.subr.mxu0 0.0
  %721 = vmatpush1.msra.mxu0 %v217
  %722 = vmatprep.subr.mxu0 0.0
  %723 = vmatpush1.msra.mxu0 %v218
  %724 = vmatprep.subr.mxu0 0.0
  %725 = vmatpush1.msra.mxu0 %v219
  %726 = vmatprep.subr.mxu0 0.0
  %727 = vmatpush1.msra.mxu0 %v220
  %728 = vmatprep.subr.mxu0 0.0
  %729 = vmatpush1.msra.mxu0 %v221
  %730 = vmatprep.subr.mxu0 0.0
  %731 = vmatpush1.msra.mxu0 %v222
  %732 = vmatprep.subr.mxu0 0.0
  %733 = vmatpush1.msra.mxu0 %v223
  %734 = vmatprep.subr.mxu0 0.0
  %735 = vmatpush1.msra.mxu0 %v224
  %736 = vmatprep.subr.mxu0 0.0
  %737 = vmatpush1.msra.mxu0 %v225
  %738 = vmatprep.subr.mxu0 0.0
  %739 = vmatpush1.msra.mxu0 %v226
  %740 = vmatprep.subr.mxu0 0.0
  %741 = vmatpush1.msra.mxu0 %v227
  %742 = vmatprep.subr.mxu0 0.0
  %743 = vmatpush1.msra.mxu0 %v228
  %744 = vmatprep.subr.mxu0 0.0
  %745 = vmatpush1.msra.mxu0 %v229
  %746 = vmatprep.subr.mxu0 0.0
  %747 = vmatpush1.msra.mxu0 %v230
  %748 = vmatprep.subr.mxu0 0.0
  %749 = vmatpush1.msra.mxu0 %v231
  %750 = vmatprep.subr.mxu0 0.0
  %751 = vmatpush1.msra.mxu0 %v232
  %752 = vmatprep.subr.mxu0 0.0
  %753 = vmatpush1.msra.mxu0 %v233
  %754 = vmatprep.subr.mxu0 0.0
  %755 = vmatpush1.msra.mxu0 %v234
  %756 = vmatprep.subr.mxu0 0.0
  %757 = vmatpush1.msra.mxu0 %v235
  %758 = vmatprep.subr.mxu0 0.0
  %759 = vmatpush1.msra.mxu0 %v236
  %760 = vmatprep.subr.mxu0 0.0
  %761 = vmatpush1.msra.mxu0 %v237
  %762 = vmatprep.subr.mxu0 0.0
  %763 = vmatpush1.msra.mxu0 %v238
  %764 = vmatprep.subr.mxu0 0.0
  %765 = vmatpush1.msra.mxu0 %v239
  %766 = vmatprep.subr.mxu0 0.0
  %767 = vmatpush1.msra.mxu0 %v240
  %768 = vmatprep.subr.mxu0 0.0
  %769 = vmatpush1.msra.mxu0 %v241
  %770 = vmatprep.subr.mxu0 0.0
  %771 = vmatpush1.msra.mxu0 %v242
  %772 = vmatprep.subr.mxu0 0.0
  %773 = vmatpush1.msra.mxu0 %v243
  %774 = vmatprep.subr.mxu0 0.0
  %775 = vmatpush1.msra.mxu0 %v244
  %776 = vmatprep.subr.mxu0 0.0
  %777 = vmatpush1.msra.mxu0 %v245
  %778 = vmatprep.mubr.f32.mxu0 %v23
  %779 = vmatmul.mubr.f32.gmra.mrb[0].mxu0 %v22
  %v780 = vpop.f32.mrb[0].mxu0
  %v781 = vadd.f32 %v696, %v780
  %v782 = vpop.f32.mrb[0].mxu0
  %783 = vmatprep.mubr.f32.mxu0 %v41
  %784 = vmatmul.mubr.f32.gmra.mrb[0].mxu0 %v40
  %v785 = vpop.f32.mrb[0].mxu0
  %v786 = vadd.f32 %v701, %v785
  %v787 = vpop.f32.mrb[0].mxu0
  %788 = vmatprep.mubr.f32.mxu0 %v59
  %789 = vmatmul.mubr.f32.gmra.mrb[0].mxu0 %v58
  %v790 = vpop.f32.mrb[0].mxu0
  %v791 = vadd.f32 %v706, %v790
  %v792 = vpop.f32.mrb[0].mxu0
  %793 = vmatprep.mubr.f32.mxu0 %v77
  %794 = vmatmul.mubr.f32.gmra.mrb[0].mxu0 %v76
  %v795 = vpop.f32.mrb[0].mxu0
  %v796 = vadd.f32 %v711, %v795
  %v797 = vpop.f32.mrb[0].mxu0
  %798 = vdwg.mxu0
  %799 = vmatprep.subr.mxu0 0.0
  %800 = vmatpush1.msra.mxu0 %v246
  %801 = vmatprep.subr.mxu0 0.0
  %802 = vmatpush1.msra.mxu0 %v247
  %803 = vmatprep.subr.mxu0 0.0
  %804 = vmatpush1.msra.mxu0 %v248
  %805 = vmatprep.subr.mxu0 0.0
  %806 = vmatpush1.msra.mxu0 %v249
  %807 = vmatprep.subr.mxu0 0.0
  %808 = vmatpush1.msra.mxu0 %v250
  %809 = vmatprep.subr.mxu0 0.0
  %810 = vmatpush1.msra.mxu0 %v251
  %811 = vmatprep.subr.mxu0 0.0
  %812 = vmatpush1.msra.mxu0 %v252
  %813 = vmatprep.subr.mxu0 0.0
  %814 = vmatpush1.msra.mxu0 %v253
  %815 = vmatprep.subr.mxu0 0.0
  %816 = vmatpush1.msra.mxu0 %v254
  %817 = vmatprep.subr.mxu0 0.0
  %818 = vmatpush1.msra.mxu0 %v255
  %819 = vmatprep.subr.mxu0 0.0
  %820 = vmatpush1.msra.mxu0 %v256
  %821 = vmatprep.subr.mxu0 0.0
  %822 = vmatpush1.msra.mxu0 %v257
  %823 = vmatprep.subr.mxu0 0.0
  %824 = vmatpush1.msra.mxu0 %v258
  %825 = vmatprep.subr.mxu0 0.0
  %826 = vmatpush1.msra.mxu0 %v259
  %827 = vmatprep.subr.mxu0 0.0
  %828 = vmatpush1.msra.mxu0 %v260
  %829 = vmatprep.subr.mxu0 0.0
  %830 = vmatpush1.msra.mxu0 %v261
  %831 = vmatprep.subr.mxu0 0.0
  %832 = vmatpush1.msra.mxu0 %v262
  %833 = vmatprep.subr.mxu0 0.0
  %834 = vmatpush1.msra.mxu0 %v263
  %835 = vmatprep.subr.mxu0 0.0
  %836 = vmatpush1.msra.mxu0 %v264
  %837 = vmatprep.subr.mxu0 0.0
  %838 = vmatpush1.msra.mxu0 %v265
  %839 = vmatprep.subr.mxu0 0.0
  %840 = vmatpush1.msra.mxu0 %v266
  %841 = vmatprep.subr.mxu0 0.0
  %842 = vmatpush1.msra.mxu0 %v267
  %843 = vmatprep.subr.mxu0 0.0
  %844 = vmatpush1.msra.mxu0 %v268
  %845 = vmatprep.subr.mxu0 0.0
  %846 = vmatpush1.msra.mxu0 %v269
  %847 = vmatprep.subr.mxu0 0.0
  %848 = vmatpush1.msra.mxu0 %v270
  %849 = vmatprep.subr.mxu0 0.0
  %850 = vmatpush1.msra.mxu0 %v271
  %851 = vmatprep.subr.mxu0 0.0
  %852 = vmatpush1.msra.mxu0 %v272
  %853 = vmatprep.subr.mxu0 0.0
  %854 = vmatpush1.msra.mxu0 %v273
  %855 = vmatprep.subr.mxu0 0.0
  %856 = vmatpush1.msra.mxu0 %v274
  %857 = vmatprep.subr.mxu0 0.0
  %858 = vmatpush1.msra.mxu0 %v275
  %859 = vmatprep.subr.mxu0 0.0
  %860 = vmatpush1.msra.mxu0 %v276
  %861 = vmatprep.subr.mxu0 0.0
  %862 = vmatpush1.msra.mxu0 %v277
  %863 = vmatprep.mubr.f32.mxu0 %v25
  %864 = vmatmul.mubr.f32.gmra.mrb[0].mxu0 %v24
  %v865 = vpop.f32.mrb[0].mxu0
  %v866 = vadd.f32 %v781, %v865
  %v867 = vpop.f32.mrb[0].mxu0
  %868 = vmatprep.mubr.f32.mxu0 %v43
  %869 = vmatmul.mubr.f32.gmra.mrb[0].mxu0 %v42
  %v870 = vpop.f32.mrb[0].mxu0
  %v871 = vadd.f32 %v786, %v870
  %v872 = vpop.f32.mrb[0].mxu0
  %873 = vmatprep.mubr.f32.mxu0 %v61
  %874 = vmatmul.mubr.f32.gmra.mrb[0].mxu0 %v60
  %v875 = vpop.f32.mrb[0].mxu0
  %v876 = vadd.f32 %v791, %v875
  %v877 = vpop.f32.mrb[0].mxu0
  %878 = vmatprep.mubr.f32.mxu0 %v79
  %879 = vmatmul.mubr.f32.gmra.mrb[0].mxu0 %v78
  %v880 = vpop.f32.mrb[0].mxu0
  %v881 = vadd.f32 %v796, %v880
  %v882 = vpop.f32.mrb[0].mxu0
  %883 = vdwg.mxu0
  %884 = vmatprep.subr.mxu0 0.0
  %885 = vmatpush1.msra.mxu0 %v278
  %886 = vmatprep.subr.mxu0 0.0
  %887 = vmatpush1.msra.mxu0 %v279
  %888 = vmatprep.subr.mxu0 0.0
  %889 = vmatpush1.msra.mxu0 %v280
  %890 = vmatprep.subr.mxu0 0.0
  %891 = vmatpush1.msra.mxu0 %v281
  %892 = vmatprep.subr.mxu0 0.0
  %893 = vmatpush1.msra.mxu0 %v282
  %894 = vmatprep.subr.mxu0 0.0
  %895 = vmatpush1.msra.mxu0 %v283
  %896 = vmatprep.subr.mxu0 0.0
  %897 = vmatpush1.msra.mxu0 %v284
  %898 = vmatprep.subr.mxu0 0.0
  %899 = vmatpush1.msra.mxu0 %v285
  %900 = vmatprep.subr.mxu0 0.0
  %901 = vmatpush1.msra.mxu0 %v286
  %902 = vmatprep.subr.mxu0 0.0
  %903 = vmatpush1.msra.mxu0 %v287
  %904 = vmatprep.subr.mxu0 0.0
  %905 = vmatpush1.msra.mxu0 %v288
  %906 = vmatprep.subr.mxu0 0.0
  %907 = vmatpush1.msra.mxu0 %v289
  %908 = vmatprep.subr.mxu0 0.0
  %909 = vmatpush1.msra.mxu0 %v290
  %910 = vmatprep.subr.mxu0 0.0
  %911 = vmatpush1.msra.mxu0 %v291
  %912 = vmatprep.subr.mxu0 0.0
  %913 = vmatpush1.msra.mxu0 %v292
  %914 = vmatprep.subr.mxu0 0.0
  %915 = vmatpush1.msra.mxu0 %v293
  %916 = vmatprep.subr.mxu0 0.0
  %917 = vmatpush1.msra.mxu0 %v294
  %918 = vmatprep.subr.mxu0 0.0
  %919 = vmatpush1.msra.mxu0 %v295
  %920 = vmatprep.subr.mxu0 0.0
  %921 = vmatpush1.msra.mxu0 %v296
  %922 = vmatprep.subr.mxu0 0.0
  %923 = vmatpush1.msra.mxu0 %v297
  %924 = vmatprep.subr.mxu0 0.0
  %925 = vmatpush1.msra.mxu0 %v298
  %926 = vmatprep.subr.mxu0 0.0
  %927 = vmatpush1.msra.mxu0 %v299
  %928 = vmatprep.subr.mxu0 0.0
  %929 = vmatpush1.msra.mxu0 %v300
  %930 = vmatprep.subr.mxu0 0.0
  %931 = vmatpush1.msra.mxu0 %v301
  %932 = vmatprep.subr.mxu0 0.0
  %933 = vmatpush1.msra.mxu0 %v302
  %934 = vmatprep.subr.mxu0 0.0
  %935 = vmatpush1.msra.mxu0 %v303
  %936 = vmatprep.subr.mxu0 0.0
  %937 = vmatpush1.msra.mxu0 %v304
  %938 = vmatprep.subr.mxu0 0.0
  %939 = vmatpush1.msra.mxu0 %v305
  %940 = vmatprep.subr.mxu0 0.0
  %941 = vmatpush1.msra.mxu0 %v306
  %942 = vmatprep.subr.mxu0 0.0
  %943 = vmatpush1.msra.mxu0 %v307
  %944 = vmatprep.subr.mxu0 0.0
  %945 = vmatpush1.msra.mxu0 %v308
  %946 = vmatprep.subr.mxu0 0.0
  %947 = vmatpush1.msra.mxu0 %v309
  %948 = vmatprep.mubr.f32.mxu0 %v27
  %949 = vmatmul.mubr.f32.gmra.mrb[0].mxu0 %v26
  %v950 = vpop.f32.mrb[0].mxu0
  %v951 = vadd.f32 %v866, %v950
  %v952 = vpop.f32.mrb[0].mxu0
  %953 = vmatprep.mubr.f32.mxu0 %v45
  %954 = vmatmul.mubr.f32.gmra.mrb[0].mxu0 %v44
  %v955 = vpop.f32.mrb[0].mxu0
  %v956 = vadd.f32 %v871, %v955
  %v957 = vpop.f32.mrb[0].mxu0
  %958 = vmatprep.mubr.f32.mxu0 %v63
  %959 = vmatmul.mubr.f32.gmra.mrb[0].mxu0 %v62
  %v960 = vpop.f32.mrb[0].mxu0
  %v961 = vadd.f32 %v876, %v960
  %v962 = vpop.f32.mrb[0].mxu0
  %963 = vmatprep.mubr.f32.mxu0 %v81
  %964 = vmatmul.mubr.f32.gmra.mrb[0].mxu0 %v80
  %v965 = vpop.f32.mrb[0].mxu0
  %v966 = vadd.f32 %v881, %v965
  %v967 = vpop.f32.mrb[0].mxu0
  %968 = vdwg.mxu0
  %969 = vmatprep.subr.mxu0 0.0
  %970 = vmatpush1.msra.mxu0 %v310
  %971 = vmatprep.subr.mxu0 0.0
  %972 = vmatpush1.msra.mxu0 %v311
  %973 = vmatprep.subr.mxu0 0.0
  %974 = vmatpush1.msra.mxu0 %v312
  %975 = vmatprep.subr.mxu0 0.0
  %976 = vmatpush1.msra.mxu0 %v313
  %977 = vmatprep.subr.mxu0 0.0
  %978 = vmatpush1.msra.mxu0 %v314
  %979 = vmatprep.subr.mxu0 0.0
  %980 = vmatpush1.msra.mxu0 %v315
  %981 = vmatprep.subr.mxu0 0.0
  %982 = vmatpush1.msra.mxu0 %v316
  %983 = vmatprep.subr.mxu0 0.0
  %984 = vmatpush1.msra.mxu0 %v317
  %985 = vmatprep.subr.mxu0 0.0
  %986 = vmatpush1.msra.mxu0 %v318
  %987 = vmatprep.subr.mxu0 0.0
  %988 = vmatpush1.msra.mxu0 %v319
  %989 = vmatprep.subr.mxu0 0.0
  %990 = vmatpush1.msra.mxu0 %v320
  %991 = vmatprep.subr.mxu0 0.0
  %992 = vmatpush1.msra.mxu0 %v321
  %993 = vmatprep.subr.mxu0 0.0
  %994 = vmatpush1.msra.mxu0 %v322
  %995 = vmatprep.subr.mxu0 0.0
  %996 = vmatpush1.msra.mxu0 %v323
  %997 = vmatprep.subr.mxu0 0.0
  %998 = vmatpush1.msra.mxu0 %v324
  %999 = vmatprep.subr.mxu0 0.0
  %1000 = vmatpush1.msra.mxu0 %v325
  %1001 = vmatprep.subr.mxu0 0.0
  %1002 = vmatpush1.msra.mxu0 %v326
  %1003 = vmatprep.subr.mxu0 0.0
  %1004 = vmatpush1.msra.mxu0 %v327
  %1005 = vmatprep.subr.mxu0 0.0
  %1006 = vmatpush1.msra.mxu0 %v328
  %1007 = vmatprep.subr.mxu0 0.0
  %1008 = vmatpush1.msra.mxu0 %v329
  %1009 = vmatprep.subr.mxu0 0.0
  %1010 = vmatpush1.msra.mxu0 %v330
  %1011 = vmatprep.subr.mxu0 0.0
  %1012 = vmatpush1.msra.mxu0 %v331
  %1013 = vmatprep.subr.mxu0 0.0
  %1014 = vmatpush1.msra.mxu0 %v332
  %1015 = vmatprep.subr.mxu0 0.0
  %1016 = vmatpush1.msra.mxu0 %v333
  %1017 = vmatprep.subr.mxu0 0.0
  %1018 = vmatpush1.msra.mxu0 %v334
  %1019 = vmatprep.subr.mxu0 0.0
  %1020 = vmatpush1.msra.mxu0 %v335
  %1021 = vmatprep.subr.mxu0 0.0
  %1022 = vmatpush1.msra.mxu0 %v336
  %1023 = vmatprep.subr.mxu0 0.0
  %1024 = vmatpush1.msra.mxu0 %v337
  %1025 = vmatprep.subr.mxu0 0.0
  %1026 = vmatpush1.msra.mxu0 %v338
  %1027 = vmatprep.subr.mxu0 0.0
  %1028 = vmatpush1.msra.mxu0 %v339
  %1029 = vmatprep.subr.mxu0 0.0
  %1030 = vmatpush1.msra.mxu0 %v340
  %1031 = vmatprep.subr.mxu0 0.0
  %1032 = vmatpush1.msra.mxu0 %v341
  %1033 = vmatprep.mubr.f32.mxu0 %v29
  %1034 = vmatmul.mubr.f32.gmra.mrb[0].mxu0 %v28
  %v1035 = vpop.f32.mrb[0].mxu0
  %v1036 = vadd.f32 %v951, %v1035
  %v1037 = vpop.f32.mrb[0].mxu0
  %1038 = vmatprep.mubr.f32.mxu0 %v47
  %1039 = vmatmul.mubr.f32.gmra.mrb[0].mxu0 %v46
  %v1040 = vpop.f32.mrb[0].mxu0
  %v1041 = vadd.f32 %v956, %v1040
  %v1042 = vpop.f32.mrb[0].mxu0
  %1043 = vmatprep.mubr.f32.mxu0 %v65
  %1044 = vmatmul.mubr.f32.gmra.mrb[0].mxu0 %v64
  %v1045 = vpop.f32.mrb[0].mxu0
  %v1046 = vadd.f32 %v961, %v1045
  %v1047 = vpop.f32.mrb[0].mxu0
  %1048 = vmatprep.mubr.f32.mxu0 %v83
  %1049 = vmatmul.mubr.f32.gmra.mrb[0].mxu0 %v82
  %v1050 = vpop.f32.mrb[0].mxu0
  %v1051 = vadd.f32 %v966, %v1050
  %v1052 = vpop.f32.mrb[0].mxu0
  %1053 = vdwg.mxu0
  %1054 = vmatprep.subr.mxu0 0.0
  %1055 = vmatpush1.msra.mxu0 %v342
  %1056 = vmatprep.subr.mxu0 0.0
  %1057 = vmatpush1.msra.mxu0 %v343
  %1058 = vmatprep.subr.mxu0 0.0
  %1059 = vmatpush1.msra.mxu0 %v344
  %1060 = vmatprep.subr.mxu0 0.0
  %1061 = vmatpush1.msra.mxu0 %v345
  %1062 = vmatprep.subr.mxu0 0.0
  %1063 = vmatpush1.msra.mxu0 %v346
  %1064 = vmatprep.subr.mxu0 0.0
  %1065 = vmatpush1.msra.mxu0 %v347
  %1066 = vmatprep.subr.mxu0 0.0
  %1067 = vmatpush1.msra.mxu0 %v348
  %1068 = vmatprep.subr.mxu0 0.0
  %1069 = vmatpush1.msra.mxu0 %v349
  %1070 = vmatprep.subr.mxu0 0.0
  %1071 = vmatpush1.msra.mxu0 %v350
  %1072 = vmatprep.subr.mxu0 0.0
  %1073 = vmatpush1.msra.mxu0 %v351
  %1074 = vmatprep.subr.mxu0 0.0
  %1075 = vmatpush1.msra.mxu0 %v352
  %1076 = vmatprep.subr.mxu0 0.0
  %1077 = vmatpush1.msra.mxu0 %v353
  %1078 = vmatprep.subr.mxu0 0.0
  %1079 = vmatpush1.msra.mxu0 %v354
  %1080 = vmatprep.subr.mxu0 0.0
  %1081 = vmatpush1.msra.mxu0 %v355
  %1082 = vmatprep.subr.mxu0 0.0
  %1083 = vmatpush1.msra.mxu0 %v356
  %1084 = vmatprep.subr.mxu0 0.0
  %1085 = vmatpush1.msra.mxu0 %v357
  %1086 = vmatprep.subr.mxu0 0.0
  %1087 = vmatpush1.msra.mxu0 %v358
  %1088 = vmatprep.subr.mxu0 0.0
  %1089 = vmatpush1.msra.mxu0 %v359
  %1090 = vmatprep.subr.mxu0 0.0
  %1091 = vmatpush1.msra.mxu0 %v360
  %1092 = vmatprep.subr.mxu0 0.0
  %1093 = vmatpush1.msra.mxu0 0.0
  %1094 = vmatprep.subr.mxu0 0.0
  %1095 = vmatpush1.msra.mxu0 0.0
  %1096 = vmatprep.subr.mxu0 0.0
  %1097 = vmatpush1.msra.mxu0 0.0
  %1098 = vmatprep.subr.mxu0 0.0
  %1099 = vmatpush1.msra.mxu0 0.0
  %1100 = vmatprep.subr.mxu0 0.0
  %1101 = vmatpush1.msra.mxu0 0.0
  %1102 = vmatprep.subr.mxu0 0.0
  %1103 = vmatpush1.msra.mxu0 0.0
  %1104 = vmatprep.subr.mxu0 0.0
  %1105 = vmatpush1.msra.mxu0 0.0
  %1106 = vmatprep.subr.mxu0 0.0
  %1107 = vmatpush1.msra.mxu0 0.0
  %1108 = vmatprep.subr.mxu0 0.0
  %1109 = vmatpush1.msra.mxu0 0.0
  %1110 = vmatprep.subr.mxu0 0.0
  %1111 = vmatpush1.msra.mxu0 0.0
  %1112 = vmatprep.subr.mxu0 0.0
  %1113 = vmatpush1.msra.mxu0 0.0
  %1114 = vmatprep.subr.mxu0 0.0
  %1115 = vmatpush1.msra.mxu0 0.0
  %1116 = vmatprep.subr.mxu0 0.0
  %1117 = vmatpush1.msra.mxu0 0.0
  %1118 = vmatprep.mubr.f32.mxu0 %v363
  %1119 = vmatmul.mubr.f32.gmra.mrb[0].mxu0 %v30
  %v1120 = vpop.f32.mrb[0].mxu0
  %v1121 = vadd.f32 %v1036, %v1120
  %v1122 = vpop.f32.mrb[0].mxu0
  %1123 = vmatprep.mubr.f32.mxu0 %v366
  %1124 = vmatmul.mubr.f32.gmra.mrb[0].mxu0 %v48
  %v1125 = vpop.f32.mrb[0].mxu0
  %v1126 = vadd.f32 %v1041, %v1125
  %v1127 = vpop.f32.mrb[0].mxu0
  %1128 = vmatprep.mubr.f32.mxu0 %v369
  %1129 = vmatmul.mubr.f32.gmra.mrb[0].mxu0 %v66
  %v1130 = vpop.f32.mrb[0].mxu0
  %v1131 = vadd.f32 %v1046, %v1130
  %v1132 = vpop.f32.mrb[0].mxu0
  %1133 = vmatprep.mubr.f32.mxu0 %v372
  %1134 = vmatmul.mubr.f32.gmra.mrb[0].mxu0 %v84
  %v1135 = vpop.f32.mrb[0].mxu0
  %v1136 = vadd.f32 %v1051, %v1135
  %v1137 = vpop.f32.mrb[0].mxu0
  %1138 = vdwg.mxu0
  %s1139 = scalar_lea.vmem %s0, 576
  %v1140 = vld [vmem:[%s1139] sm:$0xff]
  %v1141 = vld [vmem:[%s1139 + $0x8] sm:$0xff]
  %v1142 = vld [vmem:[%s1139 + $0x10] sm:$0xff]
  %v1143 = vld [vmem:[%s1139 + $0x18] sm:$0xff]
  %v1144 = vld [vmem:[%s1139 + $0x20] sm:$0xff]
  %v1145 = vld [vmem:[%s1139 + $0x28] sm:$0xff]
  %v1146 = vld [vmem:[%s1139 + $0x30] sm:$0xff]
  %v1147 = vld [vmem:[%s1139 + $0x38] sm:$0xff]
  %v1148 = vld [vmem:[%s1139 + $0x40] sm:$0xff]
  %v1149 = vld [vmem:[%s1139 + $0x48] sm:$0xff]
  %v1150 = vld [vmem:[%s1139 + $0x50] sm:$0xff]
  %v1151 = vld [vmem:[%s1139 + $0x58] sm:$0xff]
  %v1152 = vld [vmem:[%s1139 + $0x60] sm:$0xff]
  %v1153 = vld [vmem:[%s1139 + $0x68] sm:$0xff]
  %v1154 = vld [vmem:[%s1139 + $0x70] sm:$0xff]
  %v1155 = vld [vmem:[%s1139 + $0x78] sm:$0xff]
  %v1156 = vld [vmem:[%s1139 + $0x80] sm:$0xff]
  %v1157 = vld [vmem:[%s1139 + $0x88] sm:$0xff]
  %v1158 = vld [vmem:[%s1139 + $0x90] sm:$0xff]
  %v1159 = vld [vmem:[%s1139 + $0x98] sm:$0xff]
  %v1160 = vld [vmem:[%s1139 + $0xa0] sm:$0xff]
  %v1161 = vld [vmem:[%s1139 + $0xa8] sm:$0xff]
  %v1162 = vld [vmem:[%s1139 + $0xb0] sm:$0xff]
  %v1163 = vld [vmem:[%s1139 + $0xb8] sm:$0xff]
  %v1164 = vld [vmem:[%s1139 + $0xc0] sm:$0xff]
  %v1165 = vld [vmem:[%s1139 + $0xc8] sm:$0xff]
  %v1166 = vld [vmem:[%s1139 + $0xd0] sm:$0xff]
  %v1167 = vld [vmem:[%s1139 + $0xd8] sm:$0xff]
  %v1168 = vld [vmem:[%s1139 + $0xe0] sm:$0xff]
  %v1169 = vld [vmem:[%s1139 + $0xe8] sm:$0xff]
  %v1170 = vld [vmem:[%s1139 + $0xf0] sm:$0xff]
  %v1171 = vld [vmem:[%s1139 + $0xf8] sm:$0xff]
  %v1172 = vld [vmem:[%s1139 + $0x100] sm:$0xff]
  %v1173 = vld [vmem:[%s1139 + $0x108] sm:$0xff]
  %v1174 = vld [vmem:[%s1139 + $0x110] sm:$0xff]
  %v1175 = vld [vmem:[%s1139 + $0x118] sm:$0xff]
  %v1176 = vld [vmem:[%s1139 + $0x120] sm:$0xff]
  %v1177 = vld [vmem:[%s1139 + $0x128] sm:$0xff]
  %v1178 = vld [vmem:[%s1139 + $0x130] sm:$0xff]
  %v1179 = vld [vmem:[%s1139 + $0x138] sm:$0xff]
  %v1180 = vld [vmem:[%s1139 + $0x140] sm:$0xff]
  %v1181 = vld [vmem:[%s1139 + $0x148] sm:$0xff]
  %v1182 = vld [vmem:[%s1139 + $0x150] sm:$0xff]
  %v1183 = vld [vmem:[%s1139 + $0x158] sm:$0xff]
  %v1184 = vld [vmem:[%s1139 + $0x160] sm:$0xff]
  %v1185 = vld [vmem:[%s1139 + $0x168] sm:$0xff]
  %v1186 = vld [vmem:[%s1139 + $0x170] sm:$0xff]
  %v1187 = vld [vmem:[%s1139 + $0x178] sm:$0xff]
  %v1188 = vld [vmem:[%s1139 + $0x180] sm:$0xff]
  %v1189 = vld [vmem:[%s1139 + $0x188] sm:$0xff]
  %v1190 = vld [vmem:[%s1139 + $0x190] sm:$0xff]
  %v1191 = vld [vmem:[%s1139 + $0x198] sm:$0xff]
  %v1192 = vld [vmem:[%s1139 + $0x1a0] sm:$0xff]
  %v1193 = vld [vmem:[%s1139 + $0x1a8] sm:$0xff]
  %v1194 = vld [vmem:[%s1139 + $0x1b0] sm:$0xff]
  %v1195 = vld [vmem:[%s1139 + $0x1b8] sm:$0xff]
  %v1196 = vld [vmem:[%s1139 + $0x1c0] sm:$0xff]
  %v1197 = vld [vmem:[%s1139 + $0x1c8] sm:$0xff]
  %v1198 = vld [vmem:[%s1139 + $0x1d0] sm:$0xff]
  %v1199 = vld [vmem:[%s1139 + $0x1d8] sm:$0xff]
  %v1200 = vld [vmem:[%s1139 + $0x1e0] sm:$0xff]
  %v1201 = vld [vmem:[%s1139 + $0x1e8] sm:$0xff]
  %v1202 = vld [vmem:[%s1139 + $0x1f0] sm:$0xff]
  %v1203 = vld [vmem:[%s1139 + $0x1f8] sm:$0xff]
  %v1204 = vld [vmem:[%s1139 + $0x200] sm:$0xff]
  %v1205 = vld [vmem:[%s1139 + $0x208] sm:$0xff]
  %v1206 = vld [vmem:[%s1139 + $0x210] sm:$0xff]
  %v1207 = vld [vmem:[%s1139 + $0x218] sm:$0xff]
  %v1208 = vld [vmem:[%s1139 + $0x220] sm:$0xff]
  %v1209 = vld [vmem:[%s1139 + $0x228] sm:$0xff]
  %v1210 = vld [vmem:[%s1139 + $0x230] sm:$0xff]
  %v1211 = vld [vmem:[%s1139 + $0x238] sm:$0xff]
  %v1213 = vsel %vm361, %v1157, 0
  %v1216 = vsel %vm361, %v1175, 0
  %v1219 = vsel %vm361, %v1193, 0
  %v1222 = vsel %vm361, %v1211, 0
  %1224 = vmatprep.subr.mxu0 0.0
  %1225 = vmatpush1.msra.mxu0 %v86
  %1226 = vmatprep.subr.mxu0 0.0
  %1227 = vmatpush1.msra.mxu0 %v87
  %1228 = vmatprep.subr.mxu0 0.0
  %1229 = vmatpush1.msra.mxu0 %v88
  %1230 = vmatprep.subr.mxu0 0.0
  %1231 = vmatpush1.msra.mxu0 %v89
  %1232 = vmatprep.subr.mxu0 0.0
  %1233 = vmatpush1.msra.mxu0 %v90
  %1234 = vmatprep.subr.mxu0 0.0
  %1235 = vmatpush1.msra.mxu0 %v91
  %1236 = vmatprep.subr.mxu0 0.0
  %1237 = vmatpush1.msra.mxu0 %v92
  %1238 = vmatprep.subr.mxu0 0.0
  %1239 = vmatpush1.msra.mxu0 %v93
  %1240 = vmatprep.subr.mxu0 0.0
  %1241 = vmatpush1.msra.mxu0 %v94
  %1242 = vmatprep.subr.mxu0 0.0
  %1243 = vmatpush1.msra.mxu0 %v95
  %1244 = vmatprep.subr.mxu0 0.0
  %1245 = vmatpush1.msra.mxu0 %v96
  %1246 = vmatprep.subr.mxu0 0.0
  %1247 = vmatpush1.msra.mxu0 %v97
  %1248 = vmatprep.subr.mxu0 0.0
  %1249 = vmatpush1.msra.mxu0 %v98
  %1250 = vmatprep.subr.mxu0 0.0
  %1251 = vmatpush1.msra.mxu0 %v99
  %1252 = vmatprep.subr.mxu0 0.0
  %1253 = vmatpush1.msra.mxu0 %v100
  %1254 = vmatprep.subr.mxu0 0.0
  %1255 = vmatpush1.msra.mxu0 %v101
  %1256 = vmatprep.subr.mxu0 0.0
  %1257 = vmatpush1.msra.mxu0 %v102
  %1258 = vmatprep.subr.mxu0 0.0
  %1259 = vmatpush1.msra.mxu0 %v103
  %1260 = vmatprep.subr.mxu0 0.0
  %1261 = vmatpush1.msra.mxu0 %v104
  %1262 = vmatprep.subr.mxu0 0.0
  %1263 = vmatpush1.msra.mxu0 %v105
  %1264 = vmatprep.subr.mxu0 0.0
  %1265 = vmatpush1.msra.mxu0 %v106
  %1266 = vmatprep.subr.mxu0 0.0
  %1267 = vmatpush1.msra.mxu0 %v107
  %1268 = vmatprep.subr.mxu0 0.0
  %1269 = vmatpush1.msra.mxu0 %v108
  %1270 = vmatprep.subr.mxu0 0.0
  %1271 = vmatpush1.msra.mxu0 %v109
  %1272 = vmatprep.subr.mxu0 0.0
  %1273 = vmatpush1.msra.mxu0 %v110
  %1274 = vmatprep.subr.mxu0 0.0
  %1275 = vmatpush1.msra.mxu0 %v111
  %1276 = vmatprep.subr.mxu0 0.0
  %1277 = vmatpush1.msra.mxu0 %v112
  %1278 = vmatprep.subr.mxu0 0.0
  %1279 = vmatpush1.msra.mxu0 %v113
  %1280 = vmatprep.subr.mxu0 0.0
  %1281 = vmatpush1.msra.mxu0 %v114
  %1282 = vmatprep.subr.mxu0 0.0
  %1283 = vmatpush1.msra.mxu0 %v115
  %1284 = vmatprep.subr.mxu0 0.0
  %1285 = vmatpush1.msra.mxu0 %v116
  %1286 = vmatprep.subr.mxu0 0.0
  %1287 = vmatpush1.msra.mxu0 %v117
  %1288 = vmatprep.mubr.f32.mxu0 %v1141
  %1289 = vmatmul.mubr.f32.gmra.mrb[0].mxu0 %v1140
  %v1290 = vpop.f32.mrb[0].mxu0
  %v1291 = vadd.f32 0.0, %v1290
  %v1292 = vpop.f32.mrb[0].mxu0
  %1293 = vmatprep.mubr.f32.mxu0 %v1159
  %1294 = vmatmul.mubr.f32.gmra.mrb[0].mxu0 %v1158
  %v1295 = vpop.f32.mrb[0].mxu0
  %v1296 = vadd.f32 0.0, %v1295
  %v1297 = vpop.f32.mrb[0].mxu0
  %1298 = vmatprep.mubr.f32.mxu0 %v1177
  %1299 = vmatmul.mubr.f32.gmra.mrb[0].mxu0 %v1176
  %v1300 = vpop.f32.mrb[0].mxu0
  %v1301 = vadd.f32 0.0, %v1300
  %v1302 = vpop.f32.mrb[0].mxu0
  %1303 = vmatprep.mubr.f32.mxu0 %v1195
  %1304 = vmatmul.mubr.f32.gmra.mrb[0].mxu0 %v1194
  %v1305 = vpop.f32.mrb[0].mxu0
  %v1306 = vadd.f32 0.0, %v1305
  %v1307 = vpop.f32.mrb[0].mxu0
  %1308 = vdwg.mxu0
  %1309 = vmatprep.subr.mxu0 0.0
  %1310 = vmatpush1.msra.mxu0 %v118
  %1311 = vmatprep.subr.mxu0 0.0
  %1312 = vmatpush1.msra.mxu0 %v119
  %1313 = vmatprep.subr.mxu0 0.0
  %1314 = vmatpush1.msra.mxu0 %v120
  %1315 = vmatprep.subr.mxu0 0.0
  %1316 = vmatpush1.msra.mxu0 %v121
  %1317 = vmatprep.subr.mxu0 0.0
  %1318 = vmatpush1.msra.mxu0 %v122
  %1319 = vmatprep.subr.mxu0 0.0
  %1320 = vmatpush1.msra.mxu0 %v123
  %1321 = vmatprep.subr.mxu0 0.0
  %1322 = vmatpush1.msra.mxu0 %v124
  %1323 = vmatprep.subr.mxu0 0.0
  %1324 = vmatpush1.msra.mxu0 %v125
  %1325 = vmatprep.subr.mxu0 0.0
  %1326 = vmatpush1.msra.mxu0 %v126
  %1327 = vmatprep.subr.mxu0 0.0
  %1328 = vmatpush1.msra.mxu0 %v127
  %1329 = vmatprep.subr.mxu0 0.0
  %1330 = vmatpush1.msra.mxu0 %v128
  %1331 = vmatprep.subr.mxu0 0.0
  %1332 = vmatpush1.msra.mxu0 %v129
  %1333 = vmatprep.subr.mxu0 0.0
  %1334 = vmatpush1.msra.mxu0 %v130
  %1335 = vmatprep.subr.mxu0 0.0
  %1336 = vmatpush1.msra.mxu0 %v131
  %1337 = vmatprep.subr.mxu0 0.0
  %1338 = vmatpush1.msra.mxu0 %v132
  %1339 = vmatprep.subr.mxu0 0.0
  %1340 = vmatpush1.msra.mxu0 %v133
  %1341 = vmatprep.subr.mxu0 0.0
  %1342 = vmatpush1.msra.mxu0 %v134
  %1343 = vmatprep.subr.mxu0 0.0
  %1344 = vmatpush1.msra.mxu0 %v135
  %1345 = vmatprep.subr.mxu0 0.0
  %1346 = vmatpush1.msra.mxu0 %v136
  %1347 = vmatprep.subr.mxu0 0.0
  %1348 = vmatpush1.msra.mxu0 %v137
  %1349 = vmatprep.subr.mxu0 0.0
  %1350 = vmatpush1.msra.mxu0 %v138
  %1351 = vmatprep.subr.mxu0 0.0
  %1352 = vmatpush1.msra.mxu0 %v139
  %1353 = vmatprep.subr.mxu0 0.0
  %1354 = vmatpush1.msra.mxu0 %v140
  %1355 = vmatprep.subr.mxu0 0.0
  %1356 = vmatpush1.msra.mxu0 %v141
  %1357 = vmatprep.subr.mxu0 0.0
  %1358 = vmatpush1.msra.mxu0 %v142
  %1359 = vmatprep.subr.mxu0 0.0
  %1360 = vmatpush1.msra.mxu0 %v143
  %1361 = vmatprep.subr.mxu0 0.0
  %1362 = vmatpush1.msra.mxu0 %v144
  %1363 = vmatprep.subr.mxu0 0.0
  %1364 = vmatpush1.msra.mxu0 %v145
  %1365 = vmatprep.subr.mxu0 0.0
  %1366 = vmatpush1.msra.mxu0 %v146
  %1367 = vmatprep.subr.mxu0 0.0
  %1368 = vmatpush1.msra.mxu0 %v147
  %1369 = vmatprep.subr.mxu0 0.0
  %1370 = vmatpush1.msra.mxu0 %v148
  %1371 = vmatprep.subr.mxu0 0.0
  %1372 = vmatpush1.msra.mxu0 %v149
  %1373 = vmatprep.mubr.f32.mxu0 %v1143
  %1374 = vmatmul.mubr.f32.gmra.mrb[0].mxu0 %v1142
  %v1375 = vpop.f32.mrb[0].mxu0
  %v1376 = vadd.f32 %v1291, %v1375
  %v1377 = vpop.f32.mrb[0].mxu0
  %1378 = vmatprep.mubr.f32.mxu0 %v1161
  %1379 = vmatmul.mubr.f32.gmra.mrb[0].mxu0 %v1160
  %v1380 = vpop.f32.mrb[0].mxu0
  %v1381 = vadd.f32 %v1296, %v1380
  %v1382 = vpop.f32.mrb[0].mxu0
  %1383 = vmatprep.mubr.f32.mxu0 %v1179
  %1384 = vmatmul.mubr.f32.gmra.mrb[0].mxu0 %v1178
  %v1385 = vpop.f32.mrb[0].mxu0
  %v1386 = vadd.f32 %v1301, %v1385
  %v1387 = vpop.f32.mrb[0].mxu0
  %1388 = vmatprep.mubr.f32.mxu0 %v1197
  %1389 = vmatmul.mubr.f32.gmra.mrb[0].mxu0 %v1196
  %v1390 = vpop.f32.mrb[0].mxu0
  %v1391 = vadd.f32 %v1306, %v1390
  %v1392 = vpop.f32.mrb[0].mxu0
  %1393 = vdwg.mxu0
  %1394 = vmatprep.subr.mxu0 0.0
  %1395 = vmatpush1.msra.mxu0 %v150
  %1396 = vmatprep.subr.mxu0 0.0
  %1397 = vmatpush1.msra.mxu0 %v151
  %1398 = vmatprep.subr.mxu0 0.0
  %1399 = vmatpush1.msra.mxu0 %v152
  %1400 = vmatprep.subr.mxu0 0.0
  %1401 = vmatpush1.msra.mxu0 %v153
  %1402 = vmatprep.subr.mxu0 0.0
  %1403 = vmatpush1.msra.mxu0 %v154
  %1404 = vmatprep.subr.mxu0 0.0
  %1405 = vmatpush1.msra.mxu0 %v155
  %1406 = vmatprep.subr.mxu0 0.0
  %1407 = vmatpush1.msra.mxu0 %v156
  %1408 = vmatprep.subr.mxu0 0.0
  %1409 = vmatpush1.msra.mxu0 %v157
  %1410 = vmatprep.subr.mxu0 0.0
  %1411 = vmatpush1.msra.mxu0 %v158
  %1412 = vmatprep.subr.mxu0 0.0
  %1413 = vmatpush1.msra.mxu0 %v159
  %1414 = vmatprep.subr.mxu0 0.0
  %1415 = vmatpush1.msra.mxu0 %v160
  %1416 = vmatprep.subr.mxu0 0.0
  %1417 = vmatpush1.msra.mxu0 %v161
  %1418 = vmatprep.subr.mxu0 0.0
  %1419 = vmatpush1.msra.mxu0 %v162
  %1420 = vmatprep.subr.mxu0 0.0
  %1421 = vmatpush1.msra.mxu0 %v163
  %1422 = vmatprep.subr.mxu0 0.0
  %1423 = vmatpush1.msra.mxu0 %v164
  %1424 = vmatprep.subr.mxu0 0.0
  %1425 = vmatpush1.msra.mxu0 %v165
  %1426 = vmatprep.subr.mxu0 0.0
  %1427 = vmatpush1.msra.mxu0 %v166
  %1428 = vmatprep.subr.mxu0 0.0
  %1429 = vmatpush1.msra.mxu0 %v167
  %1430 = vmatprep.subr.mxu0 0.0
  %1431 = vmatpush1.msra.mxu0 %v168
  %1432 = vmatprep.subr.mxu0 0.0
  %1433 = vmatpush1.msra.mxu0 %v169
  %1434 = vmatprep.subr.mxu0 0.0
  %1435 = vmatpush1.msra.mxu0 %v170
  %1436 = vmatprep.subr.mxu0 0.0
  %1437 = vmatpush1.msra.mxu0 %v171
  %1438 = vmatprep.subr.mxu0 0.0
  %1439 = vmatpush1.msra.mxu0 %v172
  %1440 = vmatprep.subr.mxu0 0.0
  %1441 = vmatpush1.msra.mxu0 %v173
  %1442 = vmatprep.subr.mxu0 0.0
  %1443 = vmatpush1.msra.mxu0 %v174
  %1444 = vmatprep.subr.mxu0 0.0
  %1445 = vmatpush1.msra.mxu0 %v175
  %1446 = vmatprep.subr.mxu0 0.0
  %1447 = vmatpush1.msra.mxu0 %v176
  %1448 = vmatprep.subr.mxu0 0.0
  %1449 = vmatpush1.msra.mxu0 %v177
  %1450 = vmatprep.subr.mxu0 0.0
  %1451 = vmatpush1.msra.mxu0 %v178
  %1452 = vmatprep.subr.mxu0 0.0
  %1453 = vmatpush1.msra.mxu0 %v179
  %1454 = vmatprep.subr.mxu0 0.0
  %1455 = vmatpush1.msra.mxu0 %v180
  %1456 = vmatprep.subr.mxu0 0.0
  %1457 = vmatpush1.msra.mxu0 %v181
  %1458 = vmatprep.mubr.f32.mxu0 %v1145
  %1459 = vmatmul.mubr.f32.gmra.mrb[0].mxu0 %v1144
  %v1460 = vpop.f32.mrb[0].mxu0
  %v1461 = vadd.f32 %v1376, %v1460
  %v1462 = vpop.f32.mrb[0].mxu0
  %1463 = vmatprep.mubr.f32.mxu0 %v1163
  %1464 = vmatmul.mubr.f32.gmra.mrb[0].mxu0 %v1162
  %v1465 = vpop.f32.mrb[0].mxu0
  %v1466 = vadd.f32 %v1381, %v1465
  %v1467 = vpop.f32.mrb[0].mxu0
  %1468 = vmatprep.mubr.f32.mxu0 %v1181
  %1469 = vmatmul.mubr.f32.gmra.mrb[0].mxu0 %v1180
  %v1470 = vpop.f32.mrb[0].mxu0
  %v1471 = vadd.f32 %v1386, %v1470
  %v1472 = vpop.f32.mrb[0].mxu0
  %1473 = vmatprep.mubr.f32.mxu0 %v1199
  %1474 = vmatmul.mubr.f32.gmra.mrb[0].mxu0 %v1198
  %v1475 = vpop.f32.mrb[0].mxu0
  %v1476 = vadd.f32 %v1391, %v1475
  %v1477 = vpop.f32.mrb[0].mxu0
  %1478 = vdwg.mxu0
  %1479 = vmatprep.subr.mxu0 0.0
  %1480 = vmatpush1.msra.mxu0 %v182
  %1481 = vmatprep.subr.mxu0 0.0
  %1482 = vmatpush1.msra.mxu0 %v183
  %1483 = vmatprep.subr.mxu0 0.0
  %1484 = vmatpush1.msra.mxu0 %v184
  %1485 = vmatprep.subr.mxu0 0.0
  %1486 = vmatpush1.msra.mxu0 %v185
  %1487 = vmatprep.subr.mxu0 0.0
  %1488 = vmatpush1.msra.mxu0 %v186
  %1489 = vmatprep.subr.mxu0 0.0
  %1490 = vmatpush1.msra.mxu0 %v187
  %1491 = vmatprep.subr.mxu0 0.0
  %1492 = vmatpush1.msra.mxu0 %v188
  %1493 = vmatprep.subr.mxu0 0.0
  %1494 = vmatpush1.msra.mxu0 %v189
  %1495 = vmatprep.subr.mxu0 0.0
  %1496 = vmatpush1.msra.mxu0 %v190
  %1497 = vmatprep.subr.mxu0 0.0
  %1498 = vmatpush1.msra.mxu0 %v191
  %1499 = vmatprep.subr.mxu0 0.0
  %1500 = vmatpush1.msra.mxu0 %v192
  %1501 = vmatprep.subr.mxu0 0.0
  %1502 = vmatpush1.msra.mxu0 %v193
  %1503 = vmatprep.subr.mxu0 0.0
  %1504 = vmatpush1.msra.mxu0 %v194
  %1505 = vmatprep.subr.mxu0 0.0
  %1506 = vmatpush1.msra.mxu0 %v195
  %1507 = vmatprep.subr.mxu0 0.0
  %1508 = vmatpush1.msra.mxu0 %v196
  %1509 = vmatprep.subr.mxu0 0.0
  %1510 = vmatpush1.msra.mxu0 %v197
  %1511 = vmatprep.subr.mxu0 0.0
  %1512 = vmatpush1.msra.mxu0 %v198
  %1513 = vmatprep.subr.mxu0 0.0
  %1514 = vmatpush1.msra.mxu0 %v199
  %1515 = vmatprep.subr.mxu0 0.0
  %1516 = vmatpush1.msra.mxu0 %v200
  %1517 = vmatprep.subr.mxu0 0.0
  %1518 = vmatpush1.msra.mxu0 %v201
  %1519 = vmatprep.subr.mxu0 0.0
  %1520 = vmatpush1.msra.mxu0 %v202
  %1521 = vmatprep.subr.mxu0 0.0
  %1522 = vmatpush1.msra.mxu0 %v203
  %1523 = vmatprep.subr.mxu0 0.0
  %1524 = vmatpush1.msra.mxu0 %v204
  %1525 = vmatprep.subr.mxu0 0.0
  %1526 = vmatpush1.msra.mxu0 %v205
  %1527 = vmatprep.subr.mxu0 0.0
  %1528 = vmatpush1.msra.mxu0 %v206
  %1529 = vmatprep.subr.mxu0 0.0
  %1530 = vmatpush1.msra.mxu0 %v207
  %1531 = vmatprep.subr.mxu0 0.0
  %1532 = vmatpush1.msra.mxu0 %v208
  %1533 = vmatprep.subr.mxu0 0.0
  %1534 = vmatpush1.msra.mxu0 %v209
  %1535 = vmatprep.subr.mxu0 0.0
  %1536 = vmatpush1.msra.mxu0 %v210
  %1537 = vmatprep.subr.mxu0 0.0
  %1538 = vmatpush1.msra.mxu0 %v211
  %1539 = vmatprep.subr.mxu0 0.0
  %1540 = vmatpush1.msra.mxu0 %v212
  %1541 = vmatprep.subr.mxu0 0.0
  %1542 = vmatpush1.msra.mxu0 %v213
  %1543 = vmatprep.mubr.f32.mxu0 %v1147
  %1544 = vmatmul.mubr.f32.gmra.mrb[0].mxu0 %v1146
  %v1545 = vpop.f32.mrb[0].mxu0
  %v1546 = vadd.f32 %v1461, %v1545
  %v1547 = vpop.f32.mrb[0].mxu0
  %1548 = vmatprep.mubr.f32.mxu0 %v1165
  %1549 = vmatmul.mubr.f32.gmra.mrb[0].mxu0 %v1164
  %v1550 = vpop.f32.mrb[0].mxu0
  %v1551 = vadd.f32 %v1466, %v1550
  %v1552 = vpop.f32.mrb[0].mxu0
  %1553 = vmatprep.mubr.f32.mxu0 %v1183
  %1554 = vmatmul.mubr.f32.gmra.mrb[0].mxu0 %v1182
  %v1555 = vpop.f32.mrb[0].mxu0
  %v1556 = vadd.f32 %v1471, %v1555
  %v1557 = vpop.f32.mrb[0].mxu0
  %1558 = vmatprep.mubr.f32.mxu0 %v1201
  %1559 = vmatmul.mubr.f32.gmra.mrb[0].mxu0 %v1200
  %v1560 = vpop.f32.mrb[0].mxu0
  %v1561 = vadd.f32 %v1476, %v1560
  %v1562 = vpop.f32.mrb[0].mxu0
  %1563 = vdwg.mxu0
  %1564 = vmatprep.subr.mxu0 0.0
  %1565 = vmatpush1.msra.mxu0 %v214
  %1566 = vmatprep.subr.mxu0 0.0
  %1567 = vmatpush1.msra.mxu0 %v215
  %1568 = vmatprep.subr.mxu0 0.0
  %1569 = vmatpush1.msra.mxu0 %v216
  %1570 = vmatprep.subr.mxu0 0.0
  %1571 = vmatpush1.msra.mxu0 %v217
  %1572 = vmatprep.subr.mxu0 0.0
  %1573 = vmatpush1.msra.mxu0 %v218
  %1574 = vmatprep.subr.mxu0 0.0
  %1575 = vmatpush1.msra.mxu0 %v219
  %1576 = vmatprep.subr.mxu0 0.0
  %1577 = vmatpush1.msra.mxu0 %v220
  %1578 = vmatprep.subr.mxu0 0.0
  %1579 = vmatpush1.msra.mxu0 %v221
  %1580 = vmatprep.subr.mxu0 0.0
  %1581 = vmatpush1.msra.mxu0 %v222
  %1582 = vmatprep.subr.mxu0 0.0
  %1583 = vmatpush1.msra.mxu0 %v223
  %1584 = vmatprep.subr.mxu0 0.0
  %1585 = vmatpush1.msra.mxu0 %v224
  %1586 = vmatprep.subr.mxu0 0.0
  %1587 = vmatpush1.msra.mxu0 %v225
  %1588 = vmatprep.subr.mxu0 0.0
  %1589 = vmatpush1.msra.mxu0 %v226
  %1590 = vmatprep.subr.mxu0 0.0
  %1591 = vmatpush1.msra.mxu0 %v227
  %1592 = vmatprep.subr.mxu0 0.0
  %1593 = vmatpush1.msra.mxu0 %v228
  %1594 = vmatprep.subr.mxu0 0.0
  %1595 = vmatpush1.msra.mxu0 %v229
  %1596 = vmatprep.subr.mxu0 0.0
  %1597 = vmatpush1.msra.mxu0 %v230
  %1598 = vmatprep.subr.mxu0 0.0
  %1599 = vmatpush1.msra.mxu0 %v231
  %1600 = vmatprep.subr.mxu0 0.0
  %1601 = vmatpush1.msra.mxu0 %v232
  %1602 = vmatprep.subr.mxu0 0.0
  %1603 = vmatpush1.msra.mxu0 %v233
  %1604 = vmatprep.subr.mxu0 0.0
  %1605 = vmatpush1.msra.mxu0 %v234
  %1606 = vmatprep.subr.mxu0 0.0
  %1607 = vmatpush1.msra.mxu0 %v235
  %1608 = vmatprep.subr.mxu0 0.0
  %1609 = vmatpush1.msra.mxu0 %v236
  %1610 = vmatprep.subr.mxu0 0.0
  %1611 = vmatpush1.msra.mxu0 %v237
  %1612 = vmatprep.subr.mxu0 0.0
  %1613 = vmatpush1.msra.mxu0 %v238
  %1614 = vmatprep.subr.mxu0 0.0
  %1615 = vmatpush1.msra.mxu0 %v239
  %1616 = vmatprep.subr.mxu0 0.0
  %1617 = vmatpush1.msra.mxu0 %v240
  %1618 = vmatprep.subr.mxu0 0.0
  %1619 = vmatpush1.msra.mxu0 %v241
  %1620 = vmatprep.subr.mxu0 0.0
  %1621 = vmatpush1.msra.mxu0 %v242
  %1622 = vmatprep.subr.mxu0 0.0
  %1623 = vmatpush1.msra.mxu0 %v243
  %1624 = vmatprep.subr.mxu0 0.0
  %1625 = vmatpush1.msra.mxu0 %v244
  %1626 = vmatprep.subr.mxu0 0.0
  %1627 = vmatpush1.msra.mxu0 %v245
  %1628 = vmatprep.mubr.f32.mxu0 %v1149
  %1629 = vmatmul.mubr.f32.gmra.mrb[0].mxu0 %v1148
  %v1630 = vpop.f32.mrb[0].mxu0
  %v1631 = vadd.f32 %v1546, %v1630
  %v1632 = vpop.f32.mrb[0].mxu0
  %1633 = vmatprep.mubr.f32.mxu0 %v1167
  %1634 = vmatmul.mubr.f32.gmra.mrb[0].mxu0 %v1166
  %v1635 = vpop.f32.mrb[0].mxu0
  %v1636 = vadd.f32 %v1551, %v1635
  %v1637 = vpop.f32.mrb[0].mxu0
  %1638 = vmatprep.mubr.f32.mxu0 %v1185
  %1639 = vmatmul.mubr.f32.gmra.mrb[0].mxu0 %v1184
  %v1640 = vpop.f32.mrb[0].mxu0
  %v1641 = vadd.f32 %v1556, %v1640
  %v1642 = vpop.f32.mrb[0].mxu0
  %1643 = vmatprep.mubr.f32.mxu0 %v1203
  %1644 = vmatmul.mubr.f32.gmra.mrb[0].mxu0 %v1202
  %v1645 = vpop.f32.mrb[0].mxu0
  %v1646 = vadd.f32 %v1561, %v1645
  %v1647 = vpop.f32.mrb[0].mxu0
  %1648 = vdwg.mxu0
  %1649 = vmatprep.subr.mxu0 0.0
  %1650 = vmatpush1.msra.mxu0 %v246
  %1651 = vmatprep.subr.mxu0 0.0
  %1652 = vmatpush1.msra.mxu0 %v247
  %1653 = vmatprep.subr.mxu0 0.0
  %1654 = vmatpush1.msra.mxu0 %v248
  %1655 = vmatprep.subr.mxu0 0.0
  %1656 = vmatpush1.msra.mxu0 %v249
  %1657 = vmatprep.subr.mxu0 0.0
  %1658 = vmatpush1.msra.mxu0 %v250
  %1659 = vmatprep.subr.mxu0 0.0
  %1660 = vmatpush1.msra.mxu0 %v251
  %1661 = vmatprep.subr.mxu0 0.0
  %1662 = vmatpush1.msra.mxu0 %v252
  %1663 = vmatprep.subr.mxu0 0.0
  %1664 = vmatpush1.msra.mxu0 %v253
  %1665 = vmatprep.subr.mxu0 0.0
  %1666 = vmatpush1.msra.mxu0 %v254
  %1667 = vmatprep.subr.mxu0 0.0
  %1668 = vmatpush1.msra.mxu0 %v255
  %1669 = vmatprep.subr.mxu0 0.0
  %1670 = vmatpush1.msra.mxu0 %v256
  %1671 = vmatprep.subr.mxu0 0.0
  %1672 = vmatpush1.msra.mxu0 %v257
  %1673 = vmatprep.subr.mxu0 0.0
  %1674 = vmatpush1.msra.mxu0 %v258
  %1675 = vmatprep.subr.mxu0 0.0
  %1676 = vmatpush1.msra.mxu0 %v259
  %1677 = vmatprep.subr.mxu0 0.0
  %1678 = vmatpush1.msra.mxu0 %v260
  %1679 = vmatprep.subr.mxu0 0.0
  %1680 = vmatpush1.msra.mxu0 %v261
  %1681 = vmatprep.subr.mxu0 0.0
  %1682 = vmatpush1.msra.mxu0 %v262
  %1683 = vmatprep.subr.mxu0 0.0
  %1684 = vmatpush1.msra.mxu0 %v263
  %1685 = vmatprep.subr.mxu0 0.0
  %1686 = vmatpush1.msra.mxu0 %v264
  %1687 = vmatprep.subr.mxu0 0.0
  %1688 = vmatpush1.msra.mxu0 %v265
  %1689 = vmatprep.subr.mxu0 0.0
  %1690 = vmatpush1.msra.mxu0 %v266
  %1691 = vmatprep.subr.mxu0 0.0
  %1692 = vmatpush1.msra.mxu0 %v267
  %1693 = vmatprep.subr.mxu0 0.0
  %1694 = vmatpush1.msra.mxu0 %v268
  %1695 = vmatprep.subr.mxu0 0.0
  %1696 = vmatpush1.msra.mxu0 %v269
  %1697 = vmatprep.subr.mxu0 0.0
  %1698 = vmatpush1.msra.mxu0 %v270
  %1699 = vmatprep.subr.mxu0 0.0
  %1700 = vmatpush1.msra.mxu0 %v271
  %1701 = vmatprep.subr.mxu0 0.0
  %1702 = vmatpush1.msra.mxu0 %v272
  %1703 = vmatprep.subr.mxu0 0.0
  %1704 = vmatpush1.msra.mxu0 %v273
  %1705 = vmatprep.subr.mxu0 0.0
  %1706 = vmatpush1.msra.mxu0 %v274
  %1707 = vmatprep.subr.mxu0 0.0
  %1708 = vmatpush1.msra.mxu0 %v275
  %1709 = vmatprep.subr.mxu0 0.0
  %1710 = vmatpush1.msra.mxu0 %v276
  %1711 = vmatprep.subr.mxu0 0.0
  %1712 = vmatpush1.msra.mxu0 %v277
  %1713 = vmatprep.mubr.f32.mxu0 %v1151
  %1714 = vmatmul.mubr.f32.gmra.mrb[0].mxu0 %v1150
  %v1715 = vpop.f32.mrb[0].mxu0
  %v1716 = vadd.f32 %v1631, %v1715
  %v1717 = vpop.f32.mrb[0].mxu0
  %1718 = vmatprep.mubr.f32.mxu0 %v1169
  %1719 = vmatmul.mubr.f32.gmra.mrb[0].mxu0 %v1168
  %v1720 = vpop.f32.mrb[0].mxu0
  %v1721 = vadd.f32 %v1636, %v1720
  %v1722 = vpop.f32.mrb[0].mxu0
  %1723 = vmatprep.mubr.f32.mxu0 %v1187
  %1724 = vmatmul.mubr.f32.gmra.mrb[0].mxu0 %v1186
  %v1725 = vpop.f32.mrb[0].mxu0
  %v1726 = vadd.f32 %v1641, %v1725
  %v1727 = vpop.f32.mrb[0].mxu0
  %1728 = vmatprep.mubr.f32.mxu0 %v1205
  %1729 = vmatmul.mubr.f32.gmra.mrb[0].mxu0 %v1204
  %v1730 = vpop.f32.mrb[0].mxu0
  %v1731 = vadd.f32 %v1646, %v1730
  %v1732 = vpop.f32.mrb[0].mxu0
  %1733 = vdwg.mxu0
  %1734 = vmatprep.subr.mxu0 0.0
  %1735 = vmatpush1.msra.mxu0 %v278
  %1736 = vmatprep.subr.mxu0 0.0
  %1737 = vmatpush1.msra.mxu0 %v279
  %1738 = vmatprep.subr.mxu0 0.0
  %1739 = vmatpush1.msra.mxu0 %v280
  %1740 = vmatprep.subr.mxu0 0.0
  %1741 = vmatpush1.msra.mxu0 %v281
  %1742 = vmatprep.subr.mxu0 0.0
  %1743 = vmatpush1.msra.mxu0 %v282
  %1744 = vmatprep.subr.mxu0 0.0
  %1745 = vmatpush1.msra.mxu0 %v283
  %1746 = vmatprep.subr.mxu0 0.0
  %1747 = vmatpush1.msra.mxu0 %v284
  %1748 = vmatprep.subr.mxu0 0.0
  %1749 = vmatpush1.msra.mxu0 %v285
  %1750 = vmatprep.subr.mxu0 0.0
  %1751 = vmatpush1.msra.mxu0 %v286
  %1752 = vmatprep.subr.mxu0 0.0
  %1753 = vmatpush1.msra.mxu0 %v287
  %1754 = vmatprep.subr.mxu0 0.0
  %1755 = vmatpush1.msra.mxu0 %v288
  %1756 = vmatprep.subr.mxu0 0.0
  %1757 = vmatpush1.msra.mxu0 %v289
  %1758 = vmatprep.subr.mxu0 0.0
  %1759 = vmatpush1.msra.mxu0 %v290
  %1760 = vmatprep.subr.mxu0 0.0
  %1761 = vmatpush1.msra.mxu0 %v291
  %1762 = vmatprep.subr.mxu0 0.0
  %1763 = vmatpush1.msra.mxu0 %v292
  %1764 = vmatprep.subr.mxu0 0.0
  %1765 = vmatpush1.msra.mxu0 %v293
  %1766 = vmatprep.subr.mxu0 0.0
  %1767 = vmatpush1.msra.mxu0 %v294
  %1768 = vmatprep.subr.mxu0 0.0
  %1769 = vmatpush1.msra.mxu0 %v295
  %1770 = vmatprep.subr.mxu0 0.0
  %1771 = vmatpush1.msra.mxu0 %v296
  %1772 = vmatprep.subr.mxu0 0.0
  %1773 = vmatpush1.msra.mxu0 %v297
  %1774 = vmatprep.subr.mxu0 0.0
  %1775 = vmatpush1.msra.mxu0 %v298
  %1776 = vmatprep.subr.mxu0 0.0
  %1777 = vmatpush1.msra.mxu0 %v299
  %1778 = vmatprep.subr.mxu0 0.0
  %1779 = vmatpush1.msra.mxu0 %v300
  %1780 = vmatprep.subr.mxu0 0.0
  %1781 = vmatpush1.msra.mxu0 %v301
  %1782 = vmatprep.subr.mxu0 0.0
  %1783 = vmatpush1.msra.mxu0 %v302
  %1784 = vmatprep.subr.mxu0 0.0
  %1785 = vmatpush1.msra.mxu0 %v303
  %1786 = vmatprep.subr.mxu0 0.0
  %1787 = vmatpush1.msra.mxu0 %v304
  %1788 = vmatprep.subr.mxu0 0.0
  %1789 = vmatpush1.msra.mxu0 %v305
  %1790 = vmatprep.subr.mxu0 0.0
  %1791 = vmatpush1.msra.mxu0 %v306
  %1792 = vmatprep.subr.mxu0 0.0
  %1793 = vmatpush1.msra.mxu0 %v307
  %1794 = vmatprep.subr.mxu0 0.0
  %1795 = vmatpush1.msra.mxu0 %v308
  %1796 = vmatprep.subr.mxu0 0.0
  %1797 = vmatpush1.msra.mxu0 %v309
  %1798 = vmatprep.mubr.f32.mxu0 %v1153
  %1799 = vmatmul.mubr.f32.gmra.mrb[0].mxu0 %v1152
  %v1800 = vpop.f32.mrb[0].mxu0
  %v1801 = vadd.f32 %v1716, %v1800
  %v1802 = vpop.f32.mrb[0].mxu0
  %1803 = vmatprep.mubr.f32.mxu0 %v1171
  %1804 = vmatmul.mubr.f32.gmra.mrb[0].mxu0 %v1170
  %v1805 = vpop.f32.mrb[0].mxu0
  %v1806 = vadd.f32 %v1721, %v1805
  %v1807 = vpop.f32.mrb[0].mxu0
  %1808 = vmatprep.mubr.f32.mxu0 %v1189
  %1809 = vmatmul.mubr.f32.gmra.mrb[0].mxu0 %v1188
  %v1810 = vpop.f32.mrb[0].mxu0
  %v1811 = vadd.f32 %v1726, %v1810
  %v1812 = vpop.f32.mrb[0].mxu0
  %1813 = vmatprep.mubr.f32.mxu0 %v1207
  %1814 = vmatmul.mubr.f32.gmra.mrb[0].mxu0 %v1206
  %v1815 = vpop.f32.mrb[0].mxu0
  %v1816 = vadd.f32 %v1731, %v1815
  %v1817 = vpop.f32.mrb[0].mxu0
  %1818 = vdwg.mxu0
  %1819 = vmatprep.subr.mxu0 0.0
  %1820 = vmatpush1.msra.mxu0 %v310
  %1821 = vmatprep.subr.mxu0 0.0
  %1822 = vmatpush1.msra.mxu0 %v311
  %1823 = vmatprep.subr.mxu0 0.0
  %1824 = vmatpush1.msra.mxu0 %v312
  %1825 = vmatprep.subr.mxu0 0.0
  %1826 = vmatpush1.msra.mxu0 %v313
  %1827 = vmatprep.subr.mxu0 0.0
  %1828 = vmatpush1.msra.mxu0 %v314
  %1829 = vmatprep.subr.mxu0 0.0
  %1830 = vmatpush1.msra.mxu0 %v315
  %1831 = vmatprep.subr.mxu0 0.0
  %1832 = vmatpush1.msra.mxu0 %v316
  %1833 = vmatprep.subr.mxu0 0.0
  %1834 = vmatpush1.msra.mxu0 %v317
  %1835 = vmatprep.subr.mxu0 0.0
  %1836 = vmatpush1.msra.mxu0 %v318
  %1837 = vmatprep.subr.mxu0 0.0
  %1838 = vmatpush1.msra.mxu0 %v319
  %1839 = vmatprep.subr.mxu0 0.0
  %1840 = vmatpush1.msra.mxu0 %v320
  %1841 = vmatprep.subr.mxu0 0.0
  %1842 = vmatpush1.msra.mxu0 %v321
  %1843 = vmatprep.subr.mxu0 0.0
  %1844 = vmatpush1.msra.mxu0 %v322
  %1845 = vmatprep.subr.mxu0 0.0
  %1846 = vmatpush1.msra.mxu0 %v323
  %1847 = vmatprep.subr.mxu0 0.0
  %1848 = vmatpush1.msra.mxu0 %v324
  %1849 = vmatprep.subr.mxu0 0.0
  %1850 = vmatpush1.msra.mxu0 %v325
  %1851 = vmatprep.subr.mxu0 0.0
  %1852 = vmatpush1.msra.mxu0 %v326
  %1853 = vmatprep.subr.mxu0 0.0
  %1854 = vmatpush1.msra.mxu0 %v327
  %1855 = vmatprep.subr.mxu0 0.0
  %1856 = vmatpush1.msra.mxu0 %v328
  %1857 = vmatprep.subr.mxu0 0.0
  %1858 = vmatpush1.msra.mxu0 %v329
  %1859 = vmatprep.subr.mxu0 0.0
  %1860 = vmatpush1.msra.mxu0 %v330
  %1861 = vmatprep.subr.mxu0 0.0
  %1862 = vmatpush1.msra.mxu0 %v331
  %1863 = vmatprep.subr.mxu0 0.0
  %1864 = vmatpush1.msra.mxu0 %v332
  %1865 = vmatprep.subr.mxu0 0.0
  %1866 = vmatpush1.msra.mxu0 %v333
  %1867 = vmatprep.subr.mxu0 0.0
  %1868 = vmatpush1.msra.mxu0 %v334
  %1869 = vmatprep.subr.mxu0 0.0
  %1870 = vmatpush1.msra.mxu0 %v335
  %1871 = vmatprep.subr.mxu0 0.0
  %1872 = vmatpush1.msra.mxu0 %v336
  %1873 = vmatprep.subr.mxu0 0.0
  %1874 = vmatpush1.msra.mxu0 %v337
  %1875 = vmatprep.subr.mxu0 0.0
  %1876 = vmatpush1.msra.mxu0 %v338
  %1877 = vmatprep.subr.mxu0 0.0
  %1878 = vmatpush1.msra.mxu0 %v339
  %1879 = vmatprep.subr.mxu0 0.0
  %1880 = vmatpush1.msra.mxu0 %v340
  %1881 = vmatprep.subr.mxu0 0.0
  %1882 = vmatpush1.msra.mxu0 %v341
  %1883 = vmatprep.mubr.f32.mxu0 %v1155
  %1884 = vmatmul.mubr.f32.gmra.mrb[0].mxu0 %v1154
  %v1885 = vpop.f32.mrb[0].mxu0
  %v1886 = vadd.f32 %v1801, %v1885
  %v1887 = vpop.f32.mrb[0].mxu0
  %1888 = vmatprep.mubr.f32.mxu0 %v1173
  %1889 = vmatmul.mubr.f32.gmra.mrb[0].mxu0 %v1172
  %v1890 = vpop.f32.mrb[0].mxu0
  %v1891 = vadd.f32 %v1806, %v1890
  %v1892 = vpop.f32.mrb[0].mxu0
  %1893 = vmatprep.mubr.f32.mxu0 %v1191
  %1894 = vmatmul.mubr.f32.gmra.mrb[0].mxu0 %v1190
  %v1895 = vpop.f32.mrb[0].mxu0
  %v1896 = vadd.f32 %v1811, %v1895
  %v1897 = vpop.f32.mrb[0].mxu0
  %1898 = vmatprep.mubr.f32.mxu0 %v1209
  %1899 = vmatmul.mubr.f32.gmra.mrb[0].mxu0 %v1208
  %v1900 = vpop.f32.mrb[0].mxu0
  %v1901 = vadd.f32 %v1816, %v1900
  %v1902 = vpop.f32.mrb[0].mxu0
  %1903 = vdwg.mxu0
  %1904 = vmatprep.subr.mxu0 0.0
  %1905 = vmatpush1.msra.mxu0 %v342
  %1906 = vmatprep.subr.mxu0 0.0
  %1907 = vmatpush1.msra.mxu0 %v343
  %1908 = vmatprep.subr.mxu0 0.0
  %1909 = vmatpush1.msra.mxu0 %v344
  %1910 = vmatprep.subr.mxu0 0.0
  %1911 = vmatpush1.msra.mxu0 %v345
  %1912 = vmatprep.subr.mxu0 0.0
  %1913 = vmatpush1.msra.mxu0 %v346
  %1914 = vmatprep.subr.mxu0 0.0
  %1915 = vmatpush1.msra.mxu0 %v347
  %1916 = vmatprep.subr.mxu0 0.0
  %1917 = vmatpush1.msra.mxu0 %v348
  %1918 = vmatprep.subr.mxu0 0.0
  %1919 = vmatpush1.msra.mxu0 %v349
  %1920 = vmatprep.subr.mxu0 0.0
  %1921 = vmatpush1.msra.mxu0 %v350
  %1922 = vmatprep.subr.mxu0 0.0
  %1923 = vmatpush1.msra.mxu0 %v351
  %1924 = vmatprep.subr.mxu0 0.0
  %1925 = vmatpush1.msra.mxu0 %v352
  %1926 = vmatprep.subr.mxu0 0.0
  %1927 = vmatpush1.msra.mxu0 %v353
  %1928 = vmatprep.subr.mxu0 0.0
  %1929 = vmatpush1.msra.mxu0 %v354
  %1930 = vmatprep.subr.mxu0 0.0
  %1931 = vmatpush1.msra.mxu0 %v355
  %1932 = vmatprep.subr.mxu0 0.0
  %1933 = vmatpush1.msra.mxu0 %v356
  %1934 = vmatprep.subr.mxu0 0.0
  %1935 = vmatpush1.msra.mxu0 %v357
  %1936 = vmatprep.subr.mxu0 0.0
  %1937 = vmatpush1.msra.mxu0 %v358
  %1938 = vmatprep.subr.mxu0 0.0
  %1939 = vmatpush1.msra.mxu0 %v359
  %1940 = vmatprep.subr.mxu0 0.0
  %1941 = vmatpush1.msra.mxu0 %v360
  %1942 = vmatprep.subr.mxu0 0.0
  %1943 = vmatpush1.msra.mxu0 0.0
  %1944 = vmatprep.subr.mxu0 0.0
  %1945 = vmatpush1.msra.mxu0 0.0
  %1946 = vmatprep.subr.mxu0 0.0
  %1947 = vmatpush1.msra.mxu0 0.0
  %1948 = vmatprep.subr.mxu0 0.0
  %1949 = vmatpush1.msra.mxu0 0.0
  %1950 = vmatprep.subr.mxu0 0.0
  %1951 = vmatpush1.msra.mxu0 0.0
  %1952 = vmatprep.subr.mxu0 0.0
  %1953 = vmatpush1.msra.mxu0 0.0
  %1954 = vmatprep.subr.mxu0 0.0
  %1955 = vmatpush1.msra.mxu0 0.0
  %1956 = vmatprep.subr.mxu0 0.0
  %1957 = vmatpush1.msra.mxu0 0.0
  %1958 = vmatprep.subr.mxu0 0.0
  %1959 = vmatpush1.msra.mxu0 0.0
  %1960 = vmatprep.subr.mxu0 0.0
  %1961 = vmatpush1.msra.mxu0 0.0
  %1962 = vmatprep.subr.mxu0 0.0
  %1963 = vmatpush1.msra.mxu0 0.0
  %1964 = vmatprep.subr.mxu0 0.0
  %1965 = vmatpush1.msra.mxu0 0.0
  %1966 = vmatprep.subr.mxu0 0.0
  %1967 = vmatpush1.msra.mxu0 0.0
  %1968 = vmatprep.mubr.f32.mxu0 %v1213
  %1969 = vmatmul.mubr.f32.gmra.mrb[0].mxu0 %v1156
  %v1970 = vpop.f32.mrb[0].mxu0
  %v1971 = vadd.f32 %v1886, %v1970
  %v1972 = vpop.f32.mrb[0].mxu0
  %1973 = vmatprep.mubr.f32.mxu0 %v1216
  %1974 = vmatmul.mubr.f32.gmra.mrb[0].mxu0 %v1174
  %v1975 = vpop.f32.mrb[0].mxu0
  %v1976 = vadd.f32 %v1891, %v1975
  %v1977 = vpop.f32.mrb[0].mxu0
  %1978 = vmatprep.mubr.f32.mxu0 %v1219
  %1979 = vmatmul.mubr.f32.gmra.mrb[0].mxu0 %v1192
  %v1980 = vpop.f32.mrb[0].mxu0
  %v1981 = vadd.f32 %v1896, %v1980
  %v1982 = vpop.f32.mrb[0].mxu0
  %1983 = vmatprep.mubr.f32.mxu0 %v1222
  %1984 = vmatmul.mubr.f32.gmra.mrb[0].mxu0 %v1210
  %v1985 = vpop.f32.mrb[0].mxu0
  %v1986 = vadd.f32 %v1901, %v1985
  %v1987 = vpop.f32.mrb[0].mxu0
  %1988 = vdwg.mxu0
  %v1989 = vmax.f32 %v1121, %v1971
  %v1990 = vmax.f32 %v1126, %v1976
  %v1991 = vmax.f32 %v1131, %v1981
  %v1992 = vmax.f32 %v1136, %v1986
  %s1993 = scalar_lea.vmem %s0, 1152
  %v1994 = vld [vmem:[%s1993] sm:$0xff]
  %v1995 = vld [vmem:[%s1993 + $0x8] sm:$0xff]
  %v1996 = vld [vmem:[%s1993 + $0x10] sm:$0xff]
  %v1997 = vld [vmem:[%s1993 + $0x18] sm:$0xff]
  %v1998 = vld [vmem:[%s1993 + $0x20] sm:$0xff]
  %v1999 = vld [vmem:[%s1993 + $0x28] sm:$0xff]
  %v2000 = vld [vmem:[%s1993 + $0x30] sm:$0xff]
  %v2001 = vld [vmem:[%s1993 + $0x38] sm:$0xff]
  %v2002 = vld [vmem:[%s1993 + $0x40] sm:$0xff]
  %v2003 = vld [vmem:[%s1993 + $0x48] sm:$0xff]
  %v2004 = vld [vmem:[%s1993 + $0x50] sm:$0xff]
  %v2005 = vld [vmem:[%s1993 + $0x58] sm:$0xff]
  %v2006 = vld [vmem:[%s1993 + $0x60] sm:$0xff]
  %v2007 = vld [vmem:[%s1993 + $0x68] sm:$0xff]
  %v2008 = vld [vmem:[%s1993 + $0x70] sm:$0xff]
  %v2009 = vld [vmem:[%s1993 + $0x78] sm:$0xff]
  %v2010 = vld [vmem:[%s1993 + $0x80] sm:$0xff]
  %v2011 = vld [vmem:[%s1993 + $0x88] sm:$0xff]
  %v2012 = vld [vmem:[%s1993 + $0x90] sm:$0xff]
  %v2013 = vld [vmem:[%s1993 + $0x98] sm:$0xff]
  %v2014 = vld [vmem:[%s1993 + $0xa0] sm:$0xff]
  %v2015 = vld [vmem:[%s1993 + $0xa8] sm:$0xff]
  %v2016 = vld [vmem:[%s1993 + $0xb0] sm:$0xff]
  %v2017 = vld [vmem:[%s1993 + $0xb8] sm:$0xff]
  %v2018 = vld [vmem:[%s1993 + $0xc0] sm:$0xff]
  %v2019 = vld [vmem:[%s1993 + $0xc8] sm:$0xff]
  %v2020 = vld [vmem:[%s1993 + $0xd0] sm:$0xff]
  %v2021 = vld [vmem:[%s1993 + $0xd8] sm:$0xff]
  %v2022 = vld [vmem:[%s1993 + $0xe0] sm:$0xff]
  %v2023 = vld [vmem:[%s1993 + $0xe8] sm:$0xff]
  %v2024 = vld [vmem:[%s1993 + $0xf0] sm:$0xff]
  %v2025 = vld [vmem:[%s1993 + $0xf8] sm:$0xff]
  %v2026 = vld [vmem:[%s1993 + $0x100] sm:$0xff]
  %v2027 = vld [vmem:[%s1993 + $0x108] sm:$0xff]
  %v2028 = vld [vmem:[%s1993 + $0x110] sm:$0xff]
  %v2029 = vld [vmem:[%s1993 + $0x118] sm:$0xff]
  %v2030 = vld [vmem:[%s1993 + $0x120] sm:$0xff]
  %v2031 = vld [vmem:[%s1993 + $0x128] sm:$0xff]
  %v2032 = vld [vmem:[%s1993 + $0x130] sm:$0xff]
  %v2033 = vld [vmem:[%s1993 + $0x138] sm:$0xff]
  %v2034 = vld [vmem:[%s1993 + $0x140] sm:$0xff]
  %v2035 = vld [vmem:[%s1993 + $0x148] sm:$0xff]
  %v2036 = vld [vmem:[%s1993 + $0x150] sm:$0xff]
  %v2037 = vld [vmem:[%s1993 + $0x158] sm:$0xff]
  %v2038 = vld [vmem:[%s1993 + $0x160] sm:$0xff]
  %v2039 = vld [vmem:[%s1993 + $0x168] sm:$0xff]
  %v2040 = vld [vmem:[%s1993 + $0x170] sm:$0xff]
  %v2041 = vld [vmem:[%s1993 + $0x178] sm:$0xff]
  %v2042 = vld [vmem:[%s1993 + $0x180] sm:$0xff]
  %v2043 = vld [vmem:[%s1993 + $0x188] sm:$0xff]
  %v2044 = vld [vmem:[%s1993 + $0x190] sm:$0xff]
  %v2045 = vld [vmem:[%s1993 + $0x198] sm:$0xff]
  %v2046 = vld [vmem:[%s1993 + $0x1a0] sm:$0xff]
  %v2047 = vld [vmem:[%s1993 + $0x1a8] sm:$0xff]
  %v2048 = vld [vmem:[%s1993 + $0x1b0] sm:$0xff]
  %v2049 = vld [vmem:[%s1993 + $0x1b8] sm:$0xff]
  %v2050 = vld [vmem:[%s1993 + $0x1c0] sm:$0xff]
  %v2051 = vld [vmem:[%s1993 + $0x1c8] sm:$0xff]
  %v2052 = vld [vmem:[%s1993 + $0x1d0] sm:$0xff]
  %v2053 = vld [vmem:[%s1993 + $0x1d8] sm:$0xff]
  %v2054 = vld [vmem:[%s1993 + $0x1e0] sm:$0xff]
  %v2055 = vld [vmem:[%s1993 + $0x1e8] sm:$0xff]
  %v2056 = vld [vmem:[%s1993 + $0x1f0] sm:$0xff]
  %v2057 = vld [vmem:[%s1993 + $0x1f8] sm:$0xff]
  %v2058 = vld [vmem:[%s1993 + $0x200] sm:$0xff]
  %v2059 = vld [vmem:[%s1993 + $0x208] sm:$0xff]
  %v2060 = vld [vmem:[%s1993 + $0x210] sm:$0xff]
  %v2061 = vld [vmem:[%s1993 + $0x218] sm:$0xff]
  %v2062 = vld [vmem:[%s1993 + $0x220] sm:$0xff]
  %v2063 = vld [vmem:[%s1993 + $0x228] sm:$0xff]
  %v2064 = vld [vmem:[%s1993 + $0x230] sm:$0xff]
  %v2065 = vld [vmem:[%s1993 + $0x238] sm:$0xff]
  %v2067 = vsel %vm361, %v2011, 0
  %v2070 = vsel %vm361, %v2029, 0
  %v2073 = vsel %vm361, %v2047, 0
  %v2076 = vsel %vm361, %v2065, 0
  %2078 = vmatprep.subr.mxu0 0.0
  %2079 = vmatpush1.msra.mxu0 %v86
  %2080 = vmatprep.subr.mxu0 0.0
  %2081 = vmatpush1.msra.mxu0 %v87
  %2082 = vmatprep.subr.mxu0 0.0
  %2083 = vmatpush1.msra.mxu0 %v88
  %2084 = vmatprep.subr.mxu0 0.0
  %2085 = vmatpush1.msra.mxu0 %v89
  %2086 = vmatprep.subr.mxu0 0.0
  %2087 = vmatpush1.msra.mxu0 %v90
  %2088 = vmatprep.subr.mxu0 0.0
  %2089 = vmatpush1.msra.mxu0 %v91
  %2090 = vmatprep.subr.mxu0 0.0
  %2091 = vmatpush1.msra.mxu0 %v92
  %2092 = vmatprep.subr.mxu0 0.0
  %2093 = vmatpush1.msra.mxu0 %v93
  %2094 = vmatprep.subr.mxu0 0.0
  %2095 = vmatpush1.msra.mxu0 %v94
  %2096 = vmatprep.subr.mxu0 0.0
  %2097 = vmatpush1.msra.mxu0 %v95
  %2098 = vmatprep.subr.mxu0 0.0
  %2099 = vmatpush1.msra.mxu0 %v96
  %2100 = vmatprep.subr.mxu0 0.0
  %2101 = vmatpush1.msra.mxu0 %v97
  %2102 = vmatprep.subr.mxu0 0.0
  %2103 = vmatpush1.msra.mxu0 %v98
  %2104 = vmatprep.subr.mxu0 0.0
  %2105 = vmatpush1.msra.mxu0 %v99
  %2106 = vmatprep.subr.mxu0 0.0
  %2107 = vmatpush1.msra.mxu0 %v100
  %2108 = vmatprep.subr.mxu0 0.0
  %2109 = vmatpush1.msra.mxu0 %v101
  %2110 = vmatprep.subr.mxu0 0.0
  %2111 = vmatpush1.msra.mxu0 %v102
  %2112 = vmatprep.subr.mxu0 0.0
  %2113 = vmatpush1.msra.mxu0 %v103
  %2114 = vmatprep.subr.mxu0 0.0
  %2115 = vmatpush1.msra.mxu0 %v104
  %2116 = vmatprep.subr.mxu0 0.0
  %2117 = vmatpush1.msra.mxu0 %v105
  %2118 = vmatprep.subr.mxu0 0.0
  %2119 = vmatpush1.msra.mxu0 %v106
  %2120 = vmatprep.subr.mxu0 0.0
  %2121 = vmatpush1.msra.mxu0 %v107
  %2122 = vmatprep.subr.mxu0 0.0
  %2123 = vmatpush1.msra.mxu0 %v108
  %2124 = vmatprep.subr.mxu0 0.0
  %2125 = vmatpush1.msra.mxu0 %v109
  %2126 = vmatprep.subr.mxu0 0.0
  %2127 = vmatpush1.msra.mxu0 %v110
  %2128 = vmatprep.subr.mxu0 0.0
  %2129 = vmatpush1.msra.mxu0 %v111
  %2130 = vmatprep.subr.mxu0 0.0
  %2131 = vmatpush1.msra.mxu0 %v112
  %2132 = vmatprep.subr.mxu0 0.0
  %2133 = vmatpush1.msra.mxu0 %v113
  %2134 = vmatprep.subr.mxu0 0.0
  %2135 = vmatpush1.msra.mxu0 %v114
  %2136 = vmatprep.subr.mxu0 0.0
  %2137 = vmatpush1.msra.mxu0 %v115
  %2138 = vmatprep.subr.mxu0 0.0
  %2139 = vmatpush1.msra.mxu0 %v116
  %2140 = vmatprep.subr.mxu0 0.0
  %2141 = vmatpush1.msra.mxu0 %v117
  %2142 = vmatprep.mubr.f32.mxu0 %v1995
  %2143 = vmatmul.mubr.f32.gmra.mrb[0].mxu0 %v1994
  %v2144 = vpop.f32.mrb[0].mxu0
  %v2145 = vadd.f32 0.0, %v2144
  %v2146 = vpop.f32.mrb[0].mxu0
  %2147 = vmatprep.mubr.f32.mxu0 %v2013
  %2148 = vmatmul.mubr.f32.gmra.mrb[0].mxu0 %v2012
  %v2149 = vpop.f32.mrb[0].mxu0
  %v2150 = vadd.f32 0.0, %v2149
  %v2151 = vpop.f32.mrb[0].mxu0
  %2152 = vmatprep.mubr.f32.mxu0 %v2031
  %2153 = vmatmul.mubr.f32.gmra.mrb[0].mxu0 %v2030
  %v2154 = vpop.f32.mrb[0].mxu0
  %v2155 = vadd.f32 0.0, %v2154
  %v2156 = vpop.f32.mrb[0].mxu0
  %2157 = vmatprep.mubr.f32.mxu0 %v2049
  %2158 = vmatmul.mubr.f32.gmra.mrb[0].mxu0 %v2048
  %v2159 = vpop.f32.mrb[0].mxu0
  %v2160 = vadd.f32 0.0, %v2159
  %v2161 = vpop.f32.mrb[0].mxu0
  %2162 = vdwg.mxu0
  %2163 = vmatprep.subr.mxu0 0.0
  %2164 = vmatpush1.msra.mxu0 %v118
  %2165 = vmatprep.subr.mxu0 0.0
  %2166 = vmatpush1.msra.mxu0 %v119
  %2167 = vmatprep.subr.mxu0 0.0
  %2168 = vmatpush1.msra.mxu0 %v120
  %2169 = vmatprep.subr.mxu0 0.0
  %2170 = vmatpush1.msra.mxu0 %v121
  %2171 = vmatprep.subr.mxu0 0.0
  %2172 = vmatpush1.msra.mxu0 %v122
  %2173 = vmatprep.subr.mxu0 0.0
  %2174 = vmatpush1.msra.mxu0 %v123
  %2175 = vmatprep.subr.mxu0 0.0
  %2176 = vmatpush1.msra.mxu0 %v124
  %2177 = vmatprep.subr.mxu0 0.0
  %2178 = vmatpush1.msra.mxu0 %v125
  %2179 = vmatprep.subr.mxu0 0.0
  %2180 = vmatpush1.msra.mxu0 %v126
  %2181 = vmatprep.subr.mxu0 0.0
  %2182 = vmatpush1.msra.mxu0 %v127
  %2183 = vmatprep.subr.mxu0 0.0
  %2184 = vmatpush1.msra.mxu0 %v128
  %2185 = vmatprep.subr.mxu0 0.0
  %2186 = vmatpush1.msra.mxu0 %v129
  %2187 = vmatprep.subr.mxu0 0.0
  %2188 = vmatpush1.msra.mxu0 %v130
  %2189 = vmatprep.subr.mxu0 0.0
  %2190 = vmatpush1.msra.mxu0 %v131
  %2191 = vmatprep.subr.mxu0 0.0
  %2192 = vmatpush1.msra.mxu0 %v132
  %2193 = vmatprep.subr.mxu0 0.0
  %2194 = vmatpush1.msra.mxu0 %v133
  %2195 = vmatprep.subr.mxu0 0.0
  %2196 = vmatpush1.msra.mxu0 %v134
  %2197 = vmatprep.subr.mxu0 0.0
  %2198 = vmatpush1.msra.mxu0 %v135
  %2199 = vmatprep.subr.mxu0 0.0
  %2200 = vmatpush1.msra.mxu0 %v136
  %2201 = vmatprep.subr.mxu0 0.0
  %2202 = vmatpush1.msra.mxu0 %v137
  %2203 = vmatprep.subr.mxu0 0.0
  %2204 = vmatpush1.msra.mxu0 %v138
  %2205 = vmatprep.subr.mxu0 0.0
  %2206 = vmatpush1.msra.mxu0 %v139
  %2207 = vmatprep.subr.mxu0 0.0
  %2208 = vmatpush1.msra.mxu0 %v140
  %2209 = vmatprep.subr.mxu0 0.0
  %2210 = vmatpush1.msra.mxu0 %v141
  %2211 = vmatprep.subr.mxu0 0.0
  %2212 = vmatpush1.msra.mxu0 %v142
  %2213 = vmatprep.subr.mxu0 0.0
  %2214 = vmatpush1.msra.mxu0 %v143
  %2215 = vmatprep.subr.mxu0 0.0
  %2216 = vmatpush1.msra.mxu0 %v144
  %2217 = vmatprep.subr.mxu0 0.0
  %2218 = vmatpush1.msra.mxu0 %v145
  %2219 = vmatprep.subr.mxu0 0.0
  %2220 = vmatpush1.msra.mxu0 %v146
  %2221 = vmatprep.subr.mxu0 0.0
  %2222 = vmatpush1.msra.mxu0 %v147
  %2223 = vmatprep.subr.mxu0 0.0
  %2224 = vmatpush1.msra.mxu0 %v148
  %2225 = vmatprep.subr.mxu0 0.0
  %2226 = vmatpush1.msra.mxu0 %v149
  %2227 = vmatprep.mubr.f32.mxu0 %v1997
  %2228 = vmatmul.mubr.f32.gmra.mrb[0].mxu0 %v1996
  %v2229 = vpop.f32.mrb[0].mxu0
  %v2230 = vadd.f32 %v2145, %v2229
  %v2231 = vpop.f32.mrb[0].mxu0
  %2232 = vmatprep.mubr.f32.mxu0 %v2015
  %2233 = vmatmul.mubr.f32.gmra.mrb[0].mxu0 %v2014
  %v2234 = vpop.f32.mrb[0].mxu0
  %v2235 = vadd.f32 %v2150, %v2234
  %v2236 = vpop.f32.mrb[0].mxu0
  %2237 = vmatprep.mubr.f32.mxu0 %v2033
  %2238 = vmatmul.mubr.f32.gmra.mrb[0].mxu0 %v2032
  %v2239 = vpop.f32.mrb[0].mxu0
  %v2240 = vadd.f32 %v2155, %v2239
  %v2241 = vpop.f32.mrb[0].mxu0
  %2242 = vmatprep.mubr.f32.mxu0 %v2051
  %2243 = vmatmul.mubr.f32.gmra.mrb[0].mxu0 %v2050
  %v2244 = vpop.f32.mrb[0].mxu0
  %v2245 = vadd.f32 %v2160, %v2244
  %v2246 = vpop.f32.mrb[0].mxu0
  %2247 = vdwg.mxu0
  %2248 = vmatprep.subr.mxu0 0.0
  %2249 = vmatpush1.msra.mxu0 %v150
  %2250 = vmatprep.subr.mxu0 0.0
  %2251 = vmatpush1.msra.mxu0 %v151
  %2252 = vmatprep.subr.mxu0 0.0
  %2253 = vmatpush1.msra.mxu0 %v152
  %2254 = vmatprep.subr.mxu0 0.0
  %2255 = vmatpush1.msra.mxu0 %v153
  %2256 = vmatprep.subr.mxu0 0.0
  %2257 = vmatpush1.msra.mxu0 %v154
  %2258 = vmatprep.subr.mxu0 0.0
  %2259 = vmatpush1.msra.mxu0 %v155
  %2260 = vmatprep.subr.mxu0 0.0
  %2261 = vmatpush1.msra.mxu0 %v156
  %2262 = vmatprep.subr.mxu0 0.0
  %2263 = vmatpush1.msra.mxu0 %v157
  %2264 = vmatprep.subr.mxu0 0.0
  %2265 = vmatpush1.msra.mxu0 %v158
  %2266 = vmatprep.subr.mxu0 0.0
  %2267 = vmatpush1.msra.mxu0 %v159
  %2268 = vmatprep.subr.mxu0 0.0
  %2269 = vmatpush1.msra.mxu0 %v160
  %2270 = vmatprep.subr.mxu0 0.0
  %2271 = vmatpush1.msra.mxu0 %v161
  %2272 = vmatprep.subr.mxu0 0.0
  %2273 = vmatpush1.msra.mxu0 %v162
  %2274 = vmatprep.subr.mxu0 0.0
  %2275 = vmatpush1.msra.mxu0 %v163
  %2276 = vmatprep.subr.mxu0 0.0
  %2277 = vmatpush1.msra.mxu0 %v164
  %2278 = vmatprep.subr.mxu0 0.0
  %2279 = vmatpush1.msra.mxu0 %v165
  %2280 = vmatprep.subr.mxu0 0.0
  %2281 = vmatpush1.msra.mxu0 %v166
  %2282 = vmatprep.subr.mxu0 0.0
  %2283 = vmatpush1.msra.mxu0 %v167
  %2284 = vmatprep.subr.mxu0 0.0
  %2285 = vmatpush1.msra.mxu0 %v168
  %2286 = vmatprep.subr.mxu0 0.0
  %2287 = vmatpush1.msra.mxu0 %v169
  %2288 = vmatprep.subr.mxu0 0.0
  %2289 = vmatpush1.msra.mxu0 %v170
  %2290 = vmatprep.subr.mxu0 0.0
  %2291 = vmatpush1.msra.mxu0 %v171
  %2292 = vmatprep.subr.mxu0 0.0
  %2293 = vmatpush1.msra.mxu0 %v172
  %2294 = vmatprep.subr.mxu0 0.0
  %2295 = vmatpush1.msra.mxu0 %v173
  %2296 = vmatprep.subr.mxu0 0.0
  %2297 = vmatpush1.msra.mxu0 %v174
  %2298 = vmatprep.subr.mxu0 0.0
  %2299 = vmatpush1.msra.mxu0 %v175
  %2300 = vmatprep.subr.mxu0 0.0
  %2301 = vmatpush1.msra.mxu0 %v176
  %2302 = vmatprep.subr.mxu0 0.0
  %2303 = vmatpush1.msra.mxu0 %v177
  %2304 = vmatprep.subr.mxu0 0.0
  %2305 = vmatpush1.msra.mxu0 %v178
  %2306 = vmatprep.subr.mxu0 0.0
  %2307 = vmatpush1.msra.mxu0 %v179
  %2308 = vmatprep.subr.mxu0 0.0
  %2309 = vmatpush1.msra.mxu0 %v180
  %2310 = vmatprep.subr.mxu0 0.0
  %2311 = vmatpush1.msra.mxu0 %v181
  %2312 = vmatprep.mubr.f32.mxu0 %v1999
  %2313 = vmatmul.mubr.f32.gmra.mrb[0].mxu0 %v1998
  %v2314 = vpop.f32.mrb[0].mxu0
  %v2315 = vadd.f32 %v2230, %v2314
  %v2316 = vpop.f32.mrb[0].mxu0
  %2317 = vmatprep.mubr.f32.mxu0 %v2017
  %2318 = vmatmul.mubr.f32.gmra.mrb[0].mxu0 %v2016
  %v2319 = vpop.f32.mrb[0].mxu0
  %v2320 = vadd.f32 %v2235, %v2319
  %v2321 = vpop.f32.mrb[0].mxu0
  %2322 = vmatprep.mubr.f32.mxu0 %v2035
  %2323 = vmatmul.mubr.f32.gmra.mrb[0].mxu0 %v2034
  %v2324 = vpop.f32.mrb[0].mxu0
  %v2325 = vadd.f32 %v2240, %v2324
  %v2326 = vpop.f32.mrb[0].mxu0
  %2327 = vmatprep.mubr.f32.mxu0 %v2053
  %2328 = vmatmul.mubr.f32.gmra.mrb[0].mxu0 %v2052
  %v2329 = vpop.f32.mrb[0].mxu0
  %v2330 = vadd.f32 %v2245, %v2329
  %v2331 = vpop.f32.mrb[0].mxu0
  %2332 = vdwg.mxu0
  %2333 = vmatprep.subr.mxu0 0.0
  %2334 = vmatpush1.msra.mxu0 %v182
  %2335 = vmatprep.subr.mxu0 0.0
  %2336 = vmatpush1.msra.mxu0 %v183
  %2337 = vmatprep.subr.mxu0 0.0
  %2338 = vmatpush1.msra.mxu0 %v184
  %2339 = vmatprep.subr.mxu0 0.0
  %2340 = vmatpush1.msra.mxu0 %v185
  %2341 = vmatprep.subr.mxu0 0.0
  %2342 = vmatpush1.msra.mxu0 %v186
  %2343 = vmatprep.subr.mxu0 0.0
  %2344 = vmatpush1.msra.mxu0 %v187
  %2345 = vmatprep.subr.mxu0 0.0
  %2346 = vmatpush1.msra.mxu0 %v188
  %2347 = vmatprep.subr.mxu0 0.0
  %2348 = vmatpush1.msra.mxu0 %v189
  %2349 = vmatprep.subr.mxu0 0.0
  %2350 = vmatpush1.msra.mxu0 %v190
  %2351 = vmatprep.subr.mxu0 0.0
  %2352 = vmatpush1.msra.mxu0 %v191
  %2353 = vmatprep.subr.mxu0 0.0
  %2354 = vmatpush1.msra.mxu0 %v192
  %2355 = vmatprep.subr.mxu0 0.0
  %2356 = vmatpush1.msra.mxu0 %v193
  %2357 = vmatprep.subr.mxu0 0.0
  %2358 = vmatpush1.msra.mxu0 %v194
  %2359 = vmatprep.subr.mxu0 0.0
  %2360 = vmatpush1.msra.mxu0 %v195
  %2361 = vmatprep.subr.mxu0 0.0
  %2362 = vmatpush1.msra.mxu0 %v196
  %2363 = vmatprep.subr.mxu0 0.0
  %2364 = vmatpush1.msra.mxu0 %v197
  %2365 = vmatprep.subr.mxu0 0.0
  %2366 = vmatpush1.msra.mxu0 %v198
  %2367 = vmatprep.subr.mxu0 0.0
  %2368 = vmatpush1.msra.mxu0 %v199
  %2369 = vmatprep.subr.mxu0 0.0
  %2370 = vmatpush1.msra.mxu0 %v200
  %2371 = vmatprep.subr.mxu0 0.0
  %2372 = vmatpush1.msra.mxu0 %v201
  %2373 = vmatprep.subr.mxu0 0.0
  %2374 = vmatpush1.msra.mxu0 %v202
  %2375 = vmatprep.subr.mxu0 0.0
  %2376 = vmatpush1.msra.mxu0 %v203
  %2377 = vmatprep.subr.mxu0 0.0
  %2378 = vmatpush1.msra.mxu0 %v204
  %2379 = vmatprep.subr.mxu0 0.0
  %2380 = vmatpush1.msra.mxu0 %v205
  %2381 = vmatprep.subr.mxu0 0.0
  %2382 = vmatpush1.msra.mxu0 %v206
  %2383 = vmatprep.subr.mxu0 0.0
  %2384 = vmatpush1.msra.mxu0 %v207
  %2385 = vmatprep.subr.mxu0 0.0
  %2386 = vmatpush1.msra.mxu0 %v208
  %2387 = vmatprep.subr.mxu0 0.0
  %2388 = vmatpush1.msra.mxu0 %v209
  %2389 = vmatprep.subr.mxu0 0.0
  %2390 = vmatpush1.msra.mxu0 %v210
  %2391 = vmatprep.subr.mxu0 0.0
  %2392 = vmatpush1.msra.mxu0 %v211
  %2393 = vmatprep.subr.mxu0 0.0
  %2394 = vmatpush1.msra.mxu0 %v212
  %2395 = vmatprep.subr.mxu0 0.0
  %2396 = vmatpush1.msra.mxu0 %v213
  %2397 = vmatprep.mubr.f32.mxu0 %v2001
  %2398 = vmatmul.mubr.f32.gmra.mrb[0].mxu0 %v2000
  %v2399 = vpop.f32.mrb[0].mxu0
  %v2400 = vadd.f32 %v2315, %v2399
  %v2401 = vpop.f32.mrb[0].mxu0
  %2402 = vmatprep.mubr.f32.mxu0 %v2019
  %2403 = vmatmul.mubr.f32.gmra.mrb[0].mxu0 %v2018
  %v2404 = vpop.f32.mrb[0].mxu0
  %v2405 = vadd.f32 %v2320, %v2404
  %v2406 = vpop.f32.mrb[0].mxu0
  %2407 = vmatprep.mubr.f32.mxu0 %v2037
  %2408 = vmatmul.mubr.f32.gmra.mrb[0].mxu0 %v2036
  %v2409 = vpop.f32.mrb[0].mxu0
  %v2410 = vadd.f32 %v2325, %v2409
  %v2411 = vpop.f32.mrb[0].mxu0
  %2412 = vmatprep.mubr.f32.mxu0 %v2055
  %2413 = vmatmul.mubr.f32.gmra.mrb[0].mxu0 %v2054
  %v2414 = vpop.f32.mrb[0].mxu0
  %v2415 = vadd.f32 %v2330, %v2414
  %v2416 = vpop.f32.mrb[0].mxu0
  %2417 = vdwg.mxu0
  %2418 = vmatprep.subr.mxu0 0.0
  %2419 = vmatpush1.msra.mxu0 %v214
  %2420 = vmatprep.subr.mxu0 0.0
  %2421 = vmatpush1.msra.mxu0 %v215
  %2422 = vmatprep.subr.mxu0 0.0
  %2423 = vmatpush1.msra.mxu0 %v216
  %2424 = vmatprep.subr.mxu0 0.0
  %2425 = vmatpush1.msra.mxu0 %v217
  %2426 = vmatprep.subr.mxu0 0.0
  %2427 = vmatpush1.msra.mxu0 %v218
  %2428 = vmatprep.subr.mxu0 0.0
  %2429 = vmatpush1.msra.mxu0 %v219
  %2430 = vmatprep.subr.mxu0 0.0
  %2431 = vmatpush1.msra.mxu0 %v220
  %2432 = vmatprep.subr.mxu0 0.0
  %2433 = vmatpush1.msra.mxu0 %v221
  %2434 = vmatprep.subr.mxu0 0.0
  %2435 = vmatpush1.msra.mxu0 %v222
  %2436 = vmatprep.subr.mxu0 0.0
  %2437 = vmatpush1.msra.mxu0 %v223
  %2438 = vmatprep.subr.mxu0 0.0
  %2439 = vmatpush1.msra.mxu0 %v224
  %2440 = vmatprep.subr.mxu0 0.0
  %2441 = vmatpush1.msra.mxu0 %v225
  %2442 = vmatprep.subr.mxu0 0.0
  %2443 = vmatpush1.msra.mxu0 %v226
  %2444 = vmatprep.subr.mxu0 0.0
  %2445 = vmatpush1.msra.mxu0 %v227
  %2446 = vmatprep.subr.mxu0 0.0
  %2447 = vmatpush1.msra.mxu0 %v228
  %2448 = vmatprep.subr.mxu0 0.0
  %2449 = vmatpush1.msra.mxu0 %v229
  %2450 = vmatprep.subr.mxu0 0.0
  %2451 = vmatpush1.msra.mxu0 %v230
  %2452 = vmatprep.subr.mxu0 0.0
  %2453 = vmatpush1.msra.mxu0 %v231
  %2454 = vmatprep.subr.mxu0 0.0
  %2455 = vmatpush1.msra.mxu0 %v232
  %2456 = vmatprep.subr.mxu0 0.0
  %2457 = vmatpush1.msra.mxu0 %v233
  %2458 = vmatprep.subr.mxu0 0.0
  %2459 = vmatpush1.msra.mxu0 %v234
  %2460 = vmatprep.subr.mxu0 0.0
  %2461 = vmatpush1.msra.mxu0 %v235
  %2462 = vmatprep.subr.mxu0 0.0
  %2463 = vmatpush1.msra.mxu0 %v236
  %2464 = vmatprep.subr.mxu0 0.0
  %2465 = vmatpush1.msra.mxu0 %v237
  %2466 = vmatprep.subr.mxu0 0.0
  %2467 = vmatpush1.msra.mxu0 %v238
  %2468 = vmatprep.subr.mxu0 0.0
  %2469 = vmatpush1.msra.mxu0 %v239
  %2470 = vmatprep.subr.mxu0 0.0
  %2471 = vmatpush1.msra.mxu0 %v240
  %2472 = vmatprep.subr.mxu0 0.0
  %2473 = vmatpush1.msra.mxu0 %v241
  %2474 = vmatprep.subr.mxu0 0.0
  %2475 = vmatpush1.msra.mxu0 %v242
  %2476 = vmatprep.subr.mxu0 0.0
  %2477 = vmatpush1.msra.mxu0 %v243
  %2478 = vmatprep.subr.mxu0 0.0
  %2479 = vmatpush1.msra.mxu0 %v244
  %2480 = vmatprep.subr.mxu0 0.0
  %2481 = vmatpush1.msra.mxu0 %v245
  %2482 = vmatprep.mubr.f32.mxu0 %v2003
  %2483 = vmatmul.mubr.f32.gmra.mrb[0].mxu0 %v2002
  %v2484 = vpop.f32.mrb[0].mxu0
  %v2485 = vadd.f32 %v2400, %v2484
  %v2486 = vpop.f32.mrb[0].mxu0
  %2487 = vmatprep.mubr.f32.mxu0 %v2021
  %2488 = vmatmul.mubr.f32.gmra.mrb[0].mxu0 %v2020
  %v2489 = vpop.f32.mrb[0].mxu0
  %v2490 = vadd.f32 %v2405, %v2489
  %v2491 = vpop.f32.mrb[0].mxu0
  %2492 = vmatprep.mubr.f32.mxu0 %v2039
  %2493 = vmatmul.mubr.f32.gmra.mrb[0].mxu0 %v2038
  %v2494 = vpop.f32.mrb[0].mxu0
  %v2495 = vadd.f32 %v2410, %v2494
  %v2496 = vpop.f32.mrb[0].mxu0
  %2497 = vmatprep.mubr.f32.mxu0 %v2057
  %2498 = vmatmul.mubr.f32.gmra.mrb[0].mxu0 %v2056
  %v2499 = vpop.f32.mrb[0].mxu0
  %v2500 = vadd.f32 %v2415, %v2499
  %v2501 = vpop.f32.mrb[0].mxu0
  %2502 = vdwg.mxu0
  %2503 = vmatprep.subr.mxu0 0.0
  %2504 = vmatpush1.msra.mxu0 %v246
  %2505 = vmatprep.subr.mxu0 0.0
  %2506 = vmatpush1.msra.mxu0 %v247
  %2507 = vmatprep.subr.mxu0 0.0
  %2508 = vmatpush1.msra.mxu0 %v248
  %2509 = vmatprep.subr.mxu0 0.0
  %2510 = vmatpush1.msra.mxu0 %v249
  %2511 = vmatprep.subr.mxu0 0.0
  %2512 = vmatpush1.msra.mxu0 %v250
  %2513 = vmatprep.subr.mxu0 0.0
  %2514 = vmatpush1.msra.mxu0 %v251
  %2515 = vmatprep.subr.mxu0 0.0
  %2516 = vmatpush1.msra.mxu0 %v252
  %2517 = vmatprep.subr.mxu0 0.0
  %2518 = vmatpush1.msra.mxu0 %v253
  %2519 = vmatprep.subr.mxu0 0.0
  %2520 = vmatpush1.msra.mxu0 %v254
  %2521 = vmatprep.subr.mxu0 0.0
  %2522 = vmatpush1.msra.mxu0 %v255
  %2523 = vmatprep.subr.mxu0 0.0
  %2524 = vmatpush1.msra.mxu0 %v256
  %2525 = vmatprep.subr.mxu0 0.0
  %2526 = vmatpush1.msra.mxu0 %v257
  %2527 = vmatprep.subr.mxu0 0.0
  %2528 = vmatpush1.msra.mxu0 %v258
  %2529 = vmatprep.subr.mxu0 0.0
  %2530 = vmatpush1.msra.mxu0 %v259
  %2531 = vmatprep.subr.mxu0 0.0
  %2532 = vmatpush1.msra.mxu0 %v260
  %2533 = vmatprep.subr.mxu0 0.0
  %2534 = vmatpush1.msra.mxu0 %v261
  %2535 = vmatprep.subr.mxu0 0.0
  %2536 = vmatpush1.msra.mxu0 %v262
  %2537 = vmatprep.subr.mxu0 0.0
  %2538 = vmatpush1.msra.mxu0 %v263
  %2539 = vmatprep.subr.mxu0 0.0
  %2540 = vmatpush1.msra.mxu0 %v264
  %2541 = vmatprep.subr.mxu0 0.0
  %2542 = vmatpush1.msra.mxu0 %v265
  %2543 = vmatprep.subr.mxu0 0.0
  %2544 = vmatpush1.msra.mxu0 %v266
  %2545 = vmatprep.subr.mxu0 0.0
  %2546 = vmatpush1.msra.mxu0 %v267
  %2547 = vmatprep.subr.mxu0 0.0
  %2548 = vmatpush1.msra.mxu0 %v268
  %2549 = vmatprep.subr.mxu0 0.0
  %2550 = vmatpush1.msra.mxu0 %v269
  %2551 = vmatprep.subr.mxu0 0.0
  %2552 = vmatpush1.msra.mxu0 %v270
  %2553 = vmatprep.subr.mxu0 0.0
  %2554 = vmatpush1.msra.mxu0 %v271
  %2555 = vmatprep.subr.mxu0 0.0
  %2556 = vmatpush1.msra.mxu0 %v272
  %2557 = vmatprep.subr.mxu0 0.0
  %2558 = vmatpush1.msra.mxu0 %v273
  %2559 = vmatprep.subr.mxu0 0.0
  %2560 = vmatpush1.msra.mxu0 %v274
  %2561 = vmatprep.subr.mxu0 0.0
  %2562 = vmatpush1.msra.mxu0 %v275
  %2563 = vmatprep.subr.mxu0 0.0
  %2564 = vmatpush1.msra.mxu0 %v276
  %2565 = vmatprep.subr.mxu0 0.0
  %2566 = vmatpush1.msra.mxu0 %v277
  %2567 = vmatprep.mubr.f32.mxu0 %v2005
  %2568 = vmatmul.mubr.f32.gmra.mrb[0].mxu0 %v2004
  %v2569 = vpop.f32.mrb[0].mxu0
  %v2570 = vadd.f32 %v2485, %v2569
  %v2571 = vpop.f32.mrb[0].mxu0
  %2572 = vmatprep.mubr.f32.mxu0 %v2023
  %2573 = vmatmul.mubr.f32.gmra.mrb[0].mxu0 %v2022
  %v2574 = vpop.f32.mrb[0].mxu0
  %v2575 = vadd.f32 %v2490, %v2574
  %v2576 = vpop.f32.mrb[0].mxu0
  %2577 = vmatprep.mubr.f32.mxu0 %v2041
  %2578 = vmatmul.mubr.f32.gmra.mrb[0].mxu0 %v2040
  %v2579 = vpop.f32.mrb[0].mxu0
  %v2580 = vadd.f32 %v2495, %v2579
  %v2581 = vpop.f32.mrb[0].mxu0
  %2582 = vmatprep.mubr.f32.mxu0 %v2059
  %2583 = vmatmul.mubr.f32.gmra.mrb[0].mxu0 %v2058
  %v2584 = vpop.f32.mrb[0].mxu0
  %v2585 = vadd.f32 %v2500, %v2584
  %v2586 = vpop.f32.mrb[0].mxu0
  %2587 = vdwg.mxu0
  %2588 = vmatprep.subr.mxu0 0.0
  %2589 = vmatpush1.msra.mxu0 %v278
  %2590 = vmatprep.subr.mxu0 0.0
  %2591 = vmatpush1.msra.mxu0 %v279
  %2592 = vmatprep.subr.mxu0 0.0
  %2593 = vmatpush1.msra.mxu0 %v280
  %2594 = vmatprep.subr.mxu0 0.0
  %2595 = vmatpush1.msra.mxu0 %v281
  %2596 = vmatprep.subr.mxu0 0.0
  %2597 = vmatpush1.msra.mxu0 %v282
  %2598 = vmatprep.subr.mxu0 0.0
  %2599 = vmatpush1.msra.mxu0 %v283
  %2600 = vmatprep.subr.mxu0 0.0
  %2601 = vmatpush1.msra.mxu0 %v284
  %2602 = vmatprep.subr.mxu0 0.0
  %2603 = vmatpush1.msra.mxu0 %v285
  %2604 = vmatprep.subr.mxu0 0.0
  %2605 = vmatpush1.msra.mxu0 %v286
  %2606 = vmatprep.subr.mxu0 0.0
  %2607 = vmatpush1.msra.mxu0 %v287
  %2608 = vmatprep.subr.mxu0 0.0
  %2609 = vmatpush1.msra.mxu0 %v288
  %2610 = vmatprep.subr.mxu0 0.0
  %2611 = vmatpush1.msra.mxu0 %v289
  %2612 = vmatprep.subr.mxu0 0.0
  %2613 = vmatpush1.msra.mxu0 %v290
  %2614 = vmatprep.subr.mxu0 0.0
  %2615 = vmatpush1.msra.mxu0 %v291
  %2616 = vmatprep.subr.mxu0 0.0
  %2617 = vmatpush1.msra.mxu0 %v292
  %2618 = vmatprep.subr.mxu0 0.0
  %2619 = vmatpush1.msra.mxu0 %v293
  %2620 = vmatprep.subr.mxu0 0.0
  %2621 = vmatpush1.msra.mxu0 %v294
  %2622 = vmatprep.subr.mxu0 0.0
  %2623 = vmatpush1.msra.mxu0 %v295
  %2624 = vmatprep.subr.mxu0 0.0
  %2625 = vmatpush1.msra.mxu0 %v296
  %2626 = vmatprep.subr.mxu0 0.0
  %2627 = vmatpush1.msra.mxu0 %v297
  %2628 = vmatprep.subr.mxu0 0.0
  %2629 = vmatpush1.msra.mxu0 %v298
  %2630 = vmatprep.subr.mxu0 0.0
  %2631 = vmatpush1.msra.mxu0 %v299
  %2632 = vmatprep.subr.mxu0 0.0
  %2633 = vmatpush1.msra.mxu0 %v300
  %2634 = vmatprep.subr.mxu0 0.0
  %2635 = vmatpush1.msra.mxu0 %v301
  %2636 = vmatprep.subr.mxu0 0.0
  %2637 = vmatpush1.msra.mxu0 %v302
  %2638 = vmatprep.subr.mxu0 0.0
  %2639 = vmatpush1.msra.mxu0 %v303
  %2640 = vmatprep.subr.mxu0 0.0
  %2641 = vmatpush1.msra.mxu0 %v304
  %2642 = vmatprep.subr.mxu0 0.0
  %2643 = vmatpush1.msra.mxu0 %v305
  %2644 = vmatprep.subr.mxu0 0.0
  %2645 = vmatpush1.msra.mxu0 %v306
  %2646 = vmatprep.subr.mxu0 0.0
  %2647 = vmatpush1.msra.mxu0 %v307
  %2648 = vmatprep.subr.mxu0 0.0
  %2649 = vmatpush1.msra.mxu0 %v308
  %2650 = vmatprep.subr.mxu0 0.0
  %2651 = vmatpush1.msra.mxu0 %v309
  %2652 = vmatprep.mubr.f32.mxu0 %v2007
  %2653 = vmatmul.mubr.f32.gmra.mrb[0].mxu0 %v2006
  %v2654 = vpop.f32.mrb[0].mxu0
  %v2655 = vadd.f32 %v2570, %v2654
  %v2656 = vpop.f32.mrb[0].mxu0
  %2657 = vmatprep.mubr.f32.mxu0 %v2025
  %2658 = vmatmul.mubr.f32.gmra.mrb[0].mxu0 %v2024
  %v2659 = vpop.f32.mrb[0].mxu0
  %v2660 = vadd.f32 %v2575, %v2659
  %v2661 = vpop.f32.mrb[0].mxu0
  %2662 = vmatprep.mubr.f32.mxu0 %v2043
  %2663 = vmatmul.mubr.f32.gmra.mrb[0].mxu0 %v2042
  %v2664 = vpop.f32.mrb[0].mxu0
  %v2665 = vadd.f32 %v2580, %v2664
  %v2666 = vpop.f32.mrb[0].mxu0
  %2667 = vmatprep.mubr.f32.mxu0 %v2061
  %2668 = vmatmul.mubr.f32.gmra.mrb[0].mxu0 %v2060
  %v2669 = vpop.f32.mrb[0].mxu0
  %v2670 = vadd.f32 %v2585, %v2669
  %v2671 = vpop.f32.mrb[0].mxu0
  %2672 = vdwg.mxu0
  %2673 = vmatprep.subr.mxu0 0.0
  %2674 = vmatpush1.msra.mxu0 %v310
  %2675 = vmatprep.subr.mxu0 0.0
  %2676 = vmatpush1.msra.mxu0 %v311
  %2677 = vmatprep.subr.mxu0 0.0
  %2678 = vmatpush1.msra.mxu0 %v312
  %2679 = vmatprep.subr.mxu0 0.0
  %2680 = vmatpush1.msra.mxu0 %v313
  %2681 = vmatprep.subr.mxu0 0.0
  %2682 = vmatpush1.msra.mxu0 %v314
  %2683 = vmatprep.subr.mxu0 0.0
  %2684 = vmatpush1.msra.mxu0 %v315
  %2685 = vmatprep.subr.mxu0 0.0
  %2686 = vmatpush1.msra.mxu0 %v316
  %2687 = vmatprep.subr.mxu0 0.0
  %2688 = vmatpush1.msra.mxu0 %v317
  %2689 = vmatprep.subr.mxu0 0.0
  %2690 = vmatpush1.msra.mxu0 %v318
  %2691 = vmatprep.subr.mxu0 0.0
  %2692 = vmatpush1.msra.mxu0 %v319
  %2693 = vmatprep.subr.mxu0 0.0
  %2694 = vmatpush1.msra.mxu0 %v320
  %2695 = vmatprep.subr.mxu0 0.0
  %2696 = vmatpush1.msra.mxu0 %v321
  %2697 = vmatprep.subr.mxu0 0.0
  %2698 = vmatpush1.msra.mxu0 %v322
  %2699 = vmatprep.subr.mxu0 0.0
  %2700 = vmatpush1.msra.mxu0 %v323
  %2701 = vmatprep.subr.mxu0 0.0
  %2702 = vmatpush1.msra.mxu0 %v324
  %2703 = vmatprep.subr.mxu0 0.0
  %2704 = vmatpush1.msra.mxu0 %v325
  %2705 = vmatprep.subr.mxu0 0.0
  %2706 = vmatpush1.msra.mxu0 %v326
  %2707 = vmatprep.subr.mxu0 0.0
  %2708 = vmatpush1.msra.mxu0 %v327
  %2709 = vmatprep.subr.mxu0 0.0
  %2710 = vmatpush1.msra.mxu0 %v328
  %2711 = vmatprep.subr.mxu0 0.0
  %2712 = vmatpush1.msra.mxu0 %v329
  %2713 = vmatprep.subr.mxu0 0.0
  %2714 = vmatpush1.msra.mxu0 %v330
  %2715 = vmatprep.subr.mxu0 0.0
  %2716 = vmatpush1.msra.mxu0 %v331
  %2717 = vmatprep.subr.mxu0 0.0
  %2718 = vmatpush1.msra.mxu0 %v332
  %2719 = vmatprep.subr.mxu0 0.0
  %2720 = vmatpush1.msra.mxu0 %v333
  %2721 = vmatprep.subr.mxu0 0.0
  %2722 = vmatpush1.msra.mxu0 %v334
  %2723 = vmatprep.subr.mxu0 0.0
  %2724 = vmatpush1.msra.mxu0 %v335
  %2725 = vmatprep.subr.mxu0 0.0
  %2726 = vmatpush1.msra.mxu0 %v336
  %2727 = vmatprep.subr.mxu0 0.0
  %2728 = vmatpush1.msra.mxu0 %v337
  %2729 = vmatprep.subr.mxu0 0.0
  %2730 = vmatpush1.msra.mxu0 %v338
  %2731 = vmatprep.subr.mxu0 0.0
  %2732 = vmatpush1.msra.mxu0 %v339
  %2733 = vmatprep.subr.mxu0 0.0
  %2734 = vmatpush1.msra.mxu0 %v340
  %2735 = vmatprep.subr.mxu0 0.0
  %2736 = vmatpush1.msra.mxu0 %v341
  %2737 = vmatprep.mubr.f32.mxu0 %v2009
  %2738 = vmatmul.mubr.f32.gmra.mrb[0].mxu0 %v2008
  %v2739 = vpop.f32.mrb[0].mxu0
  %v2740 = vadd.f32 %v2655, %v2739
  %v2741 = vpop.f32.mrb[0].mxu0
  %2742 = vmatprep.mubr.f32.mxu0 %v2027
  %2743 = vmatmul.mubr.f32.gmra.mrb[0].mxu0 %v2026
  %v2744 = vpop.f32.mrb[0].mxu0
  %v2745 = vadd.f32 %v2660, %v2744
  %v2746 = vpop.f32.mrb[0].mxu0
  %2747 = vmatprep.mubr.f32.mxu0 %v2045
  %2748 = vmatmul.mubr.f32.gmra.mrb[0].mxu0 %v2044
  %v2749 = vpop.f32.mrb[0].mxu0
  %v2750 = vadd.f32 %v2665, %v2749
  %v2751 = vpop.f32.mrb[0].mxu0
  %2752 = vmatprep.mubr.f32.mxu0 %v2063
  %2753 = vmatmul.mubr.f32.gmra.mrb[0].mxu0 %v2062
  %v2754 = vpop.f32.mrb[0].mxu0
  %v2755 = vadd.f32 %v2670, %v2754
  %v2756 = vpop.f32.mrb[0].mxu0
  %2757 = vdwg.mxu0
  %2758 = vmatprep.subr.mxu0 0.0
  %2759 = vmatpush1.msra.mxu0 %v342
  %2760 = vmatprep.subr.mxu0 0.0
  %2761 = vmatpush1.msra.mxu0 %v343
  %2762 = vmatprep.subr.mxu0 0.0
  %2763 = vmatpush1.msra.mxu0 %v344
  %2764 = vmatprep.subr.mxu0 0.0
  %2765 = vmatpush1.msra.mxu0 %v345
  %2766 = vmatprep.subr.mxu0 0.0
  %2767 = vmatpush1.msra.mxu0 %v346
  %2768 = vmatprep.subr.mxu0 0.0
  %2769 = vmatpush1.msra.mxu0 %v347
  %2770 = vmatprep.subr.mxu0 0.0
  %2771 = vmatpush1.msra.mxu0 %v348
  %2772 = vmatprep.subr.mxu0 0.0
  %2773 = vmatpush1.msra.mxu0 %v349
  %2774 = vmatprep.subr.mxu0 0.0
  %2775 = vmatpush1.msra.mxu0 %v350
  %2776 = vmatprep.subr.mxu0 0.0
  %2777 = vmatpush1.msra.mxu0 %v351
  %2778 = vmatprep.subr.mxu0 0.0
  %2779 = vmatpush1.msra.mxu0 %v352
  %2780 = vmatprep.subr.mxu0 0.0
  %2781 = vmatpush1.msra.mxu0 %v353
  %2782 = vmatprep.subr.mxu0 0.0
  %2783 = vmatpush1.msra.mxu0 %v354
  %2784 = vmatprep.subr.mxu0 0.0
  %2785 = vmatpush1.msra.mxu0 %v355
  %2786 = vmatprep.subr.mxu0 0.0
  %2787 = vmatpush1.msra.mxu0 %v356
  %2788 = vmatprep.subr.mxu0 0.0
  %2789 = vmatpush1.msra.mxu0 %v357
  %2790 = vmatprep.subr.mxu0 0.0
  %2791 = vmatpush1.msra.mxu0 %v358
  %2792 = vmatprep.subr.mxu0 0.0
  %2793 = vmatpush1.msra.mxu0 %v359
  %2794 = vmatprep.subr.mxu0 0.0
  %2795 = vmatpush1.msra.mxu0 %v360
  %2796 = vmatprep.subr.mxu0 0.0
  %2797 = vmatpush1.msra.mxu0 0.0
  %2798 = vmatprep.subr.mxu0 0.0
  %2799 = vmatpush1.msra.mxu0 0.0
  %2800 = vmatprep.subr.mxu0 0.0
  %2801 = vmatpush1.msra.mxu0 0.0
  %2802 = vmatprep.subr.mxu0 0.0
  %2803 = vmatpush1.msra.mxu0 0.0
  %2804 = vmatprep.subr.mxu0 0.0
  %2805 = vmatpush1.msra.mxu0 0.0
  %2806 = vmatprep.subr.mxu0 0.0
  %2807 = vmatpush1.msra.mxu0 0.0
  %2808 = vmatprep.subr.mxu0 0.0
  %2809 = vmatpush1.msra.mxu0 0.0
  %2810 = vmatprep.subr.mxu0 0.0
  %2811 = vmatpush1.msra.mxu0 0.0
  %2812 = vmatprep.subr.mxu0 0.0
  %2813 = vmatpush1.msra.mxu0 0.0
  %2814 = vmatprep.subr.mxu0 0.0
  %2815 = vmatpush1.msra.mxu0 0.0
  %2816 = vmatprep.subr.mxu0 0.0
  %2817 = vmatpush1.msra.mxu0 0.0
  %2818 = vmatprep.subr.mxu0 0.0
  %2819 = vmatpush1.msra.mxu0 0.0
  %2820 = vmatprep.subr.mxu0 0.0
  %2821 = vmatpush1.msra.mxu0 0.0
  %2822 = vmatprep.mubr.f32.mxu0 %v2067
  %2823 = vmatmul.mubr.f32.gmra.mrb[0].mxu0 %v2010
  %v2824 = vpop.f32.mrb[0].mxu0
  %v2825 = vadd.f32 %v2740, %v2824
  %v2826 = vpop.f32.mrb[0].mxu0
  %2827 = vmatprep.mubr.f32.mxu0 %v2070
  %2828 = vmatmul.mubr.f32.gmra.mrb[0].mxu0 %v2028
  %v2829 = vpop.f32.mrb[0].mxu0
  %v2830 = vadd.f32 %v2745, %v2829
  %v2831 = vpop.f32.mrb[0].mxu0
  %2832 = vmatprep.mubr.f32.mxu0 %v2073
  %2833 = vmatmul.mubr.f32.gmra.mrb[0].mxu0 %v2046
  %v2834 = vpop.f32.mrb[0].mxu0
  %v2835 = vadd.f32 %v2750, %v2834
  %v2836 = vpop.f32.mrb[0].mxu0
  %2837 = vmatprep.mubr.f32.mxu0 %v2076
  %2838 = vmatmul.mubr.f32.gmra.mrb[0].mxu0 %v2064
  %v2839 = vpop.f32.mrb[0].mxu0
  %v2840 = vadd.f32 %v2755, %v2839
  %v2841 = vpop.f32.mrb[0].mxu0
  %2842 = vdwg.mxu0
  %v2843 = vmax.f32 %v1989, %v2825
  %v2844 = vmax.f32 %v1990, %v2830
  %v2845 = vmax.f32 %v1991, %v2835
  %v2846 = vmax.f32 %v1992, %v2840
  %s2847 = scalar_lea.vmem %s0, 1728
  %v2848 = vld [vmem:[%s2847] sm:$0xff]
  %v2849 = vld [vmem:[%s2847 + $0x8] sm:$0xff]
  %v2850 = vld [vmem:[%s2847 + $0x10] sm:$0xff]
  %v2851 = vld [vmem:[%s2847 + $0x18] sm:$0xff]
  %v2852 = vld [vmem:[%s2847 + $0x20] sm:$0xff]
  %v2853 = vld [vmem:[%s2847 + $0x28] sm:$0xff]
  %v2854 = vld [vmem:[%s2847 + $0x30] sm:$0xff]
  %v2855 = vld [vmem:[%s2847 + $0x38] sm:$0xff]
  %v2856 = vld [vmem:[%s2847 + $0x40] sm:$0xff]
  %v2857 = vld [vmem:[%s2847 + $0x48] sm:$0xff]
  %v2858 = vld [vmem:[%s2847 + $0x50] sm:$0xff]
  %v2859 = vld [vmem:[%s2847 + $0x58] sm:$0xff]
  %v2860 = vld [vmem:[%s2847 + $0x60] sm:$0xff]
  %v2861 = vld [vmem:[%s2847 + $0x68] sm:$0xff]
  %v2862 = vld [vmem:[%s2847 + $0x70] sm:$0xff]
  %v2863 = vld [vmem:[%s2847 + $0x78] sm:$0xff]
  %v2864 = vld [vmem:[%s2847 + $0x80] sm:$0xff]
  %v2865 = vld [vmem:[%s2847 + $0x88] sm:$0xff]
  %v2866 = vld [vmem:[%s2847 + $0x90] sm:$0xff]
  %v2867 = vld [vmem:[%s2847 + $0x98] sm:$0xff]
  %v2868 = vld [vmem:[%s2847 + $0xa0] sm:$0xff]
  %v2869 = vld [vmem:[%s2847 + $0xa8] sm:$0xff]
  %v2870 = vld [vmem:[%s2847 + $0xb0] sm:$0xff]
  %v2871 = vld [vmem:[%s2847 + $0xb8] sm:$0xff]
  %v2872 = vld [vmem:[%s2847 + $0xc0] sm:$0xff]
  %v2873 = vld [vmem:[%s2847 + $0xc8] sm:$0xff]
  %v2874 = vld [vmem:[%s2847 + $0xd0] sm:$0xff]
  %v2875 = vld [vmem:[%s2847 + $0xd8] sm:$0xff]
  %v2876 = vld [vmem:[%s2847 + $0xe0] sm:$0xff]
  %v2877 = vld [vmem:[%s2847 + $0xe8] sm:$0xff]
  %v2878 = vld [vmem:[%s2847 + $0xf0] sm:$0xff]
  %v2879 = vld [vmem:[%s2847 + $0xf8] sm:$0xff]
  %v2880 = vld [vmem:[%s2847 + $0x100] sm:$0xff]
  %v2881 = vld [vmem:[%s2847 + $0x108] sm:$0xff]
  %v2882 = vld [vmem:[%s2847 + $0x110] sm:$0xff]
  %v2883 = vld [vmem:[%s2847 + $0x118] sm:$0xff]
  %v2884 = vld [vmem:[%s2847 + $0x120] sm:$0xff]
  %v2885 = vld [vmem:[%s2847 + $0x128] sm:$0xff]
  %v2886 = vld [vmem:[%s2847 + $0x130] sm:$0xff]
  %v2887 = vld [vmem:[%s2847 + $0x138] sm:$0xff]
  %v2888 = vld [vmem:[%s2847 + $0x140] sm:$0xff]
  %v2889 = vld [vmem:[%s2847 + $0x148] sm:$0xff]
  %v2890 = vld [vmem:[%s2847 + $0x150] sm:$0xff]
  %v2891 = vld [vmem:[%s2847 + $0x158] sm:$0xff]
  %v2892 = vld [vmem:[%s2847 + $0x160] sm:$0xff]
  %v2893 = vld [vmem:[%s2847 + $0x168] sm:$0xff]
  %v2894 = vld [vmem:[%s2847 + $0x170] sm:$0xff]
  %v2895 = vld [vmem:[%s2847 + $0x178] sm:$0xff]
  %v2896 = vld [vmem:[%s2847 + $0x180] sm:$0xff]
  %v2897 = vld [vmem:[%s2847 + $0x188] sm:$0xff]
  %v2898 = vld [vmem:[%s2847 + $0x190] sm:$0xff]
  %v2899 = vld [vmem:[%s2847 + $0x198] sm:$0xff]
  %v2900 = vld [vmem:[%s2847 + $0x1a0] sm:$0xff]
  %v2901 = vld [vmem:[%s2847 + $0x1a8] sm:$0xff]
  %v2902 = vld [vmem:[%s2847 + $0x1b0] sm:$0xff]
  %v2903 = vld [vmem:[%s2847 + $0x1b8] sm:$0xff]
  %v2904 = vld [vmem:[%s2847 + $0x1c0] sm:$0xff]
  %v2905 = vld [vmem:[%s2847 + $0x1c8] sm:$0xff]
  %v2906 = vld [vmem:[%s2847 + $0x1d0] sm:$0xff]
  %v2907 = vld [vmem:[%s2847 + $0x1d8] sm:$0xff]
  %v2908 = vld [vmem:[%s2847 + $0x1e0] sm:$0xff]
  %v2909 = vld [vmem:[%s2847 + $0x1e8] sm:$0xff]
  %v2910 = vld [vmem:[%s2847 + $0x1f0] sm:$0xff]
  %v2911 = vld [vmem:[%s2847 + $0x1f8] sm:$0xff]
  %v2912 = vld [vmem:[%s2847 + $0x200] sm:$0xff]
  %v2913 = vld [vmem:[%s2847 + $0x208] sm:$0xff]
  %v2914 = vld [vmem:[%s2847 + $0x210] sm:$0xff]
  %v2915 = vld [vmem:[%s2847 + $0x218] sm:$0xff]
  %v2916 = vld [vmem:[%s2847 + $0x220] sm:$0xff]
  %v2917 = vld [vmem:[%s2847 + $0x228] sm:$0xff]
  %v2918 = vld [vmem:[%s2847 + $0x230] sm:$0xff]
  %v2919 = vld [vmem:[%s2847 + $0x238] sm:$0xff]
  %v2921 = vsel %vm361, %v2865, 0
  %v2924 = vsel %vm361, %v2883, 0
  %v2927 = vsel %vm361, %v2901, 0
  %v2930 = vsel %vm361, %v2919, 0
  %2932 = vmatprep.subr.mxu0 0.0
  %2933 = vmatpush1.msra.mxu0 %v86
  %2934 = vmatprep.subr.mxu0 0.0
  %2935 = vmatpush1.msra.mxu0 %v87
  %2936 = vmatprep.subr.mxu0 0.0
  %2937 = vmatpush1.msra.mxu0 %v88
  %2938 = vmatprep.subr.mxu0 0.0
  %2939 = vmatpush1.msra.mxu0 %v89
  %2940 = vmatprep.subr.mxu0 0.0
  %2941 = vmatpush1.msra.mxu0 %v90
  %2942 = vmatprep.subr.mxu0 0.0
  %2943 = vmatpush1.msra.mxu0 %v91
  %2944 = vmatprep.subr.mxu0 0.0
  %2945 = vmatpush1.msra.mxu0 %v92
  %2946 = vmatprep.subr.mxu0 0.0
  %2947 = vmatpush1.msra.mxu0 %v93
  %2948 = vmatprep.subr.mxu0 0.0
  %2949 = vmatpush1.msra.mxu0 %v94
  %2950 = vmatprep.subr.mxu0 0.0
  %2951 = vmatpush1.msra.mxu0 %v95
  %2952 = vmatprep.subr.mxu0 0.0
  %2953 = vmatpush1.msra.mxu0 %v96
  %2954 = vmatprep.subr.mxu0 0.0
  %2955 = vmatpush1.msra.mxu0 %v97
  %2956 = vmatprep.subr.mxu0 0.0
  %2957 = vmatpush1.msra.mxu0 %v98
  %2958 = vmatprep.subr.mxu0 0.0
  %2959 = vmatpush1.msra.mxu0 %v99
  %2960 = vmatprep.subr.mxu0 0.0
  %2961 = vmatpush1.msra.mxu0 %v100
  %2962 = vmatprep.subr.mxu0 0.0
  %2963 = vmatpush1.msra.mxu0 %v101
  %2964 = vmatprep.subr.mxu0 0.0
  %2965 = vmatpush1.msra.mxu0 %v102
  %2966 = vmatprep.subr.mxu0 0.0
  %2967 = vmatpush1.msra.mxu0 %v103
  %2968 = vmatprep.subr.mxu0 0.0
  %2969 = vmatpush1.msra.mxu0 %v104
  %2970 = vmatprep.subr.mxu0 0.0
  %2971 = vmatpush1.msra.mxu0 %v105
  %2972 = vmatprep.subr.mxu0 0.0
  %2973 = vmatpush1.msra.mxu0 %v106
  %2974 = vmatprep.subr.mxu0 0.0
  %2975 = vmatpush1.msra.mxu0 %v107
  %2976 = vmatprep.subr.mxu0 0.0
  %2977 = vmatpush1.msra.mxu0 %v108
  %2978 = vmatprep.subr.mxu0 0.0
  %2979 = vmatpush1.msra.mxu0 %v109
  %2980 = vmatprep.subr.mxu0 0.0
  %2981 = vmatpush1.msra.mxu0 %v110
  %2982 = vmatprep.subr.mxu0 0.0
  %2983 = vmatpush1.msra.mxu0 %v111
  %2984 = vmatprep.subr.mxu0 0.0
  %2985 = vmatpush1.msra.mxu0 %v112
  %2986 = vmatprep.subr.mxu0 0.0
  %2987 = vmatpush1.msra.mxu0 %v113
  %2988 = vmatprep.subr.mxu0 0.0
  %2989 = vmatpush1.msra.mxu0 %v114
  %2990 = vmatprep.subr.mxu0 0.0
  %2991 = vmatpush1.msra.mxu0 %v115
  %2992 = vmatprep.subr.mxu0 0.0
  %2993 = vmatpush1.msra.mxu0 %v116
  %2994 = vmatprep.subr.mxu0 0.0
  %2995 = vmatpush1.msra.mxu0 %v117
  %2996 = vmatprep.mubr.f32.mxu0 %v2849
  %2997 = vmatmul.mubr.f32.gmra.mrb[0].mxu0 %v2848
  %v2998 = vpop.f32.mrb[0].mxu0
  %v2999 = vadd.f32 0.0, %v2998
  %v3000 = vpop.f32.mrb[0].mxu0
  %3001 = vmatprep.mubr.f32.mxu0 %v2867
  %3002 = vmatmul.mubr.f32.gmra.mrb[0].mxu0 %v2866
  %v3003 = vpop.f32.mrb[0].mxu0
  %v3004 = vadd.f32 0.0, %v3003
  %v3005 = vpop.f32.mrb[0].mxu0
  %3006 = vmatprep.mubr.f32.mxu0 %v2885
  %3007 = vmatmul.mubr.f32.gmra.mrb[0].mxu0 %v2884
  %v3008 = vpop.f32.mrb[0].mxu0
  %v3009 = vadd.f32 0.0, %v3008
  %v3010 = vpop.f32.mrb[0].mxu0
  %3011 = vmatprep.mubr.f32.mxu0 %v2903
  %3012 = vmatmul.mubr.f32.gmra.mrb[0].mxu0 %v2902
  %v3013 = vpop.f32.mrb[0].mxu0
  %v3014 = vadd.f32 0.0, %v3013
  %v3015 = vpop.f32.mrb[0].mxu0
  %3016 = vdwg.mxu0
  %3017 = vmatprep.subr.mxu0 0.0
  %3018 = vmatpush1.msra.mxu0 %v118
  %3019 = vmatprep.subr.mxu0 0.0
  %3020 = vmatpush1.msra.mxu0 %v119
  %3021 = vmatprep.subr.mxu0 0.0
  %3022 = vmatpush1.msra.mxu0 %v120
  %3023 = vmatprep.subr.mxu0 0.0
  %3024 = vmatpush1.msra.mxu0 %v121
  %3025 = vmatprep.subr.mxu0 0.0
  %3026 = vmatpush1.msra.mxu0 %v122
  %3027 = vmatprep.subr.mxu0 0.0
  %3028 = vmatpush1.msra.mxu0 %v123
  %3029 = vmatprep.subr.mxu0 0.0
  %3030 = vmatpush1.msra.mxu0 %v124
  %3031 = vmatprep.subr.mxu0 0.0
  %3032 = vmatpush1.msra.mxu0 %v125
  %3033 = vmatprep.subr.mxu0 0.0
  %3034 = vmatpush1.msra.mxu0 %v126
  %3035 = vmatprep.subr.mxu0 0.0
  %3036 = vmatpush1.msra.mxu0 %v127
  %3037 = vmatprep.subr.mxu0 0.0
  %3038 = vmatpush1.msra.mxu0 %v128
  %3039 = vmatprep.subr.mxu0 0.0
  %3040 = vmatpush1.msra.mxu0 %v129
  %3041 = vmatprep.subr.mxu0 0.0
  %3042 = vmatpush1.msra.mxu0 %v130
  %3043 = vmatprep.subr.mxu0 0.0
  %3044 = vmatpush1.msra.mxu0 %v131
  %3045 = vmatprep.subr.mxu0 0.0
  %3046 = vmatpush1.msra.mxu0 %v132
  %3047 = vmatprep.subr.mxu0 0.0
  %3048 = vmatpush1.msra.mxu0 %v133
  %3049 = vmatprep.subr.mxu0 0.0
  %3050 = vmatpush1.msra.mxu0 %v134
  %3051 = vmatprep.subr.mxu0 0.0
  %3052 = vmatpush1.msra.mxu0 %v135
  %3053 = vmatprep.subr.mxu0 0.0
  %3054 = vmatpush1.msra.mxu0 %v136
  %3055 = vmatprep.subr.mxu0 0.0
  %3056 = vmatpush1.msra.mxu0 %v137
  %3057 = vmatprep.subr.mxu0 0.0
  %3058 = vmatpush1.msra.mxu0 %v138
  %3059 = vmatprep.subr.mxu0 0.0
  %3060 = vmatpush1.msra.mxu0 %v139
  %3061 = vmatprep.subr.mxu0 0.0
  %3062 = vmatpush1.msra.mxu0 %v140
  %3063 = vmatprep.subr.mxu0 0.0
  %3064 = vmatpush1.msra.mxu0 %v141
  %3065 = vmatprep.subr.mxu0 0.0
  %3066 = vmatpush1.msra.mxu0 %v142
  %3067 = vmatprep.subr.mxu0 0.0
  %3068 = vmatpush1.msra.mxu0 %v143
  %3069 = vmatprep.subr.mxu0 0.0
  %3070 = vmatpush1.msra.mxu0 %v144
  %3071 = vmatprep.subr.mxu0 0.0
  %3072 = vmatpush1.msra.mxu0 %v145
  %3073 = vmatprep.subr.mxu0 0.0
  %3074 = vmatpush1.msra.mxu0 %v146
  %3075 = vmatprep.subr.mxu0 0.0
  %3076 = vmatpush1.msra.mxu0 %v147
  %3077 = vmatprep.subr.mxu0 0.0
  %3078 = vmatpush1.msra.mxu0 %v148
  %3079 = vmatprep.subr.mxu0 0.0
  %3080 = vmatpush1.msra.mxu0 %v149
  %3081 = vmatprep.mubr.f32.mxu0 %v2851
  %3082 = vmatmul.mubr.f32.gmra.mrb[0].mxu0 %v2850
  %v3083 = vpop.f32.mrb[0].mxu0
  %v3084 = vadd.f32 %v2999, %v3083
  %v3085 = vpop.f32.mrb[0].mxu0
  %3086 = vmatprep.mubr.f32.mxu0 %v2869
  %3087 = vmatmul.mubr.f32.gmra.mrb[0].mxu0 %v2868
  %v3088 = vpop.f32.mrb[0].mxu0
  %v3089 = vadd.f32 %v3004, %v3088
  %v3090 = vpop.f32.mrb[0].mxu0
  %3091 = vmatprep.mubr.f32.mxu0 %v2887
  %3092 = vmatmul.mubr.f32.gmra.mrb[0].mxu0 %v2886
  %v3093 = vpop.f32.mrb[0].mxu0
  %v3094 = vadd.f32 %v3009, %v3093
  %v3095 = vpop.f32.mrb[0].mxu0
  %3096 = vmatprep.mubr.f32.mxu0 %v2905
  %3097 = vmatmul.mubr.f32.gmra.mrb[0].mxu0 %v2904
  %v3098 = vpop.f32.mrb[0].mxu0
  %v3099 = vadd.f32 %v3014, %v3098
  %v3100 = vpop.f32.mrb[0].mxu0
  %3101 = vdwg.mxu0
  %3102 = vmatprep.subr.mxu0 0.0
  %3103 = vmatpush1.msra.mxu0 %v150
  %3104 = vmatprep.subr.mxu0 0.0
  %3105 = vmatpush1.msra.mxu0 %v151
  %3106 = vmatprep.subr.mxu0 0.0
  %3107 = vmatpush1.msra.mxu0 %v152
  %3108 = vmatprep.subr.mxu0 0.0
  %3109 = vmatpush1.msra.mxu0 %v153
  %3110 = vmatprep.subr.mxu0 0.0
  %3111 = vmatpush1.msra.mxu0 %v154
  %3112 = vmatprep.subr.mxu0 0.0
  %3113 = vmatpush1.msra.mxu0 %v155
  %3114 = vmatprep.subr.mxu0 0.0
  %3115 = vmatpush1.msra.mxu0 %v156
  %3116 = vmatprep.subr.mxu0 0.0
  %3117 = vmatpush1.msra.mxu0 %v157
  %3118 = vmatprep.subr.mxu0 0.0
  %3119 = vmatpush1.msra.mxu0 %v158
  %3120 = vmatprep.subr.mxu0 0.0
  %3121 = vmatpush1.msra.mxu0 %v159
  %3122 = vmatprep.subr.mxu0 0.0
  %3123 = vmatpush1.msra.mxu0 %v160
  %3124 = vmatprep.subr.mxu0 0.0
  %3125 = vmatpush1.msra.mxu0 %v161
  %3126 = vmatprep.subr.mxu0 0.0
  %3127 = vmatpush1.msra.mxu0 %v162
  %3128 = vmatprep.subr.mxu0 0.0
  %3129 = vmatpush1.msra.mxu0 %v163
  %3130 = vmatprep.subr.mxu0 0.0
  %3131 = vmatpush1.msra.mxu0 %v164
  %3132 = vmatprep.subr.mxu0 0.0
  %3133 = vmatpush1.msra.mxu0 %v165
  %3134 = vmatprep.subr.mxu0 0.0
  %3135 = vmatpush1.msra.mxu0 %v166
  %3136 = vmatprep.subr.mxu0 0.0
  %3137 = vmatpush1.msra.mxu0 %v167
  %3138 = vmatprep.subr.mxu0 0.0
  %3139 = vmatpush1.msra.mxu0 %v168
  %3140 = vmatprep.subr.mxu0 0.0
  %3141 = vmatpush1.msra.mxu0 %v169
  %3142 = vmatprep.subr.mxu0 0.0
  %3143 = vmatpush1.msra.mxu0 %v170
  %3144 = vmatprep.subr.mxu0 0.0
  %3145 = vmatpush1.msra.mxu0 %v171
  %3146 = vmatprep.subr.mxu0 0.0
  %3147 = vmatpush1.msra.mxu0 %v172
  %3148 = vmatprep.subr.mxu0 0.0
  %3149 = vmatpush1.msra.mxu0 %v173
  %3150 = vmatprep.subr.mxu0 0.0
  %3151 = vmatpush1.msra.mxu0 %v174
  %3152 = vmatprep.subr.mxu0 0.0
  %3153 = vmatpush1.msra.mxu0 %v175
  %3154 = vmatprep.subr.mxu0 0.0
  %3155 = vmatpush1.msra.mxu0 %v176
  %3156 = vmatprep.subr.mxu0 0.0
  %3157 = vmatpush1.msra.mxu0 %v177
  %3158 = vmatprep.subr.mxu0 0.0
  %3159 = vmatpush1.msra.mxu0 %v178
  %3160 = vmatprep.subr.mxu0 0.0
  %3161 = vmatpush1.msra.mxu0 %v179
  %3162 = vmatprep.subr.mxu0 0.0
  %3163 = vmatpush1.msra.mxu0 %v180
  %3164 = vmatprep.subr.mxu0 0.0
  %3165 = vmatpush1.msra.mxu0 %v181
  %3166 = vmatprep.mubr.f32.mxu0 %v2853
  %3167 = vmatmul.mubr.f32.gmra.mrb[0].mxu0 %v2852
  %v3168 = vpop.f32.mrb[0].mxu0
  %v3169 = vadd.f32 %v3084, %v3168
  %v3170 = vpop.f32.mrb[0].mxu0
  %3171 = vmatprep.mubr.f32.mxu0 %v2871
  %3172 = vmatmul.mubr.f32.gmra.mrb[0].mxu0 %v2870
  %v3173 = vpop.f32.mrb[0].mxu0
  %v3174 = vadd.f32 %v3089, %v3173
  %v3175 = vpop.f32.mrb[0].mxu0
  %3176 = vmatprep.mubr.f32.mxu0 %v2889
  %3177 = vmatmul.mubr.f32.gmra.mrb[0].mxu0 %v2888
  %v3178 = vpop.f32.mrb[0].mxu0
  %v3179 = vadd.f32 %v3094, %v3178
  %v3180 = vpop.f32.mrb[0].mxu0
  %3181 = vmatprep.mubr.f32.mxu0 %v2907
  %3182 = vmatmul.mubr.f32.gmra.mrb[0].mxu0 %v2906
  %v3183 = vpop.f32.mrb[0].mxu0
  %v3184 = vadd.f32 %v3099, %v3183
  %v3185 = vpop.f32.mrb[0].mxu0
  %3186 = vdwg.mxu0
  %3187 = vmatprep.subr.mxu0 0.0
  %3188 = vmatpush1.msra.mxu0 %v182
  %3189 = vmatprep.subr.mxu0 0.0
  %3190 = vmatpush1.msra.mxu0 %v183
  %3191 = vmatprep.subr.mxu0 0.0
  %3192 = vmatpush1.msra.mxu0 %v184
  %3193 = vmatprep.subr.mxu0 0.0
  %3194 = vmatpush1.msra.mxu0 %v185
  %3195 = vmatprep.subr.mxu0 0.0
  %3196 = vmatpush1.msra.mxu0 %v186
  %3197 = vmatprep.subr.mxu0 0.0
  %3198 = vmatpush1.msra.mxu0 %v187
  %3199 = vmatprep.subr.mxu0 0.0
  %3200 = vmatpush1.msra.mxu0 %v188
  %3201 = vmatprep.subr.mxu0 0.0
  %3202 = vmatpush1.msra.mxu0 %v189
  %3203 = vmatprep.subr.mxu0 0.0
  %3204 = vmatpush1.msra.mxu0 %v190
  %3205 = vmatprep.subr.mxu0 0.0
  %3206 = vmatpush1.msra.mxu0 %v191
  %3207 = vmatprep.subr.mxu0 0.0
  %3208 = vmatpush1.msra.mxu0 %v192
  %3209 = vmatprep.subr.mxu0 0.0
  %3210 = vmatpush1.msra.mxu0 %v193
  %3211 = vmatprep.subr.mxu0 0.0
  %3212 = vmatpush1.msra.mxu0 %v194
  %3213 = vmatprep.subr.mxu0 0.0
  %3214 = vmatpush1.msra.mxu0 %v195
  %3215 = vmatprep.subr.mxu0 0.0
  %3216 = vmatpush1.msra.mxu0 %v196
  %3217 = vmatprep.subr.mxu0 0.0
  %3218 = vmatpush1.msra.mxu0 %v197
  %3219 = vmatprep.subr.mxu0 0.0
  %3220 = vmatpush1.msra.mxu0 %v198
  %3221 = vmatprep.subr.mxu0 0.0
  %3222 = vmatpush1.msra.mxu0 %v199
  %3223 = vmatprep.subr.mxu0 0.0
  %3224 = vmatpush1.msra.mxu0 %v200
  %3225 = vmatprep.subr.mxu0 0.0
  %3226 = vmatpush1.msra.mxu0 %v201
  %3227 = vmatprep.subr.mxu0 0.0
  %3228 = vmatpush1.msra.mxu0 %v202
  %3229 = vmatprep.subr.mxu0 0.0
  %3230 = vmatpush1.msra.mxu0 %v203
  %3231 = vmatprep.subr.mxu0 0.0
  %3232 = vmatpush1.msra.mxu0 %v204
  %3233 = vmatprep.subr.mxu0 0.0
  %3234 = vmatpush1.msra.mxu0 %v205
  %3235 = vmatprep.subr.mxu0 0.0
  %3236 = vmatpush1.msra.mxu0 %v206
  %3237 = vmatprep.subr.mxu0 0.0
  %3238 = vmatpush1.msra.mxu0 %v207
  %3239 = vmatprep.subr.mxu0 0.0
  %3240 = vmatpush1.msra.mxu0 %v208
  %3241 = vmatprep.subr.mxu0 0.0
  %3242 = vmatpush1.msra.mxu0 %v209
  %3243 = vmatprep.subr.mxu0 0.0
  %3244 = vmatpush1.msra.mxu0 %v210
  %3245 = vmatprep.subr.mxu0 0.0
  %3246 = vmatpush1.msra.mxu0 %v211
  %3247 = vmatprep.subr.mxu0 0.0
  %3248 = vmatpush1.msra.mxu0 %v212
  %3249 = vmatprep.subr.mxu0 0.0
  %3250 = vmatpush1.msra.mxu0 %v213
  %3251 = vmatprep.mubr.f32.mxu0 %v2855
  %3252 = vmatmul.mubr.f32.gmra.mrb[0].mxu0 %v2854
  %v3253 = vpop.f32.mrb[0].mxu0
  %v3254 = vadd.f32 %v3169, %v3253
  %v3255 = vpop.f32.mrb[0].mxu0
  %3256 = vmatprep.mubr.f32.mxu0 %v2873
  %3257 = vmatmul.mubr.f32.gmra.mrb[0].mxu0 %v2872
  %v3258 = vpop.f32.mrb[0].mxu0
  %v3259 = vadd.f32 %v3174, %v3258
  %v3260 = vpop.f32.mrb[0].mxu0
  %3261 = vmatprep.mubr.f32.mxu0 %v2891
  %3262 = vmatmul.mubr.f32.gmra.mrb[0].mxu0 %v2890
  %v3263 = vpop.f32.mrb[0].mxu0
  %v3264 = vadd.f32 %v3179, %v3263
  %v3265 = vpop.f32.mrb[0].mxu0
  %3266 = vmatprep.mubr.f32.mxu0 %v2909
  %3267 = vmatmul.mubr.f32.gmra.mrb[0].mxu0 %v2908
  %v3268 = vpop.f32.mrb[0].mxu0
  %v3269 = vadd.f32 %v3184, %v3268
  %v3270 = vpop.f32.mrb[0].mxu0
  %3271 = vdwg.mxu0
  %3272 = vmatprep.subr.mxu0 0.0
  %3273 = vmatpush1.msra.mxu0 %v214
  %3274 = vmatprep.subr.mxu0 0.0
  %3275 = vmatpush1.msra.mxu0 %v215
  %3276 = vmatprep.subr.mxu0 0.0
  %3277 = vmatpush1.msra.mxu0 %v216
  %3278 = vmatprep.subr.mxu0 0.0
  %3279 = vmatpush1.msra.mxu0 %v217
  %3280 = vmatprep.subr.mxu0 0.0
  %3281 = vmatpush1.msra.mxu0 %v218
  %3282 = vmatprep.subr.mxu0 0.0
  %3283 = vmatpush1.msra.mxu0 %v219
  %3284 = vmatprep.subr.mxu0 0.0
  %3285 = vmatpush1.msra.mxu0 %v220
  %3286 = vmatprep.subr.mxu0 0.0
  %3287 = vmatpush1.msra.mxu0 %v221
  %3288 = vmatprep.subr.mxu0 0.0
  %3289 = vmatpush1.msra.mxu0 %v222
  %3290 = vmatprep.subr.mxu0 0.0
  %3291 = vmatpush1.msra.mxu0 %v223
  %3292 = vmatprep.subr.mxu0 0.0
  %3293 = vmatpush1.msra.mxu0 %v224
  %3294 = vmatprep.subr.mxu0 0.0
  %3295 = vmatpush1.msra.mxu0 %v225
  %3296 = vmatprep.subr.mxu0 0.0
  %3297 = vmatpush1.msra.mxu0 %v226
  %3298 = vmatprep.subr.mxu0 0.0
  %3299 = vmatpush1.msra.mxu0 %v227
  %3300 = vmatprep.subr.mxu0 0.0
  %3301 = vmatpush1.msra.mxu0 %v228
  %3302 = vmatprep.subr.mxu0 0.0
  %3303 = vmatpush1.msra.mxu0 %v229
  %3304 = vmatprep.subr.mxu0 0.0
  %3305 = vmatpush1.msra.mxu0 %v230
  %3306 = vmatprep.subr.mxu0 0.0
  %3307 = vmatpush1.msra.mxu0 %v231
  %3308 = vmatprep.subr.mxu0 0.0
  %3309 = vmatpush1.msra.mxu0 %v232
  %3310 = vmatprep.subr.mxu0 0.0
  %3311 = vmatpush1.msra.mxu0 %v233
  %3312 = vmatprep.subr.mxu0 0.0
  %3313 = vmatpush1.msra.mxu0 %v234
  %3314 = vmatprep.subr.mxu0 0.0
  %3315 = vmatpush1.msra.mxu0 %v235
  %3316 = vmatprep.subr.mxu0 0.0
  %3317 = vmatpush1.msra.mxu0 %v236
  %3318 = vmatprep.subr.mxu0 0.0
  %3319 = vmatpush1.msra.mxu0 %v237
  %3320 = vmatprep.subr.mxu0 0.0
  %3321 = vmatpush1.msra.mxu0 %v238
  %3322 = vmatprep.subr.mxu0 0.0
  %3323 = vmatpush1.msra.mxu0 %v239
  %3324 = vmatprep.subr.mxu0 0.0
  %3325 = vmatpush1.msra.mxu0 %v240
  %3326 = vmatprep.subr.mxu0 0.0
  %3327 = vmatpush1.msra.mxu0 %v241
  %3328 = vmatprep.subr.mxu0 0.0
  %3329 = vmatpush1.msra.mxu0 %v242
  %3330 = vmatprep.subr.mxu0 0.0
  %3331 = vmatpush1.msra.mxu0 %v243
  %3332 = vmatprep.subr.mxu0 0.0
  %3333 = vmatpush1.msra.mxu0 %v244
  %3334 = vmatprep.subr.mxu0 0.0
  %3335 = vmatpush1.msra.mxu0 %v245
  %3336 = vmatprep.mubr.f32.mxu0 %v2857
  %3337 = vmatmul.mubr.f32.gmra.mrb[0].mxu0 %v2856
  %v3338 = vpop.f32.mrb[0].mxu0
  %v3339 = vadd.f32 %v3254, %v3338
  %v3340 = vpop.f32.mrb[0].mxu0
  %3341 = vmatprep.mubr.f32.mxu0 %v2875
  %3342 = vmatmul.mubr.f32.gmra.mrb[0].mxu0 %v2874
  %v3343 = vpop.f32.mrb[0].mxu0
  %v3344 = vadd.f32 %v3259, %v3343
  %v3345 = vpop.f32.mrb[0].mxu0
  %3346 = vmatprep.mubr.f32.mxu0 %v2893
  %3347 = vmatmul.mubr.f32.gmra.mrb[0].mxu0 %v2892
  %v3348 = vpop.f32.mrb[0].mxu0
  %v3349 = vadd.f32 %v3264, %v3348
  %v3350 = vpop.f32.mrb[0].mxu0
  %3351 = vmatprep.mubr.f32.mxu0 %v2911
  %3352 = vmatmul.mubr.f32.gmra.mrb[0].mxu0 %v2910
  %v3353 = vpop.f32.mrb[0].mxu0
  %v3354 = vadd.f32 %v3269, %v3353
  %v3355 = vpop.f32.mrb[0].mxu0
  %3356 = vdwg.mxu0
  %3357 = vmatprep.subr.mxu0 0.0
  %3358 = vmatpush1.msra.mxu0 %v246
  %3359 = vmatprep.subr.mxu0 0.0
  %3360 = vmatpush1.msra.mxu0 %v247
  %3361 = vmatprep.subr.mxu0 0.0
  %3362 = vmatpush1.msra.mxu0 %v248
  %3363 = vmatprep.subr.mxu0 0.0
  %3364 = vmatpush1.msra.mxu0 %v249
  %3365 = vmatprep.subr.mxu0 0.0
  %3366 = vmatpush1.msra.mxu0 %v250
  %3367 = vmatprep.subr.mxu0 0.0
  %3368 = vmatpush1.msra.mxu0 %v251
  %3369 = vmatprep.subr.mxu0 0.0
  %3370 = vmatpush1.msra.mxu0 %v252
  %3371 = vmatprep.subr.mxu0 0.0
  %3372 = vmatpush1.msra.mxu0 %v253
  %3373 = vmatprep.subr.mxu0 0.0
  %3374 = vmatpush1.msra.mxu0 %v254
  %3375 = vmatprep.subr.mxu0 0.0
  %3376 = vmatpush1.msra.mxu0 %v255
  %3377 = vmatprep.subr.mxu0 0.0
  %3378 = vmatpush1.msra.mxu0 %v256
  %3379 = vmatprep.subr.mxu0 0.0
  %3380 = vmatpush1.msra.mxu0 %v257
  %3381 = vmatprep.subr.mxu0 0.0
  %3382 = vmatpush1.msra.mxu0 %v258
  %3383 = vmatprep.subr.mxu0 0.0
  %3384 = vmatpush1.msra.mxu0 %v259
  %3385 = vmatprep.subr.mxu0 0.0
  %3386 = vmatpush1.msra.mxu0 %v260
  %3387 = vmatprep.subr.mxu0 0.0
  %3388 = vmatpush1.msra.mxu0 %v261
  %3389 = vmatprep.subr.mxu0 0.0
  %3390 = vmatpush1.msra.mxu0 %v262
  %3391 = vmatprep.subr.mxu0 0.0
  %3392 = vmatpush1.msra.mxu0 %v263
  %3393 = vmatprep.subr.mxu0 0.0
  %3394 = vmatpush1.msra.mxu0 %v264
  %3395 = vmatprep.subr.mxu0 0.0
  %3396 = vmatpush1.msra.mxu0 %v265
  %3397 = vmatprep.subr.mxu0 0.0
  %3398 = vmatpush1.msra.mxu0 %v266
  %3399 = vmatprep.subr.mxu0 0.0
  %3400 = vmatpush1.msra.mxu0 %v267
  %3401 = vmatprep.subr.mxu0 0.0
  %3402 = vmatpush1.msra.mxu0 %v268
  %3403 = vmatprep.subr.mxu0 0.0
  %3404 = vmatpush1.msra.mxu0 %v269
  %3405 = vmatprep.subr.mxu0 0.0
  %3406 = vmatpush1.msra.mxu0 %v270
  %3407 = vmatprep.subr.mxu0 0.0
  %3408 = vmatpush1.msra.mxu0 %v271
  %3409 = vmatprep.subr.mxu0 0.0
  %3410 = vmatpush1.msra.mxu0 %v272
  %3411 = vmatprep.subr.mxu0 0.0
  %3412 = vmatpush1.msra.mxu0 %v273
  %3413 = vmatprep.subr.mxu0 0.0
  %3414 = vmatpush1.msra.mxu0 %v274
  %3415 = vmatprep.subr.mxu0 0.0
  %3416 = vmatpush1.msra.mxu0 %v275
  %3417 = vmatprep.subr.mxu0 0.0
  %3418 = vmatpush1.msra.mxu0 %v276
  %3419 = vmatprep.subr.mxu0 0.0
  %3420 = vmatpush1.msra.mxu0 %v277
  %3421 = vmatprep.mubr.f32.mxu0 %v2859
  %3422 = vmatmul.mubr.f32.gmra.mrb[0].mxu0 %v2858
  %v3423 = vpop.f32.mrb[0].mxu0
  %v3424 = vadd.f32 %v3339, %v3423
  %v3425 = vpop.f32.mrb[0].mxu0
  %3426 = vmatprep.mubr.f32.mxu0 %v2877
  %3427 = vmatmul.mubr.f32.gmra.mrb[0].mxu0 %v2876
  %v3428 = vpop.f32.mrb[0].mxu0
  %v3429 = vadd.f32 %v3344, %v3428
  %v3430 = vpop.f32.mrb[0].mxu0
  %3431 = vmatprep.mubr.f32.mxu0 %v2895
  %3432 = vmatmul.mubr.f32.gmra.mrb[0].mxu0 %v2894
  %v3433 = vpop.f32.mrb[0].mxu0
  %v3434 = vadd.f32 %v3349, %v3433
  %v3435 = vpop.f32.mrb[0].mxu0
  %3436 = vmatprep.mubr.f32.mxu0 %v2913
  %3437 = vmatmul.mubr.f32.gmra.mrb[0].mxu0 %v2912
  %v3438 = vpop.f32.mrb[0].mxu0
  %v3439 = vadd.f32 %v3354, %v3438
  %v3440 = vpop.f32.mrb[0].mxu0
  %3441 = vdwg.mxu0
  %3442 = vmatprep.subr.mxu0 0.0
  %3443 = vmatpush1.msra.mxu0 %v278
  %3444 = vmatprep.subr.mxu0 0.0
  %3445 = vmatpush1.msra.mxu0 %v279
  %3446 = vmatprep.subr.mxu0 0.0
  %3447 = vmatpush1.msra.mxu0 %v280
  %3448 = vmatprep.subr.mxu0 0.0
  %3449 = vmatpush1.msra.mxu0 %v281
  %3450 = vmatprep.subr.mxu0 0.0
  %3451 = vmatpush1.msra.mxu0 %v282
  %3452 = vmatprep.subr.mxu0 0.0
  %3453 = vmatpush1.msra.mxu0 %v283
  %3454 = vmatprep.subr.mxu0 0.0
  %3455 = vmatpush1.msra.mxu0 %v284
  %3456 = vmatprep.subr.mxu0 0.0
  %3457 = vmatpush1.msra.mxu0 %v285
  %3458 = vmatprep.subr.mxu0 0.0
  %3459 = vmatpush1.msra.mxu0 %v286
  %3460 = vmatprep.subr.mxu0 0.0
  %3461 = vmatpush1.msra.mxu0 %v287
  %3462 = vmatprep.subr.mxu0 0.0
  %3463 = vmatpush1.msra.mxu0 %v288
  %3464 = vmatprep.subr.mxu0 0.0
  %3465 = vmatpush1.msra.mxu0 %v289
  %3466 = vmatprep.subr.mxu0 0.0
  %3467 = vmatpush1.msra.mxu0 %v290
  %3468 = vmatprep.subr.mxu0 0.0
  %3469 = vmatpush1.msra.mxu0 %v291
  %3470 = vmatprep.subr.mxu0 0.0
  %3471 = vmatpush1.msra.mxu0 %v292
  %3472 = vmatprep.subr.mxu0 0.0
  %3473 = vmatpush1.msra.mxu0 %v293
  %3474 = vmatprep.subr.mxu0 0.0
  %3475 = vmatpush1.msra.mxu0 %v294
  %3476 = vmatprep.subr.mxu0 0.0
  %3477 = vmatpush1.msra.mxu0 %v295
  %3478 = vmatprep.subr.mxu0 0.0
  %3479 = vmatpush1.msra.mxu0 %v296
  %3480 = vmatprep.subr.mxu0 0.0
  %3481 = vmatpush1.msra.mxu0 %v297
  %3482 = vmatprep.subr.mxu0 0.0
  %3483 = vmatpush1.msra.mxu0 %v298
  %3484 = vmatprep.subr.mxu0 0.0
  %3485 = vmatpush1.msra.mxu0 %v299
  %3486 = vmatprep.subr.mxu0 0.0
  %3487 = vmatpush1.msra.mxu0 %v300
  %3488 = vmatprep.subr.mxu0 0.0
  %3489 = vmatpush1.msra.mxu0 %v301
  %3490 = vmatprep.subr.mxu0 0.0
  %3491 = vmatpush1.msra.mxu0 %v302
  %3492 = vmatprep.subr.mxu0 0.0
  %3493 = vmatpush1.msra.mxu0 %v303
  %3494 = vmatprep.subr.mxu0 0.0
  %3495 = vmatpush1.msra.mxu0 %v304
  %3496 = vmatprep.subr.mxu0 0.0
  %3497 = vmatpush1.msra.mxu0 %v305
  %3498 = vmatprep.subr.mxu0 0.0
  %3499 = vmatpush1.msra.mxu0 %v306
  %3500 = vmatprep.subr.mxu0 0.0
  %3501 = vmatpush1.msra.mxu0 %v307
  %3502 = vmatprep.subr.mxu0 0.0
  %3503 = vmatpush1.msra.mxu0 %v308
  %3504 = vmatprep.subr.mxu0 0.0
  %3505 = vmatpush1.msra.mxu0 %v309
  %3506 = vmatprep.mubr.f32.mxu0 %v2861
  %3507 = vmatmul.mubr.f32.gmra.mrb[0].mxu0 %v2860
  %v3508 = vpop.f32.mrb[0].mxu0
  %v3509 = vadd.f32 %v3424, %v3508
  %v3510 = vpop.f32.mrb[0].mxu0
  %3511 = vmatprep.mubr.f32.mxu0 %v2879
  %3512 = vmatmul.mubr.f32.gmra.mrb[0].mxu0 %v2878
  %v3513 = vpop.f32.mrb[0].mxu0
  %v3514 = vadd.f32 %v3429, %v3513
  %v3515 = vpop.f32.mrb[0].mxu0
  %3516 = vmatprep.mubr.f32.mxu0 %v2897
  %3517 = vmatmul.mubr.f32.gmra.mrb[0].mxu0 %v2896
  %v3518 = vpop.f32.mrb[0].mxu0
  %v3519 = vadd.f32 %v3434, %v3518
  %v3520 = vpop.f32.mrb[0].mxu0
  %3521 = vmatprep.mubr.f32.mxu0 %v2915
  %3522 = vmatmul.mubr.f32.gmra.mrb[0].mxu0 %v2914
  %v3523 = vpop.f32.mrb[0].mxu0
  %v3524 = vadd.f32 %v3439, %v3523
  %v3525 = vpop.f32.mrb[0].mxu0
  %3526 = vdwg.mxu0
  %3527 = vmatprep.subr.mxu0 0.0
  %3528 = vmatpush1.msra.mxu0 %v310
  %3529 = vmatprep.subr.mxu0 0.0
  %3530 = vmatpush1.msra.mxu0 %v311
  %3531 = vmatprep.subr.mxu0 0.0
  %3532 = vmatpush1.msra.mxu0 %v312
  %3533 = vmatprep.subr.mxu0 0.0
  %3534 = vmatpush1.msra.mxu0 %v313
  %3535 = vmatprep.subr.mxu0 0.0
  %3536 = vmatpush1.msra.mxu0 %v314
  %3537 = vmatprep.subr.mxu0 0.0
  %3538 = vmatpush1.msra.mxu0 %v315
  %3539 = vmatprep.subr.mxu0 0.0
  %3540 = vmatpush1.msra.mxu0 %v316
  %3541 = vmatprep.subr.mxu0 0.0
  %3542 = vmatpush1.msra.mxu0 %v317
  %3543 = vmatprep.subr.mxu0 0.0
  %3544 = vmatpush1.msra.mxu0 %v318
  %3545 = vmatprep.subr.mxu0 0.0
  %3546 = vmatpush1.msra.mxu0 %v319
  %3547 = vmatprep.subr.mxu0 0.0
  %3548 = vmatpush1.msra.mxu0 %v320
  %3549 = vmatprep.subr.mxu0 0.0
  %3550 = vmatpush1.msra.mxu0 %v321
  %3551 = vmatprep.subr.mxu0 0.0
  %3552 = vmatpush1.msra.mxu0 %v322
  %3553 = vmatprep.subr.mxu0 0.0
  %3554 = vmatpush1.msra.mxu0 %v323
  %3555 = vmatprep.subr.mxu0 0.0
  %3556 = vmatpush1.msra.mxu0 %v324
  %3557 = vmatprep.subr.mxu0 0.0
  %3558 = vmatpush1.msra.mxu0 %v325
  %3559 = vmatprep.subr.mxu0 0.0
  %3560 = vmatpush1.msra.mxu0 %v326
  %3561 = vmatprep.subr.mxu0 0.0
  %3562 = vmatpush1.msra.mxu0 %v327
  %3563 = vmatprep.subr.mxu0 0.0
  %3564 = vmatpush1.msra.mxu0 %v328
  %3565 = vmatprep.subr.mxu0 0.0
  %3566 = vmatpush1.msra.mxu0 %v329
  %3567 = vmatprep.subr.mxu0 0.0
  %3568 = vmatpush1.msra.mxu0 %v330
  %3569 = vmatprep.subr.mxu0 0.0
  %3570 = vmatpush1.msra.mxu0 %v331
  %3571 = vmatprep.subr.mxu0 0.0
  %3572 = vmatpush1.msra.mxu0 %v332
  %3573 = vmatprep.subr.mxu0 0.0
  %3574 = vmatpush1.msra.mxu0 %v333
  %3575 = vmatprep.subr.mxu0 0.0
  %3576 = vmatpush1.msra.mxu0 %v334
  %3577 = vmatprep.subr.mxu0 0.0
  %3578 = vmatpush1.msra.mxu0 %v335
  %3579 = vmatprep.subr.mxu0 0.0
  %3580 = vmatpush1.msra.mxu0 %v336
  %3581 = vmatprep.subr.mxu0 0.0
  %3582 = vmatpush1.msra.mxu0 %v337
  %3583 = vmatprep.subr.mxu0 0.0
  %3584 = vmatpush1.msra.mxu0 %v338
  %3585 = vmatprep.subr.mxu0 0.0
  %3586 = vmatpush1.msra.mxu0 %v339
  %3587 = vmatprep.subr.mxu0 0.0
  %3588 = vmatpush1.msra.mxu0 %v340
  %3589 = vmatprep.subr.mxu0 0.0
  %3590 = vmatpush1.msra.mxu0 %v341
  %3591 = vmatprep.mubr.f32.mxu0 %v2863
  %3592 = vmatmul.mubr.f32.gmra.mrb[0].mxu0 %v2862
  %v3593 = vpop.f32.mrb[0].mxu0
  %v3594 = vadd.f32 %v3509, %v3593
  %v3595 = vpop.f32.mrb[0].mxu0
  %3596 = vmatprep.mubr.f32.mxu0 %v2881
  %3597 = vmatmul.mubr.f32.gmra.mrb[0].mxu0 %v2880
  %v3598 = vpop.f32.mrb[0].mxu0
  %v3599 = vadd.f32 %v3514, %v3598
  %v3600 = vpop.f32.mrb[0].mxu0
  %3601 = vmatprep.mubr.f32.mxu0 %v2899
  %3602 = vmatmul.mubr.f32.gmra.mrb[0].mxu0 %v2898
  %v3603 = vpop.f32.mrb[0].mxu0
  %v3604 = vadd.f32 %v3519, %v3603
  %v3605 = vpop.f32.mrb[0].mxu0
  %3606 = vmatprep.mubr.f32.mxu0 %v2917
  %3607 = vmatmul.mubr.f32.gmra.mrb[0].mxu0 %v2916
  %v3608 = vpop.f32.mrb[0].mxu0
  %v3609 = vadd.f32 %v3524, %v3608
  %v3610 = vpop.f32.mrb[0].mxu0
  %3611 = vdwg.mxu0
  %3612 = vmatprep.subr.mxu0 0.0
  %3613 = vmatpush1.msra.mxu0 %v342
  %3614 = vmatprep.subr.mxu0 0.0
  %3615 = vmatpush1.msra.mxu0 %v343
  %3616 = vmatprep.subr.mxu0 0.0
  %3617 = vmatpush1.msra.mxu0 %v344
  %3618 = vmatprep.subr.mxu0 0.0
  %3619 = vmatpush1.msra.mxu0 %v345
  %3620 = vmatprep.subr.mxu0 0.0
  %3621 = vmatpush1.msra.mxu0 %v346
  %3622 = vmatprep.subr.mxu0 0.0
  %3623 = vmatpush1.msra.mxu0 %v347
  %3624 = vmatprep.subr.mxu0 0.0
  %3625 = vmatpush1.msra.mxu0 %v348
  %3626 = vmatprep.subr.mxu0 0.0
  %3627 = vmatpush1.msra.mxu0 %v349
  %3628 = vmatprep.subr.mxu0 0.0
  %3629 = vmatpush1.msra.mxu0 %v350
  %3630 = vmatprep.subr.mxu0 0.0
  %3631 = vmatpush1.msra.mxu0 %v351
  %3632 = vmatprep.subr.mxu0 0.0
  %3633 = vmatpush1.msra.mxu0 %v352
  %3634 = vmatprep.subr.mxu0 0.0
  %3635 = vmatpush1.msra.mxu0 %v353
  %3636 = vmatprep.subr.mxu0 0.0
  %3637 = vmatpush1.msra.mxu0 %v354
  %3638 = vmatprep.subr.mxu0 0.0
  %3639 = vmatpush1.msra.mxu0 %v355
  %3640 = vmatprep.subr.mxu0 0.0
  %3641 = vmatpush1.msra.mxu0 %v356
  %3642 = vmatprep.subr.mxu0 0.0
  %3643 = vmatpush1.msra.mxu0 %v357
  %3644 = vmatprep.subr.mxu0 0.0
  %3645 = vmatpush1.msra.mxu0 %v358
  %3646 = vmatprep.subr.mxu0 0.0
  %3647 = vmatpush1.msra.mxu0 %v359
  %3648 = vmatprep.subr.mxu0 0.0
  %3649 = vmatpush1.msra.mxu0 %v360
  %3650 = vmatprep.subr.mxu0 0.0
  %3651 = vmatpush1.msra.mxu0 0.0
  %3652 = vmatprep.subr.mxu0 0.0
  %3653 = vmatpush1.msra.mxu0 0.0
  %3654 = vmatprep.subr.mxu0 0.0
  %3655 = vmatpush1.msra.mxu0 0.0
  %3656 = vmatprep.subr.mxu0 0.0
  %3657 = vmatpush1.msra.mxu0 0.0
  %3658 = vmatprep.subr.mxu0 0.0
  %3659 = vmatpush1.msra.mxu0 0.0
  %3660 = vmatprep.subr.mxu0 0.0
  %3661 = vmatpush1.msra.mxu0 0.0
  %3662 = vmatprep.subr.mxu0 0.0
  %3663 = vmatpush1.msra.mxu0 0.0
  %3664 = vmatprep.subr.mxu0 0.0
  %3665 = vmatpush1.msra.mxu0 0.0
  %3666 = vmatprep.subr.mxu0 0.0
  %3667 = vmatpush1.msra.mxu0 0.0
  %3668 = vmatprep.subr.mxu0 0.0
  %3669 = vmatpush1.msra.mxu0 0.0
  %3670 = vmatprep.subr.mxu0 0.0
  %3671 = vmatpush1.msra.mxu0 0.0
  %3672 = vmatprep.subr.mxu0 0.0
  %3673 = vmatpush1.msra.mxu0 0.0
  %3674 = vmatprep.subr.mxu0 0.0
  %3675 = vmatpush1.msra.mxu0 0.0
  %3676 = vmatprep.mubr.f32.mxu0 %v2921
  %3677 = vmatmul.mubr.f32.gmra.mrb[0].mxu0 %v2864
  %v3678 = vpop.f32.mrb[0].mxu0
  %v3679 = vadd.f32 %v3594, %v3678
  %v3680 = vpop.f32.mrb[0].mxu0
  %3681 = vmatprep.mubr.f32.mxu0 %v2924
  %3682 = vmatmul.mubr.f32.gmra.mrb[0].mxu0 %v2882
  %v3683 = vpop.f32.mrb[0].mxu0
  %v3684 = vadd.f32 %v3599, %v3683
  %v3685 = vpop.f32.mrb[0].mxu0
  %3686 = vmatprep.mubr.f32.mxu0 %v2927
  %3687 = vmatmul.mubr.f32.gmra.mrb[0].mxu0 %v2900
  %v3688 = vpop.f32.mrb[0].mxu0
  %v3689 = vadd.f32 %v3604, %v3688
  %v3690 = vpop.f32.mrb[0].mxu0
  %3691 = vmatprep.mubr.f32.mxu0 %v2930
  %3692 = vmatmul.mubr.f32.gmra.mrb[0].mxu0 %v2918
  %v3693 = vpop.f32.mrb[0].mxu0
  %v3694 = vadd.f32 %v3609, %v3693
  %v3695 = vpop.f32.mrb[0].mxu0
  %3696 = vdwg.mxu0
  %v3697 = vmax.f32 %v2843, %v3679
  %v3698 = vmax.f32 %v2844, %v3684
  %v3699 = vmax.f32 %v2845, %v3689
  %v3700 = vmax.f32 %v2846, %v3694
  %v3701 = vld [vmem:[%s2] sm:$0x1]
  %v3703 = vlaneseq
  %v3704 = vshrl.u32 %v3703, 7
  %v3705 = vsub.s32 0, %v3704
  %v3706 = vrot.slane %v3701, %v3705
  %v3708 = vadd.f32 %v3697, %v3706
  %v3709 = vadd.f32 %v3698, %v3706
  %v3710 = vadd.f32 %v3699, %v3706
  %v3711 = vadd.f32 %v3700, %v3706
  %v3712 = vmax.f32 %v3708, 0.0
  %v3713 = vmax.f32 %v3709, 0.0
  %v3714 = vmax.f32 %v3710, 0.0
  %v3715 = vmax.f32 %v3711, 0.0
  %vm3716 = vcmask 162816
  %3717 = vst.msk [vmem:[%s3] sm:$0xff] %vm3716, %v3712
  %3718 = vst.msk [vmem:[%s3 + $0x8] sm:$0xff] %vm3716, %v3713
  %3719 = vst.msk [vmem:[%s3 + $0x10] sm:$0xff] %vm3716, %v3714
  %3720 = vst.msk [vmem:[%s3 + $0x18] sm:$0xff] %vm3716, %v3715
  // Predicated region
  $region14: #{net_forward.13} parent=0 // pred_check
    _
  $region15: #{net_forward.13} parent=0 // pred_check_branch
    %3722 = sbr.rel (0) target = $region17
  $region16: #{net_forward.13} parent=0 // pred_region
    _
  $region17: #{net_forward.13} parent=0 // pred_fallthru
    _
  // Predicated region
  $region18: #{net_forward.13} parent=0 // pred_check
    _
  $region19: #{net_forward.13} parent=0 // pred_check_branch
    %3724 = sbr.rel (0) target = $region21
  $region20: #{net_forward.13} parent=0 // pred_region
    _
  $region21: #{net_forward.13} parent=0 // pred_fallthru
    _

// kernel: net_forward.17
$region0: #{net_forward.17}
  #allocation0 [shape = 'u32[]', space=smem, size = 0x4, offset = 0x4, fixed_abs, tag = 'smem constant byte address 0x4 - core index']
  #allocation1 [shape = 'u32[144,128]{1,0:T(1,128)}', space=vmem, size = 0x12000, scoped, tag = 'internal scratch']
  %s0 = inlined_call_operand.vmem [shape: f32[2,1408], index: 0, kind: input, shape index: {}]
  %s1 = inlined_call_operand.vmem [shape: f32[1408,10], index: 1, kind: input, shape index: {}]
  %s2 = inlined_call_operand.vmem [shape: f32[1,10], index: 2, kind: input, shape index: {}]
  %s3 = inlined_call_operand.hbm [shape: f32[2,10], index: 3, kind: output, shape index: {}]
  %s4 = sld [smem:[#allocation0]]
  $region22: #{net_forward.17} parent=0
    _
  %s6 = ssub.s32 1, %s4
  %s7 = scalar_select 0, %s6, %s4
  $region1: #{net_forward.17} parent=0
    #allocation2 [shape = 'u8[1024]{0}', space=vmem, size = 0x400, scoped, tag = 'output window, operand 0, single buffered']
    #allocation3 [shape = 's32[1]{0}', space=sflag, size = 0x4, scoped, tag = 'scoped memory for net_forward.17']
    %8 = vsyncpa [#allocation3], 0
    // Predicated region
    $region2: #{net_forward.17} parent=1 // pred_check
      _
    $region3: #{net_forward.17} parent=1 // pred_check_branch
      %10 = sbr.rel (0) target = $region5
    $region4: #{net_forward.17} parent=1 // pred_region
      _
    $region5: #{net_forward.17} parent=1 // pred_fallthru
      _
    // Predicated region
    $region6: #{net_forward.17} parent=1 // pred_check
      _
    $region7: #{net_forward.17} parent=1 // pred_check_branch
      %12 = sbr.rel (0) target = $region9
    $region8: #{net_forward.17} parent=1 // pred_region
      _
    $region9: #{net_forward.17} parent=1 // pred_fallthru
      _
    // Predicated region
    $region10: #{net_forward.17} parent=1 // pred_check
      _
    $region11: #{net_forward.17} parent=1 // pred_check_branch
      %14 = sbr.rel (0) target = $region13
    $region12: #{net_forward.17} parent=1 // pred_region
      _
    $region13: #{net_forward.17} parent=1 // pred_fallthru
      _
    %v15 = vld [vmem:[%s0] sm:$0xff]
    %v16 = vld [vmem:[%s0 + $0x8] sm:$0xff]
    %v17 = vld [vmem:[%s0 + $0x10] sm:$0x3f]
    %v18 = vld [vmem:[%s1] sm:$0xff]
    %v19 = vld [vmem:[%s1 + $0x8] sm:$0xff]
    %v20 = vld [vmem:[%s1 + $0x10] sm:$0xff]
    %v21 = vld [vmem:[%s1 + $0x18] sm:$0xff]
    %v22 = vld [vmem:[%s1 + $0x20] sm:$0xff]
    %v23 = vld [vmem:[%s1 + $0x28] sm:$0xff]
    %v24 = vld [vmem:[%s1 + $0x30] sm:$0xff]
    %v25 = vld [vmem:[%s1 + $0x38] sm:$0xff]
    %v26 = vld [vmem:[%s1 + $0x40] sm:$0xff]
    %v27 = vld [vmem:[%s1 + $0x48] sm:$0xff]
    %v28 = vld [vmem:[%s1 + $0x50] sm:$0xff]
    %v29 = vld [vmem:[%s1 + $0x58] sm:$0xff]
    %v30 = vld [vmem:[%s1 + $0x60] sm:$0xff]
    %v31 = vld [vmem:[%s1 + $0x68] sm:$0xff]
    %v32 = vld [vmem:[%s1 + $0x70] sm:$0xff]
    %v33 = vld [vmem:[%s1 + $0x78] sm:$0xff]
    %v34 = vld [vmem:[%s1 + $0x80] sm:$0xff]
    %v35 = vld [vmem:[%s1 + $0x88] sm:$0xff]
    %v36 = vld [vmem:[%s1 + $0x90] sm:$0xff]
    %v37 = vld [vmem:[%s1 + $0x98] sm:$0xff]
    %v38 = vld [vmem:[%s1 + $0xa0] sm:$0xff]
    %v39 = vld [vmem:[%s1 + $0xa8] sm:$0xff]
    %v40 = vld [vmem:[%s1 + $0xb0] sm:$0xff]
    %v41 = vld [vmem:[%s1 + $0xb8] sm:$0xff]
    %v42 = vld [vmem:[%s1 + $0xc0] sm:$0xff]
    %v43 = vld [vmem:[%s1 + $0xc8] sm:$0xff]
    %v44 = vld [vmem:[%s1 + $0xd0] sm:$0xff]
    %v45 = vld [vmem:[%s1 + $0xd8] sm:$0xff]
    %v46 = vld [vmem:[%s1 + $0xe0] sm:$0xff]
    %v47 = vld [vmem:[%s1 + $0xe8] sm:$0xff]
    %v48 = vld [vmem:[%s1 + $0xf0] sm:$0xff]
    %v49 = vld [vmem:[%s1 + $0xf8] sm:$0xff]
    %v50 = vld [vmem:[%s1 + $0x100] sm:$0xff]
    %v51 = vld [vmem:[%s1 + $0x108] sm:$0xff]
    %v52 = vld [vmem:[%s1 + $0x110] sm:$0xff]
    %v53 = vld [vmem:[%s1 + $0x118] sm:$0xff]
    %v54 = vld [vmem:[%s1 + $0x120] sm:$0xff]
    %v55 = vld [vmem:[%s1 + $0x128] sm:$0xff]
    %v56 = vld [vmem:[%s1 + $0x130] sm:$0xff]
    %v57 = vld [vmem:[%s1 + $0x138] sm:$0xff]
    %v58 = vld [vmem:[%s1 + $0x140] sm:$0xff]
    %v59 = vld [vmem:[%s1 + $0x148] sm:$0xff]
    %v60 = vld [vmem:[%s1 + $0x150] sm:$0xff]
    %v61 = vld [vmem:[%s1 + $0x158] sm:$0xff]
    %v62 = vld [vmem:[%s1 + $0x160] sm:$0xff]
    %v63 = vld [vmem:[%s1 + $0x168] sm:$0xff]
    %v64 = vld [vmem:[%s1 + $0x170] sm:$0xff]
    %v65 = vld [vmem:[%s1 + $0x178] sm:$0xff]
    %v66 = vld [vmem:[%s1 + $0x180] sm:$0xff]
    %v67 = vld [vmem:[%s1 + $0x188] sm:$0xff]
    %v68 = vld [vmem:[%s1 + $0x190] sm:$0xff]
    %v69 = vld [vmem:[%s1 + $0x198] sm:$0xff]
    %v70 = vld [vmem:[%s1 + $0x1a0] sm:$0xff]
    %v71 = vld [vmem:[%s1 + $0x1a8] sm:$0xff]
    %v72 = vld [vmem:[%s1 + $0x1b0] sm:$0xff]
    %v73 = vld [vmem:[%s1 + $0x1b8] sm:$0xff]
    %v74 = vld [vmem:[%s1 + $0x1c0] sm:$0xff]
    %v75 = vld [vmem:[%s1 + $0x1c8] sm:$0xff]
    %v76 = vld [vmem:[%s1 + $0x1d0] sm:$0xff]
    %v77 = vld [vmem:[%s1 + $0x1d8] sm:$0xff]
    %v78 = vld [vmem:[%s1 + $0x1e0] sm:$0xff]
    %v79 = vld [vmem:[%s1 + $0x1e8] sm:$0xff]
    %v80 = vld [vmem:[%s1 + $0x1f0] sm:$0xff]
    %v81 = vld [vmem:[%s1 + $0x1f8] sm:$0xff]
    %v82 = vld [vmem:[%s1 + $0x200] sm:$0xff]
    %v83 = vld [vmem:[%s1 + $0x208] sm:$0xff]
    %v84 = vld [vmem:[%s1 + $0x210] sm:$0xff]
    %v85 = vld [vmem:[%s1 + $0x218] sm:$0xff]
    %v86 = vld [vmem:[%s1 + $0x220] sm:$0xff]
    %v87 = vld [vmem:[%s1 + $0x228] sm:$0xff]
    %v88 = vld [vmem:[%s1 + $0x230] sm:$0xff]
    %v89 = vld [vmem:[%s1 + $0x238] sm:$0xff]
    %v90 = vld [vmem:[%s1 + $0x240] sm:$0xff]
    %v91 = vld [vmem:[%s1 + $0x248] sm:$0xff]
    %v92 = vld [vmem:[%s1 + $0x250] sm:$0xff]
    %v93 = vld [vmem:[%s1 + $0x258] sm:$0xff]
    %v94 = vld [vmem:[%s1 + $0x260] sm:$0xff]
    %v95 = vld [vmem:[%s1 + $0x268] sm:$0xff]
    %v96 = vld [vmem:[%s1 + $0x270] sm:$0xff]
    %v97 = vld [vmem:[%s1 + $0x278] sm:$0xff]
    %v98 = vld [vmem:[%s1 + $0x280] sm:$0xff]
    %v99 = vld [vmem:[%s1 + $0x288] sm:$0xff]
    %v100 = vld [vmem:[%s1 + $0x290] sm:$0xff]
    %v101 = vld [vmem:[%s1 + $0x298] sm:$0xff]
    %v102 = vld [vmem:[%s1 + $0x2a0] sm:$0xff]
    %v103 = vld [vmem:[%s1 + $0x2a8] sm:$0xff]
    %v104 = vld [vmem:[%s1 + $0x2b0] sm:$0xff]
    %v105 = vld [vmem:[%s1 + $0x2b8] sm:$0xff]
    %v106 = vld [vmem:[%s1 + $0x2c0] sm:$0xff]
    %v107 = vld [vmem:[%s1 + $0x2c8] sm:$0xff]
    %v108 = vld [vmem:[%s1 + $0x2d0] sm:$0xff]
    %v109 = vld [vmem:[%s1 + $0x2d8] sm:$0xff]
    %v110 = vld [vmem:[%s1 + $0x2e0] sm:$0xff]
    %v111 = vld [vmem:[%s1 + $0x2e8] sm:$0xff]
    %v112 = vld [vmem:[%s1 + $0x2f0] sm:$0xff]
    %v113 = vld [vmem:[%s1 + $0x2f8] sm:$0xff]
    %v114 = vld [vmem:[%s1 + $0x300] sm:$0xff]
    %v115 = vld [vmem:[%s1 + $0x308] sm:$0xff]
    %v116 = vld [vmem:[%s1 + $0x310] sm:$0xff]
    %v117 = vld [vmem:[%s1 + $0x318] sm:$0xff]
    %v118 = vld [vmem:[%s1 + $0x320] sm:$0xff]
    %v119 = vld [vmem:[%s1 + $0x328] sm:$0xff]
    %v120 = vld [vmem:[%s1 + $0x330] sm:$0xff]
    %v121 = vld [vmem:[%s1 + $0x338] sm:$0xff]
    %v122 = vld [vmem:[%s1 + $0x340] sm:$0xff]
    %v123 = vld [vmem:[%s1 + $0x348] sm:$0xff]
    %v124 = vld [vmem:[%s1 + $0x350] sm:$0xff]
    %v125 = vld [vmem:[%s1 + $0x358] sm:$0xff]
    %v126 = vld [vmem:[%s1 + $0x360] sm:$0xff]
    %v127 = vld [vmem:[%s1 + $0x368] sm:$0xff]
    %v128 = vld [vmem:[%s1 + $0x370] sm:$0xff]
    %v129 = vld [vmem:[%s1 + $0x378] sm:$0xff]
    %v130 = vld [vmem:[%s1 + $0x380] sm:$0xff]
    %v131 = vld [vmem:[%s1 + $0x388] sm:$0xff]
    %v132 = vld [vmem:[%s1 + $0x390] sm:$0xff]
    %v133 = vld [vmem:[%s1 + $0x398] sm:$0xff]
    %v134 = vld [vmem:[%s1 + $0x3a0] sm:$0xff]
    %v135 = vld [vmem:[%s1 + $0x3a8] sm:$0xff]
    %v136 = vld [vmem:[%s1 + $0x3b0] sm:$0xff]
    %v137 = vld [vmem:[%s1 + $0x3b8] sm:$0xff]
    %v138 = vld [vmem:[%s1 + $0x3c0] sm:$0xff]
    %v139 = vld [vmem:[%s1 + $0x3c8] sm:$0xff]
    %v140 = vld [vmem:[%s1 + $0x3d0] sm:$0xff]
    %v141 = vld [vmem:[%s1 + $0x3d8] sm:$0xff]
    %v142 = vld [vmem:[%s1 + $0x3e0] sm:$0xff]
    %v143 = vld [vmem:[%s1 + $0x3e8] sm:$0xff]
    %v144 = vld [vmem:[%s1 + $0x3f0] sm:$0xff]
    %v145 = vld [vmem:[%s1 + $0x3f8] sm:$0xff]
    %v146 = vld [vmem:[%s1 + $0x400] sm:$0xff]
    %v147 = vld [vmem:[%s1 + $0x408] sm:$0xff]
    %v148 = vld [vmem:[%s1 + $0x410] sm:$0xff]
    %v149 = vld [vmem:[%s1 + $0x418] sm:$0xff]
    %v150 = vld [vmem:[%s1 + $0x420] sm:$0xff]
    %v151 = vld [vmem:[%s1 + $0x428] sm:$0xff]
    %v152 = vld [vmem:[%s1 + $0x430] sm:$0xff]
    %v153 = vld [vmem:[%s1 + $0x438] sm:$0xff]
    %v154 = vld [vmem:[%s1 + $0x440] sm:$0xff]
    %v155 = vld [vmem:[%s1 + $0x448] sm:$0xff]
    %v156 = vld [vmem:[%s1 + $0x450] sm:$0xff]
    %v157 = vld [vmem:[%s1 + $0x458] sm:$0xff]
    %v158 = vld [vmem:[%s1 + $0x460] sm:$0xff]
    %v159 = vld [vmem:[%s1 + $0x468] sm:$0xff]
    %v160 = vld [vmem:[%s1 + $0x470] sm:$0xff]
    %v161 = vld [vmem:[%s1 + $0x478] sm:$0xff]
    %v162 = vld [vmem:[%s1 + $0x480] sm:$0xff]
    %v163 = vld [vmem:[%s1 + $0x488] sm:$0xff]
    %v164 = vld [vmem:[%s1 + $0x490] sm:$0xff]
    %v165 = vld [vmem:[%s1 + $0x498] sm:$0xff]
    %v166 = vld [vmem:[%s1 + $0x4a0] sm:$0xff]
    %v167 = vld [vmem:[%s1 + $0x4a8] sm:$0xff]
    %v168 = vld [vmem:[%s1 + $0x4b0] sm:$0xff]
    %v169 = vld [vmem:[%s1 + $0x4b8] sm:$0xff]
    %v170 = vld [vmem:[%s1 + $0x4c0] sm:$0xff]
    %v171 = vld [vmem:[%s1 + $0x4c8] sm:$0xff]
    %v172 = vld [vmem:[%s1 + $0x4d0] sm:$0xff]
    %v173 = vld [vmem:[%s1 + $0x4d8] sm:$0xff]
    %v174 = vld [vmem:[%s1 + $0x4e0] sm:$0xff]
    %v175 = vld [vmem:[%s1 + $0x4e8] sm:$0xff]
    %v176 = vld [vmem:[%s1 + $0x4f0] sm:$0xff]
    %v177 = vld [vmem:[%s1 + $0x4f8] sm:$0xff]
    %v178 = vld [vmem:[%s1 + $0x500] sm:$0xff]
    %v179 = vld [vmem:[%s1 + $0x508] sm:$0xff]
    %v180 = vld [vmem:[%s1 + $0x510] sm:$0xff]
    %v181 = vld [vmem:[%s1 + $0x518] sm:$0xff]
    %v182 = vld [vmem:[%s1 + $0x520] sm:$0xff]
    %v183 = vld [vmem:[%s1 + $0x528] sm:$0xff]
    %v184 = vld [vmem:[%s1 + $0x530] sm:$0xff]
    %v185 = vld [vmem:[%s1 + $0x538] sm:$0xff]
    %v186 = vld [vmem:[%s1 + $0x540] sm:$0xff]
    %v187 = vld [vmem:[%s1 + $0x548] sm:$0xff]
    %v188 = vld [vmem:[%s1 + $0x550] sm:$0xff]
    %v189 = vld [vmem:[%s1 + $0x558] sm:$0xff]
    %v190 = vld [vmem:[%s1 + $0x560] sm:$0xff]
    %v191 = vld [vmem:[%s1 + $0x568] sm:$0xff]
    %v192 = vld [vmem:[%s1 + $0x570] sm:$0xff]
    %v193 = vld [vmem:[%s1 + $0x578] sm:$0xff]
    %v194 = vld [vmem:[%s2] sm:$0x1]
    %v196 = vlaneseq
    %v197 = vshrl.u32 %v196, 7
    %v198 = vsub.s32 0, %v197
    %v199 = vrot.slane %v194, %v198
    %v204 = vcombine.high %v15, %v15
    %v206 = vunpack.c.l.s4 1983009808
    %v207 = vunpack.c.0.s8 %v206
    %v208 = vlaneseq
    %v209 = vshrl.u32 %v208, 7
    %v210 = vsub.s32 %v207, %v209
    %v211 = vrot.slane %v15, %v210
    %v213 = vunpack.c.l.s4 1983009808
    %v214 = vunpack.c.0.s8 %v213
    %v215 = vlaneseq
    %v216 = vshrl.u32 %v215, 7
    %v217 = vsub.s32 %v214, %v216
    %v218 = vrot.slane %v204, %v217
    %v219 = vcombine.high %v211, %v211
    %v220 = vcombine.high %v218, %v218
    %v221 = vcombine.high %v16, %v16
    %v223 = vunpack.c.l.s4 1983009808
    %v224 = vunpack.c.0.s8 %v223
    %v225 = vlaneseq
    %v226 = vshrl.u32 %v225, 7
    %v227 = vsub.s32 %v224, %v226
    %v228 = vrot.slane %v16, %v227
    %v230 = vunpack.c.l.s4 1983009808
    %v231 = vunpack.c.0.s8 %v230
    %v232 = vlaneseq
    %v233 = vshrl.u32 %v232, 7
    %v234 = vsub.s32 %v231, %v233
    %v235 = vrot.slane %v221, %v234
    %v236 = vcombine.high %v228, %v228
    %v237 = vcombine.high %v235, %v235
    %v238 = vcombine.high %v17, %v17
    %v240 = vunpack.c.l.s4 1983009808
    %v241 = vunpack.c.0.s8 %v240
    %v242 = vlaneseq
    %v243 = vshrl.u32 %v242, 7
    %v244 = vsub.s32 %v241, %v243
    %v245 = vrot.slane %v17, %v244
    %v247 = vunpack.c.l.s4 1983009808
    %v248 = vunpack.c.0.s8 %v247
    %v249 = vlaneseq
    %v250 = vshrl.u32 %v249, 7
    %v251 = vsub.s32 %v248, %v250
    %v252 = vrot.slane %v238, %v251
    %v253 = vcombine.high %v245, %v245
    %265 = vmatprep.subr.mxu0 0.0
    %266 = vmatpush1.msra.mxu0 %v18
    %267 = vmatprep.subr.mxu0 0.0
    %268 = vmatpush1.msra.mxu0 %v19
    %269 = vmatprep.subr.mxu0 0.0
    %270 = vmatpush1.msra.mxu0 %v20
    %271 = vmatprep.subr.mxu0 0.0
    %272 = vmatpush1.msra.mxu0 %v21
    %273 = vmatprep.subr.mxu0 0.0
    %274 = vmatpush1.msra.mxu0 %v22
    %275 = vmatprep.subr.mxu0 0.0
    %276 = vmatpush1.msra.mxu0 %v23
    %277 = vmatprep.subr.mxu0 0.0
    %278 = vmatpush1.msra.mxu0 %v24
    %279 = vmatprep.subr.mxu0 0.0
    %280 = vmatpush1.msra.mxu0 %v25
    %281 = vmatprep.subr.mxu0 0.0
    %282 = vmatpush1.msra.mxu0 %v26
    %283 = vmatprep.subr.mxu0 0.0
    %284 = vmatpush1.msra.mxu0 %v27
    %285 = vmatprep.subr.mxu0 0.0
    %286 = vmatpush1.msra.mxu0 %v28
    %287 = vmatprep.subr.mxu0 0.0
    %288 = vmatpush1.msra.mxu0 %v29
    %289 = vmatprep.subr.mxu0 0.0
    %290 = vmatpush1.msra.mxu0 %v30
    %291 = vmatprep.subr.mxu0 0.0
    %292 = vmatpush1.msra.mxu0 %v31
    %293 = vmatprep.subr.mxu0 0.0
    %294 = vmatpush1.msra.mxu0 %v32
    %295 = vmatprep.subr.mxu0 0.0
    %296 = vmatpush1.msra.mxu0 %v33
    %297 = vmatprep.subr.mxu0 0.0
    %298 = vmatpush1.msra.mxu0 %v34
    %299 = vmatprep.subr.mxu0 0.0
    %300 = vmatpush1.msra.mxu0 %v35
    %301 = vmatprep.subr.mxu0 0.0
    %302 = vmatpush1.msra.mxu0 %v36
    %303 = vmatprep.subr.mxu0 0.0
    %304 = vmatpush1.msra.mxu0 %v37
    %305 = vmatprep.subr.mxu0 0.0
    %306 = vmatpush1.msra.mxu0 %v38
    %307 = vmatprep.subr.mxu0 0.0
    %308 = vmatpush1.msra.mxu0 %v39
    %309 = vmatprep.subr.mxu0 0.0
    %310 = vmatpush1.msra.mxu0 %v40
    %311 = vmatprep.subr.mxu0 0.0
    %312 = vmatpush1.msra.mxu0 %v41
    %313 = vmatprep.subr.mxu0 0.0
    %314 = vmatpush1.msra.mxu0 %v42
    %315 = vmatprep.subr.mxu0 0.0
    %316 = vmatpush1.msra.mxu0 %v43
    %317 = vmatprep.subr.mxu0 0.0
    %318 = vmatpush1.msra.mxu0 %v44
    %319 = vmatprep.subr.mxu0 0.0
    %320 = vmatpush1.msra.mxu0 %v45
    %321 = vmatprep.subr.mxu0 0.0
    %322 = vmatpush1.msra.mxu0 %v46
    %323 = vmatprep.subr.mxu0 0.0
    %324 = vmatpush1.msra.mxu0 %v47
    %325 = vmatprep.subr.mxu0 0.0
    %326 = vmatpush1.msra.mxu0 %v48
    %327 = vmatprep.subr.mxu0 0.0
    %328 = vmatpush1.msra.mxu0 %v49
    %329 = vmatprep.mubr.f32.mxu0 %v219
    %330 = vmatmul.mubr.f32.gmra.mrb[0].mxu0 %v211
    %v331 = vpop.f32.mrb[0].mxu0
    %v332 = vadd.f32 %v199, %v331
    %v333 = vpop.f32.mrb[0].mxu0
    %334 = vdwg.mxu0
    %335 = vmatprep.subr.mxu0 0.0
    %336 = vmatpush1.msra.mxu0 %v50
    %337 = vmatprep.subr.mxu0 0.0
    %338 = vmatpush1.msra.mxu0 %v51
    %339 = vmatprep.subr.mxu0 0.0
    %340 = vmatpush1.msra.mxu0 %v52
    %341 = vmatprep.subr.mxu0 0.0
    %342 = vmatpush1.msra.mxu0 %v53
    %343 = vmatprep.subr.mxu0 0.0
    %344 = vmatpush1.msra.mxu0 %v54
    %345 = vmatprep.subr.mxu0 0.0
    %346 = vmatpush1.msra.mxu0 %v55
    %347 = vmatprep.subr.mxu0 0.0
    %348 = vmatpush1.msra.mxu0 %v56
    %349 = vmatprep.subr.mxu0 0.0
    %350 = vmatpush1.msra.mxu0 %v57
    %351 = vmatprep.subr.mxu0 0.0
    %352 = vmatpush1.msra.mxu0 %v58
    %353 = vmatprep.subr.mxu0 0.0
    %354 = vmatpush1.msra.mxu0 %v59
    %355 = vmatprep.subr.mxu0 0.0
    %356 = vmatpush1.msra.mxu0 %v60
    %357 = vmatprep.subr.mxu0 0.0
    %358 = vmatpush1.msra.mxu0 %v61
    %359 = vmatprep.subr.mxu0 0.0
    %360 = vmatpush1.msra.mxu0 %v62
    %361 = vmatprep.subr.mxu0 0.0
    %362 = vmatpush1.msra.mxu0 %v63
    %363 = vmatprep.subr.mxu0 0.0
    %364 = vmatpush1.msra.mxu0 %v64
    %365 = vmatprep.subr.mxu0 0.0
    %366 = vmatpush1.msra.mxu0 %v65
    %367 = vmatprep.subr.mxu0 0.0
    %368 = vmatpush1.msra.mxu0 %v66
    %369 = vmatprep.subr.mxu0 0.0
    %370 = vmatpush1.msra.mxu0 %v67
    %371 = vmatprep.subr.mxu0 0.0
    %372 = vmatpush1.msra.mxu0 %v68
    %373 = vmatprep.subr.mxu0 0.0
    %374 = vmatpush1.msra.mxu0 %v69
    %375 = vmatprep.subr.mxu0 0.0
    %376 = vmatpush1.msra.mxu0 %v70
    %377 = vmatprep.subr.mxu0 0.0
    %378 = vmatpush1.msra.mxu0 %v71
    %379 = vmatprep.subr.mxu0 0.0
    %380 = vmatpush1.msra.mxu0 %v72
    %381 = vmatprep.subr.mxu0 0.0
    %382 = vmatpush1.msra.mxu0 %v73
    %383 = vmatprep.subr.mxu0 0.0
    %384 = vmatpush1.msra.mxu0 %v74
    %385 = vmatprep.subr.mxu0 0.0
    %386 = vmatpush1.msra.mxu0 %v75
    %387 = vmatprep.subr.mxu0 0.0
    %388 = vmatpush1.msra.mxu0 %v76
    %389 = vmatprep.subr.mxu0 0.0
    %390 = vmatpush1.msra.mxu0 %v77
    %391 = vmatprep.subr.mxu0 0.0
    %392 = vmatpush1.msra.mxu0 %v78
    %393 = vmatprep.subr.mxu0 0.0
    %394 = vmatpush1.msra.mxu0 %v79
    %395 = vmatprep.subr.mxu0 0.0
    %396 = vmatpush1.msra.mxu0 %v80
    %397 = vmatprep.subr.mxu0 0.0
    %398 = vmatpush1.msra.mxu0 %v81
    %399 = vmatprep.mubr.f32.mxu0 %v220
    %400 = vmatmul.mubr.f32.gmra.mrb[0].mxu0 %v218
    %v401 = vpop.f32.mrb[0].mxu0
    %v402 = vadd.f32 %v332, %v401
    %v403 = vpop.f32.mrb[0].mxu0
    %404 = vdwg.mxu0
    %405 = vmatprep.subr.mxu0 0.0
    %406 = vmatpush1.msra.mxu0 %v82
    %407 = vmatprep.subr.mxu0 0.0
    %408 = vmatpush1.msra.mxu0 %v83
    %409 = vmatprep.subr.mxu0 0.0
    %410 = vmatpush1.msra.mxu0 %v84
    %411 = vmatprep.subr.mxu0 0.0
    %412 = vmatpush1.msra.mxu0 %v85
    %413 = vmatprep.subr.mxu0 0.0
    %414 = vmatpush1.msra.mxu0 %v86
    %415 = vmatprep.subr.mxu0 0.0
    %416 = vmatpush1.msra.mxu0 %v87
    %417 = vmatprep.subr.mxu0 0.0
    %418 = vmatpush1.msra.mxu0 %v88
    %419 = vmatprep.subr.mxu0 0.0
    %420 = vmatpush1.msra.mxu0 %v89
    %421 = vmatprep.subr.mxu0 0.0
    %422 = vmatpush1.msra.mxu0 %v90
    %423 = vmatprep.subr.mxu0 0.0
    %424 = vmatpush1.msra.mxu0 %v91
    %425 = vmatprep.subr.mxu0 0.0
    %426 = vmatpush1.msra.mxu0 %v92
    %427 = vmatprep.subr.mxu0 0.0
    %428 = vmatpush1.msra.mxu0 %v93
    %429 = vmatprep.subr.mxu0 0.0
    %430 = vmatpush1.msra.mxu0 %v94
    %431 = vmatprep.subr.mxu0 0.0
    %432 = vmatpush1.msra.mxu0 %v95
    %433 = vmatprep.subr.mxu0 0.0
    %434 = vmatpush1.msra.mxu0 %v96
    %435 = vmatprep.subr.mxu0 0.0
    %436 = vmatpush1.msra.mxu0 %v97
    %437 = vmatprep.subr.mxu0 0.0
    %438 = vmatpush1.msra.mxu0 %v98
    %439 = vmatprep.subr.mxu0 0.0
    %440 = vmatpush1.msra.mxu0 %v99
    %441 = vmatprep.subr.mxu0 0.0
    %442 = vmatpush1.msra.mxu0 %v100
    %443 = vmatprep.subr.mxu0 0.0
    %444 = vmatpush1.msra.mxu0 %v101
    %445 = vmatprep.subr.mxu0 0.0
    %446 = vmatpush1.msra.mxu0 %v102
    %447 = vmatprep.subr.mxu0 0.0
    %448 = vmatpush1.msra.mxu0 %v103
    %449 = vmatprep.subr.mxu0 0.0
    %450 = vmatpush1.msra.mxu0 %v104
    %451 = vmatprep.subr.mxu0 0.0
    %452 = vmatpush1.msra.mxu0 %v105
    %453 = vmatprep.subr.mxu0 0.0
    %454 = vmatpush1.msra.mxu0 %v106
    %455 = vmatprep.subr.mxu0 0.0
    %456 = vmatpush1.msra.mxu0 %v107
    %457 = vmatprep.subr.mxu0 0.0
    %458 = vmatpush1.msra.mxu0 %v108
    %459 = vmatprep.subr.mxu0 0.0
    %460 = vmatpush1.msra.mxu0 %v109
    %461 = vmatprep.subr.mxu0 0.0
    %462 = vmatpush1.msra.mxu0 %v110
    %463 = vmatprep.subr.mxu0 0.0
    %464 = vmatpush1.msra.mxu0 %v111
    %465 = vmatprep.subr.mxu0 0.0
    %466 = vmatpush1.msra.mxu0 %v112
    %467 = vmatprep.subr.mxu0 0.0
    %468 = vmatpush1.msra.mxu0 %v113
    %469 = vmatprep.mubr.f32.mxu0 %v236
    %470 = vmatmul.mubr.f32.gmra.mrb[0].mxu0 %v228
    %v471 = vpop.f32.mrb[0].mxu0
    %v472 = vadd.f32 %v402, %v471
    %v473 = vpop.f32.mrb[0].mxu0
    %474 = vdwg.mxu0
    %475 = vmatprep.subr.mxu0 0.0
    %476 = vmatpush1.msra.mxu0 %v114
    %477 = vmatprep.subr.mxu0 0.0
    %478 = vmatpush1.msra.mxu0 %v115
    %479 = vmatprep.subr.mxu0 0.0
    %480 = vmatpush1.msra.mxu0 %v116
    %481 = vmatprep.subr.mxu0 0.0
    %482 = vmatpush1.msra.mxu0 %v117
    %483 = vmatprep.subr.mxu0 0.0
    %484 = vmatpush1.msra.mxu0 %v118
    %485 = vmatprep.subr.mxu0 0.0
    %486 = vmatpush1.msra.mxu0 %v119
    %487 = vmatprep.subr.mxu0 0.0
    %488 = vmatpush1.msra.mxu0 %v120
    %489 = vmatprep.subr.mxu0 0.0
    %490 = vmatpush1.msra.mxu0 %v121
    %491 = vmatprep.subr.mxu0 0.0
    %492 = vmatpush1.msra.mxu0 %v122
    %493 = vmatprep.subr.mxu0 0.0
    %494 = vmatpush1.msra.mxu0 %v123
    %495 = vmatprep.subr.mxu0 0.0
    %496 = vmatpush1.msra.mxu0 %v124
    %497 = vmatprep.subr.mxu0 0.0
    %498 = vmatpush1.msra.mxu0 %v125
    %499 = vmatprep.subr.mxu0 0.0
    %500 = vmatpush1.msra.mxu0 %v126
    %501 = vmatprep.subr.mxu0 0.0
    %502 = vmatpush1.msra.mxu0 %v127
    %503 = vmatprep.subr.mxu0 0.0
    %504 = vmatpush1.msra.mxu0 %v128
    %505 = vmatprep.subr.mxu0 0.0
    %506 = vmatpush1.msra.mxu0 %v129
    %507 = vmatprep.subr.mxu0 0.0
    %508 = vmatpush1.msra.mxu0 %v130
    %509 = vmatprep.subr.mxu0 0.0
    %510 = vmatpush1.msra.mxu0 %v131
    %511 = vmatprep.subr.mxu0 0.0
    %512 = vmatpush1.msra.mxu0 %v132
    %513 = vmatprep.subr.mxu0 0.0
    %514 = vmatpush1.msra.mxu0 %v133
    %515 = vmatprep.subr.mxu0 0.0
    %516 = vmatpush1.msra.mxu0 %v134
    %517 = vmatprep.subr.mxu0 0.0
    %518 = vmatpush1.msra.mxu0 %v135
    %519 = vmatprep.subr.mxu0 0.0
    %520 = vmatpush1.msra.mxu0 %v136
    %521 = vmatprep.subr.mxu0 0.0
    %522 = vmatpush1.msra.mxu0 %v137
    %523 = vmatprep.subr.mxu0 0.0
    %524 = vmatpush1.msra.mxu0 %v138
    %525 = vmatprep.subr.mxu0 0.0
    %526 = vmatpush1.msra.mxu0 %v139
    %527 = vmatprep.subr.mxu0 0.0
    %528 = vmatpush1.msra.mxu0 %v140
    %529 = vmatprep.subr.mxu0 0.0
    %530 = vmatpush1.msra.mxu0 %v141
    %531 = vmatprep.subr.mxu0 0.0
    %532 = vmatpush1.msra.mxu0 %v142
    %533 = vmatprep.subr.mxu0 0.0
    %534 = vmatpush1.msra.mxu0 %v143
    %535 = vmatprep.subr.mxu0 0.0
    %536 = vmatpush1.msra.mxu0 %v144
    %537 = vmatprep.subr.mxu0 0.0
    %538 = vmatpush1.msra.mxu0 %v145
    %539 = vmatprep.mubr.f32.mxu0 %v237
    %540 = vmatmul.mubr.f32.gmra.mrb[0].mxu0 %v235
    %v541 = vpop.f32.mrb[0].mxu0
    %v542 = vadd.f32 %v472, %v541
    %v543 = vpop.f32.mrb[0].mxu0
    %544 = vdwg.mxu0
    %545 = vmatprep.subr.mxu0 0.0
    %546 = vmatpush1.msra.mxu0 %v146
    %547 = vmatprep.subr.mxu0 0.0
    %548 = vmatpush1.msra.mxu0 %v147
    %549 = vmatprep.subr.mxu0 0.0
    %550 = vmatpush1.msra.mxu0 %v148
    %551 = vmatprep.subr.mxu0 0.0
    %552 = vmatpush1.msra.mxu0 %v149
    %553 = vmatprep.subr.mxu0 0.0
    %554 = vmatpush1.msra.mxu0 %v150
    %555 = vmatprep.subr.mxu0 0.0
    %556 = vmatpush1.msra.mxu0 %v151
    %557 = vmatprep.subr.mxu0 0.0
    %558 = vmatpush1.msra.mxu0 %v152
    %559 = vmatprep.subr.mxu0 0.0
    %560 = vmatpush1.msra.mxu0 %v153
    %561 = vmatprep.subr.mxu0 0.0
    %562 = vmatpush1.msra.mxu0 %v154
    %563 = vmatprep.subr.mxu0 0.0
    %564 = vmatpush1.msra.mxu0 %v155
    %565 = vmatprep.subr.mxu0 0.0
    %566 = vmatpush1.msra.mxu0 %v156
    %567 = vmatprep.subr.mxu0 0.0
    %568 = vmatpush1.msra.mxu0 %v157
    %569 = vmatprep.subr.mxu0 0.0
    %570 = vmatpush1.msra.mxu0 %v158
    %571 = vmatprep.subr.mxu0 0.0
    %572 = vmatpush1.msra.mxu0 %v159
    %573 = vmatprep.subr.mxu0 0.0
    %574 = vmatpush1.msra.mxu0 %v160
    %575 = vmatprep.subr.mxu0 0.0
    %576 = vmatpush1.msra.mxu0 %v161
    %577 = vmatprep.subr.mxu0 0.0
    %578 = vmatpush1.msra.mxu0 %v162
    %579 = vmatprep.subr.mxu0 0.0
    %580 = vmatpush1.msra.mxu0 %v163
    %581 = vmatprep.subr.mxu0 0.0
    %582 = vmatpush1.msra.mxu0 %v164
    %583 = vmatprep.subr.mxu0 0.0
    %584 = vmatpush1.msra.mxu0 %v165
    %585 = vmatprep.subr.mxu0 0.0
    %586 = vmatpush1.msra.mxu0 %v166
    %587 = vmatprep.subr.mxu0 0.0
    %588 = vmatpush1.msra.mxu0 %v167
    %589 = vmatprep.subr.mxu0 0.0
    %590 = vmatpush1.msra.mxu0 %v168
    %591 = vmatprep.subr.mxu0 0.0
    %592 = vmatpush1.msra.mxu0 %v169
    %593 = vmatprep.subr.mxu0 0.0
    %594 = vmatpush1.msra.mxu0 %v170
    %595 = vmatprep.subr.mxu0 0.0
    %596 = vmatpush1.msra.mxu0 %v171
    %597 = vmatprep.subr.mxu0 0.0
    %598 = vmatpush1.msra.mxu0 %v172
    %599 = vmatprep.subr.mxu0 0.0
    %600 = vmatpush1.msra.mxu0 %v173
    %601 = vmatprep.subr.mxu0 0.0
    %602 = vmatpush1.msra.mxu0 %v174
    %603 = vmatprep.subr.mxu0 0.0
    %604 = vmatpush1.msra.mxu0 %v175
    %605 = vmatprep.subr.mxu0 0.0
    %606 = vmatpush1.msra.mxu0 %v176
    %607 = vmatprep.subr.mxu0 0.0
    %608 = vmatpush1.msra.mxu0 %v177
    %609 = vmatprep.mubr.f32.mxu0 %v253
    %610 = vmatmul.mubr.f32.gmra.mrb[0].mxu0 %v245
    %v611 = vpop.f32.mrb[0].mxu0
    %v612 = vadd.f32 %v542, %v611
    %v613 = vpop.f32.mrb[0].mxu0
    %614 = vdwg.mxu0
    %615 = vmatprep.subr.mxu0 0.0
    %616 = vmatpush1.msra.mxu0 %v178
    %617 = vmatprep.subr.mxu0 0.0
    %618 = vmatpush1.msra.mxu0 %v179
    %619 = vmatprep.subr.mxu0 0.0
    %620 = vmatpush1.msra.mxu0 %v180
    %621 = vmatprep.subr.mxu0 0.0
    %622 = vmatpush1.msra.mxu0 %v181
    %623 = vmatprep.subr.mxu0 0.0
    %624 = vmatpush1.msra.mxu0 %v182
    %625 = vmatprep.subr.mxu0 0.0
    %626 = vmatpush1.msra.mxu0 %v183
    %627 = vmatprep.subr.mxu0 0.0
    %628 = vmatpush1.msra.mxu0 %v184
    %629 = vmatprep.subr.mxu0 0.0
    %630 = vmatpush1.msra.mxu0 %v185
    %631 = vmatprep.subr.mxu0 0.0
    %632 = vmatpush1.msra.mxu0 %v186
    %633 = vmatprep.subr.mxu0 0.0
    %634 = vmatpush1.msra.mxu0 %v187
    %635 = vmatprep.subr.mxu0 0.0
    %636 = vmatpush1.msra.mxu0 %v188
    %637 = vmatprep.subr.mxu0 0.0
    %638 = vmatpush1.msra.mxu0 %v189
    %639 = vmatprep.subr.mxu0 0.0
    %640 = vmatpush1.msra.mxu0 %v190
    %641 = vmatprep.subr.mxu0 0.0
    %642 = vmatpush1.msra.mxu0 %v191
    %643 = vmatprep.subr.mxu0 0.0
    %644 = vmatpush1.msra.mxu0 %v192
    %645 = vmatprep.subr.mxu0 0.0
    %646 = vmatpush1.msra.mxu0 %v193
    %647 = vmatprep.subr.mxu0 0.0
    %648 = vmatpush1.msra.mxu0 0.0
    %649 = vmatprep.subr.mxu0 0.0
    %650 = vmatpush1.msra.mxu0 0.0
    %651 = vmatprep.subr.mxu0 0.0
    %652 = vmatpush1.msra.mxu0 0.0
    %653 = vmatprep.subr.mxu0 0.0
    %654 = vmatpush1.msra.mxu0 0.0
    %655 = vmatprep.subr.mxu0 0.0
    %656 = vmatpush1.msra.mxu0 0.0
    %657 = vmatprep.subr.mxu0 0.0
    %658 = vmatpush1.msra.mxu0 0.0
    %659 = vmatprep.subr.mxu0 0.0
    %660 = vmatpush1.msra.mxu0 0.0
    %661 = vmatprep.subr.mxu0 0.0
    %662 = vmatpush1.msra.mxu0 0.0
    %663 = vmatprep.subr.mxu0 0.0
    %664 = vmatpush1.msra.mxu0 0.0
    %665 = vmatprep.subr.mxu0 0.0
    %666 = vmatpush1.msra.mxu0 0.0
    %667 = vmatprep.subr.mxu0 0.0
    %668 = vmatpush1.msra.mxu0 0.0
    %669 = vmatprep.subr.mxu0 0.0
    %670 = vmatpush1.msra.mxu0 0.0
    %671 = vmatprep.subr.mxu0 0.0
    %672 = vmatpush1.msra.mxu0 0.0
    %673 = vmatprep.subr.mxu0 0.0
    %674 = vmatpush1.msra.mxu0 0.0
    %675 = vmatprep.subr.mxu0 0.0
    %676 = vmatpush1.msra.mxu0 0.0
    %677 = vmatprep.subr.mxu0 0.0
    %678 = vmatpush1.msra.mxu0 0.0
    %679 = vmatprep.mubr.f32.mxu0 0.0
    %680 = vmatmul.mubr.f32.gmra.mrb[0].mxu0 %v252
    %v681 = vpop.f32.mrb[0].mxu0
    %v682 = vadd.f32 %v612, %v681
    %v683 = vpop.f32.mrb[0].mxu0
    %684 = vdwg.mxu0
    %vm685 = vcmask 74752
    %v686 = vsel %vm685, %v682, -inf
    %687 = vmax.xlane.f32.xlu0 %v686
    %v688 = vpop.xlane.xlu0 %687
    %v689 = vsub.f32 %v682, %v688
    %v690 = vmul.f32 %v689, 1.442695
    %v691 = vpow.pop %v690
    %v692 = vsel %vm685, %v691, 0.0
    %693 = vadd.xlane.f32.xlu0 %v692
    %v694 = vpop.xlane.xlu0 %693
    %v695 = vlog2.pop %v694
    %v696 = vmul.f32 %v695, 0.6931472
    %v697 = vsub.f32 %v689, %v696
    %698 = vst.msk [vmem:[#allocation2] sm:$0x3] %vm685, %v697
    // Predicated region
    $region14: #{net_forward.17} parent=1 // pred_check
      _
    $region15: #{net_forward.17} parent=1 // pred_check_branch
      %700 = sbr.rel (0) target = $region17
    $region16: #{net_forward.17} parent=1 // pred_region
      %s702 = ssub.s32 32, 32
      %703 = vsyncadd [#allocation3], %s702
      %s705 = sshll.u32 [#allocation2], 4
      %s706 = int_to_ptr.vmem [resolvable:$true] %s705
      %708 = dma.vmem_to_hbm [thread:$0]  %s706, 32, %s3, [#allocation3]
    $region17: #{net_forward.17} parent=1 // pred_fallthru
      _
    // Predicated region
    $region18: #{net_forward.17} parent=1 // pred_check
      _
    $region19: #{net_forward.17} parent=1 // pred_check_branch
      %710 = sbr.rel (0) target = $region21
    $region20: #{net_forward.17} parent=1 // pred_region
      %711 = dma.done [#allocation3], 32
    $region21: #{net_forward.17} parent=1 // pred_fallthru
      _
    %712 = vsyncpa [#allocation3], 1

</llo_original>
